<compile_context>
chip_gen: v6e
topology: v6e:2x2x1
jax: 0.10.0
libtpu: 0.0.40
codegen_flags: <defaults>
</compile_context>

<pallas_src>
import functools
import math

import numpy as np
import jax
import jax.numpy as jnp
from jax.experimental import pallas as pl
from jax.experimental.pallas import tpu as pltpu

_VMEM_LIMIT_BYTES = 32 * 1024 * 1024   # fits every generation (v7x has 64 MiB total)


# ------------------------------------------------------------------ kernels --

def _gmm_kernel(shared_x, relu, has_res, *refs):
    """Grouped matmul + bias (+ residual) (+ ReLU).

    x: (tm, K) [shared] or (1, tm, K); w: (1, K, N); b: (1, 1, N);
    optional residual: (1, tm, N); out: (1, tm, N).
    bf16 operands, f32 accumulation on the MXU.
    """
    if has_res:
        x_ref, w_ref, b_ref, r_ref, o_ref = refs
    else:
        x_ref, w_ref, b_ref, o_ref = refs
        r_ref = None
    x = x_ref[...] if shared_x else x_ref[0]
    y = jnp.dot(x, w_ref[0], preferred_element_type=jnp.float32)
    y = y + b_ref[0]
    if has_res:
        y = y + r_ref[0].astype(jnp.float32)
    if relu:
        y = jnp.maximum(y, 0.0)
    o_ref[0] = y.astype(o_ref.dtype)


def _head_kernel(x_ref, w1_ref, b1_ref, w2_ref, b2_ref, o_ref):
    """Fused fc1 + ReLU + fc2 head (AdaptiveAvgPool2d already folded into w1)."""
    h = jnp.dot(x_ref[0], w1_ref[0], preferred_element_type=jnp.float32) + b1_ref[0]
    h = jnp.maximum(h, 0.0).astype(jnp.bfloat16)
    y = jnp.dot(h, w2_ref[0], preferred_element_type=jnp.float32) + b2_ref[0]
    o_ref[0] = y.astype(o_ref.dtype)


# ----------------------------------------------------------------- wrappers --

def grouped_matmul(x, w, b, *, relu=False, residual=None,
                   out_dtype=jnp.bfloat16, tm=512):
    """relu?(x @ w + b (+ residual)) with a leading group axis.

    x: (G, M, K) or (M, K) (shared across groups); w: (G, K, N); b: (G, N);
    residual: (G, M, N) or None.  Returns (G, M, N).
    Grid is (G, ceil(M/tm)); both axes are 'parallel' (megacore on v7x).
    """
    shared_x = (x.ndim == 2)
    G, K, N = w.shape
    M = x.shape[-2]
    tm = M if M <= tm else tm
    grid = (G, pl.cdiv(M, tm))

    x = x.astype(jnp.bfloat16)
    w = w.astype(jnp.bfloat16)
    b3 = b.reshape(G, 1, N).astype(jnp.float32)

    if shared_x:
        x_spec = pl.BlockSpec((tm, K), lambda g, i: (i, 0))
    else:
        x_spec = pl.BlockSpec((1, tm, K), lambda g, i: (g, i, 0))
    in_specs = [x_spec,
                pl.BlockSpec((1, K, N), lambda g, i: (g, 0, 0)),
                pl.BlockSpec((1, 1, N), lambda g, i: (g, 0, 0))]
    args = [x, w, b3]

    has_res = residual is not None
    if has_res:
        in_specs.append(pl.BlockSpec((1, tm, N), lambda g, i: (g, i, 0)))
        args.append(residual)

    return pl.pallas_call(
        functools.partial(_gmm_kernel, shared_x, relu, has_res),
        out_shape=jax.ShapeDtypeStruct((G, M, N), out_dtype),
        grid=grid,
        in_specs=in_specs,
        out_specs=pl.BlockSpec((1, tm, N), lambda g, i: (g, i, 0)),
        compiler_params=pltpu.CompilerParams(
            dimension_semantics=("parallel", "parallel"),
            vmem_limit_bytes=_VMEM_LIMIT_BYTES),
    )(*args)


def head_matmul(x_flat, w1, b1, w2, b2):
    """Fused (pool-folded) fc1 -> ReLU -> fc2 per group.

    x_flat: (G, B, K1); w1: (G, K1, H); b1: (G, H); w2: (G, H, A); b2: (G, A)
    -> (G, B, A) float32.
    """
    G, B, K1 = x_flat.shape
    H = w1.shape[2]
    A = w2.shape[2]
    return pl.pallas_call(
        _head_kernel,
        out_shape=jax.ShapeDtypeStruct((G, B, A), jnp.float32),
        grid=(G,),
        in_specs=[pl.BlockSpec((1, B, K1), lambda g: (g, 0, 0)),
                  pl.BlockSpec((1, K1, H), lambda g: (g, 0, 0)),
                  pl.BlockSpec((1, 1, H), lambda g: (g, 0, 0)),
                  pl.BlockSpec((1, H, A), lambda g: (g, 0, 0)),
                  pl.BlockSpec((1, 1, A), lambda g: (g, 0, 0))],
        out_specs=pl.BlockSpec((1, B, A), lambda g: (g, 0, 0)),
        compiler_params=pltpu.CompilerParams(
            dimension_semantics=("parallel",),
            vmem_limit_bytes=_VMEM_LIMIT_BYTES),
    )(x_flat.astype(jnp.bfloat16), w1.astype(jnp.bfloat16),
      b1.reshape(G, 1, H).astype(jnp.float32), w2.astype(jnp.bfloat16),
      b2.reshape(G, 1, A).astype(jnp.float32))


# --------------------------------------------------------------------- glue --

def im2col_nhwc(x, kh, kw, stride, padding=0):
    """x: (B, H, W, C) -> (B*Ho*Wo, C*kh*kw), features ordered (C, kh, kw)
    to match PyTorch's weight.reshape(Cout, Cin*kh*kw)."""
    # TODO(synk): patch extraction stays in plain JAX (tiny); in-kernel gather
    # via BlockSpec/DMA would be needed to fuse whole conv chains into one call.
    if padding:
        x = jnp.pad(x, ((0, 0), (padding, padding), (padding, padding), (0, 0)))
    B, H, W, C = x.shape
    Ho = (H - kh) // stride + 1
    Wo = (W - kw) // stride + 1
    patches = [x[:, i:i + stride * Ho:stride, j:j + stride * Wo:stride, :]
               for i in range(kh) for j in range(kw)]
    cols = jnp.stack(patches, axis=-1)                 # (B, Ho, Wo, C, kh*kw)
    return cols.reshape(B * Ho * Wo, C * kh * kw), Ho, Wo


def conv_step(x, w, b, kh, kw, stride, padding=0, relu=True, residual=None):
    """Grouped conv via im2col + Pallas matmul.

    x: (G*B, H, W, Cin) bf16 NHWC; w: (G, Cin*kh*kw, Cout); b: (G, Cout);
    residual: (G*B, Ho, Wo, Cout) or None.  Returns (G*B, Ho, Wo, Cout) bf16.
    """
    G = w.shape[0]
    GB = x.shape[0]
    B = GB // G
    cols, Ho, Wo = im2col_nhwc(x, kh, kw, stride, padding)
    cols = cols.reshape(G, B * Ho * Wo, -1)
    res = None if residual is None else residual.reshape(G, B * Ho * Wo, -1)
    y = grouped_matmul(cols, w, b, relu=relu, residual=res)
    return y.reshape(GB, Ho, Wo, -1)


def _conv_out(size, k, stride, pad=0):
    return (size + 2 * pad - k) // stride + 1


def _adaptive_pool_matrix(in_size, out_size):
    """Row-stochastic averaging matrix matching PyTorch AdaptiveAvgPool2d bins."""
    P = np.zeros((out_size, in_size), np.float32)
    for i in range(out_size):
        start = (i * in_size) // out_size
        end = -(-((i + 1) * in_size) // out_size)  # ceil
        P[i, start:end] = 1.0 / (end - start)
    return P


def fold_pool_into_fc1(fc1_w, C, H, W, ph, pw):
    """Fold AdaptiveAvgPool2d((ph, pw)) + NCHW flatten into fc1.

    fc1_w: (C*ph*pw, hidden), PyTorch row order (c, i, j).
    Returns (H*W*C, hidden) for an NHWC-flattened (h, w, c) input of the
    *unpooled* (C, H, W) feature map.  Pure linear recomposition -> exact
    (up to fp reassociation).
    """
    hidden = fc1_w.shape[1]
    Ph = jnp.asarray(_adaptive_pool_matrix(H, ph))     # (ph, H)
    Pw = jnp.asarray(_adaptive_pool_matrix(W, pw))     # (pw, W)
    w = fc1_w.reshape(C, ph, pw, hidden)
    w = jnp.einsum('ih,jw,cijn->hwcn', Ph, Pw, w)      # (H, W, C, hidden)
    return w.reshape(H * W * C, hidden)


# ------------------------------------------------------------------- params --

def init_conv(key, cout, cin, kh, kw):
    fan_in = cin * kh * kw
    bound = 1.0 / math.sqrt(fan_in)
    k1, k2 = jax.random.split(key)
    w = jax.random.uniform(k1, (cout, cin, kh, kw), jnp.float32, -bound, bound)
    b = jax.random.uniform(k2, (cout,), jnp.float32, -bound, bound)
    return {"w": w, "b": b}


def init_linear(key, in_f, out_f):
    bound = 1.0 / math.sqrt(in_f)
    k1, k2 = jax.random.split(key)
    w = jax.random.uniform(k1, (in_f, out_f), jnp.float32, -bound, bound)  # (K, N)
    b = jax.random.uniform(k2, (out_f,), jnp.float32, -bound, bound)
    return {"w": w, "b": b}


def init_ensemble_params(key, in_channels, num_actions):
    keys = jax.random.split(key, 4)

    def std_net(k, c1, c2, c3, hidden):
        ks = jax.random.split(k, 5)
        return {
            "conv1": init_conv(ks[0], c1, in_channels, 8, 8),
            "conv2": init_conv(ks[1], c2, c1, 4, 4),
            "conv3": init_conv(ks[2], c3, c2, 3, 3),
            "fc1": init_linear(ks[3], c3 * 8 * 8, hidden),
            "fc2": init_linear(ks[4], hidden, num_actions),
        }

    def res_net(k):
        ks = jax.random.split(k, 6)
        return {
            "initial": init_conv(ks[0], 32, in_channels, 8, 8),
            "res1": init_conv(ks[1], 32, 32, 3, 3),
            "res2": init_conv(ks[2], 32, 32, 3, 3),
            "down": init_conv(ks[3], 64, 32, 4, 4),
            "fc1": init_linear(ks[4], 64 * 9 * 9, 512),
            "fc2": init_linear(ks[5], 512, num_actions),
        }

    return {
        "cnn": std_net(keys[0], 32, 64, 64, 512),
        "small": std_net(keys[1], 16, 32, 32, 256),
        "residual": res_net(keys[2]),
        "dropout": std_net(keys[3], 32, 64, 64, 512),
    }


def prepare_inference_params(params, in_hw):
    """Offline weight prep: conv weights -> matmul form (bf16), pool folded into
    fc1, and the identical cnn/dropout nets stacked along a leading net axis."""
    H, W = in_hw

    def conv_prep(p):
        w, b = p["w"], p["b"]
        cout = w.shape[0]
        return w.reshape(cout, -1).T.astype(jnp.bfloat16), b.astype(jnp.float32)

    def std_prep(p, c3):
        H1, W1 = _conv_out(H, 8, 4), _conv_out(W, 8, 4)
        H2, W2 = _conv_out(H1, 4, 2), _conv_out(W1, 4, 2)
        H3, W3 = _conv_out(H2, 3, 1), _conv_out(W2, 3, 1)
        c1w, c1b = conv_prep(p["conv1"])
        c2w, c2b = conv_prep(p["conv2"])
        c3w, c3b = conv_prep(p["conv3"])
        fc1w = fold_pool_into_fc1(p["fc1"]["w"], c3, H3, W3, 8, 8).astype(jnp.bfloat16)
        return {"conv1_w": c1w, "conv1_b": c1b,
                "conv2_w": c2w, "conv2_b": c2b,
                "conv3_w": c3w, "conv3_b": c3b,
                "fc1_w": fc1w, "fc1_b": p["fc1"]["b"].astype(jnp.float32),
                "fc2_w": p["fc2"]["w"].astype(jnp.bfloat16),
                "fc2_b": p["fc2"]["b"].astype(jnp.float32)}

    def res_prep(p):
        H1, W1 = _conv_out(H, 8, 4), _conv_out(W, 8, 4)
        Hd, Wd = _conv_out(H1, 4, 2), _conv_out(W1, 4, 2)
        iw, ib = conv_prep(p["initial"])
        r1w, r1b = conv_prep(p["res1"])
        r2w, r2b = conv_prep(p["res2"])
        dw, db = conv_prep(p["down"])
        fc1w = fold_pool_into_fc1(p["fc1"]["w"], 64, Hd, Wd, 9, 9).astype(jnp.bfloat16)
        return {"initial_w": iw, "initial_b": ib,
                "res1_w": r1w, "res1_b": r1b,
                "res2_w": r2w, "res2_b": r2b,
                "down_w": dw, "down_b": db,
                "fc1_w": fc1w, "fc1_b": p["fc1"]["b"].astype(jnp.float32),
                "fc2_w": p["fc2"]["w"].astype(jnp.bfloat16),
                "fc2_b": p["fc2"]["b"].astype(jnp.float32)}

    cnn_p = std_prep(params["cnn"], 64)
    drp_p = std_prep(params["dropout"], 64)
    # TODO(synk): Dropout2d / Dropout treated as eval-mode identity (inference
    # semantics), which is what makes cnn/dropout architecturally identical here.
    pair = jax.tree_util.tree_map(lambda a, b: jnp.stack([a, b], 0), cnn_p, drp_p)
    small = jax.tree_util.tree_map(lambda a: a[None], std_prep(params["small"], 32))
    residual = jax.tree_util.tree_map(lambda a: a[None], res_prep(params["residual"]))
    return {"pair": pair, "small": small, "residual": residual}


# ----------------------------------------------------------------- forwards --

def standard_pair_forward(prep, x_nhwc):
    """CNNQnetwork + DropoutCNNQnetwork together (leading net axis of size 2)."""
    B = x_nhwc.shape[0]
    # conv1: the input image is shared between the two nets.
    cols, H1, W1 = im2col_nhwc(x_nhwc, 8, 8, 4)
    y = grouped_matmul(cols, prep["conv1_w"], prep["conv1_b"], relu=True)  # (2, B*H1*W1, 32)
    y = y.reshape(2 * B, H1, W1, -1)
    y = conv_step(y, prep["conv2_w"], prep["conv2_b"], 4, 4, 2, relu=True)
    y = conv_step(y, prep["conv3_w"], prep["conv3_b"], 3, 3, 1, relu=True)
    x_flat = y.reshape(2, B, -1)                      # NHWC flatten (pool folded into fc1)
    out = head_matmul(x_flat, prep["fc1_w"], prep["fc1_b"],
                      prep["fc2_w"], prep["fc2_b"])   # (2, B, A)
    return out[0], out[1]


def standard_single_forward(prep, x_nhwc):
    """SmallCNNQnetwork."""
    B = x_nhwc.shape[0]
    y = conv_step(x_nhwc, prep["conv1_w"], prep["conv1_b"], 8, 8, 4, relu=True)
    y = conv_step(y, prep["conv2_w"], prep["conv2_b"], 4, 4, 2, relu=True)
    y = conv_step(y, prep["conv3_w"], prep["conv3_b"], 3, 3, 1, relu=True)
    x_flat = y.reshape(1, B, -1)
    return head_matmul(x_flat, prep["fc1_w"], prep["fc1_b"],
                       prep["fc2_w"], prep["fc2_b"])[0]


def residual_forward(prep, x_nhwc):
    """ResidualCNNQnetwork (residual add + ReLU fused into res2's matmul)."""
    B = x_nhwc.shape[0]
    y = conv_step(x_nhwc, prep["initial_w"], prep["initial_b"], 8, 8, 4, relu=True)
    res = y
    z = conv_step(y, prep["res1_w"], prep["res1_b"], 3, 3, 1, padding=1, relu=True)
    z = conv_step(z, prep["res2_w"], prep["res2_b"], 3, 3, 1, padding=1,
                  relu=True, residual=res)            # relu(conv + b + residual)
    y = conv_step(z, prep["down_w"], prep["down_b"], 4, 4, 2, relu=False)
    x_flat = y.reshape(1, B, -1)
    return head_matmul(x_flat, prep["fc1_w"], prep["fc1_b"],
                       prep["fc2_w"], prep["fc2_b"])[0]


@functools.partial(jax.jit, static_argnames=("mode",))
def ensemble_forward(prep, x, mode="mean"):
    """x: (B, C, H, W) float32 (PyTorch NCHW).  mode in {'mean', 'min', 'all'}."""
    x_nhwc = jnp.transpose(x, (0, 2, 3, 1)).astype(jnp.bfloat16)
    q_cnn, q_dropout = standard_pair_forward(prep["pair"], x_nhwc)
    q_small = standard_single_forward(prep["small"], x_nhwc)
    q_res = residual_forward(prep["residual"], x_nhwc)
    outs = [q_cnn, q_small, q_res, q_dropout]         # ModuleList order: CNN, Small, Residual, Dropout
    if mode == "all":
        return outs
    if mode not in ("mean", "min"):
        raise ValueError(f"Unknown ensemble mode: {mode}")
    stacked = jnp.stack(outs, axis=0)                 # (4, B, A) — tiny, plain jnp
    return jnp.mean(stacked, axis=0) if mode == "mean" else jnp.min(stacked, axis=0)


# --------------------------------------------------------------------- main --

if __name__ == "__main__":
    key = jax.random.PRNGKey(0)
    in_channels, num_actions = 4, 6
    batch, spatial = 2, 52                    # 52 -> conv stack stays valid & small

    pkey, xkey = jax.random.split(key)
    params = init_ensemble_params(pkey, in_channels, num_actions)
    prep = prepare_inference_params(params, (spatial, spatial))
    x = jax.random.normal(xkey, (batch, in_channels, spatial, spatial), jnp.float32)

    q_mean = jax.block_until_ready(ensemble_forward(prep, x, mode="mean"))
    q_min = jax.block_until_ready(ensemble_forward(prep, x, mode="min"))
    q_all = jax.block_until_ready(ensemble_forward(prep, x, mode="all"))

    assert q_mean.shape == (batch, num_actions)
    assert q_min.shape == (batch, num_actions)
    assert len(q_all) == 4 and all(o.shape == (batch, num_actions) for o in q_all)
    assert jnp.all(jnp.isfinite(q_mean)) and jnp.all(jnp.isfinite(q_min))

    print("KERNEL_OK")
</pallas_src>

<mosaic_0001>
module attributes {stable_mosaic.version = 11 : i64} {
  func.func @_gmm_kernel(%arg0: i32, %arg1: i32, %arg2: memref<1x288x256xbf16, #tpu.memory_space<vmem>>, %arg3: memref<1x256x16xbf16, #tpu.memory_space<vmem>>, %arg4: memref<1x1x16xf32, #tpu.memory_space<vmem>>, %arg5: memref<1x288x16xbf16, #tpu.memory_space<vmem>>) attributes {dimension_semantics = [#tpu.dimension_semantics<parallel>, #tpu.dimension_semantics<parallel>], iteration_bounds = array<i64: 1, 1>, scalar_prefetch = 0 : i64, scratch_operands = 0 : i64, tpu.core_type = #tpu.core_type<tc>, window_params = [{transform_indices = @transform_0, window_bounds = array<i64: 1, 288, 256>}, {transform_indices = @transform_1, window_bounds = array<i64: 1, 256, 16>}, {transform_indices = @transform_2, window_bounds = array<i64: 1, 1, 16>}, {transform_indices = @transform_3, window_bounds = array<i64: 1, 288, 16>}]} {
    %c0 = arith.constant 0 : index
    %c0_0 = arith.constant 0 : index
    %c0_1 = arith.constant 0 : index
    %0 = vector.load %arg2[%c0, %c0_0, %c0_1] : memref<1x288x256xbf16, #tpu.memory_space<vmem>>, vector<1x288x256xbf16>
    %1 = vector.shape_cast %0 : vector<1x288x256xbf16> to vector<288x256xbf16>
    %c0_2 = arith.constant 0 : index
    %c0_3 = arith.constant 0 : index
    %c0_4 = arith.constant 0 : index
    %2 = vector.load %arg3[%c0_2, %c0_3, %c0_4] : memref<1x256x16xbf16, #tpu.memory_space<vmem>>, vector<1x256x16xbf16>
    %3 = vector.shape_cast %2 : vector<1x256x16xbf16> to vector<256x16xbf16>
    %cst = arith.constant dense<0.000000e+00> : vector<288x16xf32>
    %4 = tpu.matmul %1, %3, %cst {dimension_numbers = #tpu.dot_dimension_numbers<[1], [0], [0], [1], [0, 0, 1, 1], [], []>} : vector<288x256xbf16>, vector<256x16xbf16>, vector<288x16xf32> -> vector<288x16xf32>
    %c0_5 = arith.constant 0 : index
    %c0_6 = arith.constant 0 : index
    %c0_7 = arith.constant 0 : index
    %5 = vector.load %arg4[%c0_5, %c0_6, %c0_7] : memref<1x1x16xf32, #tpu.memory_space<vmem>>, vector<1x1x16xf32>
    %6 = vector.shape_cast %5 : vector<1x1x16xf32> to vector<1x16xf32>
    %7 = vector.broadcast %6 : vector<1x16xf32> to vector<288x16xf32>
    %8 = arith.addf %4, %7 : vector<288x16xf32>
    %cst_8 = arith.constant 0.000000e+00 : f32
    %9 = vector.broadcast %cst_8 : f32 to vector<288x16xf32>
    %10 = arith.maximumf %8, %9 : vector<288x16xf32>
    %11 = arith.truncf %10 : vector<288x16xf32> to vector<288x16xbf16>
    %c0_9 = arith.constant 0 : index
    %c0_10 = arith.constant 0 : index
    %c0_11 = arith.constant 0 : index
    %12 = vector.load %arg5[%c0_9, %c0_10, %c0_11] : memref<1x288x16xbf16, #tpu.memory_space<vmem>>, vector<1x288x16xbf16>
    %13 = vector.shape_cast %12 : vector<1x288x16xbf16> to vector<288x16xbf16>
    %14 = vector.shape_cast %11 : vector<288x16xbf16> to vector<1x288x16xbf16>
    tpu.vector_store %arg5[%c0_9, %c0_10, %c0_11], %14 {strides = array<i32>} : memref<1x288x16xbf16, #tpu.memory_space<vmem>>, vector<1x288x16xbf16>,
    return
  }
  func.func @transform_0(%arg0: i32, %arg1: i32) -> (i32, i32, i32) {
    %c0_i32 = arith.constant 0 : i32
    %c0_i32_0 = arith.constant 0 : i32
    return %arg0, %arg1, %c0_i32 : i32, i32, i32
  }
  func.func @transform_1(%arg0: i32, %arg1: i32) -> (i32, i32, i32) {
    %c0_i32 = arith.constant 0 : i32
    %c0_i32_0 = arith.constant 0 : i32
    %c0_i32_1 = arith.constant 0 : i32
    return %arg0, %c0_i32, %c0_i32_0 : i32, i32, i32
  }
  func.func @transform_2(%arg0: i32, %arg1: i32) -> (i32, i32, i32) {
    %c0_i32 = arith.constant 0 : i32
    %c0_i32_0 = arith.constant 0 : i32
    %c0_i32_1 = arith.constant 0 : i32
    return %arg0, %c0_i32, %c0_i32_0 : i32, i32, i32
  }
  func.func @transform_3(%arg0: i32, %arg1: i32) -> (i32, i32, i32) {
    %c0_i32 = arith.constant 0 : i32
    %c0_i32_0 = arith.constant 0 : i32
    return %arg0, %arg1, %c0_i32 : i32, i32, i32
  }
}

module attributes {stable_mosaic.version = 11 : i64} {
  func.func @_gmm_kernel(%arg0: i32, %arg1: i32, %arg2: memref<1x50x256xbf16, #tpu.memory_space<vmem>>, %arg3: memref<1x256x32xbf16, #tpu.memory_space<vmem>>, %arg4: memref<1x1x32xf32, #tpu.memory_space<vmem>>, %arg5: memref<1x50x32xbf16, #tpu.memory_space<vmem>>) attributes {dimension_semantics = [#tpu.dimension_semantics<parallel>, #tpu.dimension_semantics<parallel>], iteration_bounds = array<i64: 1, 1>, scalar_prefetch = 0 : i64, scratch_operands = 0 : i64, tpu.core_type = #tpu.core_type<tc>, window_params = [{transform_indices = @transform_0, window_bounds = array<i64: 1, 50, 256>}, {transform_indices = @transform_1, window_bounds = array<i64: 1, 256, 32>}, {transform_indices = @transform_2, window_bounds = array<i64: 1, 1, 32>}, {transform_indices = @transform_3, window_bounds = array<i64: 1, 50, 32>}]} {
    %c0 = arith.constant 0 : index
    %c0_0 = arith.constant 0 : index
    %c0_1 = arith.constant 0 : index
    %0 = vector.load %arg2[%c0, %c0_0, %c0_1] : memref<1x50x256xbf16, #tpu.memory_space<vmem>>, vector<1x50x256xbf16>
    %1 = vector.shape_cast %0 : vector<1x50x256xbf16> to vector<50x256xbf16>
    %c0_2 = arith.constant 0 : index
    %c0_3 = arith.constant 0 : index
    %c0_4 = arith.constant 0 : index
    %2 = vector.load %arg3[%c0_2, %c0_3, %c0_4] : memref<1x256x32xbf16, #tpu.memory_space<vmem>>, vector<1x256x32xbf16>
    %3 = vector.shape_cast %2 : vector<1x256x32xbf16> to vector<256x32xbf16>
    %cst = arith.constant dense<0.000000e+00> : vector<50x32xf32>
    %4 = tpu.matmul %1, %3, %cst {dimension_numbers = #tpu.dot_dimension_numbers<[1], [0], [0], [1], [0, 0, 1, 1], [], []>} : vector<50x256xbf16>, vector<256x32xbf16>, vector<50x32xf32> -> vector<50x32xf32>
    %c0_5 = arith.constant 0 : index
    %c0_6 = arith.constant 0 : index
    %c0_7 = arith.constant 0 : index
    %5 = vector.load %arg4[%c0_5, %c0_6, %c0_7] : memref<1x1x32xf32, #tpu.memory_space<vmem>>, vector<1x1x32xf32>
    %6 = vector.shape_cast %5 : vector<1x1x32xf32> to vector<1x32xf32>
    %7 = vector.broadcast %6 : vector<1x32xf32> to vector<50x32xf32>
    %8 = arith.addf %4, %7 : vector<50x32xf32>
    %cst_8 = arith.constant 0.000000e+00 : f32
    %9 = vector.broadcast %cst_8 : f32 to vector<50x32xf32>
    %10 = arith.maximumf %8, %9 : vector<50x32xf32>
    %11 = arith.truncf %10 : vector<50x32xf32> to vector<50x32xbf16>
    %c0_9 = arith.constant 0 : index
    %c0_10 = arith.constant 0 : index
    %c0_11 = arith.constant 0 : index
    %12 = vector.load %arg5[%c0_9, %c0_10, %c0_11] : memref<1x50x32xbf16, #tpu.memory_space<vmem>>, vector<1x50x32xbf16>
    %13 = vector.shape_cast %12 : vector<1x50x32xbf16> to vector<50x32xbf16>
    %14 = vector.shape_cast %11 : vector<50x32xbf16> to vector<1x50x32xbf16>
    tpu.vector_store %arg5[%c0_9, %c0_10, %c0_11], %14 {strides = array<i32>} : memref<1x50x32xbf16, #tpu.memory_space<vmem>>, vector<1x50x32xbf16>,
    return
  }
  func.func @transform_0(%arg0: i32, %arg1: i32) -> (i32, i32, i32) {
    %c0_i32 = arith.constant 0 : i32
    %c0_i32_0 = arith.constant 0 : i32
    return %arg0, %arg1, %c0_i32 : i32, i32, i32
  }
  func.func @transform_1(%arg0: i32, %arg1: i32) -> (i32, i32, i32) {
    %c0_i32 = arith.constant 0 : i32
    %c0_i32_0 = arith.constant 0 : i32
    %c0_i32_1 = arith.constant 0 : i32
    return %arg0, %c0_i32, %c0_i32_0 : i32, i32, i32
  }
  func.func @transform_2(%arg0: i32, %arg1: i32) -> (i32, i32, i32) {
    %c0_i32 = arith.constant 0 : i32
    %c0_i32_0 = arith.constant 0 : i32
    %c0_i32_1 = arith.constant 0 : i32
    return %arg0, %c0_i32, %c0_i32_0 : i32, i32, i32
  }
  func.func @transform_3(%arg0: i32, %arg1: i32) -> (i32, i32, i32) {
    %c0_i32 = arith.constant 0 : i32
    %c0_i32_0 = arith.constant 0 : i32
    return %arg0, %arg1, %c0_i32 : i32, i32, i32
  }
}

module attributes {stable_mosaic.version = 11 : i64} {
  func.func @_gmm_kernel(%arg0: i32, %arg1: i32, %arg2: memref<1x18x288xbf16, #tpu.memory_space<vmem>>, %arg3: memref<1x288x32xbf16, #tpu.memory_space<vmem>>, %arg4: memref<1x1x32xf32, #tpu.memory_space<vmem>>, %arg5: memref<1x18x32xbf16, #tpu.memory_space<vmem>>) attributes {dimension_semantics = [#tpu.dimension_semantics<parallel>, #tpu.dimension_semantics<parallel>], iteration_bounds = array<i64: 1, 1>, scalar_prefetch = 0 : i64, scratch_operands = 0 : i64, tpu.core_type = #tpu.core_type<tc>, window_params = [{transform_indices = @transform_0, window_bounds = array<i64: 1, 18, 288>}, {transform_indices = @transform_1, window_bounds = array<i64: 1, 288, 32>}, {transform_indices = @transform_2, window_bounds = array<i64: 1, 1, 32>}, {transform_indices = @transform_3, window_bounds = array<i64: 1, 18, 32>}]} {
    %c0 = arith.constant 0 : index
    %c0_0 = arith.constant 0 : index
    %c0_1 = arith.constant 0 : index
    %0 = vector.load %arg2[%c0, %c0_0, %c0_1] : memref<1x18x288xbf16, #tpu.memory_space<vmem>>, vector<1x18x288xbf16>
    %1 = vector.shape_cast %0 : vector<1x18x288xbf16> to vector<18x288xbf16>
    %c0_2 = arith.constant 0 : index
    %c0_3 = arith.constant 0 : index
    %c0_4 = arith.constant 0 : index
    %2 = vector.load %arg3[%c0_2, %c0_3, %c0_4] : memref<1x288x32xbf16, #tpu.memory_space<vmem>>, vector<1x288x32xbf16>
    %3 = vector.shape_cast %2 : vector<1x288x32xbf16> to vector<288x32xbf16>
    %cst = arith.constant dense<0.000000e+00> : vector<18x32xf32>
    %4 = tpu.matmul %1, %3, %cst {dimension_numbers = #tpu.dot_dimension_numbers<[1], [0], [0], [1], [0, 0, 1, 1], [], []>} : vector<18x288xbf16>, vector<288x32xbf16>, vector<18x32xf32> -> vector<18x32xf32>
    %c0_5 = arith.constant 0 : index
    %c0_6 = arith.constant 0 : index
    %c0_7 = arith.constant 0 : index
    %5 = vector.load %arg4[%c0_5, %c0_6, %c0_7] : memref<1x1x32xf32, #tpu.memory_space<vmem>>, vector<1x1x32xf32>
    %6 = vector.shape_cast %5 : vector<1x1x32xf32> to vector<1x32xf32>
    %7 = vector.broadcast %6 : vector<1x32xf32> to vector<18x32xf32>
    %8 = arith.addf %4, %7 : vector<18x32xf32>
    %cst_8 = arith.constant 0.000000e+00 : f32
    %9 = vector.broadcast %cst_8 : f32 to vector<18x32xf32>
    %10 = arith.maximumf %8, %9 : vector<18x32xf32>
    %11 = arith.truncf %10 : vector<18x32xf32> to vector<18x32xbf16>
    %c0_9 = arith.constant 0 : index
    %c0_10 = arith.constant 0 : index
    %c0_11 = arith.constant 0 : index
    %12 = vector.load %arg5[%c0_9, %c0_10, %c0_11] : memref<1x18x32xbf16, #tpu.memory_space<vmem>>, vector<1x18x32xbf16>
    %13 = vector.shape_cast %12 : vector<1x18x32xbf16> to vector<18x32xbf16>
    %14 = vector.shape_cast %11 : vector<18x32xbf16> to vector<1x18x32xbf16>
    tpu.vector_store %arg5[%c0_9, %c0_10, %c0_11], %14 {strides = array<i32>} : memref<1x18x32xbf16, #tpu.memory_space<vmem>>, vector<1x18x32xbf16>,
    return
  }
  func.func @transform_0(%arg0: i32, %arg1: i32) -> (i32, i32, i32) {
    %c0_i32 = arith.constant 0 : i32
    %c0_i32_0 = arith.constant 0 : i32
    return %arg0, %arg1, %c0_i32 : i32, i32, i32
  }
  func.func @transform_1(%arg0: i32, %arg1: i32) -> (i32, i32, i32) {
    %c0_i32 = arith.constant 0 : i32
    %c0_i32_0 = arith.constant 0 : i32
    %c0_i32_1 = arith.constant 0 : i32
    return %arg0, %c0_i32, %c0_i32_0 : i32, i32, i32
  }
  func.func @transform_2(%arg0: i32, %arg1: i32) -> (i32, i32, i32) {
    %c0_i32 = arith.constant 0 : i32
    %c0_i32_0 = arith.constant 0 : i32
    %c0_i32_1 = arith.constant 0 : i32
    return %arg0, %c0_i32, %c0_i32_0 : i32, i32, i32
  }
  func.func @transform_3(%arg0: i32, %arg1: i32) -> (i32, i32, i32) {
    %c0_i32 = arith.constant 0 : i32
    %c0_i32_0 = arith.constant 0 : i32
    return %arg0, %arg1, %c0_i32 : i32, i32, i32
  }
}

module attributes {stable_mosaic.version = 11 : i64} {
  func.func @_head_kernel(%arg0: i32, %arg1: memref<1x2x288xbf16, #tpu.memory_space<vmem>>, %arg2: memref<1x288x256xbf16, #tpu.memory_space<vmem>>, %arg3: memref<1x1x256xf32, #tpu.memory_space<vmem>>, %arg4: memref<1x256x6xbf16, #tpu.memory_space<vmem>>, %arg5: memref<1x1x6xf32, #tpu.memory_space<vmem>>, %arg6: memref<1x2x6xf32, #tpu.memory_space<vmem>>) attributes {dimension_semantics = [#tpu.dimension_semantics<parallel>], iteration_bounds = array<i64: 1>, scalar_prefetch = 0 : i64, scratch_operands = 0 : i64, tpu.core_type = #tpu.core_type<tc>, window_params = [{transform_indices = @transform_0, window_bounds = array<i64: 1, 2, 288>}, {transform_indices = @transform_1, window_bounds = array<i64: 1, 288, 256>}, {transform_indices = @transform_2, window_bounds = array<i64: 1, 1, 256>}, {transform_indices = @transform_3, window_bounds = array<i64: 1, 256, 6>}, {transform_indices = @transform_4, window_bounds = array<i64: 1, 1, 6>}, {transform_indices = @transform_5, window_bounds = array<i64: 1, 2, 6>}]} {
    %c0 = arith.constant 0 : index
    %c0_0 = arith.constant 0 : index
    %c0_1 = arith.constant 0 : index
    %0 = vector.load %arg1[%c0, %c0_0, %c0_1] : memref<1x2x288xbf16, #tpu.memory_space<vmem>>, vector<1x2x288xbf16>
    %1 = vector.shape_cast %0 : vector<1x2x288xbf16> to vector<2x288xbf16>
    %c0_2 = arith.constant 0 : index
    %c0_3 = arith.constant 0 : index
    %c0_4 = arith.constant 0 : index
    %2 = vector.load %arg2[%c0_2, %c0_3, %c0_4] : memref<1x288x256xbf16, #tpu.memory_space<vmem>>, vector<1x288x256xbf16>
    %3 = vector.shape_cast %2 : vector<1x288x256xbf16> to vector<288x256xbf16>
    %cst = arith.constant dense<0.000000e+00> : vector<2x256xf32>
    %4 = tpu.matmul %1, %3, %cst {dimension_numbers = #tpu.dot_dimension_numbers<[1], [0], [0], [1], [0, 0, 1, 1], [], []>} : vector<2x288xbf16>, vector<288x256xbf16>, vector<2x256xf32> -> vector<2x256xf32>
    %c0_5 = arith.constant 0 : index
    %c0_6 = arith.constant 0 : index
    %c0_7 = arith.constant 0 : index
    %5 = vector.load %arg3[%c0_5, %c0_6, %c0_7] : memref<1x1x256xf32, #tpu.memory_space<vmem>>, vector<1x1x256xf32>
    %6 = vector.shape_cast %5 : vector<1x1x256xf32> to vector<1x256xf32>
    %7 = vector.broadcast %6 : vector<1x256xf32> to vector<2x256xf32>
    %8 = arith.addf %4, %7 : vector<2x256xf32>
    %cst_8 = arith.constant 0.000000e+00 : f32
    %9 = vector.broadcast %cst_8 : f32 to vector<2x256xf32>
    %10 = arith.maximumf %8, %9 : vector<2x256xf32>
    %11 = arith.truncf %10 : vector<2x256xf32> to vector<2x256xbf16>
    %c0_9 = arith.constant 0 : index
    %c0_10 = arith.constant 0 : index
    %c0_11 = arith.constant 0 : index
    %12 = vector.load %arg4[%c0_9, %c0_10, %c0_11] : memref<1x256x6xbf16, #tpu.memory_space<vmem>>, vector<1x256x6xbf16>
    %13 = vector.shape_cast %12 : vector<1x256x6xbf16> to vector<256x6xbf16>
    %cst_12 = arith.constant dense<0.000000e+00> : vector<2x6xf32>
    %14 = tpu.matmul %11, %13, %cst_12 {dimension_numbers = #tpu.dot_dimension_numbers<[1], [0], [0], [1], [0, 0, 1, 1], [], []>} : vector<2x256xbf16>, vector<256x6xbf16>, vector<2x6xf32> -> vector<2x6xf32>
    %c0_13 = arith.constant 0 : index
    %c0_14 = arith.constant 0 : index
    %c0_15 = arith.constant 0 : index
    %15 = vector.load %arg5[%c0_13, %c0_14, %c0_15] : memref<1x1x6xf32, #tpu.memory_space<vmem>>, vector<1x1x6xf32>
    %16 = vector.shape_cast %15 : vector<1x1x6xf32> to vector<1x6xf32>
    %17 = vector.broadcast %16 : vector<1x6xf32> to vector<2x6xf32>
    %18 = arith.addf %14, %17 : vector<2x6xf32>
    %c0_16 = arith.constant 0 : index
    %c0_17 = arith.constant 0 : index
    %c0_18 = arith.constant 0 : index
    %19 = vector.load %arg6[%c0_16, %c0_17, %c0_18] : memref<1x2x6xf32, #tpu.memory_space<vmem>>, vector<1x2x6xf32>
    %20 = vector.shape_cast %19 : vector<1x2x6xf32> to vector<2x6xf32>
    %21 = vector.shape_cast %18 : vector<2x6xf32> to vector<1x2x6xf32>
    tpu.vector_store %arg6[%c0_16, %c0_17, %c0_18], %21 {strides = array<i32>} : memref<1x2x6xf32, #tpu.memory_space<vmem>>, vector<1x2x6xf32>,
    return
  }
  func.func @transform_0(%arg0: i32) -> (i32, i32, i32) {
    %c0_i32 = arith.constant 0 : i32
    %c0_i32_0 = arith.constant 0 : i32
    %c0_i32_1 = arith.constant 0 : i32
    return %arg0, %c0_i32, %c0_i32_0 : i32, i32, i32
  }
  func.func @transform_1(%arg0: i32) -> (i32, i32, i32) {
    %c0_i32 = arith.constant 0 : i32
    %c0_i32_0 = arith.constant 0 : i32
    %c0_i32_1 = arith.constant 0 : i32
    return %arg0, %c0_i32, %c0_i32_0 : i32, i32, i32
  }
  func.func @transform_2(%arg0: i32) -> (i32, i32, i32) {
    %c0_i32 = arith.constant 0 : i32
    %c0_i32_0 = arith.constant 0 : i32
    %c0_i32_1 = arith.constant 0 : i32
    return %arg0, %c0_i32, %c0_i32_0 : i32, i32, i32
  }
  func.func @transform_3(%arg0: i32) -> (i32, i32, i32) {
    %c0_i32 = arith.constant 0 : i32
    %c0_i32_0 = arith.constant 0 : i32
    %c0_i32_1 = arith.constant 0 : i32
    return %arg0, %c0_i32, %c0_i32_0 : i32, i32, i32
  }
  func.func @transform_4(%arg0: i32) -> (i32, i32, i32) {
    %c0_i32 = arith.constant 0 : i32
    %c0_i32_0 = arith.constant 0 : i32
    %c0_i32_1 = arith.constant 0 : i32
    return %arg0, %c0_i32, %c0_i32_0 : i32, i32, i32
  }
  func.func @transform_5(%arg0: i32) -> (i32, i32, i32) {
    %c0_i32 = arith.constant 0 : i32
    %c0_i32_0 = arith.constant 0 : i32
    %c0_i32_1 = arith.constant 0 : i32
    return %arg0, %c0_i32, %c0_i32_0 : i32, i32, i32
  }
}

module attributes {stable_mosaic.version = 11 : i64} {
  func.func @_gmm_kernel(%arg0: i32, %arg1: i32, %arg2: memref<1x288x256xbf16, #tpu.memory_space<vmem>>, %arg3: memref<1x256x32xbf16, #tpu.memory_space<vmem>>, %arg4: memref<1x1x32xf32, #tpu.memory_space<vmem>>, %arg5: memref<1x288x32xbf16, #tpu.memory_space<vmem>>) attributes {dimension_semantics = [#tpu.dimension_semantics<parallel>, #tpu.dimension_semantics<parallel>], iteration_bounds = array<i64: 1, 1>, scalar_prefetch = 0 : i64, scratch_operands = 0 : i64, tpu.core_type = #tpu.core_type<tc>, window_params = [{transform_indices = @transform_0, window_bounds = array<i64: 1, 288, 256>}, {transform_indices = @transform_1, window_bounds = array<i64: 1, 256, 32>}, {transform_indices = @transform_2, window_bounds = array<i64: 1, 1, 32>}, {transform_indices = @transform_3, window_bounds = array<i64: 1, 288, 32>}]} {
    %c0 = arith.constant 0 : index
    %c0_0 = arith.constant 0 : index
    %c0_1 = arith.constant 0 : index
    %0 = vector.load %arg2[%c0, %c0_0, %c0_1] : memref<1x288x256xbf16, #tpu.memory_space<vmem>>, vector<1x288x256xbf16>
    %1 = vector.shape_cast %0 : vector<1x288x256xbf16> to vector<288x256xbf16>
    %c0_2 = arith.constant 0 : index
    %c0_3 = arith.constant 0 : index
    %c0_4 = arith.constant 0 : index
    %2 = vector.load %arg3[%c0_2, %c0_3, %c0_4] : memref<1x256x32xbf16, #tpu.memory_space<vmem>>, vector<1x256x32xbf16>
    %3 = vector.shape_cast %2 : vector<1x256x32xbf16> to vector<256x32xbf16>
    %cst = arith.constant dense<0.000000e+00> : vector<288x32xf32>
    %4 = tpu.matmul %1, %3, %cst {dimension_numbers = #tpu.dot_dimension_numbers<[1], [0], [0], [1], [0, 0, 1, 1], [], []>} : vector<288x256xbf16>, vector<256x32xbf16>, vector<288x32xf32> -> vector<288x32xf32>
    %c0_5 = arith.constant 0 : index
    %c0_6 = arith.constant 0 : index
    %c0_7 = arith.constant 0 : index
    %5 = vector.load %arg4[%c0_5, %c0_6, %c0_7] : memref<1x1x32xf32, #tpu.memory_space<vmem>>, vector<1x1x32xf32>
    %6 = vector.shape_cast %5 : vector<1x1x32xf32> to vector<1x32xf32>
    %7 = vector.broadcast %6 : vector<1x32xf32> to vector<288x32xf32>
    %8 = arith.addf %4, %7 : vector<288x32xf32>
    %cst_8 = arith.constant 0.000000e+00 : f32
    %9 = vector.broadcast %cst_8 : f32 to vector<288x32xf32>
    %10 = arith.maximumf %8, %9 : vector<288x32xf32>
    %11 = arith.truncf %10 : vector<288x32xf32> to vector<288x32xbf16>
    %c0_9 = arith.constant 0 : index
    %c0_10 = arith.constant 0 : index
    %c0_11 = arith.constant 0 : index
    %12 = vector.load %arg5[%c0_9, %c0_10, %c0_11] : memref<1x288x32xbf16, #tpu.memory_space<vmem>>, vector<1x288x32xbf16>
    %13 = vector.shape_cast %12 : vector<1x288x32xbf16> to vector<288x32xbf16>
    %14 = vector.shape_cast %11 : vector<288x32xbf16> to vector<1x288x32xbf16>
    tpu.vector_store %arg5[%c0_9, %c0_10, %c0_11], %14 {strides = array<i32>} : memref<1x288x32xbf16, #tpu.memory_space<vmem>>, vector<1x288x32xbf16>,
    return
  }
  func.func @transform_0(%arg0: i32, %arg1: i32) -> (i32, i32, i32) {
    %c0_i32 = arith.constant 0 : i32
    %c0_i32_0 = arith.constant 0 : i32
    return %arg0, %arg1, %c0_i32 : i32, i32, i32
  }
  func.func @transform_1(%arg0: i32, %arg1: i32) -> (i32, i32, i32) {
    %c0_i32 = arith.constant 0 : i32
    %c0_i32_0 = arith.constant 0 : i32
    %c0_i32_1 = arith.constant 0 : i32
    return %arg0, %c0_i32, %c0_i32_0 : i32, i32, i32
  }
  func.func @transform_2(%arg0: i32, %arg1: i32) -> (i32, i32, i32) {
    %c0_i32 = arith.constant 0 : i32
    %c0_i32_0 = arith.constant 0 : i32
    %c0_i32_1 = arith.constant 0 : i32
    return %arg0, %c0_i32, %c0_i32_0 : i32, i32, i32
  }
  func.func @transform_3(%arg0: i32, %arg1: i32) -> (i32, i32, i32) {
    %c0_i32 = arith.constant 0 : i32
    %c0_i32_0 = arith.constant 0 : i32
    return %arg0, %arg1, %c0_i32 : i32, i32, i32
  }
}

module attributes {stable_mosaic.version = 11 : i64} {
  func.func @_gmm_kernel(%arg0: i32, %arg1: i32, %arg2: memref<1x288x288xbf16, #tpu.memory_space<vmem>>, %arg3: memref<1x288x32xbf16, #tpu.memory_space<vmem>>, %arg4: memref<1x1x32xf32, #tpu.memory_space<vmem>>, %arg5: memref<1x288x32xbf16, #tpu.memory_space<vmem>>) attributes {dimension_semantics = [#tpu.dimension_semantics<parallel>, #tpu.dimension_semantics<parallel>], iteration_bounds = array<i64: 1, 1>, scalar_prefetch = 0 : i64, scratch_operands = 0 : i64, tpu.core_type = #tpu.core_type<tc>, window_params = [{transform_indices = @transform_0, window_bounds = array<i64: 1, 288, 288>}, {transform_indices = @transform_1, window_bounds = array<i64: 1, 288, 32>}, {transform_indices = @transform_2, window_bounds = array<i64: 1, 1, 32>}, {transform_indices = @transform_3, window_bounds = array<i64: 1, 288, 32>}]} {
    %c0 = arith.constant 0 : index
    %c0_0 = arith.constant 0 : index
    %c0_1 = arith.constant 0 : index
    %0 = vector.load %arg2[%c0, %c0_0, %c0_1] : memref<1x288x288xbf16, #tpu.memory_space<vmem>>, vector<1x288x288xbf16>
    %1 = vector.shape_cast %0 : vector<1x288x288xbf16> to vector<288x288xbf16>
    %c0_2 = arith.constant 0 : index
    %c0_3 = arith.constant 0 : index
    %c0_4 = arith.constant 0 : index
    %2 = vector.load %arg3[%c0_2, %c0_3, %c0_4] : memref<1x288x32xbf16, #tpu.memory_space<vmem>>, vector<1x288x32xbf16>
    %3 = vector.shape_cast %2 : vector<1x288x32xbf16> to vector<288x32xbf16>
    %cst = arith.constant dense<0.000000e+00> : vector<288x32xf32>
    %4 = tpu.matmul %1, %3, %cst {dimension_numbers = #tpu.dot_dimension_numbers<[1], [0], [0], [1], [0, 0, 1, 1], [], []>} : vector<288x288xbf16>, vector<288x32xbf16>, vector<288x32xf32> -> vector<288x32xf32>
    %c0_5 = arith.constant 0 : index
    %c0_6 = arith.constant 0 : index
    %c0_7 = arith.constant 0 : index
    %5 = vector.load %arg4[%c0_5, %c0_6, %c0_7] : memref<1x1x32xf32, #tpu.memory_space<vmem>>, vector<1x1x32xf32>
    %6 = vector.shape_cast %5 : vector<1x1x32xf32> to vector<1x32xf32>
    %7 = vector.broadcast %6 : vector<1x32xf32> to vector<288x32xf32>
    %8 = arith.addf %4, %7 : vector<288x32xf32>
    %cst_8 = arith.constant 0.000000e+00 : f32
    %9 = vector.broadcast %cst_8 : f32 to vector<288x32xf32>
    %10 = arith.maximumf %8, %9 : vector<288x32xf32>
    %11 = arith.truncf %10 : vector<288x32xf32> to vector<288x32xbf16>
    %c0_9 = arith.constant 0 : index
    %c0_10 = arith.constant 0 : index
    %c0_11 = arith.constant 0 : index
    %12 = vector.load %arg5[%c0_9, %c0_10, %c0_11] : memref<1x288x32xbf16, #tpu.memory_space<vmem>>, vector<1x288x32xbf16>
    %13 = vector.shape_cast %12 : vector<1x288x32xbf16> to vector<288x32xbf16>
    %14 = vector.shape_cast %11 : vector<288x32xbf16> to vector<1x288x32xbf16>
    tpu.vector_store %arg5[%c0_9, %c0_10, %c0_11], %14 {strides = array<i32>} : memref<1x288x32xbf16, #tpu.memory_space<vmem>>, vector<1x288x32xbf16>,
    return
  }
  func.func @transform_0(%arg0: i32, %arg1: i32) -> (i32, i32, i32) {
    %c0_i32 = arith.constant 0 : i32
    %c0_i32_0 = arith.constant 0 : i32
    return %arg0, %arg1, %c0_i32 : i32, i32, i32
  }
  func.func @transform_1(%arg0: i32, %arg1: i32) -> (i32, i32, i32) {
    %c0_i32 = arith.constant 0 : i32
    %c0_i32_0 = arith.constant 0 : i32
    %c0_i32_1 = arith.constant 0 : i32
    return %arg0, %c0_i32, %c0_i32_0 : i32, i32, i32
  }
  func.func @transform_2(%arg0: i32, %arg1: i32) -> (i32, i32, i32) {
    %c0_i32 = arith.constant 0 : i32
    %c0_i32_0 = arith.constant 0 : i32
    %c0_i32_1 = arith.constant 0 : i32
    return %arg0, %c0_i32, %c0_i32_0 : i32, i32, i32
  }
  func.func @transform_3(%arg0: i32, %arg1: i32) -> (i32, i32, i32) {
    %c0_i32 = arith.constant 0 : i32
    %c0_i32_0 = arith.constant 0 : i32
    return %arg0, %arg1, %c0_i32 : i32, i32, i32
  }
}

module attributes {stable_mosaic.version = 11 : i64} {
  func.func @_gmm_kernel(%arg0: i32, %arg1: i32, %arg2: memref<1x288x288xbf16, #tpu.memory_space<vmem>>, %arg3: memref<1x288x32xbf16, #tpu.memory_space<vmem>>, %arg4: memref<1x1x32xf32, #tpu.memory_space<vmem>>, %arg5: memref<1x288x32xbf16, #tpu.memory_space<vmem>>, %arg6: memref<1x288x32xbf16, #tpu.memory_space<vmem>>) attributes {dimension_semantics = [#tpu.dimension_semantics<parallel>, #tpu.dimension_semantics<parallel>], iteration_bounds = array<i64: 1, 1>, scalar_prefetch = 0 : i64, scratch_operands = 0 : i64, tpu.core_type = #tpu.core_type<tc>, window_params = [{transform_indices = @transform_0, window_bounds = array<i64: 1, 288, 288>}, {transform_indices = @transform_1, window_bounds = array<i64: 1, 288, 32>}, {transform_indices = @transform_2, window_bounds = array<i64: 1, 1, 32>}, {transform_indices = @transform_3, window_bounds = array<i64: 1, 288, 32>}, {transform_indices = @transform_4, window_bounds = array<i64: 1, 288, 32>}]} {
    %c0 = arith.constant 0 : index
    %c0_0 = arith.constant 0 : index
    %c0_1 = arith.constant 0 : index
    %0 = vector.load %arg2[%c0, %c0_0, %c0_1] : memref<1x288x288xbf16, #tpu.memory_space<vmem>>, vector<1x288x288xbf16>
    %1 = vector.shape_cast %0 : vector<1x288x288xbf16> to vector<288x288xbf16>
    %c0_2 = arith.constant 0 : index
    %c0_3 = arith.constant 0 : index
    %c0_4 = arith.constant 0 : index
    %2 = vector.load %arg3[%c0_2, %c0_3, %c0_4] : memref<1x288x32xbf16, #tpu.memory_space<vmem>>, vector<1x288x32xbf16>
    %3 = vector.shape_cast %2 : vector<1x288x32xbf16> to vector<288x32xbf16>
    %cst = arith.constant dense<0.000000e+00> : vector<288x32xf32>
    %4 = tpu.matmul %1, %3, %cst {dimension_numbers = #tpu.dot_dimension_numbers<[1], [0], [0], [1], [0, 0, 1, 1], [], []>} : vector<288x288xbf16>, vector<288x32xbf16>, vector<288x32xf32> -> vector<288x32xf32>
    %c0_5 = arith.constant 0 : index
    %c0_6 = arith.constant 0 : index
    %c0_7 = arith.constant 0 : index
    %5 = vector.load %arg4[%c0_5, %c0_6, %c0_7] : memref<1x1x32xf32, #tpu.memory_space<vmem>>, vector<1x1x32xf32>
    %6 = vector.shape_cast %5 : vector<1x1x32xf32> to vector<1x32xf32>
    %7 = vector.broadcast %6 : vector<1x32xf32> to vector<288x32xf32>
    %8 = arith.addf %4, %7 : vector<288x32xf32>
    %c0_8 = arith.constant 0 : index
    %c0_9 = arith.constant 0 : index
    %c0_10 = arith.constant 0 : index
    %9 = vector.load %arg5[%c0_8, %c0_9, %c0_10] : memref<1x288x32xbf16, #tpu.memory_space<vmem>>, vector<1x288x32xbf16>
    %10 = vector.shape_cast %9 : vector<1x288x32xbf16> to vector<288x32xbf16>
    %11 = arith.extf %10 : vector<288x32xbf16> to vector<288x32xf32>
    %12 = arith.addf %8, %11 : vector<288x32xf32>
    %cst_11 = arith.constant 0.000000e+00 : f32
    %13 = vector.broadcast %cst_11 : f32 to vector<288x32xf32>
    %14 = arith.maximumf %12, %13 : vector<288x32xf32>
    %15 = arith.truncf %14 : vector<288x32xf32> to vector<288x32xbf16>
    %c0_12 = arith.constant 0 : index
    %c0_13 = arith.constant 0 : index
    %c0_14 = arith.constant 0 : index
    %16 = vector.load %arg6[%c0_12, %c0_13, %c0_14] : memref<1x288x32xbf16, #tpu.memory_space<vmem>>, vector<1x288x32xbf16>
    %17 = vector.shape_cast %16 : vector<1x288x32xbf16> to vector<288x32xbf16>
    %18 = vector.shape_cast %15 : vector<288x32xbf16> to vector<1x288x32xbf16>
    tpu.vector_store %arg6[%c0_12, %c0_13, %c0_14], %18 {strides = array<i32>} : memref<1x288x32xbf16, #tpu.memory_space<vmem>>, vector<1x288x32xbf16>,
    return
  }
  func.func @transform_0(%arg0: i32, %arg1: i32) -> (i32, i32, i32) {
    %c0_i32 = arith.constant 0 : i32
    %c0_i32_0 = arith.constant 0 : i32
    return %arg0, %arg1, %c0_i32 : i32, i32, i32
  }
  func.func @transform_1(%arg0: i32, %arg1: i32) -> (i32, i32, i32) {
    %c0_i32 = arith.constant 0 : i32
    %c0_i32_0 = arith.constant 0 : i32
    %c0_i32_1 = arith.constant 0 : i32
    return %arg0, %c0_i32, %c0_i32_0 : i32, i32, i32
  }
  func.func @transform_2(%arg0: i32, %arg1: i32) -> (i32, i32, i32) {
    %c0_i32 = arith.constant 0 : i32
    %c0_i32_0 = arith.constant 0 : i32
    %c0_i32_1 = arith.constant 0 : i32
    return %arg0, %c0_i32, %c0_i32_0 : i32, i32, i32
  }
  func.func @transform_3(%arg0: i32, %arg1: i32) -> (i32, i32, i32) {
    %c0_i32 = arith.constant 0 : i32
    %c0_i32_0 = arith.constant 0 : i32
    return %arg0, %arg1, %c0_i32 : i32, i32, i32
  }
  func.func @transform_4(%arg0: i32, %arg1: i32) -> (i32, i32, i32) {
    %c0_i32 = arith.constant 0 : i32
    %c0_i32_0 = arith.constant 0 : i32
    return %arg0, %arg1, %c0_i32 : i32, i32, i32
  }
}

module attributes {stable_mosaic.version = 11 : i64} {
  func.func @_gmm_kernel(%arg0: i32, %arg1: i32, %arg2: memref<1x50x512xbf16, #tpu.memory_space<vmem>>, %arg3: memref<1x512x64xbf16, #tpu.memory_space<vmem>>, %arg4: memref<1x1x64xf32, #tpu.memory_space<vmem>>, %arg5: memref<1x50x64xbf16, #tpu.memory_space<vmem>>) attributes {dimension_semantics = [#tpu.dimension_semantics<parallel>, #tpu.dimension_semantics<parallel>], iteration_bounds = array<i64: 1, 1>, scalar_prefetch = 0 : i64, scratch_operands = 0 : i64, tpu.core_type = #tpu.core_type<tc>, window_params = [{transform_indices = @transform_0, window_bounds = array<i64: 1, 50, 512>}, {transform_indices = @transform_1, window_bounds = array<i64: 1, 512, 64>}, {transform_indices = @transform_2, window_bounds = array<i64: 1, 1, 64>}, {transform_indices = @transform_3, window_bounds = array<i64: 1, 50, 64>}]} {
    %c0 = arith.constant 0 : index
    %c0_0 = arith.constant 0 : index
    %c0_1 = arith.constant 0 : index
    %0 = vector.load %arg2[%c0, %c0_0, %c0_1] : memref<1x50x512xbf16, #tpu.memory_space<vmem>>, vector<1x50x512xbf16>
    %1 = vector.shape_cast %0 : vector<1x50x512xbf16> to vector<50x512xbf16>
    %c0_2 = arith.constant 0 : index
    %c0_3 = arith.constant 0 : index
    %c0_4 = arith.constant 0 : index
    %2 = vector.load %arg3[%c0_2, %c0_3, %c0_4] : memref<1x512x64xbf16, #tpu.memory_space<vmem>>, vector<1x512x64xbf16>
    %3 = vector.shape_cast %2 : vector<1x512x64xbf16> to vector<512x64xbf16>
    %cst = arith.constant dense<0.000000e+00> : vector<50x64xf32>
    %4 = tpu.matmul %1, %3, %cst {dimension_numbers = #tpu.dot_dimension_numbers<[1], [0], [0], [1], [0, 0, 1, 1], [], []>} : vector<50x512xbf16>, vector<512x64xbf16>, vector<50x64xf32> -> vector<50x64xf32>
    %c0_5 = arith.constant 0 : index
    %c0_6 = arith.constant 0 : index
    %c0_7 = arith.constant 0 : index
    %5 = vector.load %arg4[%c0_5, %c0_6, %c0_7] : memref<1x1x64xf32, #tpu.memory_space<vmem>>, vector<1x1x64xf32>
    %6 = vector.shape_cast %5 : vector<1x1x64xf32> to vector<1x64xf32>
    %7 = vector.broadcast %6 : vector<1x64xf32> to vector<50x64xf32>
    %8 = arith.addf %4, %7 : vector<50x64xf32>
    %9 = arith.truncf %8 : vector<50x64xf32> to vector<50x64xbf16>
    %c0_8 = arith.constant 0 : index
    %c0_9 = arith.constant 0 : index
    %c0_10 = arith.constant 0 : index
    %10 = vector.load %arg5[%c0_8, %c0_9, %c0_10] : memref<1x50x64xbf16, #tpu.memory_space<vmem>>, vector<1x50x64xbf16>
    %11 = vector.shape_cast %10 : vector<1x50x64xbf16> to vector<50x64xbf16>
    %12 = vector.shape_cast %9 : vector<50x64xbf16> to vector<1x50x64xbf16>
    tpu.vector_store %arg5[%c0_8, %c0_9, %c0_10], %12 {strides = array<i32>} : memref<1x50x64xbf16, #tpu.memory_space<vmem>>, vector<1x50x64xbf16>,
    return
  }
  func.func @transform_0(%arg0: i32, %arg1: i32) -> (i32, i32, i32) {
    %c0_i32 = arith.constant 0 : i32
    %c0_i32_0 = arith.constant 0 : i32
    return %arg0, %arg1, %c0_i32 : i32, i32, i32
  }
  func.func @transform_1(%arg0: i32, %arg1: i32) -> (i32, i32, i32) {
    %c0_i32 = arith.constant 0 : i32
    %c0_i32_0 = arith.constant 0 : i32
    %c0_i32_1 = arith.constant 0 : i32
    return %arg0, %c0_i32, %c0_i32_0 : i32, i32, i32
  }
  func.func @transform_2(%arg0: i32, %arg1: i32) -> (i32, i32, i32) {
    %c0_i32 = arith.constant 0 : i32
    %c0_i32_0 = arith.constant 0 : i32
    %c0_i32_1 = arith.constant 0 : i32
    return %arg0, %c0_i32, %c0_i32_0 : i32, i32, i32
  }
  func.func @transform_3(%arg0: i32, %arg1: i32) -> (i32, i32, i32) {
    %c0_i32 = arith.constant 0 : i32
    %c0_i32_0 = arith.constant 0 : i32
    return %arg0, %arg1, %c0_i32 : i32, i32, i32
  }
}

module attributes {stable_mosaic.version = 11 : i64} {
  func.func @_head_kernel(%arg0: i32, %arg1: memref<1x2x1600xbf16, #tpu.memory_space<vmem>>, %arg2: memref<1x1600x512xbf16, #tpu.memory_space<vmem>>, %arg3: memref<1x1x512xf32, #tpu.memory_space<vmem>>, %arg4: memref<1x512x6xbf16, #tpu.memory_space<vmem>>, %arg5: memref<1x1x6xf32, #tpu.memory_space<vmem>>, %arg6: memref<1x2x6xf32, #tpu.memory_space<vmem>>) attributes {dimension_semantics = [#tpu.dimension_semantics<parallel>], iteration_bounds = array<i64: 1>, scalar_prefetch = 0 : i64, scratch_operands = 0 : i64, tpu.core_type = #tpu.core_type<tc>, window_params = [{transform_indices = @transform_0, window_bounds = array<i64: 1, 2, 1600>}, {transform_indices = @transform_1, window_bounds = array<i64: 1, 1600, 512>}, {transform_indices = @transform_2, window_bounds = array<i64: 1, 1, 512>}, {transform_indices = @transform_3, window_bounds = array<i64: 1, 512, 6>}, {transform_indices = @transform_4, window_bounds = array<i64: 1, 1, 6>}, {transform_indices = @transform_5, window_bounds = array<i64: 1, 2, 6>}]} {
    %c0 = arith.constant 0 : index
    %c0_0 = arith.constant 0 : index
    %c0_1 = arith.constant 0 : index
    %0 = vector.load %arg1[%c0, %c0_0, %c0_1] : memref<1x2x1600xbf16, #tpu.memory_space<vmem>>, vector<1x2x1600xbf16>
    %1 = vector.shape_cast %0 : vector<1x2x1600xbf16> to vector<2x1600xbf16>
    %c0_2 = arith.constant 0 : index
    %c0_3 = arith.constant 0 : index
    %c0_4 = arith.constant 0 : index
    %2 = vector.load %arg2[%c0_2, %c0_3, %c0_4] : memref<1x1600x512xbf16, #tpu.memory_space<vmem>>, vector<1x1600x512xbf16>
    %3 = vector.shape_cast %2 : vector<1x1600x512xbf16> to vector<1600x512xbf16>
    %cst = arith.constant dense<0.000000e+00> : vector<2x512xf32>
    %4 = tpu.matmul %1, %3, %cst {dimension_numbers = #tpu.dot_dimension_numbers<[1], [0], [0], [1], [0, 0, 1, 1], [], []>} : vector<2x1600xbf16>, vector<1600x512xbf16>, vector<2x512xf32> -> vector<2x512xf32>
    %c0_5 = arith.constant 0 : index
    %c0_6 = arith.constant 0 : index
    %c0_7 = arith.constant 0 : index
    %5 = vector.load %arg3[%c0_5, %c0_6, %c0_7] : memref<1x1x512xf32, #tpu.memory_space<vmem>>, vector<1x1x512xf32>
    %6 = vector.shape_cast %5 : vector<1x1x512xf32> to vector<1x512xf32>
    %7 = vector.broadcast %6 : vector<1x512xf32> to vector<2x512xf32>
    %8 = arith.addf %4, %7 : vector<2x512xf32>
    %cst_8 = arith.constant 0.000000e+00 : f32
    %9 = vector.broadcast %cst_8 : f32 to vector<2x512xf32>
    %10 = arith.maximumf %8, %9 : vector<2x512xf32>
    %11 = arith.truncf %10 : vector<2x512xf32> to vector<2x512xbf16>
    %c0_9 = arith.constant 0 : index
    %c0_10 = arith.constant 0 : index
    %c0_11 = arith.constant 0 : index
    %12 = vector.load %arg4[%c0_9, %c0_10, %c0_11] : memref<1x512x6xbf16, #tpu.memory_space<vmem>>, vector<1x512x6xbf16>
    %13 = vector.shape_cast %12 : vector<1x512x6xbf16> to vector<512x6xbf16>
    %cst_12 = arith.constant dense<0.000000e+00> : vector<2x6xf32>
    %14 = tpu.matmul %11, %13, %cst_12 {dimension_numbers = #tpu.dot_dimension_numbers<[1], [0], [0], [1], [0, 0, 1, 1], [], []>} : vector<2x512xbf16>, vector<512x6xbf16>, vector<2x6xf32> -> vector<2x6xf32>
    %c0_13 = arith.constant 0 : index
    %c0_14 = arith.constant 0 : index
    %c0_15 = arith.constant 0 : index
    %15 = vector.load %arg5[%c0_13, %c0_14, %c0_15] : memref<1x1x6xf32, #tpu.memory_space<vmem>>, vector<1x1x6xf32>
    %16 = vector.shape_cast %15 : vector<1x1x6xf32> to vector<1x6xf32>
    %17 = vector.broadcast %16 : vector<1x6xf32> to vector<2x6xf32>
    %18 = arith.addf %14, %17 : vector<2x6xf32>
    %c0_16 = arith.constant 0 : index
    %c0_17 = arith.constant 0 : index
    %c0_18 = arith.constant 0 : index
    %19 = vector.load %arg6[%c0_16, %c0_17, %c0_18] : memref<1x2x6xf32, #tpu.memory_space<vmem>>, vector<1x2x6xf32>
    %20 = vector.shape_cast %19 : vector<1x2x6xf32> to vector<2x6xf32>
    %21 = vector.shape_cast %18 : vector<2x6xf32> to vector<1x2x6xf32>
    tpu.vector_store %arg6[%c0_16, %c0_17, %c0_18], %21 {strides = array<i32>} : memref<1x2x6xf32, #tpu.memory_space<vmem>>, vector<1x2x6xf32>,
    return
  }
  func.func @transform_0(%arg0: i32) -> (i32, i32, i32) {
    %c0_i32 = arith.constant 0 : i32
    %c0_i32_0 = arith.constant 0 : i32
    %c0_i32_1 = arith.constant 0 : i32
    return %arg0, %c0_i32, %c0_i32_0 : i32, i32, i32
  }
  func.func @transform_1(%arg0: i32) -> (i32, i32, i32) {
    %c0_i32 = arith.constant 0 : i32
    %c0_i32_0 = arith.constant 0 : i32
    %c0_i32_1 = arith.constant 0 : i32
    return %arg0, %c0_i32, %c0_i32_0 : i32, i32, i32
  }
  func.func @transform_2(%arg0: i32) -> (i32, i32, i32) {
    %c0_i32 = arith.constant 0 : i32
    %c0_i32_0 = arith.constant 0 : i32
    %c0_i32_1 = arith.constant 0 : i32
    return %arg0, %c0_i32, %c0_i32_0 : i32, i32, i32
  }
  func.func @transform_3(%arg0: i32) -> (i32, i32, i32) {
    %c0_i32 = arith.constant 0 : i32
    %c0_i32_0 = arith.constant 0 : i32
    %c0_i32_1 = arith.constant 0 : i32
    return %arg0, %c0_i32, %c0_i32_0 : i32, i32, i32
  }
  func.func @transform_4(%arg0: i32) -> (i32, i32, i32) {
    %c0_i32 = arith.constant 0 : i32
    %c0_i32_0 = arith.constant 0 : i32
    %c0_i32_1 = arith.constant 0 : i32
    return %arg0, %c0_i32, %c0_i32_0 : i32, i32, i32
  }
  func.func @transform_5(%arg0: i32) -> (i32, i32, i32) {
    %c0_i32 = arith.constant 0 : i32
    %c0_i32_0 = arith.constant 0 : i32
    %c0_i32_1 = arith.constant 0 : i32
    return %arg0, %c0_i32, %c0_i32_0 : i32, i32, i32
  }
}

module attributes {stable_mosaic.version = 11 : i64} {
  func.func @_gmm_kernel(%arg0: i32, %arg1: i32, %arg2: memref<288x256xbf16, #tpu.memory_space<vmem>>, %arg3: memref<1x256x32xbf16, #tpu.memory_space<vmem>>, %arg4: memref<1x1x32xf32, #tpu.memory_space<vmem>>, %arg5: memref<1x288x32xbf16, #tpu.memory_space<vmem>>) attributes {dimension_semantics = [#tpu.dimension_semantics<parallel>, #tpu.dimension_semantics<parallel>], iteration_bounds = array<i64: 2, 1>, scalar_prefetch = 0 : i64, scratch_operands = 0 : i64, tpu.core_type = #tpu.core_type<tc>, window_params = [{transform_indices = @transform_0, window_bounds = array<i64: 288, 256>}, {transform_indices = @transform_1, window_bounds = array<i64: 1, 256, 32>}, {transform_indices = @transform_2, window_bounds = array<i64: 1, 1, 32>}, {transform_indices = @transform_3, window_bounds = array<i64: 1, 288, 32>}]} {
    %c0 = arith.constant 0 : index
    %c0_0 = arith.constant 0 : index
    %0 = vector.load %arg2[%c0, %c0_0] : memref<288x256xbf16, #tpu.memory_space<vmem>>, vector<288x256xbf16>
    %c0_1 = arith.constant 0 : index
    %c0_2 = arith.constant 0 : index
    %c0_3 = arith.constant 0 : index
    %1 = vector.load %arg3[%c0_1, %c0_2, %c0_3] : memref<1x256x32xbf16, #tpu.memory_space<vmem>>, vector<1x256x32xbf16>
    %2 = vector.shape_cast %1 : vector<1x256x32xbf16> to vector<256x32xbf16>
    %cst = arith.constant dense<0.000000e+00> : vector<288x32xf32>
    %3 = tpu.matmul %0, %2, %cst {dimension_numbers = #tpu.dot_dimension_numbers<[1], [0], [0], [1], [0, 0, 1, 1], [], []>} : vector<288x256xbf16>, vector<256x32xbf16>, vector<288x32xf32> -> vector<288x32xf32>
    %c0_4 = arith.constant 0 : index
    %c0_5 = arith.constant 0 : index
    %c0_6 = arith.constant 0 : index
    %4 = vector.load %arg4[%c0_4, %c0_5, %c0_6] : memref<1x1x32xf32, #tpu.memory_space<vmem>>, vector<1x1x32xf32>
    %5 = vector.shape_cast %4 : vector<1x1x32xf32> to vector<1x32xf32>
    %6 = vector.broadcast %5 : vector<1x32xf32> to vector<288x32xf32>
    %7 = arith.addf %3, %6 : vector<288x32xf32>
    %cst_7 = arith.constant 0.000000e+00 : f32
    %8 = vector.broadcast %cst_7 : f32 to vector<288x32xf32>
    %9 = arith.maximumf %7, %8 : vector<288x32xf32>
    %10 = arith.truncf %9 : vector<288x32xf32> to vector<288x32xbf16>
    %c0_8 = arith.constant 0 : index
    %c0_9 = arith.constant 0 : index
    %c0_10 = arith.constant 0 : index
    %11 = vector.load %arg5[%c0_8, %c0_9, %c0_10] : memref<1x288x32xbf16, #tpu.memory_space<vmem>>, vector<1x288x32xbf16>
    %12 = vector.shape_cast %11 : vector<1x288x32xbf16> to vector<288x32xbf16>
    %13 = vector.shape_cast %10 : vector<288x32xbf16> to vector<1x288x32xbf16>
    tpu.vector_store %arg5[%c0_8, %c0_9, %c0_10], %13 {strides = array<i32>} : memref<1x288x32xbf16, #tpu.memory_space<vmem>>, vector<1x288x32xbf16>,
    return
  }
  func.func @transform_0(%arg0: i32, %arg1: i32) -> (i32, i32) {
    %c0_i32 = arith.constant 0 : i32
    %c0_i32_0 = arith.constant 0 : i32
    return %arg1, %c0_i32 : i32, i32
  }
  func.func @transform_1(%arg0: i32, %arg1: i32) -> (i32, i32, i32) {
    %c0_i32 = arith.constant 0 : i32
    %c0_i32_0 = arith.constant 0 : i32
    %c0_i32_1 = arith.constant 0 : i32
    return %arg0, %c0_i32, %c0_i32_0 : i32, i32, i32
  }
  func.func @transform_2(%arg0: i32, %arg1: i32) -> (i32, i32, i32) {
    %c0_i32 = arith.constant 0 : i32
    %c0_i32_0 = arith.constant 0 : i32
    %c0_i32_1 = arith.constant 0 : i32
    return %arg0, %c0_i32, %c0_i32_0 : i32, i32, i32
  }
  func.func @transform_3(%arg0: i32, %arg1: i32) -> (i32, i32, i32) {
    %c0_i32 = arith.constant 0 : i32
    %c0_i32_0 = arith.constant 0 : i32
    return %arg0, %arg1, %c0_i32 : i32, i32, i32
  }
}

module attributes {stable_mosaic.version = 11 : i64} {
  func.func @_gmm_kernel(%arg0: i32, %arg1: i32, %arg2: memref<1x50x512xbf16, #tpu.memory_space<vmem>>, %arg3: memref<1x512x64xbf16, #tpu.memory_space<vmem>>, %arg4: memref<1x1x64xf32, #tpu.memory_space<vmem>>, %arg5: memref<1x50x64xbf16, #tpu.memory_space<vmem>>) attributes {dimension_semantics = [#tpu.dimension_semantics<parallel>, #tpu.dimension_semantics<parallel>], iteration_bounds = array<i64: 2, 1>, scalar_prefetch = 0 : i64, scratch_operands = 0 : i64, tpu.core_type = #tpu.core_type<tc>, window_params = [{transform_indices = @transform_0, window_bounds = array<i64: 1, 50, 512>}, {transform_indices = @transform_1, window_bounds = array<i64: 1, 512, 64>}, {transform_indices = @transform_2, window_bounds = array<i64: 1, 1, 64>}, {transform_indices = @transform_3, window_bounds = array<i64: 1, 50, 64>}]} {
    %c0 = arith.constant 0 : index
    %c0_0 = arith.constant 0 : index
    %c0_1 = arith.constant 0 : index
    %0 = vector.load %arg2[%c0, %c0_0, %c0_1] : memref<1x50x512xbf16, #tpu.memory_space<vmem>>, vector<1x50x512xbf16>
    %1 = vector.shape_cast %0 : vector<1x50x512xbf16> to vector<50x512xbf16>
    %c0_2 = arith.constant 0 : index
    %c0_3 = arith.constant 0 : index
    %c0_4 = arith.constant 0 : index
    %2 = vector.load %arg3[%c0_2, %c0_3, %c0_4] : memref<1x512x64xbf16, #tpu.memory_space<vmem>>, vector<1x512x64xbf16>
    %3 = vector.shape_cast %2 : vector<1x512x64xbf16> to vector<512x64xbf16>
    %cst = arith.constant dense<0.000000e+00> : vector<50x64xf32>
    %4 = tpu.matmul %1, %3, %cst {dimension_numbers = #tpu.dot_dimension_numbers<[1], [0], [0], [1], [0, 0, 1, 1], [], []>} : vector<50x512xbf16>, vector<512x64xbf16>, vector<50x64xf32> -> vector<50x64xf32>
    %c0_5 = arith.constant 0 : index
    %c0_6 = arith.constant 0 : index
    %c0_7 = arith.constant 0 : index
    %5 = vector.load %arg4[%c0_5, %c0_6, %c0_7] : memref<1x1x64xf32, #tpu.memory_space<vmem>>, vector<1x1x64xf32>
    %6 = vector.shape_cast %5 : vector<1x1x64xf32> to vector<1x64xf32>
    %7 = vector.broadcast %6 : vector<1x64xf32> to vector<50x64xf32>
    %8 = arith.addf %4, %7 : vector<50x64xf32>
    %cst_8 = arith.constant 0.000000e+00 : f32
    %9 = vector.broadcast %cst_8 : f32 to vector<50x64xf32>
    %10 = arith.maximumf %8, %9 : vector<50x64xf32>
    %11 = arith.truncf %10 : vector<50x64xf32> to vector<50x64xbf16>
    %c0_9 = arith.constant 0 : index
    %c0_10 = arith.constant 0 : index
    %c0_11 = arith.constant 0 : index
    %12 = vector.load %arg5[%c0_9, %c0_10, %c0_11] : memref<1x50x64xbf16, #tpu.memory_space<vmem>>, vector<1x50x64xbf16>
    %13 = vector.shape_cast %12 : vector<1x50x64xbf16> to vector<50x64xbf16>
    %14 = vector.shape_cast %11 : vector<50x64xbf16> to vector<1x50x64xbf16>
    tpu.vector_store %arg5[%c0_9, %c0_10, %c0_11], %14 {strides = array<i32>} : memref<1x50x64xbf16, #tpu.memory_space<vmem>>, vector<1x50x64xbf16>,
    return
  }
  func.func @transform_0(%arg0: i32, %arg1: i32) -> (i32, i32, i32) {
    %c0_i32 = arith.constant 0 : i32
    %c0_i32_0 = arith.constant 0 : i32
    return %arg0, %arg1, %c0_i32 : i32, i32, i32
  }
  func.func @transform_1(%arg0: i32, %arg1: i32) -> (i32, i32, i32) {
    %c0_i32 = arith.constant 0 : i32
    %c0_i32_0 = arith.constant 0 : i32
    %c0_i32_1 = arith.constant 0 : i32
    return %arg0, %c0_i32, %c0_i32_0 : i32, i32, i32
  }
  func.func @transform_2(%arg0: i32, %arg1: i32) -> (i32, i32, i32) {
    %c0_i32 = arith.constant 0 : i32
    %c0_i32_0 = arith.constant 0 : i32
    %c0_i32_1 = arith.constant 0 : i32
    return %arg0, %c0_i32, %c0_i32_0 : i32, i32, i32
  }
  func.func @transform_3(%arg0: i32, %arg1: i32) -> (i32, i32, i32) {
    %c0_i32 = arith.constant 0 : i32
    %c0_i32_0 = arith.constant 0 : i32
    return %arg0, %arg1, %c0_i32 : i32, i32, i32
  }
}

module attributes {stable_mosaic.version = 11 : i64} {
  func.func @_gmm_kernel(%arg0: i32, %arg1: i32, %arg2: memref<1x18x576xbf16, #tpu.memory_space<vmem>>, %arg3: memref<1x576x64xbf16, #tpu.memory_space<vmem>>, %arg4: memref<1x1x64xf32, #tpu.memory_space<vmem>>, %arg5: memref<1x18x64xbf16, #tpu.memory_space<vmem>>) attributes {dimension_semantics = [#tpu.dimension_semantics<parallel>, #tpu.dimension_semantics<parallel>], iteration_bounds = array<i64: 2, 1>, scalar_prefetch = 0 : i64, scratch_operands = 0 : i64, tpu.core_type = #tpu.core_type<tc>, window_params = [{transform_indices = @transform_0, window_bounds = array<i64: 1, 18, 576>}, {transform_indices = @transform_1, window_bounds = array<i64: 1, 576, 64>}, {transform_indices = @transform_2, window_bounds = array<i64: 1, 1, 64>}, {transform_indices = @transform_3, window_bounds = array<i64: 1, 18, 64>}]} {
    %c0 = arith.constant 0 : index
    %c0_0 = arith.constant 0 : index
    %c0_1 = arith.constant 0 : index
    %0 = vector.load %arg2[%c0, %c0_0, %c0_1] : memref<1x18x576xbf16, #tpu.memory_space<vmem>>, vector<1x18x576xbf16>
    %1 = vector.shape_cast %0 : vector<1x18x576xbf16> to vector<18x576xbf16>
    %c0_2 = arith.constant 0 : index
    %c0_3 = arith.constant 0 : index
    %c0_4 = arith.constant 0 : index
    %2 = vector.load %arg3[%c0_2, %c0_3, %c0_4] : memref<1x576x64xbf16, #tpu.memory_space<vmem>>, vector<1x576x64xbf16>
    %3 = vector.shape_cast %2 : vector<1x576x64xbf16> to vector<576x64xbf16>
    %cst = arith.constant dense<0.000000e+00> : vector<18x64xf32>
    %4 = tpu.matmul %1, %3, %cst {dimension_numbers = #tpu.dot_dimension_numbers<[1], [0], [0], [1], [0, 0, 1, 1], [], []>} : vector<18x576xbf16>, vector<576x64xbf16>, vector<18x64xf32> -> vector<18x64xf32>
    %c0_5 = arith.constant 0 : index
    %c0_6 = arith.constant 0 : index
    %c0_7 = arith.constant 0 : index
    %5 = vector.load %arg4[%c0_5, %c0_6, %c0_7] : memref<1x1x64xf32, #tpu.memory_space<vmem>>, vector<1x1x64xf32>
    %6 = vector.shape_cast %5 : vector<1x1x64xf32> to vector<1x64xf32>
    %7 = vector.broadcast %6 : vector<1x64xf32> to vector<18x64xf32>
    %8 = arith.addf %4, %7 : vector<18x64xf32>
    %cst_8 = arith.constant 0.000000e+00 : f32
    %9 = vector.broadcast %cst_8 : f32 to vector<18x64xf32>
    %10 = arith.maximumf %8, %9 : vector<18x64xf32>
    %11 = arith.truncf %10 : vector<18x64xf32> to vector<18x64xbf16>
    %c0_9 = arith.constant 0 : index
    %c0_10 = arith.constant 0 : index
    %c0_11 = arith.constant 0 : index
    %12 = vector.load %arg5[%c0_9, %c0_10, %c0_11] : memref<1x18x64xbf16, #tpu.memory_space<vmem>>, vector<1x18x64xbf16>
    %13 = vector.shape_cast %12 : vector<1x18x64xbf16> to vector<18x64xbf16>
    %14 = vector.shape_cast %11 : vector<18x64xbf16> to vector<1x18x64xbf16>
    tpu.vector_store %arg5[%c0_9, %c0_10, %c0_11], %14 {strides = array<i32>} : memref<1x18x64xbf16, #tpu.memory_space<vmem>>, vector<1x18x64xbf16>,
    return
  }
  func.func @transform_0(%arg0: i32, %arg1: i32) -> (i32, i32, i32) {
    %c0_i32 = arith.constant 0 : i32
    %c0_i32_0 = arith.constant 0 : i32
    return %arg0, %arg1, %c0_i32 : i32, i32, i32
  }
  func.func @transform_1(%arg0: i32, %arg1: i32) -> (i32, i32, i32) {
    %c0_i32 = arith.constant 0 : i32
    %c0_i32_0 = arith.constant 0 : i32
    %c0_i32_1 = arith.constant 0 : i32
    return %arg0, %c0_i32, %c0_i32_0 : i32, i32, i32
  }
  func.func @transform_2(%arg0: i32, %arg1: i32) -> (i32, i32, i32) {
    %c0_i32 = arith.constant 0 : i32
    %c0_i32_0 = arith.constant 0 : i32
    %c0_i32_1 = arith.constant 0 : i32
    return %arg0, %c0_i32, %c0_i32_0 : i32, i32, i32
  }
  func.func @transform_3(%arg0: i32, %arg1: i32) -> (i32, i32, i32) {
    %c0_i32 = arith.constant 0 : i32
    %c0_i32_0 = arith.constant 0 : i32
    return %arg0, %arg1, %c0_i32 : i32, i32, i32
  }
}

module attributes {stable_mosaic.version = 11 : i64} {
  func.func @_head_kernel(%arg0: i32, %arg1: memref<1x2x576xbf16, #tpu.memory_space<vmem>>, %arg2: memref<1x576x512xbf16, #tpu.memory_space<vmem>>, %arg3: memref<1x1x512xf32, #tpu.memory_space<vmem>>, %arg4: memref<1x512x6xbf16, #tpu.memory_space<vmem>>, %arg5: memref<1x1x6xf32, #tpu.memory_space<vmem>>, %arg6: memref<1x2x6xf32, #tpu.memory_space<vmem>>) attributes {dimension_semantics = [#tpu.dimension_semantics<parallel>], iteration_bounds = array<i64: 2>, scalar_prefetch = 0 : i64, scratch_operands = 0 : i64, tpu.core_type = #tpu.core_type<tc>, window_params = [{transform_indices = @transform_0, window_bounds = array<i64: 1, 2, 576>}, {transform_indices = @transform_1, window_bounds = array<i64: 1, 576, 512>}, {transform_indices = @transform_2, window_bounds = array<i64: 1, 1, 512>}, {transform_indices = @transform_3, window_bounds = array<i64: 1, 512, 6>}, {transform_indices = @transform_4, window_bounds = array<i64: 1, 1, 6>}, {transform_indices = @transform_5, window_bounds = array<i64: 1, 2, 6>}]} {
    %c0 = arith.constant 0 : index
    %c0_0 = arith.constant 0 : index
    %c0_1 = arith.constant 0 : index
    %0 = vector.load %arg1[%c0, %c0_0, %c0_1] : memref<1x2x576xbf16, #tpu.memory_space<vmem>>, vector<1x2x576xbf16>
    %1 = vector.shape_cast %0 : vector<1x2x576xbf16> to vector<2x576xbf16>
    %c0_2 = arith.constant 0 : index
    %c0_3 = arith.constant 0 : index
    %c0_4 = arith.constant 0 : index
    %2 = vector.load %arg2[%c0_2, %c0_3, %c0_4] : memref<1x576x512xbf16, #tpu.memory_space<vmem>>, vector<1x576x512xbf16>
    %3 = vector.shape_cast %2 : vector<1x576x512xbf16> to vector<576x512xbf16>
    %cst = arith.constant dense<0.000000e+00> : vector<2x512xf32>
    %4 = tpu.matmul %1, %3, %cst {dimension_numbers = #tpu.dot_dimension_numbers<[1], [0], [0], [1], [0, 0, 1, 1], [], []>} : vector<2x576xbf16>, vector<576x512xbf16>, vector<2x512xf32> -> vector<2x512xf32>
    %c0_5 = arith.constant 0 : index
    %c0_6 = arith.constant 0 : index
    %c0_7 = arith.constant 0 : index
    %5 = vector.load %arg3[%c0_5, %c0_6, %c0_7] : memref<1x1x512xf32, #tpu.memory_space<vmem>>, vector<1x1x512xf32>
    %6 = vector.shape_cast %5 : vector<1x1x512xf32> to vector<1x512xf32>
    %7 = vector.broadcast %6 : vector<1x512xf32> to vector<2x512xf32>
    %8 = arith.addf %4, %7 : vector<2x512xf32>
    %cst_8 = arith.constant 0.000000e+00 : f32
    %9 = vector.broadcast %cst_8 : f32 to vector<2x512xf32>
    %10 = arith.maximumf %8, %9 : vector<2x512xf32>
    %11 = arith.truncf %10 : vector<2x512xf32> to vector<2x512xbf16>
    %c0_9 = arith.constant 0 : index
    %c0_10 = arith.constant 0 : index
    %c0_11 = arith.constant 0 : index
    %12 = vector.load %arg4[%c0_9, %c0_10, %c0_11] : memref<1x512x6xbf16, #tpu.memory_space<vmem>>, vector<1x512x6xbf16>
    %13 = vector.shape_cast %12 : vector<1x512x6xbf16> to vector<512x6xbf16>
    %cst_12 = arith.constant dense<0.000000e+00> : vector<2x6xf32>
    %14 = tpu.matmul %11, %13, %cst_12 {dimension_numbers = #tpu.dot_dimension_numbers<[1], [0], [0], [1], [0, 0, 1, 1], [], []>} : vector<2x512xbf16>, vector<512x6xbf16>, vector<2x6xf32> -> vector<2x6xf32>
    %c0_13 = arith.constant 0 : index
    %c0_14 = arith.constant 0 : index
    %c0_15 = arith.constant 0 : index
    %15 = vector.load %arg5[%c0_13, %c0_14, %c0_15] : memref<1x1x6xf32, #tpu.memory_space<vmem>>, vector<1x1x6xf32>
    %16 = vector.shape_cast %15 : vector<1x1x6xf32> to vector<1x6xf32>
    %17 = vector.broadcast %16 : vector<1x6xf32> to vector<2x6xf32>
    %18 = arith.addf %14, %17 : vector<2x6xf32>
    %c0_16 = arith.constant 0 : index
    %c0_17 = arith.constant 0 : index
    %c0_18 = arith.constant 0 : index
    %19 = vector.load %arg6[%c0_16, %c0_17, %c0_18] : memref<1x2x6xf32, #tpu.memory_space<vmem>>, vector<1x2x6xf32>
    %20 = vector.shape_cast %19 : vector<1x2x6xf32> to vector<2x6xf32>
    %21 = vector.shape_cast %18 : vector<2x6xf32> to vector<1x2x6xf32>
    tpu.vector_store %arg6[%c0_16, %c0_17, %c0_18], %21 {strides = array<i32>} : memref<1x2x6xf32, #tpu.memory_space<vmem>>, vector<1x2x6xf32>,
    return
  }
  func.func @transform_0(%arg0: i32) -> (i32, i32, i32) {
    %c0_i32 = arith.constant 0 : i32
    %c0_i32_0 = arith.constant 0 : i32
    %c0_i32_1 = arith.constant 0 : i32
    return %arg0, %c0_i32, %c0_i32_0 : i32, i32, i32
  }
  func.func @transform_1(%arg0: i32) -> (i32, i32, i32) {
    %c0_i32 = arith.constant 0 : i32
    %c0_i32_0 = arith.constant 0 : i32
    %c0_i32_1 = arith.constant 0 : i32
    return %arg0, %c0_i32, %c0_i32_0 : i32, i32, i32
  }
  func.func @transform_2(%arg0: i32) -> (i32, i32, i32) {
    %c0_i32 = arith.constant 0 : i32
    %c0_i32_0 = arith.constant 0 : i32
    %c0_i32_1 = arith.constant 0 : i32
    return %arg0, %c0_i32, %c0_i32_0 : i32, i32, i32
  }
  func.func @transform_3(%arg0: i32) -> (i32, i32, i32) {
    %c0_i32 = arith.constant 0 : i32
    %c0_i32_0 = arith.constant 0 : i32
    %c0_i32_1 = arith.constant 0 : i32
    return %arg0, %c0_i32, %c0_i32_0 : i32, i32, i32
  }
  func.func @transform_4(%arg0: i32) -> (i32, i32, i32) {
    %c0_i32 = arith.constant 0 : i32
    %c0_i32_0 = arith.constant 0 : i32
    %c0_i32_1 = arith.constant 0 : i32
    return %arg0, %c0_i32, %c0_i32_0 : i32, i32, i32
  }
  func.func @transform_5(%arg0: i32) -> (i32, i32, i32) {
    %c0_i32 = arith.constant 0 : i32
    %c0_i32_0 = arith.constant 0 : i32
    %c0_i32_1 = arith.constant 0 : i32
    return %arg0, %c0_i32, %c0_i32_0 : i32, i32, i32
  }
}

</mosaic_0001>

<llo_original>
// kernel: ensemble_forward.17
$region0: #{ensemble_forward.17}
  #allocation0 [shape = 'u32[]', space=smem, size = 0x4, offset = 0x4, fixed_abs, tag = 'smem constant byte address 0x4 - core index']
  #allocation1 [shape = 'u32[144,128]{1,0:T(1,128)}', space=vmem, size = 0x12000, scoped, tag = 'internal scratch']
  %s0 = inlined_call_operand.vmem [shape: bf16[1,288,256], index: 0, kind: input, shape index: {}]
  %s1 = inlined_call_operand.vmem [shape: bf16[1,256,16], index: 1, kind: input, shape index: {}]
  %s2 = inlined_call_operand.vmem [shape: f32[1,1,16], index: 2, kind: input, shape index: {}]
  %s3 = inlined_call_operand.vmem [shape: bf16[1,288,16], index: 3, kind: output, shape index: {}]
  %s4 = sld [smem:[#allocation0]]
  $region22: #{ensemble_forward.17} parent=0
    _
  %s6 = ssub.s32 1, %s4
  %s7 = scalar_select 0, %s6, %s4
  // Predicated region
  $region2: #{ensemble_forward.17} parent=0 // pred_check
    _
  $region3: #{ensemble_forward.17} parent=0 // pred_check_branch
    %9 = sbr.rel (0) target = $region5
  $region4: #{ensemble_forward.17} parent=0 // pred_region
    _
  $region5: #{ensemble_forward.17} parent=0 // pred_fallthru
    _
  // Predicated region
  $region6: #{ensemble_forward.17} parent=0 // pred_check
    _
  $region7: #{ensemble_forward.17} parent=0 // pred_check_branch
    %11 = sbr.rel (0) target = $region9
  $region8: #{ensemble_forward.17} parent=0 // pred_region
    _
  $region9: #{ensemble_forward.17} parent=0 // pred_fallthru
    _
  // Predicated region
  $region10: #{ensemble_forward.17} parent=0 // pred_check
    _
  $region11: #{ensemble_forward.17} parent=0 // pred_check_branch
    %13 = sbr.rel (0) target = $region13
  $region12: #{ensemble_forward.17} parent=0 // pred_region
    _
  $region13: #{ensemble_forward.17} parent=0 // pred_fallthru
    _
  %v15 = vld [vmem:[%s0] sm:$0xff]
  %v16 = vld [vmem:[%s0 + $0x8] sm:$0xff]
  %v17 = vld [vmem:[%s0 + $0x10] sm:$0xff]
  %v18 = vld [vmem:[%s0 + $0x18] sm:$0xff]
  %v19 = vld [vmem:[%s0 + $0x20] sm:$0xff]
  %v20 = vld [vmem:[%s0 + $0x28] sm:$0xff]
  %v21 = vld [vmem:[%s0 + $0x30] sm:$0xff]
  %v22 = vld [vmem:[%s0 + $0x38] sm:$0xff]
  %v23 = vld [vmem:[%s0 + $0x40] sm:$0xff]
  %v24 = vld [vmem:[%s0 + $0x48] sm:$0xff]
  %v25 = vld [vmem:[%s0 + $0x50] sm:$0xff]
  %v26 = vld [vmem:[%s0 + $0x58] sm:$0xff]
  %v27 = vld [vmem:[%s0 + $0x60] sm:$0xff]
  %v28 = vld [vmem:[%s0 + $0x68] sm:$0xff]
  %v29 = vld [vmem:[%s0 + $0x70] sm:$0xff]
  %v30 = vld [vmem:[%s0 + $0x78] sm:$0xff]
  %v31 = vld [vmem:[%s0 + $0x80] sm:$0xff]
  %v32 = vld [vmem:[%s0 + $0x88] sm:$0xff]
  %v33 = vld [vmem:[%s0 + $0x90] sm:$0xff]
  %v34 = vld [vmem:[%s0 + $0x98] sm:$0xff]
  %v35 = vld [vmem:[%s0 + $0xa0] sm:$0xff]
  %v36 = vld [vmem:[%s0 + $0xa8] sm:$0xff]
  %v37 = vld [vmem:[%s0 + $0xb0] sm:$0xff]
  %v38 = vld [vmem:[%s0 + $0xb8] sm:$0xff]
  %v39 = vld [vmem:[%s0 + $0xc0] sm:$0xff]
  %v40 = vld [vmem:[%s0 + $0xc8] sm:$0xff]
  %v41 = vld [vmem:[%s0 + $0xd0] sm:$0xff]
  %v42 = vld [vmem:[%s0 + $0xd8] sm:$0xff]
  %v43 = vld [vmem:[%s0 + $0xe0] sm:$0xff]
  %v44 = vld [vmem:[%s0 + $0xe8] sm:$0xff]
  %v45 = vld [vmem:[%s0 + $0xf0] sm:$0xff]
  %v46 = vld [vmem:[%s0 + $0xf8] sm:$0xff]
  %v47 = vld [vmem:[%s0 + $0x100] sm:$0xff]
  %v48 = vld [vmem:[%s0 + $0x108] sm:$0xff]
  %v49 = vld [vmem:[%s0 + $0x110] sm:$0xff]
  %v50 = vld [vmem:[%s0 + $0x118] sm:$0xff]
  %v51 = vld [vmem:[%s1] sm:$0xf]
  %v52 = vld [vmem:[%s1 + $0x4] sm:$0xf]
  %v53 = vld [vmem:[%s1 + $0x8] sm:$0xf]
  %v54 = vld [vmem:[%s1 + $0xc] sm:$0xf]
  %v55 = vld [vmem:[%s1 + $0x10] sm:$0xf]
  %v56 = vld [vmem:[%s1 + $0x14] sm:$0xf]
  %v57 = vld [vmem:[%s1 + $0x18] sm:$0xf]
  %v58 = vld [vmem:[%s1 + $0x1c] sm:$0xf]
  %v59 = vld [vmem:[%s1 + $0x20] sm:$0xf]
  %v60 = vld [vmem:[%s1 + $0x24] sm:$0xf]
  %v61 = vld [vmem:[%s1 + $0x28] sm:$0xf]
  %v62 = vld [vmem:[%s1 + $0x2c] sm:$0xf]
  %v63 = vld [vmem:[%s1 + $0x30] sm:$0xf]
  %v64 = vld [vmem:[%s1 + $0x34] sm:$0xf]
  %v65 = vld [vmem:[%s1 + $0x38] sm:$0xf]
  %v66 = vld [vmem:[%s1 + $0x3c] sm:$0xf]
  %v67 = vld [vmem:[%s1 + $0x40] sm:$0xf]
  %v68 = vld [vmem:[%s1 + $0x44] sm:$0xf]
  %v69 = vld [vmem:[%s1 + $0x48] sm:$0xf]
  %v70 = vld [vmem:[%s1 + $0x4c] sm:$0xf]
  %v71 = vld [vmem:[%s1 + $0x50] sm:$0xf]
  %v72 = vld [vmem:[%s1 + $0x54] sm:$0xf]
  %v73 = vld [vmem:[%s1 + $0x58] sm:$0xf]
  %v74 = vld [vmem:[%s1 + $0x5c] sm:$0xf]
  %v75 = vld [vmem:[%s1 + $0x60] sm:$0xf]
  %v76 = vld [vmem:[%s1 + $0x64] sm:$0xf]
  %v77 = vld [vmem:[%s1 + $0x68] sm:$0xf]
  %v78 = vld [vmem:[%s1 + $0x6c] sm:$0xf]
  %v79 = vld [vmem:[%s1 + $0x70] sm:$0xf]
  %v80 = vld [vmem:[%s1 + $0x74] sm:$0xf]
  %v81 = vld [vmem:[%s1 + $0x78] sm:$0xf]
  %v82 = vld [vmem:[%s1 + $0x7c] sm:$0xf]
  %v83 = vld [vmem:[%s2] sm:$0x1]
  %v85 = vlaneseq
  %v86 = vshrl.u32 %v85, 7
  %v87 = vsub.s32 0, %v86
  %v88 = vrot.slane %v83, %v87
  %v126 = vunpack.c.l.b16 %v15
  %v127 = vunpack.c.h.b16 %v15
  %v128 = vunpack.c.l.b16 %v16
  %v129 = vunpack.c.h.b16 %v16
  %v130 = vunpack.c.l.b16 %v17
  %v131 = vunpack.c.h.b16 %v17
  %v132 = vunpack.c.l.b16 %v18
  %v133 = vunpack.c.h.b16 %v18
  %v134 = vunpack.c.l.b16 %v19
  %v135 = vunpack.c.h.b16 %v19
  %v136 = vunpack.c.l.b16 %v20
  %v137 = vunpack.c.h.b16 %v20
  %v138 = vunpack.c.l.b16 %v21
  %v139 = vunpack.c.h.b16 %v21
  %v140 = vunpack.c.l.b16 %v22
  %v141 = vunpack.c.h.b16 %v22
  %v142 = vunpack.c.l.b16 %v23
  %v143 = vunpack.c.h.b16 %v23
  %v144 = vunpack.c.l.b16 %v24
  %v145 = vunpack.c.h.b16 %v24
  %v146 = vunpack.c.l.b16 %v25
  %v147 = vunpack.c.h.b16 %v25
  %v148 = vunpack.c.l.b16 %v26
  %v149 = vunpack.c.h.b16 %v26
  %v150 = vunpack.c.l.b16 %v27
  %v151 = vunpack.c.h.b16 %v27
  %v152 = vunpack.c.l.b16 %v28
  %v153 = vunpack.c.h.b16 %v28
  %v154 = vunpack.c.l.b16 %v29
  %v155 = vunpack.c.h.b16 %v29
  %v156 = vunpack.c.l.b16 %v30
  %v157 = vunpack.c.h.b16 %v30
  %v158 = vunpack.c.l.b16 %v31
  %v159 = vunpack.c.h.b16 %v31
  %v160 = vunpack.c.l.b16 %v32
  %v161 = vunpack.c.h.b16 %v32
  %v162 = vunpack.c.l.b16 %v33
  %v163 = vunpack.c.h.b16 %v33
  %v164 = vunpack.c.l.b16 %v34
  %v165 = vunpack.c.h.b16 %v34
  %v166 = vunpack.c.l.b16 %v35
  %v167 = vunpack.c.h.b16 %v35
  %v168 = vunpack.c.l.b16 %v36
  %v169 = vunpack.c.h.b16 %v36
  %v170 = vunpack.c.l.b16 %v37
  %v171 = vunpack.c.h.b16 %v37
  %v172 = vunpack.c.l.b16 %v38
  %v173 = vunpack.c.h.b16 %v38
  %v174 = vunpack.c.l.b16 %v39
  %v175 = vunpack.c.h.b16 %v39
  %v176 = vunpack.c.l.b16 %v40
  %v177 = vunpack.c.h.b16 %v40
  %v178 = vunpack.c.l.b16 %v41
  %v179 = vunpack.c.h.b16 %v41
  %v180 = vunpack.c.l.b16 %v42
  %v181 = vunpack.c.h.b16 %v42
  %v182 = vunpack.c.l.b16 %v43
  %v183 = vunpack.c.h.b16 %v43
  %v184 = vunpack.c.l.b16 %v44
  %v185 = vunpack.c.h.b16 %v44
  %v186 = vunpack.c.l.b16 %v45
  %v187 = vunpack.c.h.b16 %v45
  %v188 = vunpack.c.l.b16 %v46
  %v189 = vunpack.c.h.b16 %v46
  %v190 = vunpack.c.l.b16 %v47
  %v191 = vunpack.c.h.b16 %v47
  %v192 = vunpack.c.l.b16 %v48
  %v193 = vunpack.c.h.b16 %v48
  %v194 = vunpack.c.l.b16 %v49
  %v195 = vunpack.c.h.b16 %v49
  %v196 = vunpack.c.l.b16 %v50
  %v197 = vunpack.c.h.b16 %v50
  %v198 = vpack.c.b16 %v128, %v126
  %v199 = vpack.c.b16 %v129, %v127
  %v200 = vpack.c.b16 %v132, %v130
  %v201 = vpack.c.b16 %v133, %v131
  %v202 = vpack.c.b16 %v136, %v134
  %v203 = vpack.c.b16 %v137, %v135
  %v204 = vpack.c.b16 %v140, %v138
  %v205 = vpack.c.b16 %v141, %v139
  %v206 = vpack.c.b16 %v144, %v142
  %v207 = vpack.c.b16 %v145, %v143
  %v208 = vpack.c.b16 %v148, %v146
  %v209 = vpack.c.b16 %v149, %v147
  %v210 = vpack.c.b16 %v152, %v150
  %v211 = vpack.c.b16 %v153, %v151
  %v212 = vpack.c.b16 %v156, %v154
  %v213 = vpack.c.b16 %v157, %v155
  %v214 = vpack.c.b16 %v160, %v158
  %v215 = vpack.c.b16 %v161, %v159
  %v216 = vpack.c.b16 %v164, %v162
  %v217 = vpack.c.b16 %v165, %v163
  %v218 = vpack.c.b16 %v168, %v166
  %v219 = vpack.c.b16 %v169, %v167
  %v220 = vpack.c.b16 %v172, %v170
  %v221 = vpack.c.b16 %v173, %v171
  %v222 = vpack.c.b16 %v176, %v174
  %v223 = vpack.c.b16 %v177, %v175
  %v224 = vpack.c.b16 %v180, %v178
  %v225 = vpack.c.b16 %v181, %v179
  %v226 = vpack.c.b16 %v184, %v182
  %v227 = vpack.c.b16 %v185, %v183
  %v228 = vpack.c.b16 %v188, %v186
  %v229 = vpack.c.b16 %v189, %v187
  %v230 = vpack.c.b16 %v192, %v190
  %v231 = vpack.c.b16 %v193, %v191
  %v232 = vpack.c.b16 %v196, %v194
  %v233 = vpack.c.b16 %v197, %v195
  %v302 = vunpack.c.l.b16 %v51
  %v303 = vunpack.c.l.b16 %v52
  %v304 = vunpack.c.l.b16 %v53
  %v305 = vunpack.c.l.b16 %v54
  %v306 = vunpack.c.l.b16 %v55
  %v307 = vunpack.c.l.b16 %v56
  %v308 = vunpack.c.l.b16 %v57
  %v309 = vunpack.c.l.b16 %v58
  %v310 = vunpack.c.l.b16 %v59
  %v311 = vunpack.c.l.b16 %v60
  %v312 = vunpack.c.l.b16 %v61
  %v313 = vunpack.c.l.b16 %v62
  %v314 = vunpack.c.l.b16 %v63
  %v315 = vunpack.c.l.b16 %v64
  %v316 = vunpack.c.l.b16 %v65
  %v317 = vunpack.c.l.b16 %v66
  %v318 = vunpack.c.l.b16 %v67
  %v319 = vunpack.c.l.b16 %v68
  %v320 = vunpack.c.l.b16 %v69
  %v321 = vunpack.c.l.b16 %v70
  %v322 = vunpack.c.l.b16 %v71
  %v323 = vunpack.c.l.b16 %v72
  %v324 = vunpack.c.l.b16 %v73
  %v325 = vunpack.c.l.b16 %v74
  %v326 = vunpack.c.l.b16 %v75
  %v327 = vunpack.c.l.b16 %v76
  %v328 = vunpack.c.l.b16 %v77
  %v329 = vunpack.c.l.b16 %v78
  %v330 = vunpack.c.l.b16 %v79
  %v331 = vunpack.c.l.b16 %v80
  %v332 = vunpack.c.l.b16 %v81
  %v333 = vunpack.c.l.b16 %v82
  %v334 = vpack.c.b16 %v303, %v302
  %v335 = vpack.c.b16 %v305, %v304
  %v336 = vpack.c.b16 %v307, %v306
  %v337 = vpack.c.b16 %v309, %v308
  %v338 = vpack.c.b16 %v311, %v310
  %v339 = vpack.c.b16 %v313, %v312
  %v340 = vpack.c.b16 %v315, %v314
  %v341 = vpack.c.b16 %v317, %v316
  %v342 = vpack.c.b16 %v319, %v318
  %v343 = vpack.c.b16 %v321, %v320
  %v344 = vpack.c.b16 %v323, %v322
  %v345 = vpack.c.b16 %v325, %v324
  %v346 = vpack.c.b16 %v327, %v326
  %v347 = vpack.c.b16 %v329, %v328
  %v348 = vpack.c.b16 %v331, %v330
  %v349 = vpack.c.b16 %v333, %v332
  %366 = vmatprep.subr.bf16.mxu0 0
  %367 = vmatpush1.bf16.msra.mxu0 %v341
  %368 = vmatprep.subr.bf16.mxu0 0
  %369 = vmatpush1.bf16.msra.mxu0 %v340
  %370 = vmatprep.subr.bf16.mxu0 0
  %371 = vmatpush1.bf16.msra.mxu0 %v339
  %372 = vmatprep.subr.bf16.mxu0 0
  %373 = vmatpush1.bf16.msra.mxu0 %v338
  %374 = vmatprep.subr.bf16.mxu0 0
  %375 = vmatpush1.bf16.msra.mxu0 %v337
  %376 = vmatprep.subr.bf16.mxu0 0
  %377 = vmatpush1.bf16.msra.mxu0 %v336
  %378 = vmatprep.subr.bf16.mxu0 0
  %379 = vmatpush1.bf16.msra.mxu0 %v335
  %380 = vmatprep.subr.bf16.mxu0 0
  %381 = vmatpush1.bf16.msra.mxu0 %v334
  %382 = vmatprep.subr.bf16.mxu0 0
  %383 = vmatpush2.bf16.msra.mxu0 %v349
  %384 = vmatprep.subr.bf16.mxu0 0
  %385 = vmatpush2.bf16.msra.mxu0 %v348
  %386 = vmatprep.subr.bf16.mxu0 0
  %387 = vmatpush2.bf16.msra.mxu0 %v347
  %388 = vmatprep.subr.bf16.mxu0 0
  %389 = vmatpush2.bf16.msra.mxu0 %v346
  %390 = vmatprep.subr.bf16.mxu0 0
  %391 = vmatpush2.bf16.msra.mxu0 %v345
  %392 = vmatprep.subr.bf16.mxu0 0
  %393 = vmatpush2.bf16.msra.mxu0 %v344
  %394 = vmatprep.subr.bf16.mxu0 0
  %395 = vmatpush2.bf16.msra.mxu0 %v343
  %396 = vmatprep.subr.bf16.mxu0 0
  %397 = vmatpush2.bf16.msra.mxu0 %v342
  %398 = vmatprep.mubr.bf16.mxu0 %v199
  %399 = vmatmul.mubr.bf16.gmra.mxu0 %v198
  %v400 = vpop.f32.mrf.mxu0
  %v401 = vadd.f32 %v88, %v400
  %v402 = vpop.f32.mrf.mxu0
  %v403 = vpop.f32.mrf.mxu0
  %v404 = vadd.f32 %v88, %v403
  %v405 = vpop.f32.mrf.mxu0
  %406 = vmatprep.mubr.bf16.mxu0 %v201
  %407 = vmatmul.mubr.bf16.gmra.mxu0 %v200
  %v408 = vpop.f32.mrf.mxu0
  %v409 = vadd.f32 %v88, %v408
  %v410 = vpop.f32.mrf.mxu0
  %v411 = vpop.f32.mrf.mxu0
  %v412 = vadd.f32 %v88, %v411
  %v413 = vpop.f32.mrf.mxu0
  %414 = vmatprep.mubr.bf16.mxu0 %v203
  %415 = vmatmul.mubr.bf16.gmra.mxu0 %v202
  %v416 = vpop.f32.mrf.mxu0
  %v417 = vadd.f32 %v88, %v416
  %v418 = vpop.f32.mrf.mxu0
  %v419 = vpop.f32.mrf.mxu0
  %v420 = vadd.f32 %v88, %v419
  %v421 = vpop.f32.mrf.mxu0
  %422 = vmatprep.mubr.bf16.mxu0 %v205
  %423 = vmatmul.mubr.bf16.gmra.mxu0 %v204
  %v424 = vpop.f32.mrf.mxu0
  %v425 = vadd.f32 %v88, %v424
  %v426 = vpop.f32.mrf.mxu0
  %v427 = vpop.f32.mrf.mxu0
  %v428 = vadd.f32 %v88, %v427
  %v429 = vpop.f32.mrf.mxu0
  %430 = vmatprep.mubr.bf16.mxu0 %v207
  %431 = vmatmul.mubr.bf16.gmra.mxu0 %v206
  %v432 = vpop.f32.mrf.mxu0
  %v433 = vadd.f32 %v88, %v432
  %v434 = vpop.f32.mrf.mxu0
  %v435 = vpop.f32.mrf.mxu0
  %v436 = vadd.f32 %v88, %v435
  %v437 = vpop.f32.mrf.mxu0
  %438 = vmatprep.mubr.bf16.mxu0 %v209
  %439 = vmatmul.mubr.bf16.gmra.mxu0 %v208
  %v440 = vpop.f32.mrf.mxu0
  %v441 = vadd.f32 %v88, %v440
  %v442 = vpop.f32.mrf.mxu0
  %v443 = vpop.f32.mrf.mxu0
  %v444 = vadd.f32 %v88, %v443
  %v445 = vpop.f32.mrf.mxu0
  %446 = vmatprep.mubr.bf16.mxu0 %v211
  %447 = vmatmul.mubr.bf16.gmra.mxu0 %v210
  %v448 = vpop.f32.mrf.mxu0
  %v449 = vadd.f32 %v88, %v448
  %v450 = vpop.f32.mrf.mxu0
  %v451 = vpop.f32.mrf.mxu0
  %v452 = vadd.f32 %v88, %v451
  %v453 = vpop.f32.mrf.mxu0
  %454 = vmatprep.mubr.bf16.mxu0 %v213
  %455 = vmatmul.mubr.bf16.gmra.mxu0 %v212
  %v456 = vpop.f32.mrf.mxu0
  %v457 = vadd.f32 %v88, %v456
  %v458 = vpop.f32.mrf.mxu0
  %v459 = vpop.f32.mrf.mxu0
  %v460 = vadd.f32 %v88, %v459
  %v461 = vpop.f32.mrf.mxu0
  %462 = vmatprep.mubr.bf16.mxu0 %v215
  %463 = vmatmul.mubr.bf16.gmra.mxu0 %v214
  %v464 = vpop.f32.mrf.mxu0
  %v465 = vadd.f32 %v88, %v464
  %v466 = vpop.f32.mrf.mxu0
  %v467 = vpop.f32.mrf.mxu0
  %v468 = vadd.f32 %v88, %v467
  %v469 = vpop.f32.mrf.mxu0
  %470 = vmatprep.mubr.bf16.mxu0 %v217
  %471 = vmatmul.mubr.bf16.gmra.mxu0 %v216
  %v472 = vpop.f32.mrf.mxu0
  %v473 = vadd.f32 %v88, %v472
  %v474 = vpop.f32.mrf.mxu0
  %v475 = vpop.f32.mrf.mxu0
  %v476 = vadd.f32 %v88, %v475
  %v477 = vpop.f32.mrf.mxu0
  %478 = vmatprep.mubr.bf16.mxu0 %v219
  %479 = vmatmul.mubr.bf16.gmra.mxu0 %v218
  %v480 = vpop.f32.mrf.mxu0
  %v481 = vadd.f32 %v88, %v480
  %v482 = vpop.f32.mrf.mxu0
  %v483 = vpop.f32.mrf.mxu0
  %v484 = vadd.f32 %v88, %v483
  %v485 = vpop.f32.mrf.mxu0
  %486 = vmatprep.mubr.bf16.mxu0 %v221
  %487 = vmatmul.mubr.bf16.gmra.mxu0 %v220
  %v488 = vpop.f32.mrf.mxu0
  %v489 = vadd.f32 %v88, %v488
  %v490 = vpop.f32.mrf.mxu0
  %v491 = vpop.f32.mrf.mxu0
  %v492 = vadd.f32 %v88, %v491
  %v493 = vpop.f32.mrf.mxu0
  %494 = vmatprep.mubr.bf16.mxu0 %v223
  %495 = vmatmul.mubr.bf16.gmra.mxu0 %v222
  %v496 = vpop.f32.mrf.mxu0
  %v497 = vadd.f32 %v88, %v496
  %v498 = vpop.f32.mrf.mxu0
  %v499 = vpop.f32.mrf.mxu0
  %v500 = vadd.f32 %v88, %v499
  %v501 = vpop.f32.mrf.mxu0
  %502 = vmatprep.mubr.bf16.mxu0 %v225
  %503 = vmatmul.mubr.bf16.gmra.mxu0 %v224
  %v504 = vpop.f32.mrf.mxu0
  %v505 = vadd.f32 %v88, %v504
  %v506 = vpop.f32.mrf.mxu0
  %v507 = vpop.f32.mrf.mxu0
  %v508 = vadd.f32 %v88, %v507
  %v509 = vpop.f32.mrf.mxu0
  %510 = vmatprep.mubr.bf16.mxu0 %v227
  %511 = vmatmul.mubr.bf16.gmra.mxu0 %v226
  %v512 = vpop.f32.mrf.mxu0
  %v513 = vadd.f32 %v88, %v512
  %v514 = vpop.f32.mrf.mxu0
  %v515 = vpop.f32.mrf.mxu0
  %v516 = vadd.f32 %v88, %v515
  %v517 = vpop.f32.mrf.mxu0
  %518 = vmatprep.mubr.bf16.mxu0 %v229
  %519 = vmatmul.mubr.bf16.gmra.mxu0 %v228
  %v520 = vpop.f32.mrf.mxu0
  %v521 = vadd.f32 %v88, %v520
  %v522 = vpop.f32.mrf.mxu0
  %v523 = vpop.f32.mrf.mxu0
  %v524 = vadd.f32 %v88, %v523
  %v525 = vpop.f32.mrf.mxu0
  %526 = vmatprep.mubr.bf16.mxu0 %v231
  %527 = vmatmul.mubr.bf16.gmra.mxu0 %v230
  %v528 = vpop.f32.mrf.mxu0
  %v529 = vadd.f32 %v88, %v528
  %v530 = vpop.f32.mrf.mxu0
  %v531 = vpop.f32.mrf.mxu0
  %v532 = vadd.f32 %v88, %v531
  %v533 = vpop.f32.mrf.mxu0
  %534 = vmatprep.mubr.bf16.mxu0 %v233
  %535 = vmatmul.mubr.bf16.gmra.mxu0 %v232
  %v536 = vpop.f32.mrf.mxu0
  %v537 = vadd.f32 %v88, %v536
  %v538 = vpop.f32.mrf.mxu0
  %v539 = vpop.f32.mrf.mxu0
  %v540 = vadd.f32 %v88, %v539
  %v541 = vpop.f32.mrf.mxu0
  %542 = vdwg.mxu0
  %v543 = vmax.f32 %v401, 0.0
  %v544 = vmax.f32 %v404, 0.0
  %v545 = vmax.f32 %v409, 0.0
  %v546 = vmax.f32 %v412, 0.0
  %v547 = vmax.f32 %v417, 0.0
  %v548 = vmax.f32 %v420, 0.0
  %v549 = vmax.f32 %v425, 0.0
  %v550 = vmax.f32 %v428, 0.0
  %v551 = vmax.f32 %v433, 0.0
  %v552 = vmax.f32 %v436, 0.0
  %v553 = vmax.f32 %v441, 0.0
  %v554 = vmax.f32 %v444, 0.0
  %v555 = vmax.f32 %v449, 0.0
  %v556 = vmax.f32 %v452, 0.0
  %v557 = vmax.f32 %v457, 0.0
  %v558 = vmax.f32 %v460, 0.0
  %v559 = vmax.f32 %v465, 0.0
  %v560 = vmax.f32 %v468, 0.0
  %v561 = vmax.f32 %v473, 0.0
  %v562 = vmax.f32 %v476, 0.0
  %v563 = vmax.f32 %v481, 0.0
  %v564 = vmax.f32 %v484, 0.0
  %v565 = vmax.f32 %v489, 0.0
  %v566 = vmax.f32 %v492, 0.0
  %v567 = vmax.f32 %v497, 0.0
  %v568 = vmax.f32 %v500, 0.0
  %v569 = vmax.f32 %v505, 0.0
  %v570 = vmax.f32 %v508, 0.0
  %v571 = vmax.f32 %v513, 0.0
  %v572 = vmax.f32 %v516, 0.0
  %v573 = vmax.f32 %v521, 0.0
  %v574 = vmax.f32 %v524, 0.0
  %v575 = vmax.f32 %v529, 0.0
  %v576 = vmax.f32 %v532, 0.0
  %v577 = vmax.f32 %v537, 0.0
  %v578 = vmax.f32 %v540, 0.0
  %v579 = vpack.c.bf16 %v544, %v543
  %v580 = vpack.c.bf16 %v546, %v545
  %v581 = vpack.c.bf16 %v548, %v547
  %v582 = vpack.c.bf16 %v550, %v549
  %v583 = vpack.c.bf16 %v552, %v551
  %v584 = vpack.c.bf16 %v554, %v553
  %v585 = vpack.c.bf16 %v556, %v555
  %v586 = vpack.c.bf16 %v558, %v557
  %v587 = vpack.c.bf16 %v560, %v559
  %v588 = vpack.c.bf16 %v562, %v561
  %v589 = vpack.c.bf16 %v564, %v563
  %v590 = vpack.c.bf16 %v566, %v565
  %v591 = vpack.c.bf16 %v568, %v567
  %v592 = vpack.c.bf16 %v570, %v569
  %v593 = vpack.c.bf16 %v572, %v571
  %v594 = vpack.c.bf16 %v574, %v573
  %v595 = vpack.c.bf16 %v576, %v575
  %v596 = vpack.c.bf16 %v578, %v577
  %v615 = vunpack.c.l.b16 %v579
  %v616 = vunpack.c.h.b16 %v579
  %v617 = vunpack.c.l.b16 %v580
  %v618 = vunpack.c.h.b16 %v580
  %v619 = vunpack.c.l.b16 %v581
  %v620 = vunpack.c.h.b16 %v581
  %v621 = vunpack.c.l.b16 %v582
  %v622 = vunpack.c.h.b16 %v582
  %v623 = vunpack.c.l.b16 %v583
  %v624 = vunpack.c.h.b16 %v583
  %v625 = vunpack.c.l.b16 %v584
  %v626 = vunpack.c.h.b16 %v584
  %v627 = vunpack.c.l.b16 %v585
  %v628 = vunpack.c.h.b16 %v585
  %v629 = vunpack.c.l.b16 %v586
  %v630 = vunpack.c.h.b16 %v586
  %v631 = vunpack.c.l.b16 %v587
  %v632 = vunpack.c.h.b16 %v587
  %v633 = vunpack.c.l.b16 %v588
  %v634 = vunpack.c.h.b16 %v588
  %v635 = vunpack.c.l.b16 %v589
  %v636 = vunpack.c.h.b16 %v589
  %v637 = vunpack.c.l.b16 %v590
  %v638 = vunpack.c.h.b16 %v590
  %v639 = vunpack.c.l.b16 %v591
  %v640 = vunpack.c.h.b16 %v591
  %v641 = vunpack.c.l.b16 %v592
  %v642 = vunpack.c.h.b16 %v592
  %v643 = vunpack.c.l.b16 %v593
  %v644 = vunpack.c.h.b16 %v593
  %v645 = vunpack.c.l.b16 %v594
  %v646 = vunpack.c.h.b16 %v594
  %v647 = vunpack.c.l.b16 %v595
  %v648 = vunpack.c.h.b16 %v595
  %v649 = vunpack.c.l.b16 %v596
  %v650 = vunpack.c.h.b16 %v596
  %v651 = vpack.c.b16 %v615, %v615
  %v652 = vpack.c.b16 %v616, %v616
  %v653 = vpack.c.b16 %v617, %v617
  %v654 = vpack.c.b16 %v618, %v618
  %v655 = vpack.c.b16 %v619, %v619
  %v656 = vpack.c.b16 %v620, %v620
  %v657 = vpack.c.b16 %v621, %v621
  %v658 = vpack.c.b16 %v622, %v622
  %v659 = vpack.c.b16 %v623, %v623
  %v660 = vpack.c.b16 %v624, %v624
  %v661 = vpack.c.b16 %v625, %v625
  %v662 = vpack.c.b16 %v626, %v626
  %v663 = vpack.c.b16 %v627, %v627
  %v664 = vpack.c.b16 %v628, %v628
  %v665 = vpack.c.b16 %v629, %v629
  %v666 = vpack.c.b16 %v630, %v630
  %v667 = vpack.c.b16 %v631, %v631
  %v668 = vpack.c.b16 %v632, %v632
  %v669 = vpack.c.b16 %v633, %v633
  %v670 = vpack.c.b16 %v634, %v634
  %v671 = vpack.c.b16 %v635, %v635
  %v672 = vpack.c.b16 %v636, %v636
  %v673 = vpack.c.b16 %v637, %v637
  %v674 = vpack.c.b16 %v638, %v638
  %v675 = vpack.c.b16 %v639, %v639
  %v676 = vpack.c.b16 %v640, %v640
  %v677 = vpack.c.b16 %v641, %v641
  %v678 = vpack.c.b16 %v642, %v642
  %v679 = vpack.c.b16 %v643, %v643
  %v680 = vpack.c.b16 %v644, %v644
  %v681 = vpack.c.b16 %v645, %v645
  %v682 = vpack.c.b16 %v646, %v646
  %v683 = vpack.c.b16 %v647, %v647
  %v684 = vpack.c.b16 %v648, %v648
  %v685 = vpack.c.b16 %v649, %v649
  %v686 = vpack.c.b16 %v650, %v650
  %vm723 = vcmask 125952
  %724 = vst.msk [vmem:[%s3] sm:$0xf] %vm723, %v651
  %725 = vst.msk [vmem:[%s3 + $0x4] sm:$0xf] %vm723, %v652
  %726 = vst.msk [vmem:[%s3 + $0x8] sm:$0xf] %vm723, %v653
  %727 = vst.msk [vmem:[%s3 + $0xc] sm:$0xf] %vm723, %v654
  %728 = vst.msk [vmem:[%s3 + $0x10] sm:$0xf] %vm723, %v655
  %729 = vst.msk [vmem:[%s3 + $0x14] sm:$0xf] %vm723, %v656
  %730 = vst.msk [vmem:[%s3 + $0x18] sm:$0xf] %vm723, %v657
  %731 = vst.msk [vmem:[%s3 + $0x1c] sm:$0xf] %vm723, %v658
  %732 = vst.msk [vmem:[%s3 + $0x20] sm:$0xf] %vm723, %v659
  %733 = vst.msk [vmem:[%s3 + $0x24] sm:$0xf] %vm723, %v660
  %734 = vst.msk [vmem:[%s3 + $0x28] sm:$0xf] %vm723, %v661
  %735 = vst.msk [vmem:[%s3 + $0x2c] sm:$0xf] %vm723, %v662
  %736 = vst.msk [vmem:[%s3 + $0x30] sm:$0xf] %vm723, %v663
  %737 = vst.msk [vmem:[%s3 + $0x34] sm:$0xf] %vm723, %v664
  %738 = vst.msk [vmem:[%s3 + $0x38] sm:$0xf] %vm723, %v665
  %739 = vst.msk [vmem:[%s3 + $0x3c] sm:$0xf] %vm723, %v666
  %740 = vst.msk [vmem:[%s3 + $0x40] sm:$0xf] %vm723, %v667
  %741 = vst.msk [vmem:[%s3 + $0x44] sm:$0xf] %vm723, %v668
  %742 = vst.msk [vmem:[%s3 + $0x48] sm:$0xf] %vm723, %v669
  %743 = vst.msk [vmem:[%s3 + $0x4c] sm:$0xf] %vm723, %v670
  %744 = vst.msk [vmem:[%s3 + $0x50] sm:$0xf] %vm723, %v671
  %745 = vst.msk [vmem:[%s3 + $0x54] sm:$0xf] %vm723, %v672
  %746 = vst.msk [vmem:[%s3 + $0x58] sm:$0xf] %vm723, %v673
  %747 = vst.msk [vmem:[%s3 + $0x5c] sm:$0xf] %vm723, %v674
  %748 = vst.msk [vmem:[%s3 + $0x60] sm:$0xf] %vm723, %v675
  %749 = vst.msk [vmem:[%s3 + $0x64] sm:$0xf] %vm723, %v676
  %750 = vst.msk [vmem:[%s3 + $0x68] sm:$0xf] %vm723, %v677
  %751 = vst.msk [vmem:[%s3 + $0x6c] sm:$0xf] %vm723, %v678
  %752 = vst.msk [vmem:[%s3 + $0x70] sm:$0xf] %vm723, %v679
  %753 = vst.msk [vmem:[%s3 + $0x74] sm:$0xf] %vm723, %v680
  %754 = vst.msk [vmem:[%s3 + $0x78] sm:$0xf] %vm723, %v681
  %755 = vst.msk [vmem:[%s3 + $0x7c] sm:$0xf] %vm723, %v682
  %756 = vst.msk [vmem:[%s3 + $0x80] sm:$0xf] %vm723, %v683
  %757 = vst.msk [vmem:[%s3 + $0x84] sm:$0xf] %vm723, %v684
  %758 = vst.msk [vmem:[%s3 + $0x88] sm:$0xf] %vm723, %v685
  %759 = vst.msk [vmem:[%s3 + $0x8c] sm:$0xf] %vm723, %v686
  // Predicated region
  $region14: #{ensemble_forward.17} parent=0 // pred_check
    _
  $region15: #{ensemble_forward.17} parent=0 // pred_check_branch
    %761 = sbr.rel (0) target = $region17
  $region16: #{ensemble_forward.17} parent=0 // pred_region
    _
  $region17: #{ensemble_forward.17} parent=0 // pred_fallthru
    _
  // Predicated region
  $region18: #{ensemble_forward.17} parent=0 // pred_check
    _
  $region19: #{ensemble_forward.17} parent=0 // pred_check_branch
    %763 = sbr.rel (0) target = $region21
  $region20: #{ensemble_forward.17} parent=0 // pred_region
    _
  $region21: #{ensemble_forward.17} parent=0 // pred_fallthru
    _

// kernel: ensemble_forward.18
$region0: #{ensemble_forward.18}
  #allocation0 [shape = 'u32[]', space=smem, size = 0x4, offset = 0x4, fixed_abs, tag = 'smem constant byte address 0x4 - core index']
  #allocation1 [shape = 'u32[144,128]{1,0:T(1,128)}', space=vmem, size = 0x12000, scoped, tag = 'internal scratch']
  %s0 = inlined_call_operand.vmem [shape: bf16[1,50,256], index: 0, kind: input, shape index: {}]
  %s1 = inlined_call_operand.vmem [shape: bf16[1,256,32], index: 1, kind: input, shape index: {}]
  %s2 = inlined_call_operand.vmem [shape: f32[1,1,32], index: 2, kind: input, shape index: {}]
  %s3 = inlined_call_operand.vmem [shape: bf16[1,50,32], index: 3, kind: output, shape index: {}]
  %s4 = sld [smem:[#allocation0]]
  $region22: #{ensemble_forward.18} parent=0
    _
  %s6 = ssub.s32 1, %s4
  %s7 = scalar_select 0, %s6, %s4
  // Predicated region
  $region2: #{ensemble_forward.18} parent=0 // pred_check
    _
  $region3: #{ensemble_forward.18} parent=0 // pred_check_branch
    %9 = sbr.rel (0) target = $region5
  $region4: #{ensemble_forward.18} parent=0 // pred_region
    _
  $region5: #{ensemble_forward.18} parent=0 // pred_fallthru
    _
  // Predicated region
  $region6: #{ensemble_forward.18} parent=0 // pred_check
    _
  $region7: #{ensemble_forward.18} parent=0 // pred_check_branch
    %11 = sbr.rel (0) target = $region9
  $region8: #{ensemble_forward.18} parent=0 // pred_region
    _
  $region9: #{ensemble_forward.18} parent=0 // pred_fallthru
    _
  // Predicated region
  $region10: #{ensemble_forward.18} parent=0 // pred_check
    _
  $region11: #{ensemble_forward.18} parent=0 // pred_check_branch
    %13 = sbr.rel (0) target = $region13
  $region12: #{ensemble_forward.18} parent=0 // pred_region
    _
  $region13: #{ensemble_forward.18} parent=0 // pred_fallthru
    _
  %v15 = vld [vmem:[%s0] sm:$0xff]
  %v16 = vld [vmem:[%s0 + $0x8] sm:$0xff]
  %v17 = vld [vmem:[%s0 + $0x10] sm:$0xff]
  %v18 = vld [vmem:[%s0 + $0x18] sm:$0xff]
  %v19 = vld [vmem:[%s0 + $0x20] sm:$0xff]
  %v20 = vld [vmem:[%s0 + $0x28] sm:$0xff]
  %v21 = vld [vmem:[%s0 + $0x30] sm:$0x11]
  %v22 = vld [vmem:[%s1] sm:$0xf]
  %v23 = vld [vmem:[%s1 + $0x4] sm:$0xf]
  %v24 = vld [vmem:[%s1 + $0x8] sm:$0xf]
  %v25 = vld [vmem:[%s1 + $0xc] sm:$0xf]
  %v26 = vld [vmem:[%s1 + $0x10] sm:$0xf]
  %v27 = vld [vmem:[%s1 + $0x14] sm:$0xf]
  %v28 = vld [vmem:[%s1 + $0x18] sm:$0xf]
  %v29 = vld [vmem:[%s1 + $0x1c] sm:$0xf]
  %v30 = vld [vmem:[%s1 + $0x20] sm:$0xf]
  %v31 = vld [vmem:[%s1 + $0x24] sm:$0xf]
  %v32 = vld [vmem:[%s1 + $0x28] sm:$0xf]
  %v33 = vld [vmem:[%s1 + $0x2c] sm:$0xf]
  %v34 = vld [vmem:[%s1 + $0x30] sm:$0xf]
  %v35 = vld [vmem:[%s1 + $0x34] sm:$0xf]
  %v36 = vld [vmem:[%s1 + $0x38] sm:$0xf]
  %v37 = vld [vmem:[%s1 + $0x3c] sm:$0xf]
  %v38 = vld [vmem:[%s1 + $0x40] sm:$0xf]
  %v39 = vld [vmem:[%s1 + $0x44] sm:$0xf]
  %v40 = vld [vmem:[%s1 + $0x48] sm:$0xf]
  %v41 = vld [vmem:[%s1 + $0x4c] sm:$0xf]
  %v42 = vld [vmem:[%s1 + $0x50] sm:$0xf]
  %v43 = vld [vmem:[%s1 + $0x54] sm:$0xf]
  %v44 = vld [vmem:[%s1 + $0x58] sm:$0xf]
  %v45 = vld [vmem:[%s1 + $0x5c] sm:$0xf]
  %v46 = vld [vmem:[%s1 + $0x60] sm:$0xf]
  %v47 = vld [vmem:[%s1 + $0x64] sm:$0xf]
  %v48 = vld [vmem:[%s1 + $0x68] sm:$0xf]
  %v49 = vld [vmem:[%s1 + $0x6c] sm:$0xf]
  %v50 = vld [vmem:[%s1 + $0x70] sm:$0xf]
  %v51 = vld [vmem:[%s1 + $0x74] sm:$0xf]
  %v52 = vld [vmem:[%s1 + $0x78] sm:$0xf]
  %v53 = vld [vmem:[%s1 + $0x7c] sm:$0xf]
  %v54 = vld [vmem:[%s2] sm:$0x1]
  %v56 = vlaneseq
  %v57 = vshrl.u32 %v56, 7
  %v58 = vsub.s32 0, %v57
  %v59 = vrot.slane %v54, %v58
  %v68 = vunpack.c.l.b16 %v15
  %v69 = vunpack.c.h.b16 %v15
  %v70 = vunpack.c.l.b16 %v16
  %v71 = vunpack.c.h.b16 %v16
  %v72 = vunpack.c.l.b16 %v17
  %v73 = vunpack.c.h.b16 %v17
  %v74 = vunpack.c.l.b16 %v18
  %v75 = vunpack.c.h.b16 %v18
  %v76 = vunpack.c.l.b16 %v19
  %v77 = vunpack.c.h.b16 %v19
  %v78 = vunpack.c.l.b16 %v20
  %v79 = vunpack.c.h.b16 %v20
  %v80 = vunpack.c.l.b16 %v21
  %v81 = vunpack.c.h.b16 %v21
  %v82 = vpack.c.b16 %v70, %v68
  %v83 = vpack.c.b16 %v71, %v69
  %v84 = vpack.c.b16 %v74, %v72
  %v85 = vpack.c.b16 %v75, %v73
  %v86 = vpack.c.b16 %v78, %v76
  %v87 = vpack.c.b16 %v79, %v77
  %v88 = vpack.c.b16 %v80, %v80
  %v89 = vpack.c.b16 %v81, %v81
  %v130 = vunpack.c.l.b16 %v22
  %v131 = vunpack.c.l.b16 %v23
  %v132 = vunpack.c.l.b16 %v24
  %v133 = vunpack.c.l.b16 %v25
  %v134 = vunpack.c.l.b16 %v26
  %v135 = vunpack.c.l.b16 %v27
  %v136 = vunpack.c.l.b16 %v28
  %v137 = vunpack.c.l.b16 %v29
  %v138 = vunpack.c.l.b16 %v30
  %v139 = vunpack.c.l.b16 %v31
  %v140 = vunpack.c.l.b16 %v32
  %v141 = vunpack.c.l.b16 %v33
  %v142 = vunpack.c.l.b16 %v34
  %v143 = vunpack.c.l.b16 %v35
  %v144 = vunpack.c.l.b16 %v36
  %v145 = vunpack.c.l.b16 %v37
  %v146 = vunpack.c.l.b16 %v38
  %v147 = vunpack.c.l.b16 %v39
  %v148 = vunpack.c.l.b16 %v40
  %v149 = vunpack.c.l.b16 %v41
  %v150 = vunpack.c.l.b16 %v42
  %v151 = vunpack.c.l.b16 %v43
  %v152 = vunpack.c.l.b16 %v44
  %v153 = vunpack.c.l.b16 %v45
  %v154 = vunpack.c.l.b16 %v46
  %v155 = vunpack.c.l.b16 %v47
  %v156 = vunpack.c.l.b16 %v48
  %v157 = vunpack.c.l.b16 %v49
  %v158 = vunpack.c.l.b16 %v50
  %v159 = vunpack.c.l.b16 %v51
  %v160 = vunpack.c.l.b16 %v52
  %v161 = vunpack.c.l.b16 %v53
  %v162 = vpack.c.b16 %v131, %v130
  %v163 = vpack.c.b16 %v133, %v132
  %v164 = vpack.c.b16 %v135, %v134
  %v165 = vpack.c.b16 %v137, %v136
  %v166 = vpack.c.b16 %v139, %v138
  %v167 = vpack.c.b16 %v141, %v140
  %v168 = vpack.c.b16 %v143, %v142
  %v169 = vpack.c.b16 %v145, %v144
  %v170 = vpack.c.b16 %v147, %v146
  %v171 = vpack.c.b16 %v149, %v148
  %v172 = vpack.c.b16 %v151, %v150
  %v173 = vpack.c.b16 %v153, %v152
  %v174 = vpack.c.b16 %v155, %v154
  %v175 = vpack.c.b16 %v157, %v156
  %v176 = vpack.c.b16 %v159, %v158
  %v177 = vpack.c.b16 %v161, %v160
  %194 = vmatprep.subr.bf16.mxu0 0
  %195 = vmatpush1.bf16.msra.mxu0 %v169
  %196 = vmatprep.subr.bf16.mxu0 0
  %197 = vmatpush1.bf16.msra.mxu0 %v168
  %198 = vmatprep.subr.bf16.mxu0 0
  %199 = vmatpush1.bf16.msra.mxu0 %v167
  %200 = vmatprep.subr.bf16.mxu0 0
  %201 = vmatpush1.bf16.msra.mxu0 %v166
  %202 = vmatprep.subr.bf16.mxu0 0
  %203 = vmatpush1.bf16.msra.mxu0 %v165
  %204 = vmatprep.subr.bf16.mxu0 0
  %205 = vmatpush1.bf16.msra.mxu0 %v164
  %206 = vmatprep.subr.bf16.mxu0 0
  %207 = vmatpush1.bf16.msra.mxu0 %v163
  %208 = vmatprep.subr.bf16.mxu0 0
  %209 = vmatpush1.bf16.msra.mxu0 %v162
  %210 = vmatprep.subr.bf16.mxu0 0
  %211 = vmatpush2.bf16.msra.mxu0 %v177
  %212 = vmatprep.subr.bf16.mxu0 0
  %213 = vmatpush2.bf16.msra.mxu0 %v176
  %214 = vmatprep.subr.bf16.mxu0 0
  %215 = vmatpush2.bf16.msra.mxu0 %v175
  %216 = vmatprep.subr.bf16.mxu0 0
  %217 = vmatpush2.bf16.msra.mxu0 %v174
  %218 = vmatprep.subr.bf16.mxu0 0
  %219 = vmatpush2.bf16.msra.mxu0 %v173
  %220 = vmatprep.subr.bf16.mxu0 0
  %221 = vmatpush2.bf16.msra.mxu0 %v172
  %222 = vmatprep.subr.bf16.mxu0 0
  %223 = vmatpush2.bf16.msra.mxu0 %v171
  %224 = vmatprep.subr.bf16.mxu0 0
  %225 = vmatpush2.bf16.msra.mxu0 %v170
  %226 = vmatprep.mubr.bf16.mxu0 %v83
  %227 = vmatmul.mubr.bf16.gmra.mxu0 %v82
  %v228 = vpop.f32.mrf.mxu0
  %v229 = vadd.f32 %v59, %v228
  %v230 = vpop.f32.mrf.mxu0
  %v231 = vpop.f32.mrf.mxu0
  %v232 = vadd.f32 %v59, %v231
  %v233 = vpop.f32.mrf.mxu0
  %234 = vmatprep.mubr.bf16.mxu0 %v85
  %235 = vmatmul.mubr.bf16.gmra.mxu0 %v84
  %v236 = vpop.f32.mrf.mxu0
  %v237 = vadd.f32 %v59, %v236
  %v238 = vpop.f32.mrf.mxu0
  %v239 = vpop.f32.mrf.mxu0
  %v240 = vadd.f32 %v59, %v239
  %v241 = vpop.f32.mrf.mxu0
  %242 = vmatprep.mubr.bf16.mxu0 %v87
  %243 = vmatmul.mubr.bf16.gmra.mxu0 %v86
  %v244 = vpop.f32.mrf.mxu0
  %v245 = vadd.f32 %v59, %v244
  %v246 = vpop.f32.mrf.mxu0
  %v247 = vpop.f32.mrf.mxu0
  %v248 = vadd.f32 %v59, %v247
  %v249 = vpop.f32.mrf.mxu0
  %250 = vmatprep.mubr.bf16.mxu0 %v89
  %251 = vmatmul.mubr.bf16.gmra.mxu0 %v88
  %v252 = vpop.f32.mrf.mxu0
  %v253 = vadd.f32 %v59, %v252
  %v254 = vpop.f32.mrf.mxu0
  %v255 = vpop.f32.mrf.mxu0
  %v256 = vpop.f32.mrf.mxu0
  %257 = vdwg.mxu0
  %v258 = vmax.f32 %v229, 0.0
  %v259 = vmax.f32 %v232, 0.0
  %v260 = vmax.f32 %v237, 0.0
  %v261 = vmax.f32 %v240, 0.0
  %v262 = vmax.f32 %v245, 0.0
  %v263 = vmax.f32 %v248, 0.0
  %v264 = vmax.f32 %v253, 0.0
  %v265 = vpack.c.bf16 %v259, %v258
  %v266 = vpack.c.bf16 %v261, %v260
  %v267 = vpack.c.bf16 %v263, %v262
  %v268 = vpack.c.bf16 %v264, %v264
  %v273 = vunpack.c.l.b16 %v265
  %v274 = vunpack.c.h.b16 %v265
  %v275 = vunpack.c.l.b16 %v266
  %v276 = vunpack.c.h.b16 %v266
  %v277 = vunpack.c.l.b16 %v267
  %v278 = vunpack.c.h.b16 %v267
  %v279 = vunpack.c.l.b16 %v268
  %v280 = vpack.c.b16 %v273, %v273
  %v281 = vpack.c.b16 %v274, %v274
  %v282 = vpack.c.b16 %v275, %v275
  %v283 = vpack.c.b16 %v276, %v276
  %v284 = vpack.c.b16 %v277, %v277
  %v285 = vpack.c.b16 %v278, %v278
  %v286 = vpack.c.b16 %v279, %v279
  %vm294 = vcmask 257024
  %295 = vst.msk [vmem:[%s3] sm:$0xf] %vm294, %v280
  %296 = vst.msk [vmem:[%s3 + $0x4] sm:$0xf] %vm294, %v281
  %297 = vst.msk [vmem:[%s3 + $0x8] sm:$0xf] %vm294, %v282
  %298 = vst.msk [vmem:[%s3 + $0xc] sm:$0xf] %vm294, %v283
  %299 = vst.msk [vmem:[%s3 + $0x10] sm:$0xf] %vm294, %v284
  %300 = vst.msk [vmem:[%s3 + $0x14] sm:$0xf] %vm294, %v285
  %vm301 = vcmask 253952
  %302 = vst.msk [vmem:[%s3 + $0x18] sm:$0x1] %vm301, %v286
  // Predicated region
  $region14: #{ensemble_forward.18} parent=0 // pred_check
    _
  $region15: #{ensemble_forward.18} parent=0 // pred_check_branch
    %304 = sbr.rel (0) target = $region17
  $region16: #{ensemble_forward.18} parent=0 // pred_region
    _
  $region17: #{ensemble_forward.18} parent=0 // pred_fallthru
    _
  // Predicated region
  $region18: #{ensemble_forward.18} parent=0 // pred_check
    _
  $region19: #{ensemble_forward.18} parent=0 // pred_check_branch
    %306 = sbr.rel (0) target = $region21
  $region20: #{ensemble_forward.18} parent=0 // pred_region
    _
  $region21: #{ensemble_forward.18} parent=0 // pred_fallthru
    _

// kernel: ensemble_forward.19
$region0: #{ensemble_forward.19}
  #allocation0 [shape = 'u32[]', space=smem, size = 0x4, offset = 0x4, fixed_abs, tag = 'smem constant byte address 0x4 - core index']
  #allocation1 [shape = 'u32[144,128]{1,0:T(1,128)}', space=vmem, size = 0x12000, scoped, tag = 'internal scratch']
  %s0 = inlined_call_operand.vmem [shape: bf16[1,18,288], index: 0, kind: input, shape index: {}]
  %s1 = inlined_call_operand.vmem [shape: bf16[1,288,32], index: 1, kind: input, shape index: {}]
  %s2 = inlined_call_operand.vmem [shape: f32[1,1,32], index: 2, kind: input, shape index: {}]
  %s3 = inlined_call_operand.vmem [shape: bf16[1,18,32], index: 3, kind: output, shape index: {}]
  %s4 = sld [smem:[#allocation0]]
  $region22: #{ensemble_forward.19} parent=0
    _
  %s6 = ssub.s32 1, %s4
  %s7 = scalar_select 0, %s6, %s4
  // Predicated region
  $region2: #{ensemble_forward.19} parent=0 // pred_check
    _
  $region3: #{ensemble_forward.19} parent=0 // pred_check_branch
    %9 = sbr.rel (0) target = $region5
  $region4: #{ensemble_forward.19} parent=0 // pred_region
    _
  $region5: #{ensemble_forward.19} parent=0 // pred_fallthru
    _
  // Predicated region
  $region6: #{ensemble_forward.19} parent=0 // pred_check
    _
  $region7: #{ensemble_forward.19} parent=0 // pred_check_branch
    %11 = sbr.rel (0) target = $region9
  $region8: #{ensemble_forward.19} parent=0 // pred_region
    _
  $region9: #{ensemble_forward.19} parent=0 // pred_fallthru
    _
  // Predicated region
  $region10: #{ensemble_forward.19} parent=0 // pred_check
    _
  $region11: #{ensemble_forward.19} parent=0 // pred_check_branch
    %13 = sbr.rel (0) target = $region13
  $region12: #{ensemble_forward.19} parent=0 // pred_region
    _
  $region13: #{ensemble_forward.19} parent=0 // pred_fallthru
    _
  %v15 = vld [vmem:[%s0] sm:$0xff]
  %v16 = vld [vmem:[%s0 + $0x8] sm:$0xf]
  %v17 = vld [vmem:[%s0 + $0xc] sm:$0xff]
  %v18 = vld [vmem:[%s0 + $0x14] sm:$0xf]
  %v19 = vld [vmem:[%s0 + $0x18] sm:$0x11]
  %v20 = vld [vmem:[%s0 + $0x20] sm:$0x1]
  %v21 = vld [vmem:[%s1] sm:$0xf]
  %v22 = vld [vmem:[%s1 + $0x4] sm:$0xf]
  %v23 = vld [vmem:[%s1 + $0x8] sm:$0xf]
  %v24 = vld [vmem:[%s1 + $0xc] sm:$0xf]
  %v25 = vld [vmem:[%s1 + $0x10] sm:$0xf]
  %v26 = vld [vmem:[%s1 + $0x14] sm:$0xf]
  %v27 = vld [vmem:[%s1 + $0x18] sm:$0xf]
  %v28 = vld [vmem:[%s1 + $0x1c] sm:$0xf]
  %v29 = vld [vmem:[%s1 + $0x20] sm:$0xf]
  %v30 = vld [vmem:[%s1 + $0x24] sm:$0xf]
  %v31 = vld [vmem:[%s1 + $0x28] sm:$0xf]
  %v32 = vld [vmem:[%s1 + $0x2c] sm:$0xf]
  %v33 = vld [vmem:[%s1 + $0x30] sm:$0xf]
  %v34 = vld [vmem:[%s1 + $0x34] sm:$0xf]
  %v35 = vld [vmem:[%s1 + $0x38] sm:$0xf]
  %v36 = vld [vmem:[%s1 + $0x3c] sm:$0xf]
  %v37 = vld [vmem:[%s1 + $0x40] sm:$0xf]
  %v38 = vld [vmem:[%s1 + $0x44] sm:$0xf]
  %v39 = vld [vmem:[%s1 + $0x48] sm:$0xf]
  %v40 = vld [vmem:[%s1 + $0x4c] sm:$0xf]
  %v41 = vld [vmem:[%s1 + $0x50] sm:$0xf]
  %v42 = vld [vmem:[%s1 + $0x54] sm:$0xf]
  %v43 = vld [vmem:[%s1 + $0x58] sm:$0xf]
  %v44 = vld [vmem:[%s1 + $0x5c] sm:$0xf]
  %v45 = vld [vmem:[%s1 + $0x60] sm:$0xf]
  %v46 = vld [vmem:[%s1 + $0x64] sm:$0xf]
  %v47 = vld [vmem:[%s1 + $0x68] sm:$0xf]
  %v48 = vld [vmem:[%s1 + $0x6c] sm:$0xf]
  %v49 = vld [vmem:[%s1 + $0x70] sm:$0xf]
  %v50 = vld [vmem:[%s1 + $0x74] sm:$0xf]
  %v51 = vld [vmem:[%s1 + $0x78] sm:$0xf]
  %v52 = vld [vmem:[%s1 + $0x7c] sm:$0xf]
  %v53 = vld [vmem:[%s1 + $0x80] sm:$0xf]
  %v54 = vld [vmem:[%s1 + $0x84] sm:$0xf]
  %v55 = vld [vmem:[%s1 + $0x88] sm:$0xf]
  %v56 = vld [vmem:[%s1 + $0x8c] sm:$0xf]
  %v57 = vld [vmem:[%s2] sm:$0x1]
  %v59 = vlaneseq
  %v60 = vshrl.u32 %v59, 7
  %v61 = vsub.s32 0, %v60
  %v62 = vrot.slane %v57, %v61
  %v70 = vunpack.c.l.b16 %v15
  %v71 = vunpack.c.h.b16 %v15
  %v72 = vunpack.c.l.b16 %v16
  %v73 = vunpack.c.l.b16 %v17
  %v74 = vunpack.c.h.b16 %v17
  %v75 = vunpack.c.l.b16 %v18
  %v76 = vunpack.c.l.b16 %v19
  %v77 = vunpack.c.h.b16 %v19
  %v78 = vunpack.c.l.b16 %v20
  %v79 = vpack.c.b16 %v73, %v70
  %v80 = vpack.c.b16 %v74, %v71
  %v81 = vpack.c.b16 %v75, %v72
  %v82 = vpack.c.b16 %v76, %v76
  %v83 = vpack.c.b16 %v77, %v77
  %v84 = vpack.c.b16 %v78, %v78
  %v125 = vunpack.c.l.b16 %v21
  %v126 = vunpack.c.l.b16 %v22
  %v127 = vunpack.c.l.b16 %v23
  %v128 = vunpack.c.l.b16 %v24
  %v129 = vunpack.c.l.b16 %v25
  %v130 = vunpack.c.l.b16 %v26
  %v131 = vunpack.c.l.b16 %v27
  %v132 = vunpack.c.l.b16 %v28
  %v133 = vunpack.c.l.b16 %v29
  %v134 = vunpack.c.l.b16 %v30
  %v135 = vunpack.c.l.b16 %v31
  %v136 = vunpack.c.l.b16 %v32
  %v137 = vunpack.c.l.b16 %v33
  %v138 = vunpack.c.l.b16 %v34
  %v139 = vunpack.c.l.b16 %v35
  %v140 = vunpack.c.l.b16 %v36
  %v141 = vunpack.c.l.b16 %v37
  %v142 = vunpack.c.l.b16 %v38
  %v143 = vunpack.c.l.b16 %v39
  %v144 = vunpack.c.l.b16 %v40
  %v145 = vunpack.c.l.b16 %v41
  %v146 = vunpack.c.l.b16 %v42
  %v147 = vunpack.c.l.b16 %v43
  %v148 = vunpack.c.l.b16 %v44
  %v149 = vunpack.c.l.b16 %v45
  %v150 = vunpack.c.l.b16 %v46
  %v151 = vunpack.c.l.b16 %v47
  %v152 = vunpack.c.l.b16 %v48
  %v153 = vunpack.c.l.b16 %v49
  %v154 = vunpack.c.l.b16 %v50
  %v155 = vunpack.c.l.b16 %v51
  %v156 = vunpack.c.l.b16 %v52
  %v157 = vunpack.c.l.b16 %v53
  %v158 = vunpack.c.l.b16 %v54
  %v159 = vunpack.c.l.b16 %v55
  %v160 = vunpack.c.l.b16 %v56
  %v161 = vpack.c.b16 %v126, %v125
  %v162 = vpack.c.b16 %v128, %v127
  %v163 = vpack.c.b16 %v130, %v129
  %v164 = vpack.c.b16 %v132, %v131
  %v165 = vpack.c.b16 %v134, %v133
  %v166 = vpack.c.b16 %v136, %v135
  %v167 = vpack.c.b16 %v138, %v137
  %v168 = vpack.c.b16 %v140, %v139
  %v169 = vpack.c.b16 %v142, %v141
  %v170 = vpack.c.b16 %v144, %v143
  %v171 = vpack.c.b16 %v146, %v145
  %v172 = vpack.c.b16 %v148, %v147
  %v173 = vpack.c.b16 %v150, %v149
  %v174 = vpack.c.b16 %v152, %v151
  %v175 = vpack.c.b16 %v154, %v153
  %v176 = vpack.c.b16 %v156, %v155
  %v177 = vpack.c.b16 %v158, %v157
  %v178 = vpack.c.b16 %v160, %v159
  %vm197 = vcmask 261120
  %v199 = vsel %vm197, %v81, 0
  %v202 = vsel %vm197, %v84, 0
  %204 = vmatprep.subr.bf16.mxu0 0
  %205 = vmatpush1.bf16.msra.mxu0 %v168
  %206 = vmatprep.subr.bf16.mxu0 0
  %207 = vmatpush1.bf16.msra.mxu0 %v167
  %208 = vmatprep.subr.bf16.mxu0 0
  %209 = vmatpush1.bf16.msra.mxu0 %v166
  %210 = vmatprep.subr.bf16.mxu0 0
  %211 = vmatpush1.bf16.msra.mxu0 %v165
  %212 = vmatprep.subr.bf16.mxu0 0
  %213 = vmatpush1.bf16.msra.mxu0 %v164
  %214 = vmatprep.subr.bf16.mxu0 0
  %215 = vmatpush1.bf16.msra.mxu0 %v163
  %216 = vmatprep.subr.bf16.mxu0 0
  %217 = vmatpush1.bf16.msra.mxu0 %v162
  %218 = vmatprep.subr.bf16.mxu0 0
  %219 = vmatpush1.bf16.msra.mxu0 %v161
  %220 = vmatprep.subr.bf16.mxu0 0
  %221 = vmatpush2.bf16.msra.mxu0 %v176
  %222 = vmatprep.subr.bf16.mxu0 0
  %223 = vmatpush2.bf16.msra.mxu0 %v175
  %224 = vmatprep.subr.bf16.mxu0 0
  %225 = vmatpush2.bf16.msra.mxu0 %v174
  %226 = vmatprep.subr.bf16.mxu0 0
  %227 = vmatpush2.bf16.msra.mxu0 %v173
  %228 = vmatprep.subr.bf16.mxu0 0
  %229 = vmatpush2.bf16.msra.mxu0 %v172
  %230 = vmatprep.subr.bf16.mxu0 0
  %231 = vmatpush2.bf16.msra.mxu0 %v171
  %232 = vmatprep.subr.bf16.mxu0 0
  %233 = vmatpush2.bf16.msra.mxu0 %v170
  %234 = vmatprep.subr.bf16.mxu0 0
  %235 = vmatpush2.bf16.msra.mxu0 %v169
  %236 = vmatprep.mubr.bf16.mxu0 %v80
  %237 = vmatmul.mubr.bf16.gmra.mxu0 %v79
  %v238 = vpop.f32.mrf.mxu0
  %v239 = vadd.f32 %v62, %v238
  %v240 = vpop.f32.mrf.mxu0
  %v241 = vpop.f32.mrf.mxu0
  %v242 = vadd.f32 %v62, %v241
  %v243 = vpop.f32.mrf.mxu0
  %244 = vmatprep.mubr.bf16.mxu0 %v83
  %245 = vmatmul.mubr.bf16.gmra.mxu0 %v82
  %v246 = vpop.f32.mrf.mxu0
  %v247 = vadd.f32 %v62, %v246
  %v248 = vpop.f32.mrf.mxu0
  %v249 = vpop.f32.mrf.mxu0
  %v250 = vpop.f32.mrf.mxu0
  %251 = vdwg.mxu0
  %252 = vmatprep.subr.bf16.mxu0 0
  %253 = vmatpush1.bf16.msra.mxu0 0
  %254 = vmatprep.subr.bf16.mxu0 0
  %255 = vmatpush1.bf16.msra.mxu0 0
  %256 = vmatprep.subr.bf16.mxu0 0
  %257 = vmatpush1.bf16.msra.mxu0 0
  %258 = vmatprep.subr.bf16.mxu0 0
  %259 = vmatpush1.bf16.msra.mxu0 0
  %260 = vmatprep.subr.bf16.mxu0 0
  %261 = vmatpush1.bf16.msra.mxu0 0
  %262 = vmatprep.subr.bf16.mxu0 0
  %263 = vmatpush1.bf16.msra.mxu0 0
  %264 = vmatprep.subr.bf16.mxu0 0
  %265 = vmatpush1.bf16.msra.mxu0 %v178
  %266 = vmatprep.subr.bf16.mxu0 0
  %267 = vmatpush1.bf16.msra.mxu0 %v177
  %268 = vmatprep.subr.bf16.mxu0 0
  %269 = vmatpush2.bf16.msra.mxu0 0
  %270 = vmatprep.subr.bf16.mxu0 0
  %271 = vmatpush2.bf16.msra.mxu0 0
  %272 = vmatprep.subr.bf16.mxu0 0
  %273 = vmatpush2.bf16.msra.mxu0 0
  %274 = vmatprep.subr.bf16.mxu0 0
  %275 = vmatpush2.bf16.msra.mxu0 0
  %276 = vmatprep.subr.bf16.mxu0 0
  %277 = vmatpush2.bf16.msra.mxu0 0
  %278 = vmatprep.subr.bf16.mxu0 0
  %279 = vmatpush2.bf16.msra.mxu0 0
  %280 = vmatprep.subr.bf16.mxu0 0
  %281 = vmatpush2.bf16.msra.mxu0 0
  %282 = vmatprep.subr.bf16.mxu0 0
  %283 = vmatpush2.bf16.msra.mxu0 0
  %284 = vmatprep.mubr.bf16.mxu0 0
  %285 = vmatmul.mubr.bf16.gmra.mxu0 %v199
  %v286 = vpop.f32.mrf.mxu0
  %v287 = vadd.f32 %v239, %v286
  %v288 = vpop.f32.mrf.mxu0
  %v289 = vpop.f32.mrf.mxu0
  %v290 = vadd.f32 %v242, %v289
  %v291 = vpop.f32.mrf.mxu0
  %292 = vmatprep.mubr.bf16.mxu0 0
  %293 = vmatmul.mubr.bf16.gmra.mxu0 %v202
  %v294 = vpop.f32.mrf.mxu0
  %v295 = vadd.f32 %v247, %v294
  %v296 = vpop.f32.mrf.mxu0
  %v297 = vpop.f32.mrf.mxu0
  %v298 = vpop.f32.mrf.mxu0
  %299 = vdwg.mxu0
  %v300 = vmax.f32 %v287, 0.0
  %v301 = vmax.f32 %v290, 0.0
  %v302 = vmax.f32 %v295, 0.0
  %v303 = vpack.c.bf16 %v301, %v300
  %v304 = vpack.c.bf16 %v302, %v302
  %v307 = vunpack.c.l.b16 %v303
  %v308 = vunpack.c.h.b16 %v303
  %v309 = vunpack.c.l.b16 %v304
  %v310 = vpack.c.b16 %v307, %v307
  %v311 = vpack.c.b16 %v308, %v308
  %v312 = vpack.c.b16 %v309, %v309
  %vm316 = vcmask 257024
  %317 = vst.msk [vmem:[%s3] sm:$0xf] %vm316, %v310
  %318 = vst.msk [vmem:[%s3 + $0x4] sm:$0xf] %vm316, %v311
  %vm319 = vcmask 253952
  %320 = vst.msk [vmem:[%s3 + $0x8] sm:$0x1] %vm319, %v312
  // Predicated region
  $region14: #{ensemble_forward.19} parent=0 // pred_check
    _
  $region15: #{ensemble_forward.19} parent=0 // pred_check_branch
    %322 = sbr.rel (0) target = $region17
  $region16: #{ensemble_forward.19} parent=0 // pred_region
    _
  $region17: #{ensemble_forward.19} parent=0 // pred_fallthru
    _
  // Predicated region
  $region18: #{ensemble_forward.19} parent=0 // pred_check
    _
  $region19: #{ensemble_forward.19} parent=0 // pred_check_branch
    %324 = sbr.rel (0) target = $region21
  $region20: #{ensemble_forward.19} parent=0 // pred_region
    _
  $region21: #{ensemble_forward.19} parent=0 // pred_fallthru
    _

// kernel: ensemble_forward.20
$region0: #{ensemble_forward.20}
  #allocation0 [shape = 'u32[]', space=smem, size = 0x4, offset = 0x4, fixed_abs, tag = 'smem constant byte address 0x4 - core index']
  #allocation1 [shape = 'u32[144,128]{1,0:T(1,128)}', space=vmem, size = 0x12000, scoped, tag = 'internal scratch']
  %s0 = inlined_call_operand.vmem [shape: bf16[1,2,288], index: 0, kind: input, shape index: {}]
  %s1 = inlined_call_operand.vmem [shape: bf16[1,288,256], index: 1, kind: input, shape index: {}]
  %s2 = inlined_call_operand.vmem [shape: f32[1,1,256], index: 2, kind: input, shape index: {}]
  %s3 = inlined_call_operand.vmem [shape: bf16[1,256,6], index: 3, kind: input, shape index: {}]
  %s4 = inlined_call_operand.vmem [shape: f32[1,1,6], index: 4, kind: input, shape index: {}]
  %s5 = inlined_call_operand.vmem [shape: f32[1,2,6], index: 5, kind: output, shape index: {}]
  %s6 = sld [smem:[#allocation0]]
  $region30: #{ensemble_forward.20} parent=0
    _
  %s8 = ssub.s32 1, %s6
  %s9 = scalar_select 0, %s8, %s6
  // Predicated region
  $region2: #{ensemble_forward.20} parent=0 // pred_check
    _
  $region3: #{ensemble_forward.20} parent=0 // pred_check_branch
    %11 = sbr.rel (0) target = $region5
  $region4: #{ensemble_forward.20} parent=0 // pred_region
    _
  $region5: #{ensemble_forward.20} parent=0 // pred_fallthru
    _
  // Predicated region
  $region6: #{ensemble_forward.20} parent=0 // pred_check
    _
  $region7: #{ensemble_forward.20} parent=0 // pred_check_branch
    %13 = sbr.rel (0) target = $region9
  $region8: #{ensemble_forward.20} parent=0 // pred_region
    _
  $region9: #{ensemble_forward.20} parent=0 // pred_fallthru
    _
  // Predicated region
  $region10: #{ensemble_forward.20} parent=0 // pred_check
    _
  $region11: #{ensemble_forward.20} parent=0 // pred_check_branch
    %15 = sbr.rel (0) target = $region13
  $region12: #{ensemble_forward.20} parent=0 // pred_region
    _
  $region13: #{ensemble_forward.20} parent=0 // pred_fallthru
    _
  // Predicated region
  $region14: #{ensemble_forward.20} parent=0 // pred_check
    _
  $region15: #{ensemble_forward.20} parent=0 // pred_check_branch
    %17 = sbr.rel (0) target = $region17
  $region16: #{ensemble_forward.20} parent=0 // pred_region
    _
  $region17: #{ensemble_forward.20} parent=0 // pred_fallthru
    _
  // Predicated region
  $region18: #{ensemble_forward.20} parent=0 // pred_check
    _
  $region19: #{ensemble_forward.20} parent=0 // pred_check_branch
    %19 = sbr.rel (0) target = $region21
  $region20: #{ensemble_forward.20} parent=0 // pred_region
    _
  $region21: #{ensemble_forward.20} parent=0 // pred_fallthru
    _
  %v21 = vld [vmem:[%s0] sm:$0x7]
  %v22 = vld [vmem:[%s1] sm:$0xff]
  %v23 = vld [vmem:[%s1 + $0x8] sm:$0xff]
  %v24 = vld [vmem:[%s1 + $0x10] sm:$0xff]
  %v25 = vld [vmem:[%s1 + $0x18] sm:$0xff]
  %v26 = vld [vmem:[%s1 + $0x20] sm:$0xff]
  %v27 = vld [vmem:[%s1 + $0x28] sm:$0xff]
  %v28 = vld [vmem:[%s1 + $0x30] sm:$0xff]
  %v29 = vld [vmem:[%s1 + $0x38] sm:$0xff]
  %v30 = vld [vmem:[%s1 + $0x40] sm:$0xff]
  %v31 = vld [vmem:[%s1 + $0x48] sm:$0xff]
  %v32 = vld [vmem:[%s1 + $0x50] sm:$0xff]
  %v33 = vld [vmem:[%s1 + $0x58] sm:$0xff]
  %v34 = vld [vmem:[%s1 + $0x60] sm:$0xff]
  %v35 = vld [vmem:[%s1 + $0x68] sm:$0xff]
  %v36 = vld [vmem:[%s1 + $0x70] sm:$0xff]
  %v37 = vld [vmem:[%s1 + $0x78] sm:$0xff]
  %v38 = vld [vmem:[%s1 + $0x80] sm:$0xff]
  %v39 = vld [vmem:[%s1 + $0x88] sm:$0xff]
  %v40 = vld [vmem:[%s1 + $0x90] sm:$0xff]
  %v41 = vld [vmem:[%s1 + $0x98] sm:$0xff]
  %v42 = vld [vmem:[%s1 + $0xa0] sm:$0xff]
  %v43 = vld [vmem:[%s1 + $0xa8] sm:$0xff]
  %v44 = vld [vmem:[%s1 + $0xb0] sm:$0xff]
  %v45 = vld [vmem:[%s1 + $0xb8] sm:$0xff]
  %v46 = vld [vmem:[%s1 + $0xc0] sm:$0xff]
  %v47 = vld [vmem:[%s1 + $0xc8] sm:$0xff]
  %v48 = vld [vmem:[%s1 + $0xd0] sm:$0xff]
  %v49 = vld [vmem:[%s1 + $0xd8] sm:$0xff]
  %v50 = vld [vmem:[%s1 + $0xe0] sm:$0xff]
  %v51 = vld [vmem:[%s1 + $0xe8] sm:$0xff]
  %v52 = vld [vmem:[%s1 + $0xf0] sm:$0xff]
  %v53 = vld [vmem:[%s1 + $0xf8] sm:$0xff]
  %v54 = vld [vmem:[%s1 + $0x100] sm:$0xff]
  %v55 = vld [vmem:[%s1 + $0x108] sm:$0xff]
  %v56 = vld [vmem:[%s1 + $0x110] sm:$0xff]
  %v57 = vld [vmem:[%s1 + $0x118] sm:$0xff]
  %v58 = vld [vmem:[%s2] sm:$0x3]
  %v60 = vlaneseq
  %v61 = vshrl.u32 %v60, 7
  %v62 = vsub.s32 0, %v61
  %v63 = vrot.slane %v58, %v62
  %v64 = vlaneseq
  %v65 = vshrl.u32 %v64, 7
  %v66 = vsub.s32 1, %v65
  %v67 = vrot.slane %v58, %v66
  %v72 = vunpack.c.l.s4 1966171168
  %v73 = vunpack.c.0.s8 %v72
  %v74 = vlaneseq
  %v75 = vshrl.u32 %v74, 7
  %v76 = vsub.s32 %v73, %v75
  %v77 = vrot.slane %v21, %v76
  %v78 = vcombine.high %v77, %v77
  %v80 = vunpack.c.l.s4 1966171168
  %v81 = vunpack.c.0.s8 %v80
  %v82 = vlaneseq
  %v83 = vshrl.u32 %v82, 7
  %v84 = vsub.s32 %v81, %v83
  %v85 = vrot.slane %v77, %v84
  %v87 = vunpack.c.l.s4 1966171168
  %v88 = vunpack.c.0.s8 %v87
  %v89 = vlaneseq
  %v90 = vshrl.u32 %v89, 7
  %v91 = vsub.s32 %v88, %v90
  %v92 = vrot.slane %v78, %v91
  %v93 = vcombine.high %v85, %v85
  %v132 = vunpack.c.l.b16 %v22
  %v133 = vunpack.c.h.b16 %v22
  %v134 = vunpack.c.l.b16 %v23
  %v135 = vunpack.c.h.b16 %v23
  %v136 = vunpack.c.l.b16 %v24
  %v137 = vunpack.c.h.b16 %v24
  %v138 = vunpack.c.l.b16 %v25
  %v139 = vunpack.c.h.b16 %v25
  %v140 = vunpack.c.l.b16 %v26
  %v141 = vunpack.c.h.b16 %v26
  %v142 = vunpack.c.l.b16 %v27
  %v143 = vunpack.c.h.b16 %v27
  %v144 = vunpack.c.l.b16 %v28
  %v145 = vunpack.c.h.b16 %v28
  %v146 = vunpack.c.l.b16 %v29
  %v147 = vunpack.c.h.b16 %v29
  %v148 = vunpack.c.l.b16 %v30
  %v149 = vunpack.c.h.b16 %v30
  %v150 = vunpack.c.l.b16 %v31
  %v151 = vunpack.c.h.b16 %v31
  %v152 = vunpack.c.l.b16 %v32
  %v153 = vunpack.c.h.b16 %v32
  %v154 = vunpack.c.l.b16 %v33
  %v155 = vunpack.c.h.b16 %v33
  %v156 = vunpack.c.l.b16 %v34
  %v157 = vunpack.c.h.b16 %v34
  %v158 = vunpack.c.l.b16 %v35
  %v159 = vunpack.c.h.b16 %v35
  %v160 = vunpack.c.l.b16 %v36
  %v161 = vunpack.c.h.b16 %v36
  %v162 = vunpack.c.l.b16 %v37
  %v163 = vunpack.c.h.b16 %v37
  %v164 = vunpack.c.l.b16 %v38
  %v165 = vunpack.c.h.b16 %v38
  %v166 = vunpack.c.l.b16 %v39
  %v167 = vunpack.c.h.b16 %v39
  %v168 = vunpack.c.l.b16 %v40
  %v169 = vunpack.c.h.b16 %v40
  %v170 = vunpack.c.l.b16 %v41
  %v171 = vunpack.c.h.b16 %v41
  %v172 = vunpack.c.l.b16 %v42
  %v173 = vunpack.c.h.b16 %v42
  %v174 = vunpack.c.l.b16 %v43
  %v175 = vunpack.c.h.b16 %v43
  %v176 = vunpack.c.l.b16 %v44
  %v177 = vunpack.c.h.b16 %v44
  %v178 = vunpack.c.l.b16 %v45
  %v179 = vunpack.c.h.b16 %v45
  %v180 = vunpack.c.l.b16 %v46
  %v181 = vunpack.c.h.b16 %v46
  %v182 = vunpack.c.l.b16 %v47
  %v183 = vunpack.c.h.b16 %v47
  %v184 = vunpack.c.l.b16 %v48
  %v185 = vunpack.c.h.b16 %v48
  %v186 = vunpack.c.l.b16 %v49
  %v187 = vunpack.c.h.b16 %v49
  %v188 = vunpack.c.l.b16 %v50
  %v189 = vunpack.c.h.b16 %v50
  %v190 = vunpack.c.l.b16 %v51
  %v191 = vunpack.c.h.b16 %v51
  %v192 = vunpack.c.l.b16 %v52
  %v193 = vunpack.c.h.b16 %v52
  %v194 = vunpack.c.l.b16 %v53
  %v195 = vunpack.c.h.b16 %v53
  %v196 = vunpack.c.l.b16 %v54
  %v197 = vunpack.c.h.b16 %v54
  %v198 = vunpack.c.l.b16 %v55
  %v199 = vunpack.c.h.b16 %v55
  %v200 = vunpack.c.l.b16 %v56
  %v201 = vunpack.c.h.b16 %v56
  %v202 = vunpack.c.l.b16 %v57
  %v203 = vunpack.c.h.b16 %v57
  %v204 = vpack.c.b16 %v134, %v132
  %v205 = vpack.c.b16 %v135, %v133
  %v206 = vpack.c.b16 %v138, %v136
  %v207 = vpack.c.b16 %v139, %v137
  %v208 = vpack.c.b16 %v142, %v140
  %v209 = vpack.c.b16 %v143, %v141
  %v210 = vpack.c.b16 %v146, %v144
  %v211 = vpack.c.b16 %v147, %v145
  %v212 = vpack.c.b16 %v150, %v148
  %v213 = vpack.c.b16 %v151, %v149
  %v214 = vpack.c.b16 %v154, %v152
  %v215 = vpack.c.b16 %v155, %v153
  %v216 = vpack.c.b16 %v158, %v156
  %v217 = vpack.c.b16 %v159, %v157
  %v218 = vpack.c.b16 %v162, %v160
  %v219 = vpack.c.b16 %v163, %v161
  %v220 = vpack.c.b16 %v166, %v164
  %v221 = vpack.c.b16 %v167, %v165
  %v222 = vpack.c.b16 %v170, %v168
  %v223 = vpack.c.b16 %v171, %v169
  %v224 = vpack.c.b16 %v174, %v172
  %v225 = vpack.c.b16 %v175, %v173
  %v226 = vpack.c.b16 %v178, %v176
  %v227 = vpack.c.b16 %v179, %v177
  %v228 = vpack.c.b16 %v182, %v180
  %v229 = vpack.c.b16 %v183, %v181
  %v230 = vpack.c.b16 %v186, %v184
  %v231 = vpack.c.b16 %v187, %v185
  %v232 = vpack.c.b16 %v190, %v188
  %v233 = vpack.c.b16 %v191, %v189
  %v234 = vpack.c.b16 %v194, %v192
  %v235 = vpack.c.b16 %v195, %v193
  %v236 = vpack.c.b16 %v198, %v196
  %v237 = vpack.c.b16 %v199, %v197
  %v238 = vpack.c.b16 %v202, %v200
  %v239 = vpack.c.b16 %v203, %v201
  %vm276 = vcmask 261120
  %v278 = vsel %vm276, %v93, 0
  %280 = vmatprep.subr.bf16.mxu0 %v219
  %281 = vmatpush1.bf16.msra.mxu0 %v218
  %282 = vmatprep.subr.bf16.mxu0 %v217
  %283 = vmatpush1.bf16.msra.mxu0 %v216
  %284 = vmatprep.subr.bf16.mxu0 %v215
  %285 = vmatpush1.bf16.msra.mxu0 %v214
  %286 = vmatprep.subr.bf16.mxu0 %v213
  %287 = vmatpush1.bf16.msra.mxu0 %v212
  %288 = vmatprep.subr.bf16.mxu0 %v211
  %289 = vmatpush1.bf16.msra.mxu0 %v210
  %290 = vmatprep.subr.bf16.mxu0 %v209
  %291 = vmatpush1.bf16.msra.mxu0 %v208
  %292 = vmatprep.subr.bf16.mxu0 %v207
  %293 = vmatpush1.bf16.msra.mxu0 %v206
  %294 = vmatprep.subr.bf16.mxu0 %v205
  %295 = vmatpush1.bf16.msra.mxu0 %v204
  %296 = vmatprep.subr.bf16.mxu0 %v235
  %297 = vmatpush2.bf16.msra.mxu0 %v234
  %298 = vmatprep.subr.bf16.mxu0 %v233
  %299 = vmatpush2.bf16.msra.mxu0 %v232
  %300 = vmatprep.subr.bf16.mxu0 %v231
  %301 = vmatpush2.bf16.msra.mxu0 %v230
  %302 = vmatprep.subr.bf16.mxu0 %v229
  %303 = vmatpush2.bf16.msra.mxu0 %v228
  %304 = vmatprep.subr.bf16.mxu0 %v227
  %305 = vmatpush2.bf16.msra.mxu0 %v226
  %306 = vmatprep.subr.bf16.mxu0 %v225
  %307 = vmatpush2.bf16.msra.mxu0 %v224
  %308 = vmatprep.subr.bf16.mxu0 %v223
  %309 = vmatpush2.bf16.msra.mxu0 %v222
  %310 = vmatprep.subr.bf16.mxu0 %v221
  %311 = vmatpush2.bf16.msra.mxu0 %v220
  %312 = vmatprep.mubr.bf16.mxu0 %v92
  %313 = vmatmul.mubr.bf16.gmra.mxu0 %v85
  %v314 = vpop.f32.mrf.mxu0
  %v315 = vadd.f32 %v63, %v314
  %v316 = vpop.f32.mrf.mxu0
  %v317 = vadd.f32 %v67, %v316
  %v318 = vpop.f32.mrf.mxu0
  %v319 = vpop.f32.mrf.mxu0
  %320 = vdwg.mxu0
  %321 = vmatprep.subr.bf16.mxu0 0
  %322 = vmatpush1.bf16.msra.mxu0 0
  %323 = vmatprep.subr.bf16.mxu0 0
  %324 = vmatpush1.bf16.msra.mxu0 0
  %325 = vmatprep.subr.bf16.mxu0 0
  %326 = vmatpush1.bf16.msra.mxu0 0
  %327 = vmatprep.subr.bf16.mxu0 0
  %328 = vmatpush1.bf16.msra.mxu0 0
  %329 = vmatprep.subr.bf16.mxu0 0
  %330 = vmatpush1.bf16.msra.mxu0 0
  %331 = vmatprep.subr.bf16.mxu0 0
  %332 = vmatpush1.bf16.msra.mxu0 0
  %333 = vmatprep.subr.bf16.mxu0 %v239
  %334 = vmatpush1.bf16.msra.mxu0 %v238
  %335 = vmatprep.subr.bf16.mxu0 %v237
  %336 = vmatpush1.bf16.msra.mxu0 %v236
  %337 = vmatprep.subr.bf16.mxu0 0
  %338 = vmatpush2.bf16.msra.mxu0 0
  %339 = vmatprep.subr.bf16.mxu0 0
  %340 = vmatpush2.bf16.msra.mxu0 0
  %341 = vmatprep.subr.bf16.mxu0 0
  %342 = vmatpush2.bf16.msra.mxu0 0
  %343 = vmatprep.subr.bf16.mxu0 0
  %344 = vmatpush2.bf16.msra.mxu0 0
  %345 = vmatprep.subr.bf16.mxu0 0
  %346 = vmatpush2.bf16.msra.mxu0 0
  %347 = vmatprep.subr.bf16.mxu0 0
  %348 = vmatpush2.bf16.msra.mxu0 0
  %349 = vmatprep.subr.bf16.mxu0 0
  %350 = vmatpush2.bf16.msra.mxu0 0
  %351 = vmatprep.subr.bf16.mxu0 0
  %352 = vmatpush2.bf16.msra.mxu0 0
  %353 = vmatprep.mubr.bf16.mxu0 0
  %354 = vmatmul.mubr.bf16.gmra.mxu0 %v278
  %v355 = vpop.f32.mrf.mxu0
  %v356 = vadd.f32 %v315, %v355
  %v357 = vpop.f32.mrf.mxu0
  %v358 = vadd.f32 %v317, %v357
  %v359 = vpop.f32.mrf.mxu0
  %v360 = vpop.f32.mrf.mxu0
  %361 = vdwg.mxu0
  %v362 = vmax.f32 %v356, 0.0
  %v363 = vmax.f32 %v358, 0.0
  %v364 = vpack.c.bf16 %v362, %v362
  %v365 = vpack.c.bf16 %v363, %v363
  %v366 = vld [vmem:[%s3] sm:$0xf]
  %v367 = vld [vmem:[%s3 + $0x4] sm:$0xf]
  %v368 = vld [vmem:[%s3 + $0x8] sm:$0xf]
  %v369 = vld [vmem:[%s3 + $0xc] sm:$0xf]
  %v370 = vld [vmem:[%s3 + $0x10] sm:$0xf]
  %v371 = vld [vmem:[%s3 + $0x14] sm:$0xf]
  %v372 = vld [vmem:[%s3 + $0x18] sm:$0xf]
  %v373 = vld [vmem:[%s3 + $0x1c] sm:$0xf]
  %v374 = vld [vmem:[%s3 + $0x20] sm:$0xf]
  %v375 = vld [vmem:[%s3 + $0x24] sm:$0xf]
  %v376 = vld [vmem:[%s3 + $0x28] sm:$0xf]
  %v377 = vld [vmem:[%s3 + $0x2c] sm:$0xf]
  %v378 = vld [vmem:[%s3 + $0x30] sm:$0xf]
  %v379 = vld [vmem:[%s3 + $0x34] sm:$0xf]
  %v380 = vld [vmem:[%s3 + $0x38] sm:$0xf]
  %v381 = vld [vmem:[%s3 + $0x3c] sm:$0xf]
  %v382 = vld [vmem:[%s3 + $0x40] sm:$0xf]
  %v383 = vld [vmem:[%s3 + $0x44] sm:$0xf]
  %v384 = vld [vmem:[%s3 + $0x48] sm:$0xf]
  %v385 = vld [vmem:[%s3 + $0x4c] sm:$0xf]
  %v386 = vld [vmem:[%s3 + $0x50] sm:$0xf]
  %v387 = vld [vmem:[%s3 + $0x54] sm:$0xf]
  %v388 = vld [vmem:[%s3 + $0x58] sm:$0xf]
  %v389 = vld [vmem:[%s3 + $0x5c] sm:$0xf]
  %v390 = vld [vmem:[%s3 + $0x60] sm:$0xf]
  %v391 = vld [vmem:[%s3 + $0x64] sm:$0xf]
  %v392 = vld [vmem:[%s3 + $0x68] sm:$0xf]
  %v393 = vld [vmem:[%s3 + $0x6c] sm:$0xf]
  %v394 = vld [vmem:[%s3 + $0x70] sm:$0xf]
  %v395 = vld [vmem:[%s3 + $0x74] sm:$0xf]
  %v396 = vld [vmem:[%s3 + $0x78] sm:$0xf]
  %v397 = vld [vmem:[%s3 + $0x7c] sm:$0xf]
  %v398 = vld [vmem:[%s4] sm:$0x1]
  %v400 = vlaneseq
  %v401 = vshrl.u32 %v400, 7
  %v402 = vsub.s32 0, %v401
  %v403 = vrot.slane %v398, %v402
  %v437 = vunpack.c.l.b16 %v366
  %v438 = vunpack.c.l.b16 %v367
  %v439 = vunpack.c.l.b16 %v368
  %v440 = vunpack.c.l.b16 %v369
  %v441 = vunpack.c.l.b16 %v370
  %v442 = vunpack.c.l.b16 %v371
  %v443 = vunpack.c.l.b16 %v372
  %v444 = vunpack.c.l.b16 %v373
  %v445 = vunpack.c.l.b16 %v374
  %v446 = vunpack.c.l.b16 %v375
  %v447 = vunpack.c.l.b16 %v376
  %v448 = vunpack.c.l.b16 %v377
  %v449 = vunpack.c.l.b16 %v378
  %v450 = vunpack.c.l.b16 %v379
  %v451 = vunpack.c.l.b16 %v380
  %v452 = vunpack.c.l.b16 %v381
  %v453 = vunpack.c.l.b16 %v382
  %v454 = vunpack.c.l.b16 %v383
  %v455 = vunpack.c.l.b16 %v384
  %v456 = vunpack.c.l.b16 %v385
  %v457 = vunpack.c.l.b16 %v386
  %v458 = vunpack.c.l.b16 %v387
  %v459 = vunpack.c.l.b16 %v388
  %v460 = vunpack.c.l.b16 %v389
  %v461 = vunpack.c.l.b16 %v390
  %v462 = vunpack.c.l.b16 %v391
  %v463 = vunpack.c.l.b16 %v392
  %v464 = vunpack.c.l.b16 %v393
  %v465 = vunpack.c.l.b16 %v394
  %v466 = vunpack.c.l.b16 %v395
  %v467 = vunpack.c.l.b16 %v396
  %v468 = vunpack.c.l.b16 %v397
  %v469 = vpack.c.b16 %v438, %v437
  %v470 = vpack.c.b16 %v440, %v439
  %v471 = vpack.c.b16 %v442, %v441
  %v472 = vpack.c.b16 %v444, %v443
  %v473 = vpack.c.b16 %v446, %v445
  %v474 = vpack.c.b16 %v448, %v447
  %v475 = vpack.c.b16 %v450, %v449
  %v476 = vpack.c.b16 %v452, %v451
  %v477 = vpack.c.b16 %v454, %v453
  %v478 = vpack.c.b16 %v456, %v455
  %v479 = vpack.c.b16 %v458, %v457
  %v480 = vpack.c.b16 %v460, %v459
  %v481 = vpack.c.b16 %v462, %v461
  %v482 = vpack.c.b16 %v464, %v463
  %v483 = vpack.c.b16 %v466, %v465
  %v484 = vpack.c.b16 %v468, %v467
  %501 = vmatprep.subr.bf16.mxu0 0
  %502 = vmatpush1.bf16.msra.mxu0 %v476
  %503 = vmatprep.subr.bf16.mxu0 0
  %504 = vmatpush1.bf16.msra.mxu0 %v475
  %505 = vmatprep.subr.bf16.mxu0 0
  %506 = vmatpush1.bf16.msra.mxu0 %v474
  %507 = vmatprep.subr.bf16.mxu0 0
  %508 = vmatpush1.bf16.msra.mxu0 %v473
  %509 = vmatprep.subr.bf16.mxu0 0
  %510 = vmatpush1.bf16.msra.mxu0 %v472
  %511 = vmatprep.subr.bf16.mxu0 0
  %512 = vmatpush1.bf16.msra.mxu0 %v471
  %513 = vmatprep.subr.bf16.mxu0 0
  %514 = vmatpush1.bf16.msra.mxu0 %v470
  %515 = vmatprep.subr.bf16.mxu0 0
  %516 = vmatpush1.bf16.msra.mxu0 %v469
  %517 = vmatprep.subr.bf16.mxu0 0
  %518 = vmatpush2.bf16.msra.mxu0 %v484
  %519 = vmatprep.subr.bf16.mxu0 0
  %520 = vmatpush2.bf16.msra.mxu0 %v483
  %521 = vmatprep.subr.bf16.mxu0 0
  %522 = vmatpush2.bf16.msra.mxu0 %v482
  %523 = vmatprep.subr.bf16.mxu0 0
  %524 = vmatpush2.bf16.msra.mxu0 %v481
  %525 = vmatprep.subr.bf16.mxu0 0
  %526 = vmatpush2.bf16.msra.mxu0 %v480
  %527 = vmatprep.subr.bf16.mxu0 0
  %528 = vmatpush2.bf16.msra.mxu0 %v479
  %529 = vmatprep.subr.bf16.mxu0 0
  %530 = vmatpush2.bf16.msra.mxu0 %v478
  %531 = vmatprep.subr.bf16.mxu0 0
  %532 = vmatpush2.bf16.msra.mxu0 %v477
  %533 = vmatprep.mubr.bf16.mxu0 %v365
  %534 = vmatmul.mubr.bf16.gmra.mxu0 %v364
  %v535 = vpop.f32.mrf.mxu0
  %v536 = vadd.f32 %v403, %v535
  %v537 = vpop.f32.mrf.mxu0
  %v538 = vpop.f32.mrf.mxu0
  %v539 = vpop.f32.mrf.mxu0
  %540 = vdwg.mxu0
  %vm541 = vcmask 41984
  %542 = vst.msk [vmem:[%s5] sm:$0x3] %vm541, %v536
  // Predicated region
  $region22: #{ensemble_forward.20} parent=0 // pred_check
    _
  $region23: #{ensemble_forward.20} parent=0 // pred_check_branch
    %544 = sbr.rel (0) target = $region25
  $region24: #{ensemble_forward.20} parent=0 // pred_region
    _
  $region25: #{ensemble_forward.20} parent=0 // pred_fallthru
    _
  // Predicated region
  $region26: #{ensemble_forward.20} parent=0 // pred_check
    _
  $region27: #{ensemble_forward.20} parent=0 // pred_check_branch
    %546 = sbr.rel (0) target = $region29
  $region28: #{ensemble_forward.20} parent=0 // pred_region
    _
  $region29: #{ensemble_forward.20} parent=0 // pred_fallthru
    _

// kernel: ensemble_forward.21
$region0: #{ensemble_forward.21}
  #allocation0 [shape = 'u32[]', space=smem, size = 0x4, offset = 0x4, fixed_abs, tag = 'smem constant byte address 0x4 - core index']
  #allocation1 [shape = 'u32[144,128]{1,0:T(1,128)}', space=vmem, size = 0x12000, scoped, tag = 'internal scratch']
  %s0 = inlined_call_operand.vmem [shape: bf16[1,288,256], index: 0, kind: input, shape index: {}]
  %s1 = inlined_call_operand.vmem [shape: bf16[1,256,32], index: 1, kind: input, shape index: {}]
  %s2 = inlined_call_operand.vmem [shape: f32[1,1,32], index: 2, kind: input, shape index: {}]
  %s3 = inlined_call_operand.vmem [shape: bf16[1,288,32], index: 3, kind: output, shape index: {}]
  %s4 = sld [smem:[#allocation0]]
  $region22: #{ensemble_forward.21} parent=0
    _
  %s6 = ssub.s32 1, %s4
  %s7 = scalar_select 0, %s6, %s4
  // Predicated region
  $region2: #{ensemble_forward.21} parent=0 // pred_check
    _
  $region3: #{ensemble_forward.21} parent=0 // pred_check_branch
    %9 = sbr.rel (0) target = $region5
  $region4: #{ensemble_forward.21} parent=0 // pred_region
    _
  $region5: #{ensemble_forward.21} parent=0 // pred_fallthru
    _
  // Predicated region
  $region6: #{ensemble_forward.21} parent=0 // pred_check
    _
  $region7: #{ensemble_forward.21} parent=0 // pred_check_branch
    %11 = sbr.rel (0) target = $region9
  $region8: #{ensemble_forward.21} parent=0 // pred_region
    _
  $region9: #{ensemble_forward.21} parent=0 // pred_fallthru
    _
  // Predicated region
  $region10: #{ensemble_forward.21} parent=0 // pred_check
    _
  $region11: #{ensemble_forward.21} parent=0 // pred_check_branch
    %13 = sbr.rel (0) target = $region13
  $region12: #{ensemble_forward.21} parent=0 // pred_region
    _
  $region13: #{ensemble_forward.21} parent=0 // pred_fallthru
    _
  %v15 = vld [vmem:[%s0] sm:$0xff]
  %v16 = vld [vmem:[%s0 + $0x8] sm:$0xff]
  %v17 = vld [vmem:[%s0 + $0x10] sm:$0xff]
  %v18 = vld [vmem:[%s0 + $0x18] sm:$0xff]
  %v19 = vld [vmem:[%s0 + $0x20] sm:$0xff]
  %v20 = vld [vmem:[%s0 + $0x28] sm:$0xff]
  %v21 = vld [vmem:[%s0 + $0x30] sm:$0xff]
  %v22 = vld [vmem:[%s0 + $0x38] sm:$0xff]
  %v23 = vld [vmem:[%s0 + $0x40] sm:$0xff]
  %v24 = vld [vmem:[%s0 + $0x48] sm:$0xff]
  %v25 = vld [vmem:[%s0 + $0x50] sm:$0xff]
  %v26 = vld [vmem:[%s0 + $0x58] sm:$0xff]
  %v27 = vld [vmem:[%s0 + $0x60] sm:$0xff]
  %v28 = vld [vmem:[%s0 + $0x68] sm:$0xff]
  %v29 = vld [vmem:[%s0 + $0x70] sm:$0xff]
  %v30 = vld [vmem:[%s0 + $0x78] sm:$0xff]
  %v31 = vld [vmem:[%s0 + $0x80] sm:$0xff]
  %v32 = vld [vmem:[%s0 + $0x88] sm:$0xff]
  %v33 = vld [vmem:[%s0 + $0x90] sm:$0xff]
  %v34 = vld [vmem:[%s0 + $0x98] sm:$0xff]
  %v35 = vld [vmem:[%s0 + $0xa0] sm:$0xff]
  %v36 = vld [vmem:[%s0 + $0xa8] sm:$0xff]
  %v37 = vld [vmem:[%s0 + $0xb0] sm:$0xff]
  %v38 = vld [vmem:[%s0 + $0xb8] sm:$0xff]
  %v39 = vld [vmem:[%s0 + $0xc0] sm:$0xff]
  %v40 = vld [vmem:[%s0 + $0xc8] sm:$0xff]
  %v41 = vld [vmem:[%s0 + $0xd0] sm:$0xff]
  %v42 = vld [vmem:[%s0 + $0xd8] sm:$0xff]
  %v43 = vld [vmem:[%s0 + $0xe0] sm:$0xff]
  %v44 = vld [vmem:[%s0 + $0xe8] sm:$0xff]
  %v45 = vld [vmem:[%s0 + $0xf0] sm:$0xff]
  %v46 = vld [vmem:[%s0 + $0xf8] sm:$0xff]
  %v47 = vld [vmem:[%s0 + $0x100] sm:$0xff]
  %v48 = vld [vmem:[%s0 + $0x108] sm:$0xff]
  %v49 = vld [vmem:[%s0 + $0x110] sm:$0xff]
  %v50 = vld [vmem:[%s0 + $0x118] sm:$0xff]
  %v51 = vld [vmem:[%s1] sm:$0xf]
  %v52 = vld [vmem:[%s1 + $0x4] sm:$0xf]
  %v53 = vld [vmem:[%s1 + $0x8] sm:$0xf]
  %v54 = vld [vmem:[%s1 + $0xc] sm:$0xf]
  %v55 = vld [vmem:[%s1 + $0x10] sm:$0xf]
  %v56 = vld [vmem:[%s1 + $0x14] sm:$0xf]
  %v57 = vld [vmem:[%s1 + $0x18] sm:$0xf]
  %v58 = vld [vmem:[%s1 + $0x1c] sm:$0xf]
  %v59 = vld [vmem:[%s1 + $0x20] sm:$0xf]
  %v60 = vld [vmem:[%s1 + $0x24] sm:$0xf]
  %v61 = vld [vmem:[%s1 + $0x28] sm:$0xf]
  %v62 = vld [vmem:[%s1 + $0x2c] sm:$0xf]
  %v63 = vld [vmem:[%s1 + $0x30] sm:$0xf]
  %v64 = vld [vmem:[%s1 + $0x34] sm:$0xf]
  %v65 = vld [vmem:[%s1 + $0x38] sm:$0xf]
  %v66 = vld [vmem:[%s1 + $0x3c] sm:$0xf]
  %v67 = vld [vmem:[%s1 + $0x40] sm:$0xf]
  %v68 = vld [vmem:[%s1 + $0x44] sm:$0xf]
  %v69 = vld [vmem:[%s1 + $0x48] sm:$0xf]
  %v70 = vld [vmem:[%s1 + $0x4c] sm:$0xf]
  %v71 = vld [vmem:[%s1 + $0x50] sm:$0xf]
  %v72 = vld [vmem:[%s1 + $0x54] sm:$0xf]
  %v73 = vld [vmem:[%s1 + $0x58] sm:$0xf]
  %v74 = vld [vmem:[%s1 + $0x5c] sm:$0xf]
  %v75 = vld [vmem:[%s1 + $0x60] sm:$0xf]
  %v76 = vld [vmem:[%s1 + $0x64] sm:$0xf]
  %v77 = vld [vmem:[%s1 + $0x68] sm:$0xf]
  %v78 = vld [vmem:[%s1 + $0x6c] sm:$0xf]
  %v79 = vld [vmem:[%s1 + $0x70] sm:$0xf]
  %v80 = vld [vmem:[%s1 + $0x74] sm:$0xf]
  %v81 = vld [vmem:[%s1 + $0x78] sm:$0xf]
  %v82 = vld [vmem:[%s1 + $0x7c] sm:$0xf]
  %v83 = vld [vmem:[%s2] sm:$0x1]
  %v85 = vlaneseq
  %v86 = vshrl.u32 %v85, 7
  %v87 = vsub.s32 0, %v86
  %v88 = vrot.slane %v83, %v87
  %v126 = vunpack.c.l.b16 %v15
  %v127 = vunpack.c.h.b16 %v15
  %v128 = vunpack.c.l.b16 %v16
  %v129 = vunpack.c.h.b16 %v16
  %v130 = vunpack.c.l.b16 %v17
  %v131 = vunpack.c.h.b16 %v17
  %v132 = vunpack.c.l.b16 %v18
  %v133 = vunpack.c.h.b16 %v18
  %v134 = vunpack.c.l.b16 %v19
  %v135 = vunpack.c.h.b16 %v19
  %v136 = vunpack.c.l.b16 %v20
  %v137 = vunpack.c.h.b16 %v20
  %v138 = vunpack.c.l.b16 %v21
  %v139 = vunpack.c.h.b16 %v21
  %v140 = vunpack.c.l.b16 %v22
  %v141 = vunpack.c.h.b16 %v22
  %v142 = vunpack.c.l.b16 %v23
  %v143 = vunpack.c.h.b16 %v23
  %v144 = vunpack.c.l.b16 %v24
  %v145 = vunpack.c.h.b16 %v24
  %v146 = vunpack.c.l.b16 %v25
  %v147 = vunpack.c.h.b16 %v25
  %v148 = vunpack.c.l.b16 %v26
  %v149 = vunpack.c.h.b16 %v26
  %v150 = vunpack.c.l.b16 %v27
  %v151 = vunpack.c.h.b16 %v27
  %v152 = vunpack.c.l.b16 %v28
  %v153 = vunpack.c.h.b16 %v28
  %v154 = vunpack.c.l.b16 %v29
  %v155 = vunpack.c.h.b16 %v29
  %v156 = vunpack.c.l.b16 %v30
  %v157 = vunpack.c.h.b16 %v30
  %v158 = vunpack.c.l.b16 %v31
  %v159 = vunpack.c.h.b16 %v31
  %v160 = vunpack.c.l.b16 %v32
  %v161 = vunpack.c.h.b16 %v32
  %v162 = vunpack.c.l.b16 %v33
  %v163 = vunpack.c.h.b16 %v33
  %v164 = vunpack.c.l.b16 %v34
  %v165 = vunpack.c.h.b16 %v34
  %v166 = vunpack.c.l.b16 %v35
  %v167 = vunpack.c.h.b16 %v35
  %v168 = vunpack.c.l.b16 %v36
  %v169 = vunpack.c.h.b16 %v36
  %v170 = vunpack.c.l.b16 %v37
  %v171 = vunpack.c.h.b16 %v37
  %v172 = vunpack.c.l.b16 %v38
  %v173 = vunpack.c.h.b16 %v38
  %v174 = vunpack.c.l.b16 %v39
  %v175 = vunpack.c.h.b16 %v39
  %v176 = vunpack.c.l.b16 %v40
  %v177 = vunpack.c.h.b16 %v40
  %v178 = vunpack.c.l.b16 %v41
  %v179 = vunpack.c.h.b16 %v41
  %v180 = vunpack.c.l.b16 %v42
  %v181 = vunpack.c.h.b16 %v42
  %v182 = vunpack.c.l.b16 %v43
  %v183 = vunpack.c.h.b16 %v43
  %v184 = vunpack.c.l.b16 %v44
  %v185 = vunpack.c.h.b16 %v44
  %v186 = vunpack.c.l.b16 %v45
  %v187 = vunpack.c.h.b16 %v45
  %v188 = vunpack.c.l.b16 %v46
  %v189 = vunpack.c.h.b16 %v46
  %v190 = vunpack.c.l.b16 %v47
  %v191 = vunpack.c.h.b16 %v47
  %v192 = vunpack.c.l.b16 %v48
  %v193 = vunpack.c.h.b16 %v48
  %v194 = vunpack.c.l.b16 %v49
  %v195 = vunpack.c.h.b16 %v49
  %v196 = vunpack.c.l.b16 %v50
  %v197 = vunpack.c.h.b16 %v50
  %v198 = vpack.c.b16 %v128, %v126
  %v199 = vpack.c.b16 %v129, %v127
  %v200 = vpack.c.b16 %v132, %v130
  %v201 = vpack.c.b16 %v133, %v131
  %v202 = vpack.c.b16 %v136, %v134
  %v203 = vpack.c.b16 %v137, %v135
  %v204 = vpack.c.b16 %v140, %v138
  %v205 = vpack.c.b16 %v141, %v139
  %v206 = vpack.c.b16 %v144, %v142
  %v207 = vpack.c.b16 %v145, %v143
  %v208 = vpack.c.b16 %v148, %v146
  %v209 = vpack.c.b16 %v149, %v147
  %v210 = vpack.c.b16 %v152, %v150
  %v211 = vpack.c.b16 %v153, %v151
  %v212 = vpack.c.b16 %v156, %v154
  %v213 = vpack.c.b16 %v157, %v155
  %v214 = vpack.c.b16 %v160, %v158
  %v215 = vpack.c.b16 %v161, %v159
  %v216 = vpack.c.b16 %v164, %v162
  %v217 = vpack.c.b16 %v165, %v163
  %v218 = vpack.c.b16 %v168, %v166
  %v219 = vpack.c.b16 %v169, %v167
  %v220 = vpack.c.b16 %v172, %v170
  %v221 = vpack.c.b16 %v173, %v171
  %v222 = vpack.c.b16 %v176, %v174
  %v223 = vpack.c.b16 %v177, %v175
  %v224 = vpack.c.b16 %v180, %v178
  %v225 = vpack.c.b16 %v181, %v179
  %v226 = vpack.c.b16 %v184, %v182
  %v227 = vpack.c.b16 %v185, %v183
  %v228 = vpack.c.b16 %v188, %v186
  %v229 = vpack.c.b16 %v189, %v187
  %v230 = vpack.c.b16 %v192, %v190
  %v231 = vpack.c.b16 %v193, %v191
  %v232 = vpack.c.b16 %v196, %v194
  %v233 = vpack.c.b16 %v197, %v195
  %v302 = vunpack.c.l.b16 %v51
  %v303 = vunpack.c.l.b16 %v52
  %v304 = vunpack.c.l.b16 %v53
  %v305 = vunpack.c.l.b16 %v54
  %v306 = vunpack.c.l.b16 %v55
  %v307 = vunpack.c.l.b16 %v56
  %v308 = vunpack.c.l.b16 %v57
  %v309 = vunpack.c.l.b16 %v58
  %v310 = vunpack.c.l.b16 %v59
  %v311 = vunpack.c.l.b16 %v60
  %v312 = vunpack.c.l.b16 %v61
  %v313 = vunpack.c.l.b16 %v62
  %v314 = vunpack.c.l.b16 %v63
  %v315 = vunpack.c.l.b16 %v64
  %v316 = vunpack.c.l.b16 %v65
  %v317 = vunpack.c.l.b16 %v66
  %v318 = vunpack.c.l.b16 %v67
  %v319 = vunpack.c.l.b16 %v68
  %v320 = vunpack.c.l.b16 %v69
  %v321 = vunpack.c.l.b16 %v70
  %v322 = vunpack.c.l.b16 %v71
  %v323 = vunpack.c.l.b16 %v72
  %v324 = vunpack.c.l.b16 %v73
  %v325 = vunpack.c.l.b16 %v74
  %v326 = vunpack.c.l.b16 %v75
  %v327 = vunpack.c.l.b16 %v76
  %v328 = vunpack.c.l.b16 %v77
  %v329 = vunpack.c.l.b16 %v78
  %v330 = vunpack.c.l.b16 %v79
  %v331 = vunpack.c.l.b16 %v80
  %v332 = vunpack.c.l.b16 %v81
  %v333 = vunpack.c.l.b16 %v82
  %v334 = vpack.c.b16 %v303, %v302
  %v335 = vpack.c.b16 %v305, %v304
  %v336 = vpack.c.b16 %v307, %v306
  %v337 = vpack.c.b16 %v309, %v308
  %v338 = vpack.c.b16 %v311, %v310
  %v339 = vpack.c.b16 %v313, %v312
  %v340 = vpack.c.b16 %v315, %v314
  %v341 = vpack.c.b16 %v317, %v316
  %v342 = vpack.c.b16 %v319, %v318
  %v343 = vpack.c.b16 %v321, %v320
  %v344 = vpack.c.b16 %v323, %v322
  %v345 = vpack.c.b16 %v325, %v324
  %v346 = vpack.c.b16 %v327, %v326
  %v347 = vpack.c.b16 %v329, %v328
  %v348 = vpack.c.b16 %v331, %v330
  %v349 = vpack.c.b16 %v333, %v332
  %366 = vmatprep.subr.bf16.mxu0 0
  %367 = vmatpush1.bf16.msra.mxu0 %v341
  %368 = vmatprep.subr.bf16.mxu0 0
  %369 = vmatpush1.bf16.msra.mxu0 %v340
  %370 = vmatprep.subr.bf16.mxu0 0
  %371 = vmatpush1.bf16.msra.mxu0 %v339
  %372 = vmatprep.subr.bf16.mxu0 0
  %373 = vmatpush1.bf16.msra.mxu0 %v338
  %374 = vmatprep.subr.bf16.mxu0 0
  %375 = vmatpush1.bf16.msra.mxu0 %v337
  %376 = vmatprep.subr.bf16.mxu0 0
  %377 = vmatpush1.bf16.msra.mxu0 %v336
  %378 = vmatprep.subr.bf16.mxu0 0
  %379 = vmatpush1.bf16.msra.mxu0 %v335
  %380 = vmatprep.subr.bf16.mxu0 0
  %381 = vmatpush1.bf16.msra.mxu0 %v334
  %382 = vmatprep.subr.bf16.mxu0 0
  %383 = vmatpush2.bf16.msra.mxu0 %v349
  %384 = vmatprep.subr.bf16.mxu0 0
  %385 = vmatpush2.bf16.msra.mxu0 %v348
  %386 = vmatprep.subr.bf16.mxu0 0
  %387 = vmatpush2.bf16.msra.mxu0 %v347
  %388 = vmatprep.subr.bf16.mxu0 0
  %389 = vmatpush2.bf16.msra.mxu0 %v346
  %390 = vmatprep.subr.bf16.mxu0 0
  %391 = vmatpush2.bf16.msra.mxu0 %v345
  %392 = vmatprep.subr.bf16.mxu0 0
  %393 = vmatpush2.bf16.msra.mxu0 %v344
  %394 = vmatprep.subr.bf16.mxu0 0
  %395 = vmatpush2.bf16.msra.mxu0 %v343
  %396 = vmatprep.subr.bf16.mxu0 0
  %397 = vmatpush2.bf16.msra.mxu0 %v342
  %398 = vmatprep.mubr.bf16.mxu0 %v199
  %399 = vmatmul.mubr.bf16.gmra.mxu0 %v198
  %v400 = vpop.f32.mrf.mxu0
  %v401 = vadd.f32 %v88, %v400
  %v402 = vpop.f32.mrf.mxu0
  %v403 = vpop.f32.mrf.mxu0
  %v404 = vadd.f32 %v88, %v403
  %v405 = vpop.f32.mrf.mxu0
  %406 = vmatprep.mubr.bf16.mxu0 %v201
  %407 = vmatmul.mubr.bf16.gmra.mxu0 %v200
  %v408 = vpop.f32.mrf.mxu0
  %v409 = vadd.f32 %v88, %v408
  %v410 = vpop.f32.mrf.mxu0
  %v411 = vpop.f32.mrf.mxu0
  %v412 = vadd.f32 %v88, %v411
  %v413 = vpop.f32.mrf.mxu0
  %414 = vmatprep.mubr.bf16.mxu0 %v203
  %415 = vmatmul.mubr.bf16.gmra.mxu0 %v202
  %v416 = vpop.f32.mrf.mxu0
  %v417 = vadd.f32 %v88, %v416
  %v418 = vpop.f32.mrf.mxu0
  %v419 = vpop.f32.mrf.mxu0
  %v420 = vadd.f32 %v88, %v419
  %v421 = vpop.f32.mrf.mxu0
  %422 = vmatprep.mubr.bf16.mxu0 %v205
  %423 = vmatmul.mubr.bf16.gmra.mxu0 %v204
  %v424 = vpop.f32.mrf.mxu0
  %v425 = vadd.f32 %v88, %v424
  %v426 = vpop.f32.mrf.mxu0
  %v427 = vpop.f32.mrf.mxu0
  %v428 = vadd.f32 %v88, %v427
  %v429 = vpop.f32.mrf.mxu0
  %430 = vmatprep.mubr.bf16.mxu0 %v207
  %431 = vmatmul.mubr.bf16.gmra.mxu0 %v206
  %v432 = vpop.f32.mrf.mxu0
  %v433 = vadd.f32 %v88, %v432
  %v434 = vpop.f32.mrf.mxu0
  %v435 = vpop.f32.mrf.mxu0
  %v436 = vadd.f32 %v88, %v435
  %v437 = vpop.f32.mrf.mxu0
  %438 = vmatprep.mubr.bf16.mxu0 %v209
  %439 = vmatmul.mubr.bf16.gmra.mxu0 %v208
  %v440 = vpop.f32.mrf.mxu0
  %v441 = vadd.f32 %v88, %v440
  %v442 = vpop.f32.mrf.mxu0
  %v443 = vpop.f32.mrf.mxu0
  %v444 = vadd.f32 %v88, %v443
  %v445 = vpop.f32.mrf.mxu0
  %446 = vmatprep.mubr.bf16.mxu0 %v211
  %447 = vmatmul.mubr.bf16.gmra.mxu0 %v210
  %v448 = vpop.f32.mrf.mxu0
  %v449 = vadd.f32 %v88, %v448
  %v450 = vpop.f32.mrf.mxu0
  %v451 = vpop.f32.mrf.mxu0
  %v452 = vadd.f32 %v88, %v451
  %v453 = vpop.f32.mrf.mxu0
  %454 = vmatprep.mubr.bf16.mxu0 %v213
  %455 = vmatmul.mubr.bf16.gmra.mxu0 %v212
  %v456 = vpop.f32.mrf.mxu0
  %v457 = vadd.f32 %v88, %v456
  %v458 = vpop.f32.mrf.mxu0
  %v459 = vpop.f32.mrf.mxu0
  %v460 = vadd.f32 %v88, %v459
  %v461 = vpop.f32.mrf.mxu0
  %462 = vmatprep.mubr.bf16.mxu0 %v215
  %463 = vmatmul.mubr.bf16.gmra.mxu0 %v214
  %v464 = vpop.f32.mrf.mxu0
  %v465 = vadd.f32 %v88, %v464
  %v466 = vpop.f32.mrf.mxu0
  %v467 = vpop.f32.mrf.mxu0
  %v468 = vadd.f32 %v88, %v467
  %v469 = vpop.f32.mrf.mxu0
  %470 = vmatprep.mubr.bf16.mxu0 %v217
  %471 = vmatmul.mubr.bf16.gmra.mxu0 %v216
  %v472 = vpop.f32.mrf.mxu0
  %v473 = vadd.f32 %v88, %v472
  %v474 = vpop.f32.mrf.mxu0
  %v475 = vpop.f32.mrf.mxu0
  %v476 = vadd.f32 %v88, %v475
  %v477 = vpop.f32.mrf.mxu0
  %478 = vmatprep.mubr.bf16.mxu0 %v219
  %479 = vmatmul.mubr.bf16.gmra.mxu0 %v218
  %v480 = vpop.f32.mrf.mxu0
  %v481 = vadd.f32 %v88, %v480
  %v482 = vpop.f32.mrf.mxu0
  %v483 = vpop.f32.mrf.mxu0
  %v484 = vadd.f32 %v88, %v483
  %v485 = vpop.f32.mrf.mxu0
  %486 = vmatprep.mubr.bf16.mxu0 %v221
  %487 = vmatmul.mubr.bf16.gmra.mxu0 %v220
  %v488 = vpop.f32.mrf.mxu0
  %v489 = vadd.f32 %v88, %v488
  %v490 = vpop.f32.mrf.mxu0
  %v491 = vpop.f32.mrf.mxu0
  %v492 = vadd.f32 %v88, %v491
  %v493 = vpop.f32.mrf.mxu0
  %494 = vmatprep.mubr.bf16.mxu0 %v223
  %495 = vmatmul.mubr.bf16.gmra.mxu0 %v222
  %v496 = vpop.f32.mrf.mxu0
  %v497 = vadd.f32 %v88, %v496
  %v498 = vpop.f32.mrf.mxu0
  %v499 = vpop.f32.mrf.mxu0
  %v500 = vadd.f32 %v88, %v499
  %v501 = vpop.f32.mrf.mxu0
  %502 = vmatprep.mubr.bf16.mxu0 %v225
  %503 = vmatmul.mubr.bf16.gmra.mxu0 %v224
  %v504 = vpop.f32.mrf.mxu0
  %v505 = vadd.f32 %v88, %v504
  %v506 = vpop.f32.mrf.mxu0
  %v507 = vpop.f32.mrf.mxu0
  %v508 = vadd.f32 %v88, %v507
  %v509 = vpop.f32.mrf.mxu0
  %510 = vmatprep.mubr.bf16.mxu0 %v227
  %511 = vmatmul.mubr.bf16.gmra.mxu0 %v226
  %v512 = vpop.f32.mrf.mxu0
  %v513 = vadd.f32 %v88, %v512
  %v514 = vpop.f32.mrf.mxu0
  %v515 = vpop.f32.mrf.mxu0
  %v516 = vadd.f32 %v88, %v515
  %v517 = vpop.f32.mrf.mxu0
  %518 = vmatprep.mubr.bf16.mxu0 %v229
  %519 = vmatmul.mubr.bf16.gmra.mxu0 %v228
  %v520 = vpop.f32.mrf.mxu0
  %v521 = vadd.f32 %v88, %v520
  %v522 = vpop.f32.mrf.mxu0
  %v523 = vpop.f32.mrf.mxu0
  %v524 = vadd.f32 %v88, %v523
  %v525 = vpop.f32.mrf.mxu0
  %526 = vmatprep.mubr.bf16.mxu0 %v231
  %527 = vmatmul.mubr.bf16.gmra.mxu0 %v230
  %v528 = vpop.f32.mrf.mxu0
  %v529 = vadd.f32 %v88, %v528
  %v530 = vpop.f32.mrf.mxu0
  %v531 = vpop.f32.mrf.mxu0
  %v532 = vadd.f32 %v88, %v531
  %v533 = vpop.f32.mrf.mxu0
  %534 = vmatprep.mubr.bf16.mxu0 %v233
  %535 = vmatmul.mubr.bf16.gmra.mxu0 %v232
  %v536 = vpop.f32.mrf.mxu0
  %v537 = vadd.f32 %v88, %v536
  %v538 = vpop.f32.mrf.mxu0
  %v539 = vpop.f32.mrf.mxu0
  %v540 = vadd.f32 %v88, %v539
  %v541 = vpop.f32.mrf.mxu0
  %542 = vdwg.mxu0
  %v543 = vmax.f32 %v401, 0.0
  %v544 = vmax.f32 %v404, 0.0
  %v545 = vmax.f32 %v409, 0.0
  %v546 = vmax.f32 %v412, 0.0
  %v547 = vmax.f32 %v417, 0.0
  %v548 = vmax.f32 %v420, 0.0
  %v549 = vmax.f32 %v425, 0.0
  %v550 = vmax.f32 %v428, 0.0
  %v551 = vmax.f32 %v433, 0.0
  %v552 = vmax.f32 %v436, 0.0
  %v553 = vmax.f32 %v441, 0.0
  %v554 = vmax.f32 %v444, 0.0
  %v555 = vmax.f32 %v449, 0.0
  %v556 = vmax.f32 %v452, 0.0
  %v557 = vmax.f32 %v457, 0.0
  %v558 = vmax.f32 %v460, 0.0
  %v559 = vmax.f32 %v465, 0.0
  %v560 = vmax.f32 %v468, 0.0
  %v561 = vmax.f32 %v473, 0.0
  %v562 = vmax.f32 %v476, 0.0
  %v563 = vmax.f32 %v481, 0.0
  %v564 = vmax.f32 %v484, 0.0
  %v565 = vmax.f32 %v489, 0.0
  %v566 = vmax.f32 %v492, 0.0
  %v567 = vmax.f32 %v497, 0.0
  %v568 = vmax.f32 %v500, 0.0
  %v569 = vmax.f32 %v505, 0.0
  %v570 = vmax.f32 %v508, 0.0
  %v571 = vmax.f32 %v513, 0.0
  %v572 = vmax.f32 %v516, 0.0
  %v573 = vmax.f32 %v521, 0.0
  %v574 = vmax.f32 %v524, 0.0
  %v575 = vmax.f32 %v529, 0.0
  %v576 = vmax.f32 %v532, 0.0
  %v577 = vmax.f32 %v537, 0.0
  %v578 = vmax.f32 %v540, 0.0
  %v579 = vpack.c.bf16 %v544, %v543
  %v580 = vpack.c.bf16 %v546, %v545
  %v581 = vpack.c.bf16 %v548, %v547
  %v582 = vpack.c.bf16 %v550, %v549
  %v583 = vpack.c.bf16 %v552, %v551
  %v584 = vpack.c.bf16 %v554, %v553
  %v585 = vpack.c.bf16 %v556, %v555
  %v586 = vpack.c.bf16 %v558, %v557
  %v587 = vpack.c.bf16 %v560, %v559
  %v588 = vpack.c.bf16 %v562, %v561
  %v589 = vpack.c.bf16 %v564, %v563
  %v590 = vpack.c.bf16 %v566, %v565
  %v591 = vpack.c.bf16 %v568, %v567
  %v592 = vpack.c.bf16 %v570, %v569
  %v593 = vpack.c.bf16 %v572, %v571
  %v594 = vpack.c.bf16 %v574, %v573
  %v595 = vpack.c.bf16 %v576, %v575
  %v596 = vpack.c.bf16 %v578, %v577
  %v615 = vunpack.c.l.b16 %v579
  %v616 = vunpack.c.h.b16 %v579
  %v617 = vunpack.c.l.b16 %v580
  %v618 = vunpack.c.h.b16 %v580
  %v619 = vunpack.c.l.b16 %v581
  %v620 = vunpack.c.h.b16 %v581
  %v621 = vunpack.c.l.b16 %v582
  %v622 = vunpack.c.h.b16 %v582
  %v623 = vunpack.c.l.b16 %v583
  %v624 = vunpack.c.h.b16 %v583
  %v625 = vunpack.c.l.b16 %v584
  %v626 = vunpack.c.h.b16 %v584
  %v627 = vunpack.c.l.b16 %v585
  %v628 = vunpack.c.h.b16 %v585
  %v629 = vunpack.c.l.b16 %v586
  %v630 = vunpack.c.h.b16 %v586
  %v631 = vunpack.c.l.b16 %v587
  %v632 = vunpack.c.h.b16 %v587
  %v633 = vunpack.c.l.b16 %v588
  %v634 = vunpack.c.h.b16 %v588
  %v635 = vunpack.c.l.b16 %v589
  %v636 = vunpack.c.h.b16 %v589
  %v637 = vunpack.c.l.b16 %v590
  %v638 = vunpack.c.h.b16 %v590
  %v639 = vunpack.c.l.b16 %v591
  %v640 = vunpack.c.h.b16 %v591
  %v641 = vunpack.c.l.b16 %v592
  %v642 = vunpack.c.h.b16 %v592
  %v643 = vunpack.c.l.b16 %v593
  %v644 = vunpack.c.h.b16 %v593
  %v645 = vunpack.c.l.b16 %v594
  %v646 = vunpack.c.h.b16 %v594
  %v647 = vunpack.c.l.b16 %v595
  %v648 = vunpack.c.h.b16 %v595
  %v649 = vunpack.c.l.b16 %v596
  %v650 = vunpack.c.h.b16 %v596
  %v651 = vpack.c.b16 %v615, %v615
  %v652 = vpack.c.b16 %v616, %v616
  %v653 = vpack.c.b16 %v617, %v617
  %v654 = vpack.c.b16 %v618, %v618
  %v655 = vpack.c.b16 %v619, %v619
  %v656 = vpack.c.b16 %v620, %v620
  %v657 = vpack.c.b16 %v621, %v621
  %v658 = vpack.c.b16 %v622, %v622
  %v659 = vpack.c.b16 %v623, %v623
  %v660 = vpack.c.b16 %v624, %v624
  %v661 = vpack.c.b16 %v625, %v625
  %v662 = vpack.c.b16 %v626, %v626
  %v663 = vpack.c.b16 %v627, %v627
  %v664 = vpack.c.b16 %v628, %v628
  %v665 = vpack.c.b16 %v629, %v629
  %v666 = vpack.c.b16 %v630, %v630
  %v667 = vpack.c.b16 %v631, %v631
  %v668 = vpack.c.b16 %v632, %v632
  %v669 = vpack.c.b16 %v633, %v633
  %v670 = vpack.c.b16 %v634, %v634
  %v671 = vpack.c.b16 %v635, %v635
  %v672 = vpack.c.b16 %v636, %v636
  %v673 = vpack.c.b16 %v637, %v637
  %v674 = vpack.c.b16 %v638, %v638
  %v675 = vpack.c.b16 %v639, %v639
  %v676 = vpack.c.b16 %v640, %v640
  %v677 = vpack.c.b16 %v641, %v641
  %v678 = vpack.c.b16 %v642, %v642
  %v679 = vpack.c.b16 %v643, %v643
  %v680 = vpack.c.b16 %v644, %v644
  %v681 = vpack.c.b16 %v645, %v645
  %v682 = vpack.c.b16 %v646, %v646
  %v683 = vpack.c.b16 %v647, %v647
  %v684 = vpack.c.b16 %v648, %v648
  %v685 = vpack.c.b16 %v649, %v649
  %v686 = vpack.c.b16 %v650, %v650
  %vm723 = vcmask 257024
  %724 = vst.msk [vmem:[%s3] sm:$0xf] %vm723, %v651
  %725 = vst.msk [vmem:[%s3 + $0x4] sm:$0xf] %vm723, %v652
  %726 = vst.msk [vmem:[%s3 + $0x8] sm:$0xf] %vm723, %v653
  %727 = vst.msk [vmem:[%s3 + $0xc] sm:$0xf] %vm723, %v654
  %728 = vst.msk [vmem:[%s3 + $0x10] sm:$0xf] %vm723, %v655
  %729 = vst.msk [vmem:[%s3 + $0x14] sm:$0xf] %vm723, %v656
  %730 = vst.msk [vmem:[%s3 + $0x18] sm:$0xf] %vm723, %v657
  %731 = vst.msk [vmem:[%s3 + $0x1c] sm:$0xf] %vm723, %v658
  %732 = vst.msk [vmem:[%s3 + $0x20] sm:$0xf] %vm723, %v659
  %733 = vst.msk [vmem:[%s3 + $0x24] sm:$0xf] %vm723, %v660
  %734 = vst.msk [vmem:[%s3 + $0x28] sm:$0xf] %vm723, %v661
  %735 = vst.msk [vmem:[%s3 + $0x2c] sm:$0xf] %vm723, %v662
  %736 = vst.msk [vmem:[%s3 + $0x30] sm:$0xf] %vm723, %v663
  %737 = vst.msk [vmem:[%s3 + $0x34] sm:$0xf] %vm723, %v664
  %738 = vst.msk [vmem:[%s3 + $0x38] sm:$0xf] %vm723, %v665
  %739 = vst.msk [vmem:[%s3 + $0x3c] sm:$0xf] %vm723, %v666
  %740 = vst.msk [vmem:[%s3 + $0x40] sm:$0xf] %vm723, %v667
  %741 = vst.msk [vmem:[%s3 + $0x44] sm:$0xf] %vm723, %v668
  %742 = vst.msk [vmem:[%s3 + $0x48] sm:$0xf] %vm723, %v669
  %743 = vst.msk [vmem:[%s3 + $0x4c] sm:$0xf] %vm723, %v670
  %744 = vst.msk [vmem:[%s3 + $0x50] sm:$0xf] %vm723, %v671
  %745 = vst.msk [vmem:[%s3 + $0x54] sm:$0xf] %vm723, %v672
  %746 = vst.msk [vmem:[%s3 + $0x58] sm:$0xf] %vm723, %v673
  %747 = vst.msk [vmem:[%s3 + $0x5c] sm:$0xf] %vm723, %v674
  %748 = vst.msk [vmem:[%s3 + $0x60] sm:$0xf] %vm723, %v675
  %749 = vst.msk [vmem:[%s3 + $0x64] sm:$0xf] %vm723, %v676
  %750 = vst.msk [vmem:[%s3 + $0x68] sm:$0xf] %vm723, %v677
  %751 = vst.msk [vmem:[%s3 + $0x6c] sm:$0xf] %vm723, %v678
  %752 = vst.msk [vmem:[%s3 + $0x70] sm:$0xf] %vm723, %v679
  %753 = vst.msk [vmem:[%s3 + $0x74] sm:$0xf] %vm723, %v680
  %754 = vst.msk [vmem:[%s3 + $0x78] sm:$0xf] %vm723, %v681
  %755 = vst.msk [vmem:[%s3 + $0x7c] sm:$0xf] %vm723, %v682
  %756 = vst.msk [vmem:[%s3 + $0x80] sm:$0xf] %vm723, %v683
  %757 = vst.msk [vmem:[%s3 + $0x84] sm:$0xf] %vm723, %v684
  %758 = vst.msk [vmem:[%s3 + $0x88] sm:$0xf] %vm723, %v685
  %759 = vst.msk [vmem:[%s3 + $0x8c] sm:$0xf] %vm723, %v686
  // Predicated region
  $region14: #{ensemble_forward.21} parent=0 // pred_check
    _
  $region15: #{ensemble_forward.21} parent=0 // pred_check_branch
    %761 = sbr.rel (0) target = $region17
  $region16: #{ensemble_forward.21} parent=0 // pred_region
    _
  $region17: #{ensemble_forward.21} parent=0 // pred_fallthru
    _
  // Predicated region
  $region18: #{ensemble_forward.21} parent=0 // pred_check
    _
  $region19: #{ensemble_forward.21} parent=0 // pred_check_branch
    %763 = sbr.rel (0) target = $region21
  $region20: #{ensemble_forward.21} parent=0 // pred_region
    _
  $region21: #{ensemble_forward.21} parent=0 // pred_fallthru
    _

// kernel: ensemble_forward.22
$region0: #{ensemble_forward.22}
  #allocation0 [shape = 'u32[]', space=smem, size = 0x4, offset = 0x4, fixed_abs, tag = 'smem constant byte address 0x4 - core index']
  #allocation1 [shape = 'u32[144,128]{1,0:T(1,128)}', space=vmem, size = 0x12000, scoped, tag = 'internal scratch']
  %s0 = inlined_call_operand.vmem [shape: bf16[1,288,288], index: 0, kind: input, shape index: {}]
  %s1 = inlined_call_operand.vmem [shape: bf16[1,288,32], index: 1, kind: input, shape index: {}]
  %s2 = inlined_call_operand.vmem [shape: f32[1,1,32], index: 2, kind: input, shape index: {}]
  %s3 = inlined_call_operand.vmem [shape: bf16[1,288,32], index: 3, kind: output, shape index: {}]
  %s4 = sld [smem:[#allocation0]]
  $region22: #{ensemble_forward.22} parent=0
    _
  %s6 = ssub.s32 1, %s4
  %s7 = scalar_select 0, %s6, %s4
  // Predicated region
  $region2: #{ensemble_forward.22} parent=0 // pred_check
    _
  $region3: #{ensemble_forward.22} parent=0 // pred_check_branch
    %9 = sbr.rel (0) target = $region5
  $region4: #{ensemble_forward.22} parent=0 // pred_region
    _
  $region5: #{ensemble_forward.22} parent=0 // pred_fallthru
    _
  // Predicated region
  $region6: #{ensemble_forward.22} parent=0 // pred_check
    _
  $region7: #{ensemble_forward.22} parent=0 // pred_check_branch
    %11 = sbr.rel (0) target = $region9
  $region8: #{ensemble_forward.22} parent=0 // pred_region
    _
  $region9: #{ensemble_forward.22} parent=0 // pred_fallthru
    _
  // Predicated region
  $region10: #{ensemble_forward.22} parent=0 // pred_check
    _
  $region11: #{ensemble_forward.22} parent=0 // pred_check_branch
    %13 = sbr.rel (0) target = $region13
  $region12: #{ensemble_forward.22} parent=0 // pred_region
    _
  $region13: #{ensemble_forward.22} parent=0 // pred_fallthru
    _
  %v15 = vld [vmem:[%s0] sm:$0xff]
  %v16 = vld [vmem:[%s0 + $0x8] sm:$0xf]
  %v17 = vld [vmem:[%s0 + $0xc] sm:$0xff]
  %v18 = vld [vmem:[%s0 + $0x14] sm:$0xf]
  %v19 = vld [vmem:[%s0 + $0x18] sm:$0xff]
  %v20 = vld [vmem:[%s0 + $0x20] sm:$0xf]
  %v21 = vld [vmem:[%s0 + $0x24] sm:$0xff]
  %v22 = vld [vmem:[%s0 + $0x2c] sm:$0xf]
  %v23 = vld [vmem:[%s0 + $0x30] sm:$0xff]
  %v24 = vld [vmem:[%s0 + $0x38] sm:$0xf]
  %v25 = vld [vmem:[%s0 + $0x3c] sm:$0xff]
  %v26 = vld [vmem:[%s0 + $0x44] sm:$0xf]
  %v27 = vld [vmem:[%s0 + $0x48] sm:$0xff]
  %v28 = vld [vmem:[%s0 + $0x50] sm:$0xf]
  %v29 = vld [vmem:[%s0 + $0x54] sm:$0xff]
  %v30 = vld [vmem:[%s0 + $0x5c] sm:$0xf]
  %v31 = vld [vmem:[%s0 + $0x60] sm:$0xff]
  %v32 = vld [vmem:[%s0 + $0x68] sm:$0xf]
  %v33 = vld [vmem:[%s0 + $0x6c] sm:$0xff]
  %v34 = vld [vmem:[%s0 + $0x74] sm:$0xf]
  %v35 = vld [vmem:[%s0 + $0x78] sm:$0xff]
  %v36 = vld [vmem:[%s0 + $0x80] sm:$0xf]
  %v37 = vld [vmem:[%s0 + $0x84] sm:$0xff]
  %v38 = vld [vmem:[%s0 + $0x8c] sm:$0xf]
  %v39 = vld [vmem:[%s0 + $0x90] sm:$0xff]
  %v40 = vld [vmem:[%s0 + $0x98] sm:$0xf]
  %v41 = vld [vmem:[%s0 + $0x9c] sm:$0xff]
  %v42 = vld [vmem:[%s0 + $0xa4] sm:$0xf]
  %v43 = vld [vmem:[%s0 + $0xa8] sm:$0xff]
  %v44 = vld [vmem:[%s0 + $0xb0] sm:$0xf]
  %v45 = vld [vmem:[%s0 + $0xb4] sm:$0xff]
  %v46 = vld [vmem:[%s0 + $0xbc] sm:$0xf]
  %v47 = vld [vmem:[%s0 + $0xc0] sm:$0xff]
  %v48 = vld [vmem:[%s0 + $0xc8] sm:$0xf]
  %v49 = vld [vmem:[%s0 + $0xcc] sm:$0xff]
  %v50 = vld [vmem:[%s0 + $0xd4] sm:$0xf]
  %v51 = vld [vmem:[%s0 + $0xd8] sm:$0xff]
  %v52 = vld [vmem:[%s0 + $0xe0] sm:$0xf]
  %v53 = vld [vmem:[%s0 + $0xe4] sm:$0xff]
  %v54 = vld [vmem:[%s0 + $0xec] sm:$0xf]
  %v55 = vld [vmem:[%s0 + $0xf0] sm:$0xff]
  %v56 = vld [vmem:[%s0 + $0xf8] sm:$0xf]
  %v57 = vld [vmem:[%s0 + $0xfc] sm:$0xff]
  %v58 = vld [vmem:[%s0 + $0x104] sm:$0xf]
  %v59 = vld [vmem:[%s0 + $0x108] sm:$0xff]
  %v60 = vld [vmem:[%s0 + $0x110] sm:$0xf]
  %v61 = vld [vmem:[%s0 + $0x114] sm:$0xff]
  %v62 = vld [vmem:[%s0 + $0x11c] sm:$0xf]
  %v63 = vld [vmem:[%s0 + $0x120] sm:$0xff]
  %v64 = vld [vmem:[%s0 + $0x128] sm:$0xf]
  %v65 = vld [vmem:[%s0 + $0x12c] sm:$0xff]
  %v66 = vld [vmem:[%s0 + $0x134] sm:$0xf]
  %v67 = vld [vmem:[%s0 + $0x138] sm:$0xff]
  %v68 = vld [vmem:[%s0 + $0x140] sm:$0xf]
  %v69 = vld [vmem:[%s0 + $0x144] sm:$0xff]
  %v70 = vld [vmem:[%s0 + $0x14c] sm:$0xf]
  %v71 = vld [vmem:[%s0 + $0x150] sm:$0xff]
  %v72 = vld [vmem:[%s0 + $0x158] sm:$0xf]
  %v73 = vld [vmem:[%s0 + $0x15c] sm:$0xff]
  %v74 = vld [vmem:[%s0 + $0x164] sm:$0xf]
  %v75 = vld [vmem:[%s0 + $0x168] sm:$0xff]
  %v76 = vld [vmem:[%s0 + $0x170] sm:$0xf]
  %v77 = vld [vmem:[%s0 + $0x174] sm:$0xff]
  %v78 = vld [vmem:[%s0 + $0x17c] sm:$0xf]
  %v79 = vld [vmem:[%s0 + $0x180] sm:$0xff]
  %v80 = vld [vmem:[%s0 + $0x188] sm:$0xf]
  %v81 = vld [vmem:[%s0 + $0x18c] sm:$0xff]
  %v82 = vld [vmem:[%s0 + $0x194] sm:$0xf]
  %v83 = vld [vmem:[%s0 + $0x198] sm:$0xff]
  %v84 = vld [vmem:[%s0 + $0x1a0] sm:$0xf]
  %v85 = vld [vmem:[%s0 + $0x1a4] sm:$0xff]
  %v86 = vld [vmem:[%s0 + $0x1ac] sm:$0xf]
  %v87 = vld [vmem:[%s1] sm:$0xf]
  %v88 = vld [vmem:[%s1 + $0x4] sm:$0xf]
  %v89 = vld [vmem:[%s1 + $0x8] sm:$0xf]
  %v90 = vld [vmem:[%s1 + $0xc] sm:$0xf]
  %v91 = vld [vmem:[%s1 + $0x10] sm:$0xf]
  %v92 = vld [vmem:[%s1 + $0x14] sm:$0xf]
  %v93 = vld [vmem:[%s1 + $0x18] sm:$0xf]
  %v94 = vld [vmem:[%s1 + $0x1c] sm:$0xf]
  %v95 = vld [vmem:[%s1 + $0x20] sm:$0xf]
  %v96 = vld [vmem:[%s1 + $0x24] sm:$0xf]
  %v97 = vld [vmem:[%s1 + $0x28] sm:$0xf]
  %v98 = vld [vmem:[%s1 + $0x2c] sm:$0xf]
  %v99 = vld [vmem:[%s1 + $0x30] sm:$0xf]
  %v100 = vld [vmem:[%s1 + $0x34] sm:$0xf]
  %v101 = vld [vmem:[%s1 + $0x38] sm:$0xf]
  %v102 = vld [vmem:[%s1 + $0x3c] sm:$0xf]
  %v103 = vld [vmem:[%s1 + $0x40] sm:$0xf]
  %v104 = vld [vmem:[%s1 + $0x44] sm:$0xf]
  %v105 = vld [vmem:[%s1 + $0x48] sm:$0xf]
  %v106 = vld [vmem:[%s1 + $0x4c] sm:$0xf]
  %v107 = vld [vmem:[%s1 + $0x50] sm:$0xf]
  %v108 = vld [vmem:[%s1 + $0x54] sm:$0xf]
  %v109 = vld [vmem:[%s1 + $0x58] sm:$0xf]
  %v110 = vld [vmem:[%s1 + $0x5c] sm:$0xf]
  %v111 = vld [vmem:[%s1 + $0x60] sm:$0xf]
  %v112 = vld [vmem:[%s1 + $0x64] sm:$0xf]
  %v113 = vld [vmem:[%s1 + $0x68] sm:$0xf]
  %v114 = vld [vmem:[%s1 + $0x6c] sm:$0xf]
  %v115 = vld [vmem:[%s1 + $0x70] sm:$0xf]
  %v116 = vld [vmem:[%s1 + $0x74] sm:$0xf]
  %v117 = vld [vmem:[%s1 + $0x78] sm:$0xf]
  %v118 = vld [vmem:[%s1 + $0x7c] sm:$0xf]
  %v119 = vld [vmem:[%s1 + $0x80] sm:$0xf]
  %v120 = vld [vmem:[%s1 + $0x84] sm:$0xf]
  %v121 = vld [vmem:[%s1 + $0x88] sm:$0xf]
  %v122 = vld [vmem:[%s1 + $0x8c] sm:$0xf]
  %v123 = vld [vmem:[%s2] sm:$0x1]
  %v125 = vlaneseq
  %v126 = vshrl.u32 %v125, 7
  %v127 = vsub.s32 0, %v126
  %v128 = vrot.slane %v123, %v127
  %v202 = vunpack.c.l.b16 %v15
  %v203 = vunpack.c.h.b16 %v15
  %v204 = vunpack.c.l.b16 %v16
  %v205 = vunpack.c.l.b16 %v17
  %v206 = vunpack.c.h.b16 %v17
  %v207 = vunpack.c.l.b16 %v18
  %v208 = vunpack.c.l.b16 %v19
  %v209 = vunpack.c.h.b16 %v19
  %v210 = vunpack.c.l.b16 %v20
  %v211 = vunpack.c.l.b16 %v21
  %v212 = vunpack.c.h.b16 %v21
  %v213 = vunpack.c.l.b16 %v22
  %v214 = vunpack.c.l.b16 %v23
  %v215 = vunpack.c.h.b16 %v23
  %v216 = vunpack.c.l.b16 %v24
  %v217 = vunpack.c.l.b16 %v25
  %v218 = vunpack.c.h.b16 %v25
  %v219 = vunpack.c.l.b16 %v26
  %v220 = vunpack.c.l.b16 %v27
  %v221 = vunpack.c.h.b16 %v27
  %v222 = vunpack.c.l.b16 %v28
  %v223 = vunpack.c.l.b16 %v29
  %v224 = vunpack.c.h.b16 %v29
  %v225 = vunpack.c.l.b16 %v30
  %v226 = vunpack.c.l.b16 %v31
  %v227 = vunpack.c.h.b16 %v31
  %v228 = vunpack.c.l.b16 %v32
  %v229 = vunpack.c.l.b16 %v33
  %v230 = vunpack.c.h.b16 %v33
  %v231 = vunpack.c.l.b16 %v34
  %v232 = vunpack.c.l.b16 %v35
  %v233 = vunpack.c.h.b16 %v35
  %v234 = vunpack.c.l.b16 %v36
  %v235 = vunpack.c.l.b16 %v37
  %v236 = vunpack.c.h.b16 %v37
  %v237 = vunpack.c.l.b16 %v38
  %v238 = vunpack.c.l.b16 %v39
  %v239 = vunpack.c.h.b16 %v39
  %v240 = vunpack.c.l.b16 %v40
  %v241 = vunpack.c.l.b16 %v41
  %v242 = vunpack.c.h.b16 %v41
  %v243 = vunpack.c.l.b16 %v42
  %v244 = vunpack.c.l.b16 %v43
  %v245 = vunpack.c.h.b16 %v43
  %v246 = vunpack.c.l.b16 %v44
  %v247 = vunpack.c.l.b16 %v45
  %v248 = vunpack.c.h.b16 %v45
  %v249 = vunpack.c.l.b16 %v46
  %v250 = vunpack.c.l.b16 %v47
  %v251 = vunpack.c.h.b16 %v47
  %v252 = vunpack.c.l.b16 %v48
  %v253 = vunpack.c.l.b16 %v49
  %v254 = vunpack.c.h.b16 %v49
  %v255 = vunpack.c.l.b16 %v50
  %v256 = vunpack.c.l.b16 %v51
  %v257 = vunpack.c.h.b16 %v51
  %v258 = vunpack.c.l.b16 %v52
  %v259 = vunpack.c.l.b16 %v53
  %v260 = vunpack.c.h.b16 %v53
  %v261 = vunpack.c.l.b16 %v54
  %v262 = vunpack.c.l.b16 %v55
  %v263 = vunpack.c.h.b16 %v55
  %v264 = vunpack.c.l.b16 %v56
  %v265 = vunpack.c.l.b16 %v57
  %v266 = vunpack.c.h.b16 %v57
  %v267 = vunpack.c.l.b16 %v58
  %v268 = vunpack.c.l.b16 %v59
  %v269 = vunpack.c.h.b16 %v59
  %v270 = vunpack.c.l.b16 %v60
  %v271 = vunpack.c.l.b16 %v61
  %v272 = vunpack.c.h.b16 %v61
  %v273 = vunpack.c.l.b16 %v62
  %v274 = vunpack.c.l.b16 %v63
  %v275 = vunpack.c.h.b16 %v63
  %v276 = vunpack.c.l.b16 %v64
  %v277 = vunpack.c.l.b16 %v65
  %v278 = vunpack.c.h.b16 %v65
  %v279 = vunpack.c.l.b16 %v66
  %v280 = vunpack.c.l.b16 %v67
  %v281 = vunpack.c.h.b16 %v67
  %v282 = vunpack.c.l.b16 %v68
  %v283 = vunpack.c.l.b16 %v69
  %v284 = vunpack.c.h.b16 %v69
  %v285 = vunpack.c.l.b16 %v70
  %v286 = vunpack.c.l.b16 %v71
  %v287 = vunpack.c.h.b16 %v71
  %v288 = vunpack.c.l.b16 %v72
  %v289 = vunpack.c.l.b16 %v73
  %v290 = vunpack.c.h.b16 %v73
  %v291 = vunpack.c.l.b16 %v74
  %v292 = vunpack.c.l.b16 %v75
  %v293 = vunpack.c.h.b16 %v75
  %v294 = vunpack.c.l.b16 %v76
  %v295 = vunpack.c.l.b16 %v77
  %v296 = vunpack.c.h.b16 %v77
  %v297 = vunpack.c.l.b16 %v78
  %v298 = vunpack.c.l.b16 %v79
  %v299 = vunpack.c.h.b16 %v79
  %v300 = vunpack.c.l.b16 %v80
  %v301 = vunpack.c.l.b16 %v81
  %v302 = vunpack.c.h.b16 %v81
  %v303 = vunpack.c.l.b16 %v82
  %v304 = vunpack.c.l.b16 %v83
  %v305 = vunpack.c.h.b16 %v83
  %v306 = vunpack.c.l.b16 %v84
  %v307 = vunpack.c.l.b16 %v85
  %v308 = vunpack.c.h.b16 %v85
  %v309 = vunpack.c.l.b16 %v86
  %v310 = vpack.c.b16 %v205, %v202
  %v311 = vpack.c.b16 %v206, %v203
  %v312 = vpack.c.b16 %v207, %v204
  %v313 = vpack.c.b16 %v211, %v208
  %v314 = vpack.c.b16 %v212, %v209
  %v315 = vpack.c.b16 %v213, %v210
  %v316 = vpack.c.b16 %v217, %v214
  %v317 = vpack.c.b16 %v218, %v215
  %v318 = vpack.c.b16 %v219, %v216
  %v319 = vpack.c.b16 %v223, %v220
  %v320 = vpack.c.b16 %v224, %v221
  %v321 = vpack.c.b16 %v225, %v222
  %v322 = vpack.c.b16 %v229, %v226
  %v323 = vpack.c.b16 %v230, %v227
  %v324 = vpack.c.b16 %v231, %v228
  %v325 = vpack.c.b16 %v235, %v232
  %v326 = vpack.c.b16 %v236, %v233
  %v327 = vpack.c.b16 %v237, %v234
  %v328 = vpack.c.b16 %v241, %v238
  %v329 = vpack.c.b16 %v242, %v239
  %v330 = vpack.c.b16 %v243, %v240
  %v331 = vpack.c.b16 %v247, %v244
  %v332 = vpack.c.b16 %v248, %v245
  %v333 = vpack.c.b16 %v249, %v246
  %v334 = vpack.c.b16 %v253, %v250
  %v335 = vpack.c.b16 %v254, %v251
  %v336 = vpack.c.b16 %v255, %v252
  %v337 = vpack.c.b16 %v259, %v256
  %v338 = vpack.c.b16 %v260, %v257
  %v339 = vpack.c.b16 %v261, %v258
  %v340 = vpack.c.b16 %v265, %v262
  %v341 = vpack.c.b16 %v266, %v263
  %v342 = vpack.c.b16 %v267, %v264
  %v343 = vpack.c.b16 %v271, %v268
  %v344 = vpack.c.b16 %v272, %v269
  %v345 = vpack.c.b16 %v273, %v270
  %v346 = vpack.c.b16 %v277, %v274
  %v347 = vpack.c.b16 %v278, %v275
  %v348 = vpack.c.b16 %v279, %v276
  %v349 = vpack.c.b16 %v283, %v280
  %v350 = vpack.c.b16 %v284, %v281
  %v351 = vpack.c.b16 %v285, %v282
  %v352 = vpack.c.b16 %v289, %v286
  %v353 = vpack.c.b16 %v290, %v287
  %v354 = vpack.c.b16 %v291, %v288
  %v355 = vpack.c.b16 %v295, %v292
  %v356 = vpack.c.b16 %v296, %v293
  %v357 = vpack.c.b16 %v297, %v294
  %v358 = vpack.c.b16 %v301, %v298
  %v359 = vpack.c.b16 %v302, %v299
  %v360 = vpack.c.b16 %v303, %v300
  %v361 = vpack.c.b16 %v307, %v304
  %v362 = vpack.c.b16 %v308, %v305
  %v363 = vpack.c.b16 %v309, %v306
  %v436 = vunpack.c.l.b16 %v87
  %v437 = vunpack.c.l.b16 %v88
  %v438 = vunpack.c.l.b16 %v89
  %v439 = vunpack.c.l.b16 %v90
  %v440 = vunpack.c.l.b16 %v91
  %v441 = vunpack.c.l.b16 %v92
  %v442 = vunpack.c.l.b16 %v93
  %v443 = vunpack.c.l.b16 %v94
  %v444 = vunpack.c.l.b16 %v95
  %v445 = vunpack.c.l.b16 %v96
  %v446 = vunpack.c.l.b16 %v97
  %v447 = vunpack.c.l.b16 %v98
  %v448 = vunpack.c.l.b16 %v99
  %v449 = vunpack.c.l.b16 %v100
  %v450 = vunpack.c.l.b16 %v101
  %v451 = vunpack.c.l.b16 %v102
  %v452 = vunpack.c.l.b16 %v103
  %v453 = vunpack.c.l.b16 %v104
  %v454 = vunpack.c.l.b16 %v105
  %v455 = vunpack.c.l.b16 %v106
  %v456 = vunpack.c.l.b16 %v107
  %v457 = vunpack.c.l.b16 %v108
  %v458 = vunpack.c.l.b16 %v109
  %v459 = vunpack.c.l.b16 %v110
  %v460 = vunpack.c.l.b16 %v111
  %v461 = vunpack.c.l.b16 %v112
  %v462 = vunpack.c.l.b16 %v113
  %v463 = vunpack.c.l.b16 %v114
  %v464 = vunpack.c.l.b16 %v115
  %v465 = vunpack.c.l.b16 %v116
  %v466 = vunpack.c.l.b16 %v117
  %v467 = vunpack.c.l.b16 %v118
  %v468 = vunpack.c.l.b16 %v119
  %v469 = vunpack.c.l.b16 %v120
  %v470 = vunpack.c.l.b16 %v121
  %v471 = vunpack.c.l.b16 %v122
  %v472 = vpack.c.b16 %v437, %v436
  %v473 = vpack.c.b16 %v439, %v438
  %v474 = vpack.c.b16 %v441, %v440
  %v475 = vpack.c.b16 %v443, %v442
  %v476 = vpack.c.b16 %v445, %v444
  %v477 = vpack.c.b16 %v447, %v446
  %v478 = vpack.c.b16 %v449, %v448
  %v479 = vpack.c.b16 %v451, %v450
  %v480 = vpack.c.b16 %v453, %v452
  %v481 = vpack.c.b16 %v455, %v454
  %v482 = vpack.c.b16 %v457, %v456
  %v483 = vpack.c.b16 %v459, %v458
  %v484 = vpack.c.b16 %v461, %v460
  %v485 = vpack.c.b16 %v463, %v462
  %v486 = vpack.c.b16 %v465, %v464
  %v487 = vpack.c.b16 %v467, %v466
  %v488 = vpack.c.b16 %v469, %v468
  %v489 = vpack.c.b16 %v471, %v470
  %vm508 = vcmask 261120
  %v510 = vsel %vm508, %v312, 0
  %v513 = vsel %vm508, %v315, 0
  %v516 = vsel %vm508, %v318, 0
  %v519 = vsel %vm508, %v321, 0
  %v522 = vsel %vm508, %v324, 0
  %v525 = vsel %vm508, %v327, 0
  %v528 = vsel %vm508, %v330, 0
  %v531 = vsel %vm508, %v333, 0
  %v534 = vsel %vm508, %v336, 0
  %v537 = vsel %vm508, %v339, 0
  %v540 = vsel %vm508, %v342, 0
  %v543 = vsel %vm508, %v345, 0
  %v546 = vsel %vm508, %v348, 0
  %v549 = vsel %vm508, %v351, 0
  %v552 = vsel %vm508, %v354, 0
  %v555 = vsel %vm508, %v357, 0
  %v558 = vsel %vm508, %v360, 0
  %v561 = vsel %vm508, %v363, 0
  %563 = vmatprep.subr.bf16.mxu0 0
  %564 = vmatpush1.bf16.msra.mxu0 %v479
  %565 = vmatprep.subr.bf16.mxu0 0
  %566 = vmatpush1.bf16.msra.mxu0 %v478
  %567 = vmatprep.subr.bf16.mxu0 0
  %568 = vmatpush1.bf16.msra.mxu0 %v477
  %569 = vmatprep.subr.bf16.mxu0 0
  %570 = vmatpush1.bf16.msra.mxu0 %v476
  %571 = vmatprep.subr.bf16.mxu0 0
  %572 = vmatpush1.bf16.msra.mxu0 %v475
  %573 = vmatprep.subr.bf16.mxu0 0
  %574 = vmatpush1.bf16.msra.mxu0 %v474
  %575 = vmatprep.subr.bf16.mxu0 0
  %576 = vmatpush1.bf16.msra.mxu0 %v473
  %577 = vmatprep.subr.bf16.mxu0 0
  %578 = vmatpush1.bf16.msra.mxu0 %v472
  %579 = vmatprep.subr.bf16.mxu0 0
  %580 = vmatpush2.bf16.msra.mxu0 %v487
  %581 = vmatprep.subr.bf16.mxu0 0
  %582 = vmatpush2.bf16.msra.mxu0 %v486
  %583 = vmatprep.subr.bf16.mxu0 0
  %584 = vmatpush2.bf16.msra.mxu0 %v485
  %585 = vmatprep.subr.bf16.mxu0 0
  %586 = vmatpush2.bf16.msra.mxu0 %v484
  %587 = vmatprep.subr.bf16.mxu0 0
  %588 = vmatpush2.bf16.msra.mxu0 %v483
  %589 = vmatprep.subr.bf16.mxu0 0
  %590 = vmatpush2.bf16.msra.mxu0 %v482
  %591 = vmatprep.subr.bf16.mxu0 0
  %592 = vmatpush2.bf16.msra.mxu0 %v481
  %593 = vmatprep.subr.bf16.mxu0 0
  %594 = vmatpush2.bf16.msra.mxu0 %v480
  %595 = vmatprep.mubr.bf16.mxu0 %v311
  %596 = vmatmul.mubr.bf16.gmra.mxu0 %v310
  %v597 = vpop.f32.mrf.mxu0
  %v598 = vadd.f32 %v128, %v597
  %v599 = vpop.f32.mrf.mxu0
  %v600 = vpop.f32.mrf.mxu0
  %v601 = vadd.f32 %v128, %v600
  %v602 = vpop.f32.mrf.mxu0
  %603 = vmatprep.mubr.bf16.mxu0 %v314
  %604 = vmatmul.mubr.bf16.gmra.mxu0 %v313
  %v605 = vpop.f32.mrf.mxu0
  %v606 = vadd.f32 %v128, %v605
  %v607 = vpop.f32.mrf.mxu0
  %v608 = vpop.f32.mrf.mxu0
  %v609 = vadd.f32 %v128, %v608
  %v610 = vpop.f32.mrf.mxu0
  %611 = vmatprep.mubr.bf16.mxu0 %v317
  %612 = vmatmul.mubr.bf16.gmra.mxu0 %v316
  %v613 = vpop.f32.mrf.mxu0
  %v614 = vadd.f32 %v128, %v613
  %v615 = vpop.f32.mrf.mxu0
  %v616 = vpop.f32.mrf.mxu0
  %v617 = vadd.f32 %v128, %v616
  %v618 = vpop.f32.mrf.mxu0
  %619 = vmatprep.mubr.bf16.mxu0 %v320
  %620 = vmatmul.mubr.bf16.gmra.mxu0 %v319
  %v621 = vpop.f32.mrf.mxu0
  %v622 = vadd.f32 %v128, %v621
  %v623 = vpop.f32.mrf.mxu0
  %v624 = vpop.f32.mrf.mxu0
  %v625 = vadd.f32 %v128, %v624
  %v626 = vpop.f32.mrf.mxu0
  %627 = vmatprep.mubr.bf16.mxu0 %v323
  %628 = vmatmul.mubr.bf16.gmra.mxu0 %v322
  %v629 = vpop.f32.mrf.mxu0
  %v630 = vadd.f32 %v128, %v629
  %v631 = vpop.f32.mrf.mxu0
  %v632 = vpop.f32.mrf.mxu0
  %v633 = vadd.f32 %v128, %v632
  %v634 = vpop.f32.mrf.mxu0
  %635 = vmatprep.mubr.bf16.mxu0 %v326
  %636 = vmatmul.mubr.bf16.gmra.mxu0 %v325
  %v637 = vpop.f32.mrf.mxu0
  %v638 = vadd.f32 %v128, %v637
  %v639 = vpop.f32.mrf.mxu0
  %v640 = vpop.f32.mrf.mxu0
  %v641 = vadd.f32 %v128, %v640
  %v642 = vpop.f32.mrf.mxu0
  %643 = vmatprep.mubr.bf16.mxu0 %v329
  %644 = vmatmul.mubr.bf16.gmra.mxu0 %v328
  %v645 = vpop.f32.mrf.mxu0
  %v646 = vadd.f32 %v128, %v645
  %v647 = vpop.f32.mrf.mxu0
  %v648 = vpop.f32.mrf.mxu0
  %v649 = vadd.f32 %v128, %v648
  %v650 = vpop.f32.mrf.mxu0
  %651 = vmatprep.mubr.bf16.mxu0 %v332
  %652 = vmatmul.mubr.bf16.gmra.mxu0 %v331
  %v653 = vpop.f32.mrf.mxu0
  %v654 = vadd.f32 %v128, %v653
  %v655 = vpop.f32.mrf.mxu0
  %v656 = vpop.f32.mrf.mxu0
  %v657 = vadd.f32 %v128, %v656
  %v658 = vpop.f32.mrf.mxu0
  %659 = vmatprep.mubr.bf16.mxu0 %v335
  %660 = vmatmul.mubr.bf16.gmra.mxu0 %v334
  %v661 = vpop.f32.mrf.mxu0
  %v662 = vadd.f32 %v128, %v661
  %v663 = vpop.f32.mrf.mxu0
  %v664 = vpop.f32.mrf.mxu0
  %v665 = vadd.f32 %v128, %v664
  %v666 = vpop.f32.mrf.mxu0
  %667 = vmatprep.mubr.bf16.mxu0 %v338
  %668 = vmatmul.mubr.bf16.gmra.mxu0 %v337
  %v669 = vpop.f32.mrf.mxu0
  %v670 = vadd.f32 %v128, %v669
  %v671 = vpop.f32.mrf.mxu0
  %v672 = vpop.f32.mrf.mxu0
  %v673 = vadd.f32 %v128, %v672
  %v674 = vpop.f32.mrf.mxu0
  %675 = vmatprep.mubr.bf16.mxu0 %v341
  %676 = vmatmul.mubr.bf16.gmra.mxu0 %v340
  %v677 = vpop.f32.mrf.mxu0
  %v678 = vadd.f32 %v128, %v677
  %v679 = vpop.f32.mrf.mxu0
  %v680 = vpop.f32.mrf.mxu0
  %v681 = vadd.f32 %v128, %v680
  %v682 = vpop.f32.mrf.mxu0
  %683 = vmatprep.mubr.bf16.mxu0 %v344
  %684 = vmatmul.mubr.bf16.gmra.mxu0 %v343
  %v685 = vpop.f32.mrf.mxu0
  %v686 = vadd.f32 %v128, %v685
  %v687 = vpop.f32.mrf.mxu0
  %v688 = vpop.f32.mrf.mxu0
  %v689 = vadd.f32 %v128, %v688
  %v690 = vpop.f32.mrf.mxu0
  %691 = vmatprep.mubr.bf16.mxu0 %v347
  %692 = vmatmul.mubr.bf16.gmra.mxu0 %v346
  %v693 = vpop.f32.mrf.mxu0
  %v694 = vadd.f32 %v128, %v693
  %v695 = vpop.f32.mrf.mxu0
  %v696 = vpop.f32.mrf.mxu0
  %v697 = vadd.f32 %v128, %v696
  %v698 = vpop.f32.mrf.mxu0
  %699 = vmatprep.mubr.bf16.mxu0 %v350
  %700 = vmatmul.mubr.bf16.gmra.mxu0 %v349
  %v701 = vpop.f32.mrf.mxu0
  %v702 = vadd.f32 %v128, %v701
  %v703 = vpop.f32.mrf.mxu0
  %v704 = vpop.f32.mrf.mxu0
  %v705 = vadd.f32 %v128, %v704
  %v706 = vpop.f32.mrf.mxu0
  %707 = vmatprep.mubr.bf16.mxu0 %v353
  %708 = vmatmul.mubr.bf16.gmra.mxu0 %v352
  %v709 = vpop.f32.mrf.mxu0
  %v710 = vadd.f32 %v128, %v709
  %v711 = vpop.f32.mrf.mxu0
  %v712 = vpop.f32.mrf.mxu0
  %v713 = vadd.f32 %v128, %v712
  %v714 = vpop.f32.mrf.mxu0
  %715 = vmatprep.mubr.bf16.mxu0 %v356
  %716 = vmatmul.mubr.bf16.gmra.mxu0 %v355
  %v717 = vpop.f32.mrf.mxu0
  %v718 = vadd.f32 %v128, %v717
  %v719 = vpop.f32.mrf.mxu0
  %v720 = vpop.f32.mrf.mxu0
  %v721 = vadd.f32 %v128, %v720
  %v722 = vpop.f32.mrf.mxu0
  %723 = vmatprep.mubr.bf16.mxu0 %v359
  %724 = vmatmul.mubr.bf16.gmra.mxu0 %v358
  %v725 = vpop.f32.mrf.mxu0
  %v726 = vadd.f32 %v128, %v725
  %v727 = vpop.f32.mrf.mxu0
  %v728 = vpop.f32.mrf.mxu0
  %v729 = vadd.f32 %v128, %v728
  %v730 = vpop.f32.mrf.mxu0
  %731 = vmatprep.mubr.bf16.mxu0 %v362
  %732 = vmatmul.mubr.bf16.gmra.mxu0 %v361
  %v733 = vpop.f32.mrf.mxu0
  %v734 = vadd.f32 %v128, %v733
  %v735 = vpop.f32.mrf.mxu0
  %v736 = vpop.f32.mrf.mxu0
  %v737 = vadd.f32 %v128, %v736
  %v738 = vpop.f32.mrf.mxu0
  %739 = vdwg.mxu0
  %740 = vmatprep.subr.bf16.mxu0 0
  %741 = vmatpush1.bf16.msra.mxu0 0
  %742 = vmatprep.subr.bf16.mxu0 0
  %743 = vmatpush1.bf16.msra.mxu0 0
  %744 = vmatprep.subr.bf16.mxu0 0
  %745 = vmatpush1.bf16.msra.mxu0 0
  %746 = vmatprep.subr.bf16.mxu0 0
  %747 = vmatpush1.bf16.msra.mxu0 0
  %748 = vmatprep.subr.bf16.mxu0 0
  %749 = vmatpush1.bf16.msra.mxu0 0
  %750 = vmatprep.subr.bf16.mxu0 0
  %751 = vmatpush1.bf16.msra.mxu0 0
  %752 = vmatprep.subr.bf16.mxu0 0
  %753 = vmatpush1.bf16.msra.mxu0 %v489
  %754 = vmatprep.subr.bf16.mxu0 0
  %755 = vmatpush1.bf16.msra.mxu0 %v488
  %756 = vmatprep.subr.bf16.mxu0 0
  %757 = vmatpush2.bf16.msra.mxu0 0
  %758 = vmatprep.subr.bf16.mxu0 0
  %759 = vmatpush2.bf16.msra.mxu0 0
  %760 = vmatprep.subr.bf16.mxu0 0
  %761 = vmatpush2.bf16.msra.mxu0 0
  %762 = vmatprep.subr.bf16.mxu0 0
  %763 = vmatpush2.bf16.msra.mxu0 0
  %764 = vmatprep.subr.bf16.mxu0 0
  %765 = vmatpush2.bf16.msra.mxu0 0
  %766 = vmatprep.subr.bf16.mxu0 0
  %767 = vmatpush2.bf16.msra.mxu0 0
  %768 = vmatprep.subr.bf16.mxu0 0
  %769 = vmatpush2.bf16.msra.mxu0 0
  %770 = vmatprep.subr.bf16.mxu0 0
  %771 = vmatpush2.bf16.msra.mxu0 0
  %772 = vmatprep.mubr.bf16.mxu0 0
  %773 = vmatmul.mubr.bf16.gmra.mxu0 %v510
  %v774 = vpop.f32.mrf.mxu0
  %v775 = vadd.f32 %v598, %v774
  %v776 = vpop.f32.mrf.mxu0
  %v777 = vpop.f32.mrf.mxu0
  %v778 = vadd.f32 %v601, %v777
  %v779 = vpop.f32.mrf.mxu0
  %780 = vmatprep.mubr.bf16.mxu0 0
  %781 = vmatmul.mubr.bf16.gmra.mxu0 %v513
  %v782 = vpop.f32.mrf.mxu0
  %v783 = vadd.f32 %v606, %v782
  %v784 = vpop.f32.mrf.mxu0
  %v785 = vpop.f32.mrf.mxu0
  %v786 = vadd.f32 %v609, %v785
  %v787 = vpop.f32.mrf.mxu0
  %788 = vmatprep.mubr.bf16.mxu0 0
  %789 = vmatmul.mubr.bf16.gmra.mxu0 %v516
  %v790 = vpop.f32.mrf.mxu0
  %v791 = vadd.f32 %v614, %v790
  %v792 = vpop.f32.mrf.mxu0
  %v793 = vpop.f32.mrf.mxu0
  %v794 = vadd.f32 %v617, %v793
  %v795 = vpop.f32.mrf.mxu0
  %796 = vmatprep.mubr.bf16.mxu0 0
  %797 = vmatmul.mubr.bf16.gmra.mxu0 %v519
  %v798 = vpop.f32.mrf.mxu0
  %v799 = vadd.f32 %v622, %v798
  %v800 = vpop.f32.mrf.mxu0
  %v801 = vpop.f32.mrf.mxu0
  %v802 = vadd.f32 %v625, %v801
  %v803 = vpop.f32.mrf.mxu0
  %804 = vmatprep.mubr.bf16.mxu0 0
  %805 = vmatmul.mubr.bf16.gmra.mxu0 %v522
  %v806 = vpop.f32.mrf.mxu0
  %v807 = vadd.f32 %v630, %v806
  %v808 = vpop.f32.mrf.mxu0
  %v809 = vpop.f32.mrf.mxu0
  %v810 = vadd.f32 %v633, %v809
  %v811 = vpop.f32.mrf.mxu0
  %812 = vmatprep.mubr.bf16.mxu0 0
  %813 = vmatmul.mubr.bf16.gmra.mxu0 %v525
  %v814 = vpop.f32.mrf.mxu0
  %v815 = vadd.f32 %v638, %v814
  %v816 = vpop.f32.mrf.mxu0
  %v817 = vpop.f32.mrf.mxu0
  %v818 = vadd.f32 %v641, %v817
  %v819 = vpop.f32.mrf.mxu0
  %820 = vmatprep.mubr.bf16.mxu0 0
  %821 = vmatmul.mubr.bf16.gmra.mxu0 %v528
  %v822 = vpop.f32.mrf.mxu0
  %v823 = vadd.f32 %v646, %v822
  %v824 = vpop.f32.mrf.mxu0
  %v825 = vpop.f32.mrf.mxu0
  %v826 = vadd.f32 %v649, %v825
  %v827 = vpop.f32.mrf.mxu0
  %828 = vmatprep.mubr.bf16.mxu0 0
  %829 = vmatmul.mubr.bf16.gmra.mxu0 %v531
  %v830 = vpop.f32.mrf.mxu0
  %v831 = vadd.f32 %v654, %v830
  %v832 = vpop.f32.mrf.mxu0
  %v833 = vpop.f32.mrf.mxu0
  %v834 = vadd.f32 %v657, %v833
  %v835 = vpop.f32.mrf.mxu0
  %836 = vmatprep.mubr.bf16.mxu0 0
  %837 = vmatmul.mubr.bf16.gmra.mxu0 %v534
  %v838 = vpop.f32.mrf.mxu0
  %v839 = vadd.f32 %v662, %v838
  %v840 = vpop.f32.mrf.mxu0
  %v841 = vpop.f32.mrf.mxu0
  %v842 = vadd.f32 %v665, %v841
  %v843 = vpop.f32.mrf.mxu0
  %844 = vmatprep.mubr.bf16.mxu0 0
  %845 = vmatmul.mubr.bf16.gmra.mxu0 %v537
  %v846 = vpop.f32.mrf.mxu0
  %v847 = vadd.f32 %v670, %v846
  %v848 = vpop.f32.mrf.mxu0
  %v849 = vpop.f32.mrf.mxu0
  %v850 = vadd.f32 %v673, %v849
  %v851 = vpop.f32.mrf.mxu0
  %852 = vmatprep.mubr.bf16.mxu0 0
  %853 = vmatmul.mubr.bf16.gmra.mxu0 %v540
  %v854 = vpop.f32.mrf.mxu0
  %v855 = vadd.f32 %v678, %v854
  %v856 = vpop.f32.mrf.mxu0
  %v857 = vpop.f32.mrf.mxu0
  %v858 = vadd.f32 %v681, %v857
  %v859 = vpop.f32.mrf.mxu0
  %860 = vmatprep.mubr.bf16.mxu0 0
  %861 = vmatmul.mubr.bf16.gmra.mxu0 %v543
  %v862 = vpop.f32.mrf.mxu0
  %v863 = vadd.f32 %v686, %v862
  %v864 = vpop.f32.mrf.mxu0
  %v865 = vpop.f32.mrf.mxu0
  %v866 = vadd.f32 %v689, %v865
  %v867 = vpop.f32.mrf.mxu0
  %868 = vmatprep.mubr.bf16.mxu0 0
  %869 = vmatmul.mubr.bf16.gmra.mxu0 %v546
  %v870 = vpop.f32.mrf.mxu0
  %v871 = vadd.f32 %v694, %v870
  %v872 = vpop.f32.mrf.mxu0
  %v873 = vpop.f32.mrf.mxu0
  %v874 = vadd.f32 %v697, %v873
  %v875 = vpop.f32.mrf.mxu0
  %876 = vmatprep.mubr.bf16.mxu0 0
  %877 = vmatmul.mubr.bf16.gmra.mxu0 %v549
  %v878 = vpop.f32.mrf.mxu0
  %v879 = vadd.f32 %v702, %v878
  %v880 = vpop.f32.mrf.mxu0
  %v881 = vpop.f32.mrf.mxu0
  %v882 = vadd.f32 %v705, %v881
  %v883 = vpop.f32.mrf.mxu0
  %884 = vmatprep.mubr.bf16.mxu0 0
  %885 = vmatmul.mubr.bf16.gmra.mxu0 %v552
  %v886 = vpop.f32.mrf.mxu0
  %v887 = vadd.f32 %v710, %v886
  %v888 = vpop.f32.mrf.mxu0
  %v889 = vpop.f32.mrf.mxu0
  %v890 = vadd.f32 %v713, %v889
  %v891 = vpop.f32.mrf.mxu0
  %892 = vmatprep.mubr.bf16.mxu0 0
  %893 = vmatmul.mubr.bf16.gmra.mxu0 %v555
  %v894 = vpop.f32.mrf.mxu0
  %v895 = vadd.f32 %v718, %v894
  %v896 = vpop.f32.mrf.mxu0
  %v897 = vpop.f32.mrf.mxu0
  %v898 = vadd.f32 %v721, %v897
  %v899 = vpop.f32.mrf.mxu0
  %900 = vmatprep.mubr.bf16.mxu0 0
  %901 = vmatmul.mubr.bf16.gmra.mxu0 %v558
  %v902 = vpop.f32.mrf.mxu0
  %v903 = vadd.f32 %v726, %v902
  %v904 = vpop.f32.mrf.mxu0
  %v905 = vpop.f32.mrf.mxu0
  %v906 = vadd.f32 %v729, %v905
  %v907 = vpop.f32.mrf.mxu0
  %908 = vmatprep.mubr.bf16.mxu0 0
  %909 = vmatmul.mubr.bf16.gmra.mxu0 %v561
  %v910 = vpop.f32.mrf.mxu0
  %v911 = vadd.f32 %v734, %v910
  %v912 = vpop.f32.mrf.mxu0
  %v913 = vpop.f32.mrf.mxu0
  %v914 = vadd.f32 %v737, %v913
  %v915 = vpop.f32.mrf.mxu0
  %916 = vdwg.mxu0
  %v917 = vmax.f32 %v775, 0.0
  %v918 = vmax.f32 %v778, 0.0
  %v919 = vmax.f32 %v783, 0.0
  %v920 = vmax.f32 %v786, 0.0
  %v921 = vmax.f32 %v791, 0.0
  %v922 = vmax.f32 %v794, 0.0
  %v923 = vmax.f32 %v799, 0.0
  %v924 = vmax.f32 %v802, 0.0
  %v925 = vmax.f32 %v807, 0.0
  %v926 = vmax.f32 %v810, 0.0
  %v927 = vmax.f32 %v815, 0.0
  %v928 = vmax.f32 %v818, 0.0
  %v929 = vmax.f32 %v823, 0.0
  %v930 = vmax.f32 %v826, 0.0
  %v931 = vmax.f32 %v831, 0.0
  %v932 = vmax.f32 %v834, 0.0
  %v933 = vmax.f32 %v839, 0.0
  %v934 = vmax.f32 %v842, 0.0
  %v935 = vmax.f32 %v847, 0.0
  %v936 = vmax.f32 %v850, 0.0
  %v937 = vmax.f32 %v855, 0.0
  %v938 = vmax.f32 %v858, 0.0
  %v939 = vmax.f32 %v863, 0.0
  %v940 = vmax.f32 %v866, 0.0
  %v941 = vmax.f32 %v871, 0.0
  %v942 = vmax.f32 %v874, 0.0
  %v943 = vmax.f32 %v879, 0.0
  %v944 = vmax.f32 %v882, 0.0
  %v945 = vmax.f32 %v887, 0.0
  %v946 = vmax.f32 %v890, 0.0
  %v947 = vmax.f32 %v895, 0.0
  %v948 = vmax.f32 %v898, 0.0
  %v949 = vmax.f32 %v903, 0.0
  %v950 = vmax.f32 %v906, 0.0
  %v951 = vmax.f32 %v911, 0.0
  %v952 = vmax.f32 %v914, 0.0
  %v953 = vpack.c.bf16 %v918, %v917
  %v954 = vpack.c.bf16 %v920, %v919
  %v955 = vpack.c.bf16 %v922, %v921
  %v956 = vpack.c.bf16 %v924, %v923
  %v957 = vpack.c.bf16 %v926, %v925
  %v958 = vpack.c.bf16 %v928, %v927
  %v959 = vpack.c.bf16 %v930, %v929
  %v960 = vpack.c.bf16 %v932, %v931
  %v961 = vpack.c.bf16 %v934, %v933
  %v962 = vpack.c.bf16 %v936, %v935
  %v963 = vpack.c.bf16 %v938, %v937
  %v964 = vpack.c.bf16 %v940, %v939
  %v965 = vpack.c.bf16 %v942, %v941
  %v966 = vpack.c.bf16 %v944, %v943
  %v967 = vpack.c.bf16 %v946, %v945
  %v968 = vpack.c.bf16 %v948, %v947
  %v969 = vpack.c.bf16 %v950, %v949
  %v970 = vpack.c.bf16 %v952, %v951
  %v989 = vunpack.c.l.b16 %v953
  %v990 = vunpack.c.h.b16 %v953
  %v991 = vunpack.c.l.b16 %v954
  %v992 = vunpack.c.h.b16 %v954
  %v993 = vunpack.c.l.b16 %v955
  %v994 = vunpack.c.h.b16 %v955
  %v995 = vunpack.c.l.b16 %v956
  %v996 = vunpack.c.h.b16 %v956
  %v997 = vunpack.c.l.b16 %v957
  %v998 = vunpack.c.h.b16 %v957
  %v999 = vunpack.c.l.b16 %v958
  %v1000 = vunpack.c.h.b16 %v958
  %v1001 = vunpack.c.l.b16 %v959
  %v1002 = vunpack.c.h.b16 %v959
  %v1003 = vunpack.c.l.b16 %v960
  %v1004 = vunpack.c.h.b16 %v960
  %v1005 = vunpack.c.l.b16 %v961
  %v1006 = vunpack.c.h.b16 %v961
  %v1007 = vunpack.c.l.b16 %v962
  %v1008 = vunpack.c.h.b16 %v962
  %v1009 = vunpack.c.l.b16 %v963
  %v1010 = vunpack.c.h.b16 %v963
  %v1011 = vunpack.c.l.b16 %v964
  %v1012 = vunpack.c.h.b16 %v964
  %v1013 = vunpack.c.l.b16 %v965
  %v1014 = vunpack.c.h.b16 %v965
  %v1015 = vunpack.c.l.b16 %v966
  %v1016 = vunpack.c.h.b16 %v966
  %v1017 = vunpack.c.l.b16 %v967
  %v1018 = vunpack.c.h.b16 %v967
  %v1019 = vunpack.c.l.b16 %v968
  %v1020 = vunpack.c.h.b16 %v968
  %v1021 = vunpack.c.l.b16 %v969
  %v1022 = vunpack.c.h.b16 %v969
  %v1023 = vunpack.c.l.b16 %v970
  %v1024 = vunpack.c.h.b16 %v970
  %v1025 = vpack.c.b16 %v989, %v989
  %v1026 = vpack.c.b16 %v990, %v990
  %v1027 = vpack.c.b16 %v991, %v991
  %v1028 = vpack.c.b16 %v992, %v992
  %v1029 = vpack.c.b16 %v993, %v993
  %v1030 = vpack.c.b16 %v994, %v994
  %v1031 = vpack.c.b16 %v995, %v995
  %v1032 = vpack.c.b16 %v996, %v996
  %v1033 = vpack.c.b16 %v997, %v997
  %v1034 = vpack.c.b16 %v998, %v998
  %v1035 = vpack.c.b16 %v999, %v999
  %v1036 = vpack.c.b16 %v1000, %v1000
  %v1037 = vpack.c.b16 %v1001, %v1001
  %v1038 = vpack.c.b16 %v1002, %v1002
  %v1039 = vpack.c.b16 %v1003, %v1003
  %v1040 = vpack.c.b16 %v1004, %v1004
  %v1041 = vpack.c.b16 %v1005, %v1005
  %v1042 = vpack.c.b16 %v1006, %v1006
  %v1043 = vpack.c.b16 %v1007, %v1007
  %v1044 = vpack.c.b16 %v1008, %v1008
  %v1045 = vpack.c.b16 %v1009, %v1009
  %v1046 = vpack.c.b16 %v1010, %v1010
  %v1047 = vpack.c.b16 %v1011, %v1011
  %v1048 = vpack.c.b16 %v1012, %v1012
  %v1049 = vpack.c.b16 %v1013, %v1013
  %v1050 = vpack.c.b16 %v1014, %v1014
  %v1051 = vpack.c.b16 %v1015, %v1015
  %v1052 = vpack.c.b16 %v1016, %v1016
  %v1053 = vpack.c.b16 %v1017, %v1017
  %v1054 = vpack.c.b16 %v1018, %v1018
  %v1055 = vpack.c.b16 %v1019, %v1019
  %v1056 = vpack.c.b16 %v1020, %v1020
  %v1057 = vpack.c.b16 %v1021, %v1021
  %v1058 = vpack.c.b16 %v1022, %v1022
  %v1059 = vpack.c.b16 %v1023, %v1023
  %v1060 = vpack.c.b16 %v1024, %v1024
  %vm1097 = vcmask 257024
  %1098 = vst.msk [vmem:[%s3] sm:$0xf] %vm1097, %v1025
  %1099 = vst.msk [vmem:[%s3 + $0x4] sm:$0xf] %vm1097, %v1026
  %1100 = vst.msk [vmem:[%s3 + $0x8] sm:$0xf] %vm1097, %v1027
  %1101 = vst.msk [vmem:[%s3 + $0xc] sm:$0xf] %vm1097, %v1028
  %1102 = vst.msk [vmem:[%s3 + $0x10] sm:$0xf] %vm1097, %v1029
  %1103 = vst.msk [vmem:[%s3 + $0x14] sm:$0xf] %vm1097, %v1030
  %1104 = vst.msk [vmem:[%s3 + $0x18] sm:$0xf] %vm1097, %v1031
  %1105 = vst.msk [vmem:[%s3 + $0x1c] sm:$0xf] %vm1097, %v1032
  %1106 = vst.msk [vmem:[%s3 + $0x20] sm:$0xf] %vm1097, %v1033
  %1107 = vst.msk [vmem:[%s3 + $0x24] sm:$0xf] %vm1097, %v1034
  %1108 = vst.msk [vmem:[%s3 + $0x28] sm:$0xf] %vm1097, %v1035
  %1109 = vst.msk [vmem:[%s3 + $0x2c] sm:$0xf] %vm1097, %v1036
  %1110 = vst.msk [vmem:[%s3 + $0x30] sm:$0xf] %vm1097, %v1037
  %1111 = vst.msk [vmem:[%s3 + $0x34] sm:$0xf] %vm1097, %v1038
  %1112 = vst.msk [vmem:[%s3 + $0x38] sm:$0xf] %vm1097, %v1039
  %1113 = vst.msk [vmem:[%s3 + $0x3c] sm:$0xf] %vm1097, %v1040
  %1114 = vst.msk [vmem:[%s3 + $0x40] sm:$0xf] %vm1097, %v1041
  %1115 = vst.msk [vmem:[%s3 + $0x44] sm:$0xf] %vm1097, %v1042
  %1116 = vst.msk [vmem:[%s3 + $0x48] sm:$0xf] %vm1097, %v1043
  %1117 = vst.msk [vmem:[%s3 + $0x4c] sm:$0xf] %vm1097, %v1044
  %1118 = vst.msk [vmem:[%s3 + $0x50] sm:$0xf] %vm1097, %v1045
  %1119 = vst.msk [vmem:[%s3 + $0x54] sm:$0xf] %vm1097, %v1046
  %1120 = vst.msk [vmem:[%s3 + $0x58] sm:$0xf] %vm1097, %v1047
  %1121 = vst.msk [vmem:[%s3 + $0x5c] sm:$0xf] %vm1097, %v1048
  %1122 = vst.msk [vmem:[%s3 + $0x60] sm:$0xf] %vm1097, %v1049
  %1123 = vst.msk [vmem:[%s3 + $0x64] sm:$0xf] %vm1097, %v1050
  %1124 = vst.msk [vmem:[%s3 + $0x68] sm:$0xf] %vm1097, %v1051
  %1125 = vst.msk [vmem:[%s3 + $0x6c] sm:$0xf] %vm1097, %v1052
  %1126 = vst.msk [vmem:[%s3 + $0x70] sm:$0xf] %vm1097, %v1053
  %1127 = vst.msk [vmem:[%s3 + $0x74] sm:$0xf] %vm1097, %v1054
  %1128 = vst.msk [vmem:[%s3 + $0x78] sm:$0xf] %vm1097, %v1055
  %1129 = vst.msk [vmem:[%s3 + $0x7c] sm:$0xf] %vm1097, %v1056
  %1130 = vst.msk [vmem:[%s3 + $0x80] sm:$0xf] %vm1097, %v1057
  %1131 = vst.msk [vmem:[%s3 + $0x84] sm:$0xf] %vm1097, %v1058
  %1132 = vst.msk [vmem:[%s3 + $0x88] sm:$0xf] %vm1097, %v1059
  %1133 = vst.msk [vmem:[%s3 + $0x8c] sm:$0xf] %vm1097, %v1060
  // Predicated region
  $region14: #{ensemble_forward.22} parent=0 // pred_check
    _
  $region15: #{ensemble_forward.22} parent=0 // pred_check_branch
    %1135 = sbr.rel (0) target = $region17
  $region16: #{ensemble_forward.22} parent=0 // pred_region
    _
  $region17: #{ensemble_forward.22} parent=0 // pred_fallthru
    _
  // Predicated region
  $region18: #{ensemble_forward.22} parent=0 // pred_check
    _
  $region19: #{ensemble_forward.22} parent=0 // pred_check_branch
    %1137 = sbr.rel (0) target = $region21
  $region20: #{ensemble_forward.22} parent=0 // pred_region
    _
  $region21: #{ensemble_forward.22} parent=0 // pred_fallthru
    _

// kernel: ensemble_forward.23
$region0: #{ensemble_forward.23}
  #allocation0 [shape = 'u32[]', space=smem, size = 0x4, offset = 0x4, fixed_abs, tag = 'smem constant byte address 0x4 - core index']
  #allocation1 [shape = 'u32[144,128]{1,0:T(1,128)}', space=vmem, size = 0x12000, scoped, tag = 'internal scratch']
  %s0 = inlined_call_operand.vmem [shape: bf16[1,288,288], index: 0, kind: input, shape index: {}]
  %s1 = inlined_call_operand.vmem [shape: bf16[1,288,32], index: 1, kind: input, shape index: {}]
  %s2 = inlined_call_operand.vmem [shape: f32[1,1,32], index: 2, kind: input, shape index: {}]
  %s3 = inlined_call_operand.vmem [shape: bf16[1,288,32], index: 3, kind: input, shape index: {}]
  %s4 = inlined_call_operand.vmem [shape: bf16[1,288,32], index: 4, kind: output, shape index: {}]
  %s5 = sld [smem:[#allocation0]]
  $region26: #{ensemble_forward.23} parent=0
    _
  %s7 = ssub.s32 1, %s5
  %s8 = scalar_select 0, %s7, %s5
  // Predicated region
  $region2: #{ensemble_forward.23} parent=0 // pred_check
    _
  $region3: #{ensemble_forward.23} parent=0 // pred_check_branch
    %10 = sbr.rel (0) target = $region5
  $region4: #{ensemble_forward.23} parent=0 // pred_region
    _
  $region5: #{ensemble_forward.23} parent=0 // pred_fallthru
    _
  // Predicated region
  $region6: #{ensemble_forward.23} parent=0 // pred_check
    _
  $region7: #{ensemble_forward.23} parent=0 // pred_check_branch
    %12 = sbr.rel (0) target = $region9
  $region8: #{ensemble_forward.23} parent=0 // pred_region
    _
  $region9: #{ensemble_forward.23} parent=0 // pred_fallthru
    _
  // Predicated region
  $region10: #{ensemble_forward.23} parent=0 // pred_check
    _
  $region11: #{ensemble_forward.23} parent=0 // pred_check_branch
    %14 = sbr.rel (0) target = $region13
  $region12: #{ensemble_forward.23} parent=0 // pred_region
    _
  $region13: #{ensemble_forward.23} parent=0 // pred_fallthru
    _
  // Predicated region
  $region14: #{ensemble_forward.23} parent=0 // pred_check
    _
  $region15: #{ensemble_forward.23} parent=0 // pred_check_branch
    %16 = sbr.rel (0) target = $region17
  $region16: #{ensemble_forward.23} parent=0 // pred_region
    _
  $region17: #{ensemble_forward.23} parent=0 // pred_fallthru
    _
  %v18 = vld [vmem:[%s0] sm:$0xff]
  %v19 = vld [vmem:[%s0 + $0x8] sm:$0xf]
  %v20 = vld [vmem:[%s0 + $0xc] sm:$0xff]
  %v21 = vld [vmem:[%s0 + $0x14] sm:$0xf]
  %v22 = vld [vmem:[%s0 + $0x18] sm:$0xff]
  %v23 = vld [vmem:[%s0 + $0x20] sm:$0xf]
  %v24 = vld [vmem:[%s0 + $0x24] sm:$0xff]
  %v25 = vld [vmem:[%s0 + $0x2c] sm:$0xf]
  %v26 = vld [vmem:[%s0 + $0x30] sm:$0xff]
  %v27 = vld [vmem:[%s0 + $0x38] sm:$0xf]
  %v28 = vld [vmem:[%s0 + $0x3c] sm:$0xff]
  %v29 = vld [vmem:[%s0 + $0x44] sm:$0xf]
  %v30 = vld [vmem:[%s0 + $0x48] sm:$0xff]
  %v31 = vld [vmem:[%s0 + $0x50] sm:$0xf]
  %v32 = vld [vmem:[%s0 + $0x54] sm:$0xff]
  %v33 = vld [vmem:[%s0 + $0x5c] sm:$0xf]
  %v34 = vld [vmem:[%s0 + $0x60] sm:$0xff]
  %v35 = vld [vmem:[%s0 + $0x68] sm:$0xf]
  %v36 = vld [vmem:[%s0 + $0x6c] sm:$0xff]
  %v37 = vld [vmem:[%s0 + $0x74] sm:$0xf]
  %v38 = vld [vmem:[%s0 + $0x78] sm:$0xff]
  %v39 = vld [vmem:[%s0 + $0x80] sm:$0xf]
  %v40 = vld [vmem:[%s0 + $0x84] sm:$0xff]
  %v41 = vld [vmem:[%s0 + $0x8c] sm:$0xf]
  %v42 = vld [vmem:[%s0 + $0x90] sm:$0xff]
  %v43 = vld [vmem:[%s0 + $0x98] sm:$0xf]
  %v44 = vld [vmem:[%s0 + $0x9c] sm:$0xff]
  %v45 = vld [vmem:[%s0 + $0xa4] sm:$0xf]
  %v46 = vld [vmem:[%s0 + $0xa8] sm:$0xff]
  %v47 = vld [vmem:[%s0 + $0xb0] sm:$0xf]
  %v48 = vld [vmem:[%s0 + $0xb4] sm:$0xff]
  %v49 = vld [vmem:[%s0 + $0xbc] sm:$0xf]
  %v50 = vld [vmem:[%s0 + $0xc0] sm:$0xff]
  %v51 = vld [vmem:[%s0 + $0xc8] sm:$0xf]
  %v52 = vld [vmem:[%s0 + $0xcc] sm:$0xff]
  %v53 = vld [vmem:[%s0 + $0xd4] sm:$0xf]
  %v54 = vld [vmem:[%s0 + $0xd8] sm:$0xff]
  %v55 = vld [vmem:[%s0 + $0xe0] sm:$0xf]
  %v56 = vld [vmem:[%s0 + $0xe4] sm:$0xff]
  %v57 = vld [vmem:[%s0 + $0xec] sm:$0xf]
  %v58 = vld [vmem:[%s0 + $0xf0] sm:$0xff]
  %v59 = vld [vmem:[%s0 + $0xf8] sm:$0xf]
  %v60 = vld [vmem:[%s0 + $0xfc] sm:$0xff]
  %v61 = vld [vmem:[%s0 + $0x104] sm:$0xf]
  %v62 = vld [vmem:[%s0 + $0x108] sm:$0xff]
  %v63 = vld [vmem:[%s0 + $0x110] sm:$0xf]
  %v64 = vld [vmem:[%s0 + $0x114] sm:$0xff]
  %v65 = vld [vmem:[%s0 + $0x11c] sm:$0xf]
  %v66 = vld [vmem:[%s0 + $0x120] sm:$0xff]
  %v67 = vld [vmem:[%s0 + $0x128] sm:$0xf]
  %v68 = vld [vmem:[%s0 + $0x12c] sm:$0xff]
  %v69 = vld [vmem:[%s0 + $0x134] sm:$0xf]
  %v70 = vld [vmem:[%s0 + $0x138] sm:$0xff]
  %v71 = vld [vmem:[%s0 + $0x140] sm:$0xf]
  %v72 = vld [vmem:[%s0 + $0x144] sm:$0xff]
  %v73 = vld [vmem:[%s0 + $0x14c] sm:$0xf]
  %v74 = vld [vmem:[%s0 + $0x150] sm:$0xff]
  %v75 = vld [vmem:[%s0 + $0x158] sm:$0xf]
  %v76 = vld [vmem:[%s0 + $0x15c] sm:$0xff]
  %v77 = vld [vmem:[%s0 + $0x164] sm:$0xf]
  %v78 = vld [vmem:[%s0 + $0x168] sm:$0xff]
  %v79 = vld [vmem:[%s0 + $0x170] sm:$0xf]
  %v80 = vld [vmem:[%s0 + $0x174] sm:$0xff]
  %v81 = vld [vmem:[%s0 + $0x17c] sm:$0xf]
  %v82 = vld [vmem:[%s0 + $0x180] sm:$0xff]
  %v83 = vld [vmem:[%s0 + $0x188] sm:$0xf]
  %v84 = vld [vmem:[%s0 + $0x18c] sm:$0xff]
  %v85 = vld [vmem:[%s0 + $0x194] sm:$0xf]
  %v86 = vld [vmem:[%s0 + $0x198] sm:$0xff]
  %v87 = vld [vmem:[%s0 + $0x1a0] sm:$0xf]
  %v88 = vld [vmem:[%s0 + $0x1a4] sm:$0xff]
  %v89 = vld [vmem:[%s0 + $0x1ac] sm:$0xf]
  %v90 = vld [vmem:[%s1] sm:$0xf]
  %v91 = vld [vmem:[%s1 + $0x4] sm:$0xf]
  %v92 = vld [vmem:[%s1 + $0x8] sm:$0xf]
  %v93 = vld [vmem:[%s1 + $0xc] sm:$0xf]
  %v94 = vld [vmem:[%s1 + $0x10] sm:$0xf]
  %v95 = vld [vmem:[%s1 + $0x14] sm:$0xf]
  %v96 = vld [vmem:[%s1 + $0x18] sm:$0xf]
  %v97 = vld [vmem:[%s1 + $0x1c] sm:$0xf]
  %v98 = vld [vmem:[%s1 + $0x20] sm:$0xf]
  %v99 = vld [vmem:[%s1 + $0x24] sm:$0xf]
  %v100 = vld [vmem:[%s1 + $0x28] sm:$0xf]
  %v101 = vld [vmem:[%s1 + $0x2c] sm:$0xf]
  %v102 = vld [vmem:[%s1 + $0x30] sm:$0xf]
  %v103 = vld [vmem:[%s1 + $0x34] sm:$0xf]
  %v104 = vld [vmem:[%s1 + $0x38] sm:$0xf]
  %v105 = vld [vmem:[%s1 + $0x3c] sm:$0xf]
  %v106 = vld [vmem:[%s1 + $0x40] sm:$0xf]
  %v107 = vld [vmem:[%s1 + $0x44] sm:$0xf]
  %v108 = vld [vmem:[%s1 + $0x48] sm:$0xf]
  %v109 = vld [vmem:[%s1 + $0x4c] sm:$0xf]
  %v110 = vld [vmem:[%s1 + $0x50] sm:$0xf]
  %v111 = vld [vmem:[%s1 + $0x54] sm:$0xf]
  %v112 = vld [vmem:[%s1 + $0x58] sm:$0xf]
  %v113 = vld [vmem:[%s1 + $0x5c] sm:$0xf]
  %v114 = vld [vmem:[%s1 + $0x60] sm:$0xf]
  %v115 = vld [vmem:[%s1 + $0x64] sm:$0xf]
  %v116 = vld [vmem:[%s1 + $0x68] sm:$0xf]
  %v117 = vld [vmem:[%s1 + $0x6c] sm:$0xf]
  %v118 = vld [vmem:[%s1 + $0x70] sm:$0xf]
  %v119 = vld [vmem:[%s1 + $0x74] sm:$0xf]
  %v120 = vld [vmem:[%s1 + $0x78] sm:$0xf]
  %v121 = vld [vmem:[%s1 + $0x7c] sm:$0xf]
  %v122 = vld [vmem:[%s1 + $0x80] sm:$0xf]
  %v123 = vld [vmem:[%s1 + $0x84] sm:$0xf]
  %v124 = vld [vmem:[%s1 + $0x88] sm:$0xf]
  %v125 = vld [vmem:[%s1 + $0x8c] sm:$0xf]
  %v126 = vld [vmem:[%s2] sm:$0x1]
  %v128 = vlaneseq
  %v129 = vshrl.u32 %v128, 7
  %v130 = vsub.s32 0, %v129
  %v131 = vrot.slane %v126, %v130
  %v205 = vunpack.c.l.b16 %v18
  %v206 = vunpack.c.h.b16 %v18
  %v207 = vunpack.c.l.b16 %v19
  %v208 = vunpack.c.l.b16 %v20
  %v209 = vunpack.c.h.b16 %v20
  %v210 = vunpack.c.l.b16 %v21
  %v211 = vunpack.c.l.b16 %v22
  %v212 = vunpack.c.h.b16 %v22
  %v213 = vunpack.c.l.b16 %v23
  %v214 = vunpack.c.l.b16 %v24
  %v215 = vunpack.c.h.b16 %v24
  %v216 = vunpack.c.l.b16 %v25
  %v217 = vunpack.c.l.b16 %v26
  %v218 = vunpack.c.h.b16 %v26
  %v219 = vunpack.c.l.b16 %v27
  %v220 = vunpack.c.l.b16 %v28
  %v221 = vunpack.c.h.b16 %v28
  %v222 = vunpack.c.l.b16 %v29
  %v223 = vunpack.c.l.b16 %v30
  %v224 = vunpack.c.h.b16 %v30
  %v225 = vunpack.c.l.b16 %v31
  %v226 = vunpack.c.l.b16 %v32
  %v227 = vunpack.c.h.b16 %v32
  %v228 = vunpack.c.l.b16 %v33
  %v229 = vunpack.c.l.b16 %v34
  %v230 = vunpack.c.h.b16 %v34
  %v231 = vunpack.c.l.b16 %v35
  %v232 = vunpack.c.l.b16 %v36
  %v233 = vunpack.c.h.b16 %v36
  %v234 = vunpack.c.l.b16 %v37
  %v235 = vunpack.c.l.b16 %v38
  %v236 = vunpack.c.h.b16 %v38
  %v237 = vunpack.c.l.b16 %v39
  %v238 = vunpack.c.l.b16 %v40
  %v239 = vunpack.c.h.b16 %v40
  %v240 = vunpack.c.l.b16 %v41
  %v241 = vunpack.c.l.b16 %v42
  %v242 = vunpack.c.h.b16 %v42
  %v243 = vunpack.c.l.b16 %v43
  %v244 = vunpack.c.l.b16 %v44
  %v245 = vunpack.c.h.b16 %v44
  %v246 = vunpack.c.l.b16 %v45
  %v247 = vunpack.c.l.b16 %v46
  %v248 = vunpack.c.h.b16 %v46
  %v249 = vunpack.c.l.b16 %v47
  %v250 = vunpack.c.l.b16 %v48
  %v251 = vunpack.c.h.b16 %v48
  %v252 = vunpack.c.l.b16 %v49
  %v253 = vunpack.c.l.b16 %v50
  %v254 = vunpack.c.h.b16 %v50
  %v255 = vunpack.c.l.b16 %v51
  %v256 = vunpack.c.l.b16 %v52
  %v257 = vunpack.c.h.b16 %v52
  %v258 = vunpack.c.l.b16 %v53
  %v259 = vunpack.c.l.b16 %v54
  %v260 = vunpack.c.h.b16 %v54
  %v261 = vunpack.c.l.b16 %v55
  %v262 = vunpack.c.l.b16 %v56
  %v263 = vunpack.c.h.b16 %v56
  %v264 = vunpack.c.l.b16 %v57
  %v265 = vunpack.c.l.b16 %v58
  %v266 = vunpack.c.h.b16 %v58
  %v267 = vunpack.c.l.b16 %v59
  %v268 = vunpack.c.l.b16 %v60
  %v269 = vunpack.c.h.b16 %v60
  %v270 = vunpack.c.l.b16 %v61
  %v271 = vunpack.c.l.b16 %v62
  %v272 = vunpack.c.h.b16 %v62
  %v273 = vunpack.c.l.b16 %v63
  %v274 = vunpack.c.l.b16 %v64
  %v275 = vunpack.c.h.b16 %v64
  %v276 = vunpack.c.l.b16 %v65
  %v277 = vunpack.c.l.b16 %v66
  %v278 = vunpack.c.h.b16 %v66
  %v279 = vunpack.c.l.b16 %v67
  %v280 = vunpack.c.l.b16 %v68
  %v281 = vunpack.c.h.b16 %v68
  %v282 = vunpack.c.l.b16 %v69
  %v283 = vunpack.c.l.b16 %v70
  %v284 = vunpack.c.h.b16 %v70
  %v285 = vunpack.c.l.b16 %v71
  %v286 = vunpack.c.l.b16 %v72
  %v287 = vunpack.c.h.b16 %v72
  %v288 = vunpack.c.l.b16 %v73
  %v289 = vunpack.c.l.b16 %v74
  %v290 = vunpack.c.h.b16 %v74
  %v291 = vunpack.c.l.b16 %v75
  %v292 = vunpack.c.l.b16 %v76
  %v293 = vunpack.c.h.b16 %v76
  %v294 = vunpack.c.l.b16 %v77
  %v295 = vunpack.c.l.b16 %v78
  %v296 = vunpack.c.h.b16 %v78
  %v297 = vunpack.c.l.b16 %v79
  %v298 = vunpack.c.l.b16 %v80
  %v299 = vunpack.c.h.b16 %v80
  %v300 = vunpack.c.l.b16 %v81
  %v301 = vunpack.c.l.b16 %v82
  %v302 = vunpack.c.h.b16 %v82
  %v303 = vunpack.c.l.b16 %v83
  %v304 = vunpack.c.l.b16 %v84
  %v305 = vunpack.c.h.b16 %v84
  %v306 = vunpack.c.l.b16 %v85
  %v307 = vunpack.c.l.b16 %v86
  %v308 = vunpack.c.h.b16 %v86
  %v309 = vunpack.c.l.b16 %v87
  %v310 = vunpack.c.l.b16 %v88
  %v311 = vunpack.c.h.b16 %v88
  %v312 = vunpack.c.l.b16 %v89
  %v313 = vpack.c.b16 %v208, %v205
  %v314 = vpack.c.b16 %v209, %v206
  %v315 = vpack.c.b16 %v210, %v207
  %v316 = vpack.c.b16 %v214, %v211
  %v317 = vpack.c.b16 %v215, %v212
  %v318 = vpack.c.b16 %v216, %v213
  %v319 = vpack.c.b16 %v220, %v217
  %v320 = vpack.c.b16 %v221, %v218
  %v321 = vpack.c.b16 %v222, %v219
  %v322 = vpack.c.b16 %v226, %v223
  %v323 = vpack.c.b16 %v227, %v224
  %v324 = vpack.c.b16 %v228, %v225
  %v325 = vpack.c.b16 %v232, %v229
  %v326 = vpack.c.b16 %v233, %v230
  %v327 = vpack.c.b16 %v234, %v231
  %v328 = vpack.c.b16 %v238, %v235
  %v329 = vpack.c.b16 %v239, %v236
  %v330 = vpack.c.b16 %v240, %v237
  %v331 = vpack.c.b16 %v244, %v241
  %v332 = vpack.c.b16 %v245, %v242
  %v333 = vpack.c.b16 %v246, %v243
  %v334 = vpack.c.b16 %v250, %v247
  %v335 = vpack.c.b16 %v251, %v248
  %v336 = vpack.c.b16 %v252, %v249
  %v337 = vpack.c.b16 %v256, %v253
  %v338 = vpack.c.b16 %v257, %v254
  %v339 = vpack.c.b16 %v258, %v255
  %v340 = vpack.c.b16 %v262, %v259
  %v341 = vpack.c.b16 %v263, %v260
  %v342 = vpack.c.b16 %v264, %v261
  %v343 = vpack.c.b16 %v268, %v265
  %v344 = vpack.c.b16 %v269, %v266
  %v345 = vpack.c.b16 %v270, %v267
  %v346 = vpack.c.b16 %v274, %v271
  %v347 = vpack.c.b16 %v275, %v272
  %v348 = vpack.c.b16 %v276, %v273
  %v349 = vpack.c.b16 %v280, %v277
  %v350 = vpack.c.b16 %v281, %v278
  %v351 = vpack.c.b16 %v282, %v279
  %v352 = vpack.c.b16 %v286, %v283
  %v353 = vpack.c.b16 %v287, %v284
  %v354 = vpack.c.b16 %v288, %v285
  %v355 = vpack.c.b16 %v292, %v289
  %v356 = vpack.c.b16 %v293, %v290
  %v357 = vpack.c.b16 %v294, %v291
  %v358 = vpack.c.b16 %v298, %v295
  %v359 = vpack.c.b16 %v299, %v296
  %v360 = vpack.c.b16 %v300, %v297
  %v361 = vpack.c.b16 %v304, %v301
  %v362 = vpack.c.b16 %v305, %v302
  %v363 = vpack.c.b16 %v306, %v303
  %v364 = vpack.c.b16 %v310, %v307
  %v365 = vpack.c.b16 %v311, %v308
  %v366 = vpack.c.b16 %v312, %v309
  %v439 = vunpack.c.l.b16 %v90
  %v440 = vunpack.c.l.b16 %v91
  %v441 = vunpack.c.l.b16 %v92
  %v442 = vunpack.c.l.b16 %v93
  %v443 = vunpack.c.l.b16 %v94
  %v444 = vunpack.c.l.b16 %v95
  %v445 = vunpack.c.l.b16 %v96
  %v446 = vunpack.c.l.b16 %v97
  %v447 = vunpack.c.l.b16 %v98
  %v448 = vunpack.c.l.b16 %v99
  %v449 = vunpack.c.l.b16 %v100
  %v450 = vunpack.c.l.b16 %v101
  %v451 = vunpack.c.l.b16 %v102
  %v452 = vunpack.c.l.b16 %v103
  %v453 = vunpack.c.l.b16 %v104
  %v454 = vunpack.c.l.b16 %v105
  %v455 = vunpack.c.l.b16 %v106
  %v456 = vunpack.c.l.b16 %v107
  %v457 = vunpack.c.l.b16 %v108
  %v458 = vunpack.c.l.b16 %v109
  %v459 = vunpack.c.l.b16 %v110
  %v460 = vunpack.c.l.b16 %v111
  %v461 = vunpack.c.l.b16 %v112
  %v462 = vunpack.c.l.b16 %v113
  %v463 = vunpack.c.l.b16 %v114
  %v464 = vunpack.c.l.b16 %v115
  %v465 = vunpack.c.l.b16 %v116
  %v466 = vunpack.c.l.b16 %v117
  %v467 = vunpack.c.l.b16 %v118
  %v468 = vunpack.c.l.b16 %v119
  %v469 = vunpack.c.l.b16 %v120
  %v470 = vunpack.c.l.b16 %v121
  %v471 = vunpack.c.l.b16 %v122
  %v472 = vunpack.c.l.b16 %v123
  %v473 = vunpack.c.l.b16 %v124
  %v474 = vunpack.c.l.b16 %v125
  %v475 = vpack.c.b16 %v440, %v439
  %v476 = vpack.c.b16 %v442, %v441
  %v477 = vpack.c.b16 %v444, %v443
  %v478 = vpack.c.b16 %v446, %v445
  %v479 = vpack.c.b16 %v448, %v447
  %v480 = vpack.c.b16 %v450, %v449
  %v481 = vpack.c.b16 %v452, %v451
  %v482 = vpack.c.b16 %v454, %v453
  %v483 = vpack.c.b16 %v456, %v455
  %v484 = vpack.c.b16 %v458, %v457
  %v485 = vpack.c.b16 %v460, %v459
  %v486 = vpack.c.b16 %v462, %v461
  %v487 = vpack.c.b16 %v464, %v463
  %v488 = vpack.c.b16 %v466, %v465
  %v489 = vpack.c.b16 %v468, %v467
  %v490 = vpack.c.b16 %v470, %v469
  %v491 = vpack.c.b16 %v472, %v471
  %v492 = vpack.c.b16 %v474, %v473
  %vm511 = vcmask 261120
  %v513 = vsel %vm511, %v315, 0
  %v516 = vsel %vm511, %v318, 0
  %v519 = vsel %vm511, %v321, 0
  %v522 = vsel %vm511, %v324, 0
  %v525 = vsel %vm511, %v327, 0
  %v528 = vsel %vm511, %v330, 0
  %v531 = vsel %vm511, %v333, 0
  %v534 = vsel %vm511, %v336, 0
  %v537 = vsel %vm511, %v339, 0
  %v540 = vsel %vm511, %v342, 0
  %v543 = vsel %vm511, %v345, 0
  %v546 = vsel %vm511, %v348, 0
  %v549 = vsel %vm511, %v351, 0
  %v552 = vsel %vm511, %v354, 0
  %v555 = vsel %vm511, %v357, 0
  %v558 = vsel %vm511, %v360, 0
  %v561 = vsel %vm511, %v363, 0
  %v564 = vsel %vm511, %v366, 0
  %566 = vmatprep.subr.bf16.mxu0 0
  %567 = vmatpush1.bf16.msra.mxu0 %v482
  %568 = vmatprep.subr.bf16.mxu0 0
  %569 = vmatpush1.bf16.msra.mxu0 %v481
  %570 = vmatprep.subr.bf16.mxu0 0
  %571 = vmatpush1.bf16.msra.mxu0 %v480
  %572 = vmatprep.subr.bf16.mxu0 0
  %573 = vmatpush1.bf16.msra.mxu0 %v479
  %574 = vmatprep.subr.bf16.mxu0 0
  %575 = vmatpush1.bf16.msra.mxu0 %v478
  %576 = vmatprep.subr.bf16.mxu0 0
  %577 = vmatpush1.bf16.msra.mxu0 %v477
  %578 = vmatprep.subr.bf16.mxu0 0
  %579 = vmatpush1.bf16.msra.mxu0 %v476
  %580 = vmatprep.subr.bf16.mxu0 0
  %581 = vmatpush1.bf16.msra.mxu0 %v475
  %582 = vmatprep.subr.bf16.mxu0 0
  %583 = vmatpush2.bf16.msra.mxu0 %v490
  %584 = vmatprep.subr.bf16.mxu0 0
  %585 = vmatpush2.bf16.msra.mxu0 %v489
  %586 = vmatprep.subr.bf16.mxu0 0
  %587 = vmatpush2.bf16.msra.mxu0 %v488
  %588 = vmatprep.subr.bf16.mxu0 0
  %589 = vmatpush2.bf16.msra.mxu0 %v487
  %590 = vmatprep.subr.bf16.mxu0 0
  %591 = vmatpush2.bf16.msra.mxu0 %v486
  %592 = vmatprep.subr.bf16.mxu0 0
  %593 = vmatpush2.bf16.msra.mxu0 %v485
  %594 = vmatprep.subr.bf16.mxu0 0
  %595 = vmatpush2.bf16.msra.mxu0 %v484
  %596 = vmatprep.subr.bf16.mxu0 0
  %597 = vmatpush2.bf16.msra.mxu0 %v483
  %598 = vmatprep.mubr.bf16.mxu0 %v314
  %599 = vmatmul.mubr.bf16.gmra.mxu0 %v313
  %v600 = vpop.f32.mrf.mxu0
  %v601 = vadd.f32 %v131, %v600
  %v602 = vpop.f32.mrf.mxu0
  %v603 = vpop.f32.mrf.mxu0
  %v604 = vadd.f32 %v131, %v603
  %v605 = vpop.f32.mrf.mxu0
  %606 = vmatprep.mubr.bf16.mxu0 %v317
  %607 = vmatmul.mubr.bf16.gmra.mxu0 %v316
  %v608 = vpop.f32.mrf.mxu0
  %v609 = vadd.f32 %v131, %v608
  %v610 = vpop.f32.mrf.mxu0
  %v611 = vpop.f32.mrf.mxu0
  %v612 = vadd.f32 %v131, %v611
  %v613 = vpop.f32.mrf.mxu0
  %614 = vmatprep.mubr.bf16.mxu0 %v320
  %615 = vmatmul.mubr.bf16.gmra.mxu0 %v319
  %v616 = vpop.f32.mrf.mxu0
  %v617 = vadd.f32 %v131, %v616
  %v618 = vpop.f32.mrf.mxu0
  %v619 = vpop.f32.mrf.mxu0
  %v620 = vadd.f32 %v131, %v619
  %v621 = vpop.f32.mrf.mxu0
  %622 = vmatprep.mubr.bf16.mxu0 %v323
  %623 = vmatmul.mubr.bf16.gmra.mxu0 %v322
  %v624 = vpop.f32.mrf.mxu0
  %v625 = vadd.f32 %v131, %v624
  %v626 = vpop.f32.mrf.mxu0
  %v627 = vpop.f32.mrf.mxu0
  %v628 = vadd.f32 %v131, %v627
  %v629 = vpop.f32.mrf.mxu0
  %630 = vmatprep.mubr.bf16.mxu0 %v326
  %631 = vmatmul.mubr.bf16.gmra.mxu0 %v325
  %v632 = vpop.f32.mrf.mxu0
  %v633 = vadd.f32 %v131, %v632
  %v634 = vpop.f32.mrf.mxu0
  %v635 = vpop.f32.mrf.mxu0
  %v636 = vadd.f32 %v131, %v635
  %v637 = vpop.f32.mrf.mxu0
  %638 = vmatprep.mubr.bf16.mxu0 %v329
  %639 = vmatmul.mubr.bf16.gmra.mxu0 %v328
  %v640 = vpop.f32.mrf.mxu0
  %v641 = vadd.f32 %v131, %v640
  %v642 = vpop.f32.mrf.mxu0
  %v643 = vpop.f32.mrf.mxu0
  %v644 = vadd.f32 %v131, %v643
  %v645 = vpop.f32.mrf.mxu0
  %646 = vmatprep.mubr.bf16.mxu0 %v332
  %647 = vmatmul.mubr.bf16.gmra.mxu0 %v331
  %v648 = vpop.f32.mrf.mxu0
  %v649 = vadd.f32 %v131, %v648
  %v650 = vpop.f32.mrf.mxu0
  %v651 = vpop.f32.mrf.mxu0
  %v652 = vadd.f32 %v131, %v651
  %v653 = vpop.f32.mrf.mxu0
  %654 = vmatprep.mubr.bf16.mxu0 %v335
  %655 = vmatmul.mubr.bf16.gmra.mxu0 %v334
  %v656 = vpop.f32.mrf.mxu0
  %v657 = vadd.f32 %v131, %v656
  %v658 = vpop.f32.mrf.mxu0
  %v659 = vpop.f32.mrf.mxu0
  %v660 = vadd.f32 %v131, %v659
  %v661 = vpop.f32.mrf.mxu0
  %662 = vmatprep.mubr.bf16.mxu0 %v338
  %663 = vmatmul.mubr.bf16.gmra.mxu0 %v337
  %v664 = vpop.f32.mrf.mxu0
  %v665 = vadd.f32 %v131, %v664
  %v666 = vpop.f32.mrf.mxu0
  %v667 = vpop.f32.mrf.mxu0
  %v668 = vadd.f32 %v131, %v667
  %v669 = vpop.f32.mrf.mxu0
  %670 = vmatprep.mubr.bf16.mxu0 %v341
  %671 = vmatmul.mubr.bf16.gmra.mxu0 %v340
  %v672 = vpop.f32.mrf.mxu0
  %v673 = vadd.f32 %v131, %v672
  %v674 = vpop.f32.mrf.mxu0
  %v675 = vpop.f32.mrf.mxu0
  %v676 = vadd.f32 %v131, %v675
  %v677 = vpop.f32.mrf.mxu0
  %678 = vmatprep.mubr.bf16.mxu0 %v344
  %679 = vmatmul.mubr.bf16.gmra.mxu0 %v343
  %v680 = vpop.f32.mrf.mxu0
  %v681 = vadd.f32 %v131, %v680
  %v682 = vpop.f32.mrf.mxu0
  %v683 = vpop.f32.mrf.mxu0
  %v684 = vadd.f32 %v131, %v683
  %v685 = vpop.f32.mrf.mxu0
  %686 = vmatprep.mubr.bf16.mxu0 %v347
  %687 = vmatmul.mubr.bf16.gmra.mxu0 %v346
  %v688 = vpop.f32.mrf.mxu0
  %v689 = vadd.f32 %v131, %v688
  %v690 = vpop.f32.mrf.mxu0
  %v691 = vpop.f32.mrf.mxu0
  %v692 = vadd.f32 %v131, %v691
  %v693 = vpop.f32.mrf.mxu0
  %694 = vmatprep.mubr.bf16.mxu0 %v350
  %695 = vmatmul.mubr.bf16.gmra.mxu0 %v349
  %v696 = vpop.f32.mrf.mxu0
  %v697 = vadd.f32 %v131, %v696
  %v698 = vpop.f32.mrf.mxu0
  %v699 = vpop.f32.mrf.mxu0
  %v700 = vadd.f32 %v131, %v699
  %v701 = vpop.f32.mrf.mxu0
  %702 = vmatprep.mubr.bf16.mxu0 %v353
  %703 = vmatmul.mubr.bf16.gmra.mxu0 %v352
  %v704 = vpop.f32.mrf.mxu0
  %v705 = vadd.f32 %v131, %v704
  %v706 = vpop.f32.mrf.mxu0
  %v707 = vpop.f32.mrf.mxu0
  %v708 = vadd.f32 %v131, %v707
  %v709 = vpop.f32.mrf.mxu0
  %710 = vmatprep.mubr.bf16.mxu0 %v356
  %711 = vmatmul.mubr.bf16.gmra.mxu0 %v355
  %v712 = vpop.f32.mrf.mxu0
  %v713 = vadd.f32 %v131, %v712
  %v714 = vpop.f32.mrf.mxu0
  %v715 = vpop.f32.mrf.mxu0
  %v716 = vadd.f32 %v131, %v715
  %v717 = vpop.f32.mrf.mxu0
  %718 = vmatprep.mubr.bf16.mxu0 %v359
  %719 = vmatmul.mubr.bf16.gmra.mxu0 %v358
  %v720 = vpop.f32.mrf.mxu0
  %v721 = vadd.f32 %v131, %v720
  %v722 = vpop.f32.mrf.mxu0
  %v723 = vpop.f32.mrf.mxu0
  %v724 = vadd.f32 %v131, %v723
  %v725 = vpop.f32.mrf.mxu0
  %726 = vmatprep.mubr.bf16.mxu0 %v362
  %727 = vmatmul.mubr.bf16.gmra.mxu0 %v361
  %v728 = vpop.f32.mrf.mxu0
  %v729 = vadd.f32 %v131, %v728
  %v730 = vpop.f32.mrf.mxu0
  %v731 = vpop.f32.mrf.mxu0
  %v732 = vadd.f32 %v131, %v731
  %v733 = vpop.f32.mrf.mxu0
  %734 = vmatprep.mubr.bf16.mxu0 %v365
  %735 = vmatmul.mubr.bf16.gmra.mxu0 %v364
  %v736 = vpop.f32.mrf.mxu0
  %v737 = vadd.f32 %v131, %v736
  %v738 = vpop.f32.mrf.mxu0
  %v739 = vpop.f32.mrf.mxu0
  %v740 = vadd.f32 %v131, %v739
  %v741 = vpop.f32.mrf.mxu0
  %742 = vdwg.mxu0
  %743 = vmatprep.subr.bf16.mxu0 0
  %744 = vmatpush1.bf16.msra.mxu0 0
  %745 = vmatprep.subr.bf16.mxu0 0
  %746 = vmatpush1.bf16.msra.mxu0 0
  %747 = vmatprep.subr.bf16.mxu0 0
  %748 = vmatpush1.bf16.msra.mxu0 0
  %749 = vmatprep.subr.bf16.mxu0 0
  %750 = vmatpush1.bf16.msra.mxu0 0
  %751 = vmatprep.subr.bf16.mxu0 0
  %752 = vmatpush1.bf16.msra.mxu0 0
  %753 = vmatprep.subr.bf16.mxu0 0
  %754 = vmatpush1.bf16.msra.mxu0 0
  %755 = vmatprep.subr.bf16.mxu0 0
  %756 = vmatpush1.bf16.msra.mxu0 %v492
  %757 = vmatprep.subr.bf16.mxu0 0
  %758 = vmatpush1.bf16.msra.mxu0 %v491
  %759 = vmatprep.subr.bf16.mxu0 0
  %760 = vmatpush2.bf16.msra.mxu0 0
  %761 = vmatprep.subr.bf16.mxu0 0
  %762 = vmatpush2.bf16.msra.mxu0 0
  %763 = vmatprep.subr.bf16.mxu0 0
  %764 = vmatpush2.bf16.msra.mxu0 0
  %765 = vmatprep.subr.bf16.mxu0 0
  %766 = vmatpush2.bf16.msra.mxu0 0
  %767 = vmatprep.subr.bf16.mxu0 0
  %768 = vmatpush2.bf16.msra.mxu0 0
  %769 = vmatprep.subr.bf16.mxu0 0
  %770 = vmatpush2.bf16.msra.mxu0 0
  %771 = vmatprep.subr.bf16.mxu0 0
  %772 = vmatpush2.bf16.msra.mxu0 0
  %773 = vmatprep.subr.bf16.mxu0 0
  %774 = vmatpush2.bf16.msra.mxu0 0
  %775 = vmatprep.mubr.bf16.mxu0 0
  %776 = vmatmul.mubr.bf16.gmra.mxu0 %v513
  %v777 = vpop.f32.mrf.mxu0
  %v778 = vadd.f32 %v601, %v777
  %v779 = vpop.f32.mrf.mxu0
  %v780 = vpop.f32.mrf.mxu0
  %v781 = vadd.f32 %v604, %v780
  %v782 = vpop.f32.mrf.mxu0
  %783 = vmatprep.mubr.bf16.mxu0 0
  %784 = vmatmul.mubr.bf16.gmra.mxu0 %v516
  %v785 = vpop.f32.mrf.mxu0
  %v786 = vadd.f32 %v609, %v785
  %v787 = vpop.f32.mrf.mxu0
  %v788 = vpop.f32.mrf.mxu0
  %v789 = vadd.f32 %v612, %v788
  %v790 = vpop.f32.mrf.mxu0
  %791 = vmatprep.mubr.bf16.mxu0 0
  %792 = vmatmul.mubr.bf16.gmra.mxu0 %v519
  %v793 = vpop.f32.mrf.mxu0
  %v794 = vadd.f32 %v617, %v793
  %v795 = vpop.f32.mrf.mxu0
  %v796 = vpop.f32.mrf.mxu0
  %v797 = vadd.f32 %v620, %v796
  %v798 = vpop.f32.mrf.mxu0
  %799 = vmatprep.mubr.bf16.mxu0 0
  %800 = vmatmul.mubr.bf16.gmra.mxu0 %v522
  %v801 = vpop.f32.mrf.mxu0
  %v802 = vadd.f32 %v625, %v801
  %v803 = vpop.f32.mrf.mxu0
  %v804 = vpop.f32.mrf.mxu0
  %v805 = vadd.f32 %v628, %v804
  %v806 = vpop.f32.mrf.mxu0
  %807 = vmatprep.mubr.bf16.mxu0 0
  %808 = vmatmul.mubr.bf16.gmra.mxu0 %v525
  %v809 = vpop.f32.mrf.mxu0
  %v810 = vadd.f32 %v633, %v809
  %v811 = vpop.f32.mrf.mxu0
  %v812 = vpop.f32.mrf.mxu0
  %v813 = vadd.f32 %v636, %v812
  %v814 = vpop.f32.mrf.mxu0
  %815 = vmatprep.mubr.bf16.mxu0 0
  %816 = vmatmul.mubr.bf16.gmra.mxu0 %v528
  %v817 = vpop.f32.mrf.mxu0
  %v818 = vadd.f32 %v641, %v817
  %v819 = vpop.f32.mrf.mxu0
  %v820 = vpop.f32.mrf.mxu0
  %v821 = vadd.f32 %v644, %v820
  %v822 = vpop.f32.mrf.mxu0
  %823 = vmatprep.mubr.bf16.mxu0 0
  %824 = vmatmul.mubr.bf16.gmra.mxu0 %v531
  %v825 = vpop.f32.mrf.mxu0
  %v826 = vadd.f32 %v649, %v825
  %v827 = vpop.f32.mrf.mxu0
  %v828 = vpop.f32.mrf.mxu0
  %v829 = vadd.f32 %v652, %v828
  %v830 = vpop.f32.mrf.mxu0
  %831 = vmatprep.mubr.bf16.mxu0 0
  %832 = vmatmul.mubr.bf16.gmra.mxu0 %v534
  %v833 = vpop.f32.mrf.mxu0
  %v834 = vadd.f32 %v657, %v833
  %v835 = vpop.f32.mrf.mxu0
  %v836 = vpop.f32.mrf.mxu0
  %v837 = vadd.f32 %v660, %v836
  %v838 = vpop.f32.mrf.mxu0
  %839 = vmatprep.mubr.bf16.mxu0 0
  %840 = vmatmul.mubr.bf16.gmra.mxu0 %v537
  %v841 = vpop.f32.mrf.mxu0
  %v842 = vadd.f32 %v665, %v841
  %v843 = vpop.f32.mrf.mxu0
  %v844 = vpop.f32.mrf.mxu0
  %v845 = vadd.f32 %v668, %v844
  %v846 = vpop.f32.mrf.mxu0
  %847 = vmatprep.mubr.bf16.mxu0 0
  %848 = vmatmul.mubr.bf16.gmra.mxu0 %v540
  %v849 = vpop.f32.mrf.mxu0
  %v850 = vadd.f32 %v673, %v849
  %v851 = vpop.f32.mrf.mxu0
  %v852 = vpop.f32.mrf.mxu0
  %v853 = vadd.f32 %v676, %v852
  %v854 = vpop.f32.mrf.mxu0
  %855 = vmatprep.mubr.bf16.mxu0 0
  %856 = vmatmul.mubr.bf16.gmra.mxu0 %v543
  %v857 = vpop.f32.mrf.mxu0
  %v858 = vadd.f32 %v681, %v857
  %v859 = vpop.f32.mrf.mxu0
  %v860 = vpop.f32.mrf.mxu0
  %v861 = vadd.f32 %v684, %v860
  %v862 = vpop.f32.mrf.mxu0
  %863 = vmatprep.mubr.bf16.mxu0 0
  %864 = vmatmul.mubr.bf16.gmra.mxu0 %v546
  %v865 = vpop.f32.mrf.mxu0
  %v866 = vadd.f32 %v689, %v865
  %v867 = vpop.f32.mrf.mxu0
  %v868 = vpop.f32.mrf.mxu0
  %v869 = vadd.f32 %v692, %v868
  %v870 = vpop.f32.mrf.mxu0
  %871 = vmatprep.mubr.bf16.mxu0 0
  %872 = vmatmul.mubr.bf16.gmra.mxu0 %v549
  %v873 = vpop.f32.mrf.mxu0
  %v874 = vadd.f32 %v697, %v873
  %v875 = vpop.f32.mrf.mxu0
  %v876 = vpop.f32.mrf.mxu0
  %v877 = vadd.f32 %v700, %v876
  %v878 = vpop.f32.mrf.mxu0
  %879 = vmatprep.mubr.bf16.mxu0 0
  %880 = vmatmul.mubr.bf16.gmra.mxu0 %v552
  %v881 = vpop.f32.mrf.mxu0
  %v882 = vadd.f32 %v705, %v881
  %v883 = vpop.f32.mrf.mxu0
  %v884 = vpop.f32.mrf.mxu0
  %v885 = vadd.f32 %v708, %v884
  %v886 = vpop.f32.mrf.mxu0
  %887 = vmatprep.mubr.bf16.mxu0 0
  %888 = vmatmul.mubr.bf16.gmra.mxu0 %v555
  %v889 = vpop.f32.mrf.mxu0
  %v890 = vadd.f32 %v713, %v889
  %v891 = vpop.f32.mrf.mxu0
  %v892 = vpop.f32.mrf.mxu0
  %v893 = vadd.f32 %v716, %v892
  %v894 = vpop.f32.mrf.mxu0
  %895 = vmatprep.mubr.bf16.mxu0 0
  %896 = vmatmul.mubr.bf16.gmra.mxu0 %v558
  %v897 = vpop.f32.mrf.mxu0
  %v898 = vadd.f32 %v721, %v897
  %v899 = vpop.f32.mrf.mxu0
  %v900 = vpop.f32.mrf.mxu0
  %v901 = vadd.f32 %v724, %v900
  %v902 = vpop.f32.mrf.mxu0
  %903 = vmatprep.mubr.bf16.mxu0 0
  %904 = vmatmul.mubr.bf16.gmra.mxu0 %v561
  %v905 = vpop.f32.mrf.mxu0
  %v906 = vadd.f32 %v729, %v905
  %v907 = vpop.f32.mrf.mxu0
  %v908 = vpop.f32.mrf.mxu0
  %v909 = vadd.f32 %v732, %v908
  %v910 = vpop.f32.mrf.mxu0
  %911 = vmatprep.mubr.bf16.mxu0 0
  %912 = vmatmul.mubr.bf16.gmra.mxu0 %v564
  %v913 = vpop.f32.mrf.mxu0
  %v914 = vadd.f32 %v737, %v913
  %v915 = vpop.f32.mrf.mxu0
  %v916 = vpop.f32.mrf.mxu0
  %v917 = vadd.f32 %v740, %v916
  %v918 = vpop.f32.mrf.mxu0
  %919 = vdwg.mxu0
  %v920 = vld [vmem:[%s3] sm:$0xf]
  %v921 = vld [vmem:[%s3 + $0x4] sm:$0xf]
  %v922 = vld [vmem:[%s3 + $0x8] sm:$0xf]
  %v923 = vld [vmem:[%s3 + $0xc] sm:$0xf]
  %v924 = vld [vmem:[%s3 + $0x10] sm:$0xf]
  %v925 = vld [vmem:[%s3 + $0x14] sm:$0xf]
  %v926 = vld [vmem:[%s3 + $0x18] sm:$0xf]
  %v927 = vld [vmem:[%s3 + $0x1c] sm:$0xf]
  %v928 = vld [vmem:[%s3 + $0x20] sm:$0xf]
  %v929 = vld [vmem:[%s3 + $0x24] sm:$0xf]
  %v930 = vld [vmem:[%s3 + $0x28] sm:$0xf]
  %v931 = vld [vmem:[%s3 + $0x2c] sm:$0xf]
  %v932 = vld [vmem:[%s3 + $0x30] sm:$0xf]
  %v933 = vld [vmem:[%s3 + $0x34] sm:$0xf]
  %v934 = vld [vmem:[%s3 + $0x38] sm:$0xf]
  %v935 = vld [vmem:[%s3 + $0x3c] sm:$0xf]
  %v936 = vld [vmem:[%s3 + $0x40] sm:$0xf]
  %v937 = vld [vmem:[%s3 + $0x44] sm:$0xf]
  %v938 = vld [vmem:[%s3 + $0x48] sm:$0xf]
  %v939 = vld [vmem:[%s3 + $0x4c] sm:$0xf]
  %v940 = vld [vmem:[%s3 + $0x50] sm:$0xf]
  %v941 = vld [vmem:[%s3 + $0x54] sm:$0xf]
  %v942 = vld [vmem:[%s3 + $0x58] sm:$0xf]
  %v943 = vld [vmem:[%s3 + $0x5c] sm:$0xf]
  %v944 = vld [vmem:[%s3 + $0x60] sm:$0xf]
  %v945 = vld [vmem:[%s3 + $0x64] sm:$0xf]
  %v946 = vld [vmem:[%s3 + $0x68] sm:$0xf]
  %v947 = vld [vmem:[%s3 + $0x6c] sm:$0xf]
  %v948 = vld [vmem:[%s3 + $0x70] sm:$0xf]
  %v949 = vld [vmem:[%s3 + $0x74] sm:$0xf]
  %v950 = vld [vmem:[%s3 + $0x78] sm:$0xf]
  %v951 = vld [vmem:[%s3 + $0x7c] sm:$0xf]
  %v952 = vld [vmem:[%s3 + $0x80] sm:$0xf]
  %v953 = vld [vmem:[%s3 + $0x84] sm:$0xf]
  %v954 = vld [vmem:[%s3 + $0x88] sm:$0xf]
  %v955 = vld [vmem:[%s3 + $0x8c] sm:$0xf]
  %v956 = vunpack.c.l.bf16 %v920
  %v957 = vunpack.c.l.bf16 %v921
  %v958 = vunpack.c.l.bf16 %v922
  %v959 = vunpack.c.l.bf16 %v923
  %v960 = vunpack.c.l.bf16 %v924
  %v961 = vunpack.c.l.bf16 %v925
  %v962 = vunpack.c.l.bf16 %v926
  %v963 = vunpack.c.l.bf16 %v927
  %v964 = vunpack.c.l.bf16 %v928
  %v965 = vunpack.c.l.bf16 %v929
  %v966 = vunpack.c.l.bf16 %v930
  %v967 = vunpack.c.l.bf16 %v931
  %v968 = vunpack.c.l.bf16 %v932
  %v969 = vunpack.c.l.bf16 %v933
  %v970 = vunpack.c.l.bf16 %v934
  %v971 = vunpack.c.l.bf16 %v935
  %v972 = vunpack.c.l.bf16 %v936
  %v973 = vunpack.c.l.bf16 %v937
  %v974 = vunpack.c.l.bf16 %v938
  %v975 = vunpack.c.l.bf16 %v939
  %v976 = vunpack.c.l.bf16 %v940
  %v977 = vunpack.c.l.bf16 %v941
  %v978 = vunpack.c.l.bf16 %v942
  %v979 = vunpack.c.l.bf16 %v943
  %v980 = vunpack.c.l.bf16 %v944
  %v981 = vunpack.c.l.bf16 %v945
  %v982 = vunpack.c.l.bf16 %v946
  %v983 = vunpack.c.l.bf16 %v947
  %v984 = vunpack.c.l.bf16 %v948
  %v985 = vunpack.c.l.bf16 %v949
  %v986 = vunpack.c.l.bf16 %v950
  %v987 = vunpack.c.l.bf16 %v951
  %v988 = vunpack.c.l.bf16 %v952
  %v989 = vunpack.c.l.bf16 %v953
  %v990 = vunpack.c.l.bf16 %v954
  %v991 = vunpack.c.l.bf16 %v955
  %v992 = vadd.f32 %v778, %v956
  %v993 = vadd.f32 %v781, %v957
  %v994 = vadd.f32 %v786, %v958
  %v995 = vadd.f32 %v789, %v959
  %v996 = vadd.f32 %v794, %v960
  %v997 = vadd.f32 %v797, %v961
  %v998 = vadd.f32 %v802, %v962
  %v999 = vadd.f32 %v805, %v963
  %v1000 = vadd.f32 %v810, %v964
  %v1001 = vadd.f32 %v813, %v965
  %v1002 = vadd.f32 %v818, %v966
  %v1003 = vadd.f32 %v821, %v967
  %v1004 = vadd.f32 %v826, %v968
  %v1005 = vadd.f32 %v829, %v969
  %v1006 = vadd.f32 %v834, %v970
  %v1007 = vadd.f32 %v837, %v971
  %v1008 = vadd.f32 %v842, %v972
  %v1009 = vadd.f32 %v845, %v973
  %v1010 = vadd.f32 %v850, %v974
  %v1011 = vadd.f32 %v853, %v975
  %v1012 = vadd.f32 %v858, %v976
  %v1013 = vadd.f32 %v861, %v977
  %v1014 = vadd.f32 %v866, %v978
  %v1015 = vadd.f32 %v869, %v979
  %v1016 = vadd.f32 %v874, %v980
  %v1017 = vadd.f32 %v877, %v981
  %v1018 = vadd.f32 %v882, %v982
  %v1019 = vadd.f32 %v885, %v983
  %v1020 = vadd.f32 %v890, %v984
  %v1021 = vadd.f32 %v893, %v985
  %v1022 = vadd.f32 %v898, %v986
  %v1023 = vadd.f32 %v901, %v987
  %v1024 = vadd.f32 %v906, %v988
  %v1025 = vadd.f32 %v909, %v989
  %v1026 = vadd.f32 %v914, %v990
  %v1027 = vadd.f32 %v917, %v991
  %v1028 = vmax.f32 %v992, 0.0
  %v1029 = vmax.f32 %v993, 0.0
  %v1030 = vmax.f32 %v994, 0.0
  %v1031 = vmax.f32 %v995, 0.0
  %v1032 = vmax.f32 %v996, 0.0
  %v1033 = vmax.f32 %v997, 0.0
  %v1034 = vmax.f32 %v998, 0.0
  %v1035 = vmax.f32 %v999, 0.0
  %v1036 = vmax.f32 %v1000, 0.0
  %v1037 = vmax.f32 %v1001, 0.0
  %v1038 = vmax.f32 %v1002, 0.0
  %v1039 = vmax.f32 %v1003, 0.0
  %v1040 = vmax.f32 %v1004, 0.0
  %v1041 = vmax.f32 %v1005, 0.0
  %v1042 = vmax.f32 %v1006, 0.0
  %v1043 = vmax.f32 %v1007, 0.0
  %v1044 = vmax.f32 %v1008, 0.0
  %v1045 = vmax.f32 %v1009, 0.0
  %v1046 = vmax.f32 %v1010, 0.0
  %v1047 = vmax.f32 %v1011, 0.0
  %v1048 = vmax.f32 %v1012, 0.0
  %v1049 = vmax.f32 %v1013, 0.0
  %v1050 = vmax.f32 %v1014, 0.0
  %v1051 = vmax.f32 %v1015, 0.0
  %v1052 = vmax.f32 %v1016, 0.0
  %v1053 = vmax.f32 %v1017, 0.0
  %v1054 = vmax.f32 %v1018, 0.0
  %v1055 = vmax.f32 %v1019, 0.0
  %v1056 = vmax.f32 %v1020, 0.0
  %v1057 = vmax.f32 %v1021, 0.0
  %v1058 = vmax.f32 %v1022, 0.0
  %v1059 = vmax.f32 %v1023, 0.0
  %v1060 = vmax.f32 %v1024, 0.0
  %v1061 = vmax.f32 %v1025, 0.0
  %v1062 = vmax.f32 %v1026, 0.0
  %v1063 = vmax.f32 %v1027, 0.0
  %v1064 = vpack.c.bf16 %v1029, %v1028
  %v1065 = vpack.c.bf16 %v1031, %v1030
  %v1066 = vpack.c.bf16 %v1033, %v1032
  %v1067 = vpack.c.bf16 %v1035, %v1034
  %v1068 = vpack.c.bf16 %v1037, %v1036
  %v1069 = vpack.c.bf16 %v1039, %v1038
  %v1070 = vpack.c.bf16 %v1041, %v1040
  %v1071 = vpack.c.bf16 %v1043, %v1042
  %v1072 = vpack.c.bf16 %v1045, %v1044
  %v1073 = vpack.c.bf16 %v1047, %v1046
  %v1074 = vpack.c.bf16 %v1049, %v1048
  %v1075 = vpack.c.bf16 %v1051, %v1050
  %v1076 = vpack.c.bf16 %v1053, %v1052
  %v1077 = vpack.c.bf16 %v1055, %v1054
  %v1078 = vpack.c.bf16 %v1057, %v1056
  %v1079 = vpack.c.bf16 %v1059, %v1058
  %v1080 = vpack.c.bf16 %v1061, %v1060
  %v1081 = vpack.c.bf16 %v1063, %v1062
  %v1100 = vunpack.c.l.b16 %v1064
  %v1101 = vunpack.c.h.b16 %v1064
  %v1102 = vunpack.c.l.b16 %v1065
  %v1103 = vunpack.c.h.b16 %v1065
  %v1104 = vunpack.c.l.b16 %v1066
  %v1105 = vunpack.c.h.b16 %v1066
  %v1106 = vunpack.c.l.b16 %v1067
  %v1107 = vunpack.c.h.b16 %v1067
  %v1108 = vunpack.c.l.b16 %v1068
  %v1109 = vunpack.c.h.b16 %v1068
  %v1110 = vunpack.c.l.b16 %v1069
  %v1111 = vunpack.c.h.b16 %v1069
  %v1112 = vunpack.c.l.b16 %v1070
  %v1113 = vunpack.c.h.b16 %v1070
  %v1114 = vunpack.c.l.b16 %v1071
  %v1115 = vunpack.c.h.b16 %v1071
  %v1116 = vunpack.c.l.b16 %v1072
  %v1117 = vunpack.c.h.b16 %v1072
  %v1118 = vunpack.c.l.b16 %v1073
  %v1119 = vunpack.c.h.b16 %v1073
  %v1120 = vunpack.c.l.b16 %v1074
  %v1121 = vunpack.c.h.b16 %v1074
  %v1122 = vunpack.c.l.b16 %v1075
  %v1123 = vunpack.c.h.b16 %v1075
  %v1124 = vunpack.c.l.b16 %v1076
  %v1125 = vunpack.c.h.b16 %v1076
  %v1126 = vunpack.c.l.b16 %v1077
  %v1127 = vunpack.c.h.b16 %v1077
  %v1128 = vunpack.c.l.b16 %v1078
  %v1129 = vunpack.c.h.b16 %v1078
  %v1130 = vunpack.c.l.b16 %v1079
  %v1131 = vunpack.c.h.b16 %v1079
  %v1132 = vunpack.c.l.b16 %v1080
  %v1133 = vunpack.c.h.b16 %v1080
  %v1134 = vunpack.c.l.b16 %v1081
  %v1135 = vunpack.c.h.b16 %v1081
  %v1136 = vpack.c.b16 %v1100, %v1100
  %v1137 = vpack.c.b16 %v1101, %v1101
  %v1138 = vpack.c.b16 %v1102, %v1102
  %v1139 = vpack.c.b16 %v1103, %v1103
  %v1140 = vpack.c.b16 %v1104, %v1104
  %v1141 = vpack.c.b16 %v1105, %v1105
  %v1142 = vpack.c.b16 %v1106, %v1106
  %v1143 = vpack.c.b16 %v1107, %v1107
  %v1144 = vpack.c.b16 %v1108, %v1108
  %v1145 = vpack.c.b16 %v1109, %v1109
  %v1146 = vpack.c.b16 %v1110, %v1110
  %v1147 = vpack.c.b16 %v1111, %v1111
  %v1148 = vpack.c.b16 %v1112, %v1112
  %v1149 = vpack.c.b16 %v1113, %v1113
  %v1150 = vpack.c.b16 %v1114, %v1114
  %v1151 = vpack.c.b16 %v1115, %v1115
  %v1152 = vpack.c.b16 %v1116, %v1116
  %v1153 = vpack.c.b16 %v1117, %v1117
  %v1154 = vpack.c.b16 %v1118, %v1118
  %v1155 = vpack.c.b16 %v1119, %v1119
  %v1156 = vpack.c.b16 %v1120, %v1120
  %v1157 = vpack.c.b16 %v1121, %v1121
  %v1158 = vpack.c.b16 %v1122, %v1122
  %v1159 = vpack.c.b16 %v1123, %v1123
  %v1160 = vpack.c.b16 %v1124, %v1124
  %v1161 = vpack.c.b16 %v1125, %v1125
  %v1162 = vpack.c.b16 %v1126, %v1126
  %v1163 = vpack.c.b16 %v1127, %v1127
  %v1164 = vpack.c.b16 %v1128, %v1128
  %v1165 = vpack.c.b16 %v1129, %v1129
  %v1166 = vpack.c.b16 %v1130, %v1130
  %v1167 = vpack.c.b16 %v1131, %v1131
  %v1168 = vpack.c.b16 %v1132, %v1132
  %v1169 = vpack.c.b16 %v1133, %v1133
  %v1170 = vpack.c.b16 %v1134, %v1134
  %v1171 = vpack.c.b16 %v1135, %v1135
  %vm1208 = vcmask 257024
  %1209 = vst.msk [vmem:[%s4] sm:$0xf] %vm1208, %v1136
  %1210 = vst.msk [vmem:[%s4 + $0x4] sm:$0xf] %vm1208, %v1137
  %1211 = vst.msk [vmem:[%s4 + $0x8] sm:$0xf] %vm1208, %v1138
  %1212 = vst.msk [vmem:[%s4 + $0xc] sm:$0xf] %vm1208, %v1139
  %1213 = vst.msk [vmem:[%s4 + $0x10] sm:$0xf] %vm1208, %v1140
  %1214 = vst.msk [vmem:[%s4 + $0x14] sm:$0xf] %vm1208, %v1141
  %1215 = vst.msk [vmem:[%s4 + $0x18] sm:$0xf] %vm1208, %v1142
  %1216 = vst.msk [vmem:[%s4 + $0x1c] sm:$0xf] %vm1208, %v1143
  %1217 = vst.msk [vmem:[%s4 + $0x20] sm:$0xf] %vm1208, %v1144
  %1218 = vst.msk [vmem:[%s4 + $0x24] sm:$0xf] %vm1208, %v1145
  %1219 = vst.msk [vmem:[%s4 + $0x28] sm:$0xf] %vm1208, %v1146
  %1220 = vst.msk [vmem:[%s4 + $0x2c] sm:$0xf] %vm1208, %v1147
  %1221 = vst.msk [vmem:[%s4 + $0x30] sm:$0xf] %vm1208, %v1148
  %1222 = vst.msk [vmem:[%s4 + $0x34] sm:$0xf] %vm1208, %v1149
  %1223 = vst.msk [vmem:[%s4 + $0x38] sm:$0xf] %vm1208, %v1150
  %1224 = vst.msk [vmem:[%s4 + $0x3c] sm:$0xf] %vm1208, %v1151
  %1225 = vst.msk [vmem:[%s4 + $0x40] sm:$0xf] %vm1208, %v1152
  %1226 = vst.msk [vmem:[%s4 + $0x44] sm:$0xf] %vm1208, %v1153
  %1227 = vst.msk [vmem:[%s4 + $0x48] sm:$0xf] %vm1208, %v1154
  %1228 = vst.msk [vmem:[%s4 + $0x4c] sm:$0xf] %vm1208, %v1155
  %1229 = vst.msk [vmem:[%s4 + $0x50] sm:$0xf] %vm1208, %v1156
  %1230 = vst.msk [vmem:[%s4 + $0x54] sm:$0xf] %vm1208, %v1157
  %1231 = vst.msk [vmem:[%s4 + $0x58] sm:$0xf] %vm1208, %v1158
  %1232 = vst.msk [vmem:[%s4 + $0x5c] sm:$0xf] %vm1208, %v1159
  %1233 = vst.msk [vmem:[%s4 + $0x60] sm:$0xf] %vm1208, %v1160
  %1234 = vst.msk [vmem:[%s4 + $0x64] sm:$0xf] %vm1208, %v1161
  %1235 = vst.msk [vmem:[%s4 + $0x68] sm:$0xf] %vm1208, %v1162
  %1236 = vst.msk [vmem:[%s4 + $0x6c] sm:$0xf] %vm1208, %v1163
  %1237 = vst.msk [vmem:[%s4 + $0x70] sm:$0xf] %vm1208, %v1164
  %1238 = vst.msk [vmem:[%s4 + $0x74] sm:$0xf] %vm1208, %v1165
  %1239 = vst.msk [vmem:[%s4 + $0x78] sm:$0xf] %vm1208, %v1166
  %1240 = vst.msk [vmem:[%s4 + $0x7c] sm:$0xf] %vm1208, %v1167
  %1241 = vst.msk [vmem:[%s4 + $0x80] sm:$0xf] %vm1208, %v1168
  %1242 = vst.msk [vmem:[%s4 + $0x84] sm:$0xf] %vm1208, %v1169
  %1243 = vst.msk [vmem:[%s4 + $0x88] sm:$0xf] %vm1208, %v1170
  %1244 = vst.msk [vmem:[%s4 + $0x8c] sm:$0xf] %vm1208, %v1171
  // Predicated region
  $region18: #{ensemble_forward.23} parent=0 // pred_check
    _
  $region19: #{ensemble_forward.23} parent=0 // pred_check_branch
    %1246 = sbr.rel (0) target = $region21
  $region20: #{ensemble_forward.23} parent=0 // pred_region
    _
  $region21: #{ensemble_forward.23} parent=0 // pred_fallthru
    _
  // Predicated region
  $region22: #{ensemble_forward.23} parent=0 // pred_check
    _
  $region23: #{ensemble_forward.23} parent=0 // pred_check_branch
    %1248 = sbr.rel (0) target = $region25
  $region24: #{ensemble_forward.23} parent=0 // pred_region
    _
  $region25: #{ensemble_forward.23} parent=0 // pred_fallthru
    _

// kernel: ensemble_forward.24
$region0: #{ensemble_forward.24}
  #allocation0 [shape = 'u32[]', space=smem, size = 0x4, offset = 0x4, fixed_abs, tag = 'smem constant byte address 0x4 - core index']
  #allocation1 [shape = 'u32[144,128]{1,0:T(1,128)}', space=vmem, size = 0x12000, scoped, tag = 'internal scratch']
  %s0 = inlined_call_operand.vmem [shape: bf16[1,50,512], index: 0, kind: input, shape index: {}]
  %s1 = inlined_call_operand.vmem [shape: bf16[1,512,64], index: 1, kind: input, shape index: {}]
  %s2 = inlined_call_operand.vmem [shape: f32[1,1,64], index: 2, kind: input, shape index: {}]
  %s3 = inlined_call_operand.vmem [shape: bf16[1,50,64], index: 3, kind: output, shape index: {}]
  %s4 = sld [smem:[#allocation0]]
  $region22: #{ensemble_forward.24} parent=0
    _
  %s6 = ssub.s32 1, %s4
  %s7 = scalar_select 0, %s6, %s4
  // Predicated region
  $region2: #{ensemble_forward.24} parent=0 // pred_check
    _
  $region3: #{ensemble_forward.24} parent=0 // pred_check_branch
    %9 = sbr.rel (0) target = $region5
  $region4: #{ensemble_forward.24} parent=0 // pred_region
    _
  $region5: #{ensemble_forward.24} parent=0 // pred_fallthru
    _
  // Predicated region
  $region6: #{ensemble_forward.24} parent=0 // pred_check
    _
  $region7: #{ensemble_forward.24} parent=0 // pred_check_branch
    %11 = sbr.rel (0) target = $region9
  $region8: #{ensemble_forward.24} parent=0 // pred_region
    _
  $region9: #{ensemble_forward.24} parent=0 // pred_fallthru
    _
  // Predicated region
  $region10: #{ensemble_forward.24} parent=0 // pred_check
    _
  $region11: #{ensemble_forward.24} parent=0 // pred_check_branch
    %13 = sbr.rel (0) target = $region13
  $region12: #{ensemble_forward.24} parent=0 // pred_region
    _
  $region13: #{ensemble_forward.24} parent=0 // pred_fallthru
    _
  %v15 = vld [vmem:[%s0] sm:$0xff]
  %v16 = vld [vmem:[%s0 + $0x8] sm:$0xff]
  %v17 = vld [vmem:[%s0 + $0x10] sm:$0xff]
  %v18 = vld [vmem:[%s0 + $0x18] sm:$0xff]
  %v19 = vld [vmem:[%s0 + $0x20] sm:$0xff]
  %v20 = vld [vmem:[%s0 + $0x28] sm:$0xff]
  %v21 = vld [vmem:[%s0 + $0x30] sm:$0xff]
  %v22 = vld [vmem:[%s0 + $0x38] sm:$0xff]
  %v23 = vld [vmem:[%s0 + $0x40] sm:$0xff]
  %v24 = vld [vmem:[%s0 + $0x48] sm:$0xff]
  %v25 = vld [vmem:[%s0 + $0x50] sm:$0xff]
  %v26 = vld [vmem:[%s0 + $0x58] sm:$0xff]
  %v27 = vld [vmem:[%s0 + $0x60] sm:$0x11]
  %v28 = vld [vmem:[%s0 + $0x68] sm:$0x11]
  %v29 = vld [vmem:[%s1] sm:$0xf]
  %v30 = vld [vmem:[%s1 + $0x4] sm:$0xf]
  %v31 = vld [vmem:[%s1 + $0x8] sm:$0xf]
  %v32 = vld [vmem:[%s1 + $0xc] sm:$0xf]
  %v33 = vld [vmem:[%s1 + $0x10] sm:$0xf]
  %v34 = vld [vmem:[%s1 + $0x14] sm:$0xf]
  %v35 = vld [vmem:[%s1 + $0x18] sm:$0xf]
  %v36 = vld [vmem:[%s1 + $0x1c] sm:$0xf]
  %v37 = vld [vmem:[%s1 + $0x20] sm:$0xf]
  %v38 = vld [vmem:[%s1 + $0x24] sm:$0xf]
  %v39 = vld [vmem:[%s1 + $0x28] sm:$0xf]
  %v40 = vld [vmem:[%s1 + $0x2c] sm:$0xf]
  %v41 = vld [vmem:[%s1 + $0x30] sm:$0xf]
  %v42 = vld [vmem:[%s1 + $0x34] sm:$0xf]
  %v43 = vld [vmem:[%s1 + $0x38] sm:$0xf]
  %v44 = vld [vmem:[%s1 + $0x3c] sm:$0xf]
  %v45 = vld [vmem:[%s1 + $0x40] sm:$0xf]
  %v46 = vld [vmem:[%s1 + $0x44] sm:$0xf]
  %v47 = vld [vmem:[%s1 + $0x48] sm:$0xf]
  %v48 = vld [vmem:[%s1 + $0x4c] sm:$0xf]
  %v49 = vld [vmem:[%s1 + $0x50] sm:$0xf]
  %v50 = vld [vmem:[%s1 + $0x54] sm:$0xf]
  %v51 = vld [vmem:[%s1 + $0x58] sm:$0xf]
  %v52 = vld [vmem:[%s1 + $0x5c] sm:$0xf]
  %v53 = vld [vmem:[%s1 + $0x60] sm:$0xf]
  %v54 = vld [vmem:[%s1 + $0x64] sm:$0xf]
  %v55 = vld [vmem:[%s1 + $0x68] sm:$0xf]
  %v56 = vld [vmem:[%s1 + $0x6c] sm:$0xf]
  %v57 = vld [vmem:[%s1 + $0x70] sm:$0xf]
  %v58 = vld [vmem:[%s1 + $0x74] sm:$0xf]
  %v59 = vld [vmem:[%s1 + $0x78] sm:$0xf]
  %v60 = vld [vmem:[%s1 + $0x7c] sm:$0xf]
  %v61 = vld [vmem:[%s1 + $0x80] sm:$0xf]
  %v62 = vld [vmem:[%s1 + $0x84] sm:$0xf]
  %v63 = vld [vmem:[%s1 + $0x88] sm:$0xf]
  %v64 = vld [vmem:[%s1 + $0x8c] sm:$0xf]
  %v65 = vld [vmem:[%s1 + $0x90] sm:$0xf]
  %v66 = vld [vmem:[%s1 + $0x94] sm:$0xf]
  %v67 = vld [vmem:[%s1 + $0x98] sm:$0xf]
  %v68 = vld [vmem:[%s1 + $0x9c] sm:$0xf]
  %v69 = vld [vmem:[%s1 + $0xa0] sm:$0xf]
  %v70 = vld [vmem:[%s1 + $0xa4] sm:$0xf]
  %v71 = vld [vmem:[%s1 + $0xa8] sm:$0xf]
  %v72 = vld [vmem:[%s1 + $0xac] sm:$0xf]
  %v73 = vld [vmem:[%s1 + $0xb0] sm:$0xf]
  %v74 = vld [vmem:[%s1 + $0xb4] sm:$0xf]
  %v75 = vld [vmem:[%s1 + $0xb8] sm:$0xf]
  %v76 = vld [vmem:[%s1 + $0xbc] sm:$0xf]
  %v77 = vld [vmem:[%s1 + $0xc0] sm:$0xf]
  %v78 = vld [vmem:[%s1 + $0xc4] sm:$0xf]
  %v79 = vld [vmem:[%s1 + $0xc8] sm:$0xf]
  %v80 = vld [vmem:[%s1 + $0xcc] sm:$0xf]
  %v81 = vld [vmem:[%s1 + $0xd0] sm:$0xf]
  %v82 = vld [vmem:[%s1 + $0xd4] sm:$0xf]
  %v83 = vld [vmem:[%s1 + $0xd8] sm:$0xf]
  %v84 = vld [vmem:[%s1 + $0xdc] sm:$0xf]
  %v85 = vld [vmem:[%s1 + $0xe0] sm:$0xf]
  %v86 = vld [vmem:[%s1 + $0xe4] sm:$0xf]
  %v87 = vld [vmem:[%s1 + $0xe8] sm:$0xf]
  %v88 = vld [vmem:[%s1 + $0xec] sm:$0xf]
  %v89 = vld [vmem:[%s1 + $0xf0] sm:$0xf]
  %v90 = vld [vmem:[%s1 + $0xf4] sm:$0xf]
  %v91 = vld [vmem:[%s1 + $0xf8] sm:$0xf]
  %v92 = vld [vmem:[%s1 + $0xfc] sm:$0xf]
  %v93 = vld [vmem:[%s2] sm:$0x1]
  %v95 = vlaneseq
  %v96 = vshrl.u32 %v95, 7
  %v97 = vsub.s32 0, %v96
  %v98 = vrot.slane %v93, %v97
  %v114 = vunpack.c.l.b16 %v15
  %v115 = vunpack.c.h.b16 %v15
  %v116 = vunpack.c.l.b16 %v16
  %v117 = vunpack.c.h.b16 %v16
  %v118 = vunpack.c.l.b16 %v17
  %v119 = vunpack.c.h.b16 %v17
  %v120 = vunpack.c.l.b16 %v18
  %v121 = vunpack.c.h.b16 %v18
  %v122 = vunpack.c.l.b16 %v19
  %v123 = vunpack.c.h.b16 %v19
  %v124 = vunpack.c.l.b16 %v20
  %v125 = vunpack.c.h.b16 %v20
  %v126 = vunpack.c.l.b16 %v21
  %v127 = vunpack.c.h.b16 %v21
  %v128 = vunpack.c.l.b16 %v22
  %v129 = vunpack.c.h.b16 %v22
  %v130 = vunpack.c.l.b16 %v23
  %v131 = vunpack.c.h.b16 %v23
  %v132 = vunpack.c.l.b16 %v24
  %v133 = vunpack.c.h.b16 %v24
  %v134 = vunpack.c.l.b16 %v25
  %v135 = vunpack.c.h.b16 %v25
  %v136 = vunpack.c.l.b16 %v26
  %v137 = vunpack.c.h.b16 %v26
  %v138 = vunpack.c.l.b16 %v27
  %v139 = vunpack.c.h.b16 %v27
  %v140 = vunpack.c.l.b16 %v28
  %v141 = vunpack.c.h.b16 %v28
  %v142 = vpack.c.b16 %v118, %v114
  %v143 = vpack.c.b16 %v119, %v115
  %v144 = vpack.c.b16 %v120, %v116
  %v145 = vpack.c.b16 %v121, %v117
  %v146 = vpack.c.b16 %v126, %v122
  %v147 = vpack.c.b16 %v127, %v123
  %v148 = vpack.c.b16 %v128, %v124
  %v149 = vpack.c.b16 %v129, %v125
  %v150 = vpack.c.b16 %v134, %v130
  %v151 = vpack.c.b16 %v135, %v131
  %v152 = vpack.c.b16 %v136, %v132
  %v153 = vpack.c.b16 %v137, %v133
  %v154 = vpack.c.b16 %v138, %v138
  %v155 = vpack.c.b16 %v139, %v139
  %v156 = vpack.c.b16 %v140, %v140
  %v157 = vpack.c.b16 %v141, %v141
  %v238 = vunpack.c.l.b16 %v29
  %v239 = vunpack.c.l.b16 %v30
  %v240 = vunpack.c.l.b16 %v31
  %v241 = vunpack.c.l.b16 %v32
  %v242 = vunpack.c.l.b16 %v33
  %v243 = vunpack.c.l.b16 %v34
  %v244 = vunpack.c.l.b16 %v35
  %v245 = vunpack.c.l.b16 %v36
  %v246 = vunpack.c.l.b16 %v37
  %v247 = vunpack.c.l.b16 %v38
  %v248 = vunpack.c.l.b16 %v39
  %v249 = vunpack.c.l.b16 %v40
  %v250 = vunpack.c.l.b16 %v41
  %v251 = vunpack.c.l.b16 %v42
  %v252 = vunpack.c.l.b16 %v43
  %v253 = vunpack.c.l.b16 %v44
  %v254 = vunpack.c.l.b16 %v45
  %v255 = vunpack.c.l.b16 %v46
  %v256 = vunpack.c.l.b16 %v47
  %v257 = vunpack.c.l.b16 %v48
  %v258 = vunpack.c.l.b16 %v49
  %v259 = vunpack.c.l.b16 %v50
  %v260 = vunpack.c.l.b16 %v51
  %v261 = vunpack.c.l.b16 %v52
  %v262 = vunpack.c.l.b16 %v53
  %v263 = vunpack.c.l.b16 %v54
  %v264 = vunpack.c.l.b16 %v55
  %v265 = vunpack.c.l.b16 %v56
  %v266 = vunpack.c.l.b16 %v57
  %v267 = vunpack.c.l.b16 %v58
  %v268 = vunpack.c.l.b16 %v59
  %v269 = vunpack.c.l.b16 %v60
  %v270 = vunpack.c.l.b16 %v61
  %v271 = vunpack.c.l.b16 %v62
  %v272 = vunpack.c.l.b16 %v63
  %v273 = vunpack.c.l.b16 %v64
  %v274 = vunpack.c.l.b16 %v65
  %v275 = vunpack.c.l.b16 %v66
  %v276 = vunpack.c.l.b16 %v67
  %v277 = vunpack.c.l.b16 %v68
  %v278 = vunpack.c.l.b16 %v69
  %v279 = vunpack.c.l.b16 %v70
  %v280 = vunpack.c.l.b16 %v71
  %v281 = vunpack.c.l.b16 %v72
  %v282 = vunpack.c.l.b16 %v73
  %v283 = vunpack.c.l.b16 %v74
  %v284 = vunpack.c.l.b16 %v75
  %v285 = vunpack.c.l.b16 %v76
  %v286 = vunpack.c.l.b16 %v77
  %v287 = vunpack.c.l.b16 %v78
  %v288 = vunpack.c.l.b16 %v79
  %v289 = vunpack.c.l.b16 %v80
  %v290 = vunpack.c.l.b16 %v81
  %v291 = vunpack.c.l.b16 %v82
  %v292 = vunpack.c.l.b16 %v83
  %v293 = vunpack.c.l.b16 %v84
  %v294 = vunpack.c.l.b16 %v85
  %v295 = vunpack.c.l.b16 %v86
  %v296 = vunpack.c.l.b16 %v87
  %v297 = vunpack.c.l.b16 %v88
  %v298 = vunpack.c.l.b16 %v89
  %v299 = vunpack.c.l.b16 %v90
  %v300 = vunpack.c.l.b16 %v91
  %v301 = vunpack.c.l.b16 %v92
  %v302 = vpack.c.b16 %v239, %v238
  %v303 = vpack.c.b16 %v241, %v240
  %v304 = vpack.c.b16 %v243, %v242
  %v305 = vpack.c.b16 %v245, %v244
  %v306 = vpack.c.b16 %v247, %v246
  %v307 = vpack.c.b16 %v249, %v248
  %v308 = vpack.c.b16 %v251, %v250
  %v309 = vpack.c.b16 %v253, %v252
  %v310 = vpack.c.b16 %v255, %v254
  %v311 = vpack.c.b16 %v257, %v256
  %v312 = vpack.c.b16 %v259, %v258
  %v313 = vpack.c.b16 %v261, %v260
  %v314 = vpack.c.b16 %v263, %v262
  %v315 = vpack.c.b16 %v265, %v264
  %v316 = vpack.c.b16 %v267, %v266
  %v317 = vpack.c.b16 %v269, %v268
  %v318 = vpack.c.b16 %v271, %v270
  %v319 = vpack.c.b16 %v273, %v272
  %v320 = vpack.c.b16 %v275, %v274
  %v321 = vpack.c.b16 %v277, %v276
  %v322 = vpack.c.b16 %v279, %v278
  %v323 = vpack.c.b16 %v281, %v280
  %v324 = vpack.c.b16 %v283, %v282
  %v325 = vpack.c.b16 %v285, %v284
  %v326 = vpack.c.b16 %v287, %v286
  %v327 = vpack.c.b16 %v289, %v288
  %v328 = vpack.c.b16 %v291, %v290
  %v329 = vpack.c.b16 %v293, %v292
  %v330 = vpack.c.b16 %v295, %v294
  %v331 = vpack.c.b16 %v297, %v296
  %v332 = vpack.c.b16 %v299, %v298
  %v333 = vpack.c.b16 %v301, %v300
  %366 = vmatprep.subr.bf16.mxu0 0
  %367 = vmatpush1.bf16.msra.mxu0 %v309
  %368 = vmatprep.subr.bf16.mxu0 0
  %369 = vmatpush1.bf16.msra.mxu0 %v308
  %370 = vmatprep.subr.bf16.mxu0 0
  %371 = vmatpush1.bf16.msra.mxu0 %v307
  %372 = vmatprep.subr.bf16.mxu0 0
  %373 = vmatpush1.bf16.msra.mxu0 %v306
  %374 = vmatprep.subr.bf16.mxu0 0
  %375 = vmatpush1.bf16.msra.mxu0 %v305
  %376 = vmatprep.subr.bf16.mxu0 0
  %377 = vmatpush1.bf16.msra.mxu0 %v304
  %378 = vmatprep.subr.bf16.mxu0 0
  %379 = vmatpush1.bf16.msra.mxu0 %v303
  %380 = vmatprep.subr.bf16.mxu0 0
  %381 = vmatpush1.bf16.msra.mxu0 %v302
  %382 = vmatprep.subr.bf16.mxu0 0
  %383 = vmatpush2.bf16.msra.mxu0 %v317
  %384 = vmatprep.subr.bf16.mxu0 0
  %385 = vmatpush2.bf16.msra.mxu0 %v316
  %386 = vmatprep.subr.bf16.mxu0 0
  %387 = vmatpush2.bf16.msra.mxu0 %v315
  %388 = vmatprep.subr.bf16.mxu0 0
  %389 = vmatpush2.bf16.msra.mxu0 %v314
  %390 = vmatprep.subr.bf16.mxu0 0
  %391 = vmatpush2.bf16.msra.mxu0 %v313
  %392 = vmatprep.subr.bf16.mxu0 0
  %393 = vmatpush2.bf16.msra.mxu0 %v312
  %394 = vmatprep.subr.bf16.mxu0 0
  %395 = vmatpush2.bf16.msra.mxu0 %v311
  %396 = vmatprep.subr.bf16.mxu0 0
  %397 = vmatpush2.bf16.msra.mxu0 %v310
  %398 = vmatprep.mubr.bf16.mxu0 %v143
  %399 = vmatmul.mubr.bf16.gmra.mxu0 %v142
  %v400 = vpop.f32.mrf.mxu0
  %v401 = vadd.f32 %v98, %v400
  %v402 = vpop.f32.mrf.mxu0
  %v403 = vpop.f32.mrf.mxu0
  %v404 = vadd.f32 %v98, %v403
  %v405 = vpop.f32.mrf.mxu0
  %406 = vmatprep.mubr.bf16.mxu0 %v147
  %407 = vmatmul.mubr.bf16.gmra.mxu0 %v146
  %v408 = vpop.f32.mrf.mxu0
  %v409 = vadd.f32 %v98, %v408
  %v410 = vpop.f32.mrf.mxu0
  %v411 = vpop.f32.mrf.mxu0
  %v412 = vadd.f32 %v98, %v411
  %v413 = vpop.f32.mrf.mxu0
  %414 = vmatprep.mubr.bf16.mxu0 %v151
  %415 = vmatmul.mubr.bf16.gmra.mxu0 %v150
  %v416 = vpop.f32.mrf.mxu0
  %v417 = vadd.f32 %v98, %v416
  %v418 = vpop.f32.mrf.mxu0
  %v419 = vpop.f32.mrf.mxu0
  %v420 = vadd.f32 %v98, %v419
  %v421 = vpop.f32.mrf.mxu0
  %422 = vmatprep.mubr.bf16.mxu0 %v155
  %423 = vmatmul.mubr.bf16.gmra.mxu0 %v154
  %v424 = vpop.f32.mrf.mxu0
  %v425 = vadd.f32 %v98, %v424
  %v426 = vpop.f32.mrf.mxu0
  %v427 = vpop.f32.mrf.mxu0
  %v428 = vpop.f32.mrf.mxu0
  %429 = vdwg.mxu0
  %430 = vmatprep.subr.bf16.mxu0 0
  %431 = vmatpush1.bf16.msra.mxu0 %v325
  %432 = vmatprep.subr.bf16.mxu0 0
  %433 = vmatpush1.bf16.msra.mxu0 %v324
  %434 = vmatprep.subr.bf16.mxu0 0
  %435 = vmatpush1.bf16.msra.mxu0 %v323
  %436 = vmatprep.subr.bf16.mxu0 0
  %437 = vmatpush1.bf16.msra.mxu0 %v322
  %438 = vmatprep.subr.bf16.mxu0 0
  %439 = vmatpush1.bf16.msra.mxu0 %v321
  %440 = vmatprep.subr.bf16.mxu0 0
  %441 = vmatpush1.bf16.msra.mxu0 %v320
  %442 = vmatprep.subr.bf16.mxu0 0
  %443 = vmatpush1.bf16.msra.mxu0 %v319
  %444 = vmatprep.subr.bf16.mxu0 0
  %445 = vmatpush1.bf16.msra.mxu0 %v318
  %446 = vmatprep.subr.bf16.mxu0 0
  %447 = vmatpush2.bf16.msra.mxu0 %v333
  %448 = vmatprep.subr.bf16.mxu0 0
  %449 = vmatpush2.bf16.msra.mxu0 %v332
  %450 = vmatprep.subr.bf16.mxu0 0
  %451 = vmatpush2.bf16.msra.mxu0 %v331
  %452 = vmatprep.subr.bf16.mxu0 0
  %453 = vmatpush2.bf16.msra.mxu0 %v330
  %454 = vmatprep.subr.bf16.mxu0 0
  %455 = vmatpush2.bf16.msra.mxu0 %v329
  %456 = vmatprep.subr.bf16.mxu0 0
  %457 = vmatpush2.bf16.msra.mxu0 %v328
  %458 = vmatprep.subr.bf16.mxu0 0
  %459 = vmatpush2.bf16.msra.mxu0 %v327
  %460 = vmatprep.subr.bf16.mxu0 0
  %461 = vmatpush2.bf16.msra.mxu0 %v326
  %462 = vmatprep.mubr.bf16.mxu0 %v145
  %463 = vmatmul.mubr.bf16.gmra.mxu0 %v144
  %v464 = vpop.f32.mrf.mxu0
  %v465 = vadd.f32 %v401, %v464
  %v466 = vpop.f32.mrf.mxu0
  %v467 = vpop.f32.mrf.mxu0
  %v468 = vadd.f32 %v404, %v467
  %v469 = vpop.f32.mrf.mxu0
  %470 = vmatprep.mubr.bf16.mxu0 %v149
  %471 = vmatmul.mubr.bf16.gmra.mxu0 %v148
  %v472 = vpop.f32.mrf.mxu0
  %v473 = vadd.f32 %v409, %v472
  %v474 = vpop.f32.mrf.mxu0
  %v475 = vpop.f32.mrf.mxu0
  %v476 = vadd.f32 %v412, %v475
  %v477 = vpop.f32.mrf.mxu0
  %478 = vmatprep.mubr.bf16.mxu0 %v153
  %479 = vmatmul.mubr.bf16.gmra.mxu0 %v152
  %v480 = vpop.f32.mrf.mxu0
  %v481 = vadd.f32 %v417, %v480
  %v482 = vpop.f32.mrf.mxu0
  %v483 = vpop.f32.mrf.mxu0
  %v484 = vadd.f32 %v420, %v483
  %v485 = vpop.f32.mrf.mxu0
  %486 = vmatprep.mubr.bf16.mxu0 %v157
  %487 = vmatmul.mubr.bf16.gmra.mxu0 %v156
  %v488 = vpop.f32.mrf.mxu0
  %v489 = vadd.f32 %v425, %v488
  %v490 = vpop.f32.mrf.mxu0
  %v491 = vpop.f32.mrf.mxu0
  %v492 = vpop.f32.mrf.mxu0
  %493 = vdwg.mxu0
  %v494 = vpack.c.bf16 %v468, %v465
  %v495 = vpack.c.bf16 %v476, %v473
  %v496 = vpack.c.bf16 %v484, %v481
  %v497 = vpack.c.bf16 %v489, %v489
  %v502 = vunpack.c.l.b16 %v494
  %v503 = vunpack.c.h.b16 %v494
  %v504 = vunpack.c.l.b16 %v495
  %v505 = vunpack.c.h.b16 %v495
  %v506 = vunpack.c.l.b16 %v496
  %v507 = vunpack.c.h.b16 %v496
  %v508 = vunpack.c.l.b16 %v497
  %v509 = vpack.c.b16 %v502, %v502
  %v510 = vpack.c.b16 %v503, %v503
  %v511 = vpack.c.b16 %v504, %v504
  %v512 = vpack.c.b16 %v505, %v505
  %v513 = vpack.c.b16 %v506, %v506
  %v514 = vpack.c.b16 %v507, %v507
  %v515 = vpack.c.b16 %v508, %v508
  %vm523 = vcmask 519168
  %524 = vst.msk [vmem:[%s3] sm:$0xf] %vm523, %v509
  %525 = vst.msk [vmem:[%s3 + $0x4] sm:$0xf] %vm523, %v510
  %526 = vst.msk [vmem:[%s3 + $0x8] sm:$0xf] %vm523, %v511
  %527 = vst.msk [vmem:[%s3 + $0xc] sm:$0xf] %vm523, %v512
  %528 = vst.msk [vmem:[%s3 + $0x10] sm:$0xf] %vm523, %v513
  %529 = vst.msk [vmem:[%s3 + $0x14] sm:$0xf] %vm523, %v514
  %vm530 = vcmask 516096
  %531 = vst.msk [vmem:[%s3 + $0x18] sm:$0x1] %vm530, %v515
  // Predicated region
  $region14: #{ensemble_forward.24} parent=0 // pred_check
    _
  $region15: #{ensemble_forward.24} parent=0 // pred_check_branch
    %533 = sbr.rel (0) target = $region17
  $region16: #{ensemble_forward.24} parent=0 // pred_region
    _
  $region17: #{ensemble_forward.24} parent=0 // pred_fallthru
    _
  // Predicated region
  $region18: #{ensemble_forward.24} parent=0 // pred_check
    _
  $region19: #{ensemble_forward.24} parent=0 // pred_check_branch
    %535 = sbr.rel (0) target = $region21
  $region20: #{ensemble_forward.24} parent=0 // pred_region
    _
  $region21: #{ensemble_forward.24} parent=0 // pred_fallthru
    _

// kernel: ensemble_forward.25
$region0: #{ensemble_forward.25}
  #allocation0 [shape = 'u32[]', space=smem, size = 0x4, offset = 0x4, fixed_abs, tag = 'smem constant byte address 0x4 - core index']
  #allocation1 [shape = 'u32[144,128]{1,0:T(1,128)}', space=vmem, size = 0x12000, scoped, tag = 'internal scratch']
  %s0 = inlined_call_operand.vmem [shape: bf16[1,2,1600], index: 0, kind: input, shape index: {}]
  %s1 = inlined_call_operand.vmem [shape: bf16[1,1600,512], index: 1, kind: input, shape index: {}]
  %s2 = inlined_call_operand.vmem [shape: f32[1,1,512], index: 2, kind: input, shape index: {}]
  %s3 = inlined_call_operand.vmem [shape: bf16[1,512,6], index: 3, kind: input, shape index: {}]
  %s4 = inlined_call_operand.vmem [shape: f32[1,1,6], index: 4, kind: input, shape index: {}]
  %s5 = inlined_call_operand.vmem [shape: f32[1,2,6], index: 5, kind: output, shape index: {}]
  %s6 = sld [smem:[#allocation0]]
  $region30: #{ensemble_forward.25} parent=0
    _
  %s8 = ssub.s32 1, %s6
  %s9 = scalar_select 0, %s8, %s6
  // Predicated region
  $region2: #{ensemble_forward.25} parent=0 // pred_check
    _
  $region3: #{ensemble_forward.25} parent=0 // pred_check_branch
    %11 = sbr.rel (0) target = $region5
  $region4: #{ensemble_forward.25} parent=0 // pred_region
    _
  $region5: #{ensemble_forward.25} parent=0 // pred_fallthru
    _
  // Predicated region
  $region6: #{ensemble_forward.25} parent=0 // pred_check
    _
  $region7: #{ensemble_forward.25} parent=0 // pred_check_branch
    %13 = sbr.rel (0) target = $region9
  $region8: #{ensemble_forward.25} parent=0 // pred_region
    _
  $region9: #{ensemble_forward.25} parent=0 // pred_fallthru
    _
  // Predicated region
  $region10: #{ensemble_forward.25} parent=0 // pred_check
    _
  $region11: #{ensemble_forward.25} parent=0 // pred_check_branch
    %15 = sbr.rel (0) target = $region13
  $region12: #{ensemble_forward.25} parent=0 // pred_region
    _
  $region13: #{ensemble_forward.25} parent=0 // pred_fallthru
    _
  // Predicated region
  $region14: #{ensemble_forward.25} parent=0 // pred_check
    _
  $region15: #{ensemble_forward.25} parent=0 // pred_check_branch
    %17 = sbr.rel (0) target = $region17
  $region16: #{ensemble_forward.25} parent=0 // pred_region
    _
  $region17: #{ensemble_forward.25} parent=0 // pred_fallthru
    _
  // Predicated region
  $region18: #{ensemble_forward.25} parent=0 // pred_check
    _
  $region19: #{ensemble_forward.25} parent=0 // pred_check_branch
    %19 = sbr.rel (0) target = $region21
  $region20: #{ensemble_forward.25} parent=0 // pred_region
    _
  $region21: #{ensemble_forward.25} parent=0 // pred_fallthru
    _
  %v21 = vld [vmem:[%s0] sm:$0xff]
  %v22 = vld [vmem:[%s0 + $0x8] sm:$0x1f]
  %v23 = vld [vmem:[%s1] sm:$0xff]
  %v24 = vld [vmem:[%s1 + $0x8] sm:$0xff]
  %v25 = vld [vmem:[%s1 + $0x10] sm:$0xff]
  %v26 = vld [vmem:[%s1 + $0x18] sm:$0xff]
  %v27 = vld [vmem:[%s1 + $0x20] sm:$0xff]
  %v28 = vld [vmem:[%s1 + $0x28] sm:$0xff]
  %v29 = vld [vmem:[%s1 + $0x30] sm:$0xff]
  %v30 = vld [vmem:[%s1 + $0x38] sm:$0xff]
  %v31 = vld [vmem:[%s1 + $0x40] sm:$0xff]
  %v32 = vld [vmem:[%s1 + $0x48] sm:$0xff]
  %v33 = vld [vmem:[%s1 + $0x50] sm:$0xff]
  %v34 = vld [vmem:[%s1 + $0x58] sm:$0xff]
  %v35 = vld [vmem:[%s1 + $0x60] sm:$0xff]
  %v36 = vld [vmem:[%s1 + $0x68] sm:$0xff]
  %v37 = vld [vmem:[%s1 + $0x70] sm:$0xff]
  %v38 = vld [vmem:[%s1 + $0x78] sm:$0xff]
  %v39 = vld [vmem:[%s1 + $0x80] sm:$0xff]
  %v40 = vld [vmem:[%s1 + $0x88] sm:$0xff]
  %v41 = vld [vmem:[%s1 + $0x90] sm:$0xff]
  %v42 = vld [vmem:[%s1 + $0x98] sm:$0xff]
  %v43 = vld [vmem:[%s1 + $0xa0] sm:$0xff]
  %v44 = vld [vmem:[%s1 + $0xa8] sm:$0xff]
  %v45 = vld [vmem:[%s1 + $0xb0] sm:$0xff]
  %v46 = vld [vmem:[%s1 + $0xb8] sm:$0xff]
  %v47 = vld [vmem:[%s1 + $0xc0] sm:$0xff]
  %v48 = vld [vmem:[%s1 + $0xc8] sm:$0xff]
  %v49 = vld [vmem:[%s1 + $0xd0] sm:$0xff]
  %v50 = vld [vmem:[%s1 + $0xd8] sm:$0xff]
  %v51 = vld [vmem:[%s1 + $0xe0] sm:$0xff]
  %v52 = vld [vmem:[%s1 + $0xe8] sm:$0xff]
  %v53 = vld [vmem:[%s1 + $0xf0] sm:$0xff]
  %v54 = vld [vmem:[%s1 + $0xf8] sm:$0xff]
  %v55 = vld [vmem:[%s1 + $0x100] sm:$0xff]
  %v56 = vld [vmem:[%s1 + $0x108] sm:$0xff]
  %v57 = vld [vmem:[%s1 + $0x110] sm:$0xff]
  %v58 = vld [vmem:[%s1 + $0x118] sm:$0xff]
  %v59 = vld [vmem:[%s1 + $0x120] sm:$0xff]
  %v60 = vld [vmem:[%s1 + $0x128] sm:$0xff]
  %v61 = vld [vmem:[%s1 + $0x130] sm:$0xff]
  %v62 = vld [vmem:[%s1 + $0x138] sm:$0xff]
  %v63 = vld [vmem:[%s1 + $0x140] sm:$0xff]
  %v64 = vld [vmem:[%s1 + $0x148] sm:$0xff]
  %v65 = vld [vmem:[%s1 + $0x150] sm:$0xff]
  %v66 = vld [vmem:[%s1 + $0x158] sm:$0xff]
  %v67 = vld [vmem:[%s1 + $0x160] sm:$0xff]
  %v68 = vld [vmem:[%s1 + $0x168] sm:$0xff]
  %v69 = vld [vmem:[%s1 + $0x170] sm:$0xff]
  %v70 = vld [vmem:[%s1 + $0x178] sm:$0xff]
  %v71 = vld [vmem:[%s1 + $0x180] sm:$0xff]
  %v72 = vld [vmem:[%s1 + $0x188] sm:$0xff]
  %v73 = vld [vmem:[%s1 + $0x190] sm:$0xff]
  %v74 = vld [vmem:[%s1 + $0x198] sm:$0xff]
  %v75 = vld [vmem:[%s1 + $0x1a0] sm:$0xff]
  %v76 = vld [vmem:[%s1 + $0x1a8] sm:$0xff]
  %v77 = vld [vmem:[%s1 + $0x1b0] sm:$0xff]
  %v78 = vld [vmem:[%s1 + $0x1b8] sm:$0xff]
  %v79 = vld [vmem:[%s1 + $0x1c0] sm:$0xff]
  %v80 = vld [vmem:[%s1 + $0x1c8] sm:$0xff]
  %v81 = vld [vmem:[%s1 + $0x1d0] sm:$0xff]
  %v82 = vld [vmem:[%s1 + $0x1d8] sm:$0xff]
  %v83 = vld [vmem:[%s1 + $0x1e0] sm:$0xff]
  %v84 = vld [vmem:[%s1 + $0x1e8] sm:$0xff]
  %v85 = vld [vmem:[%s1 + $0x1f0] sm:$0xff]
  %v86 = vld [vmem:[%s1 + $0x1f8] sm:$0xff]
  %v87 = vld [vmem:[%s1 + $0x200] sm:$0xff]
  %v88 = vld [vmem:[%s1 + $0x208] sm:$0xff]
  %v89 = vld [vmem:[%s1 + $0x210] sm:$0xff]
  %v90 = vld [vmem:[%s1 + $0x218] sm:$0xff]
  %v91 = vld [vmem:[%s1 + $0x220] sm:$0xff]
  %v92 = vld [vmem:[%s1 + $0x228] sm:$0xff]
  %v93 = vld [vmem:[%s1 + $0x230] sm:$0xff]
  %v94 = vld [vmem:[%s1 + $0x238] sm:$0xff]
  %v95 = vld [vmem:[%s1 + $0x240] sm:$0xff]
  %v96 = vld [vmem:[%s1 + $0x248] sm:$0xff]
  %v97 = vld [vmem:[%s1 + $0x250] sm:$0xff]
  %v98 = vld [vmem:[%s1 + $0x258] sm:$0xff]
  %v99 = vld [vmem:[%s1 + $0x260] sm:$0xff]
  %v100 = vld [vmem:[%s1 + $0x268] sm:$0xff]
  %v101 = vld [vmem:[%s1 + $0x270] sm:$0xff]
  %v102 = vld [vmem:[%s1 + $0x278] sm:$0xff]
  %v103 = vld [vmem:[%s1 + $0x280] sm:$0xff]
  %v104 = vld [vmem:[%s1 + $0x288] sm:$0xff]
  %v105 = vld [vmem:[%s1 + $0x290] sm:$0xff]
  %v106 = vld [vmem:[%s1 + $0x298] sm:$0xff]
  %v107 = vld [vmem:[%s1 + $0x2a0] sm:$0xff]
  %v108 = vld [vmem:[%s1 + $0x2a8] sm:$0xff]
  %v109 = vld [vmem:[%s1 + $0x2b0] sm:$0xff]
  %v110 = vld [vmem:[%s1 + $0x2b8] sm:$0xff]
  %v111 = vld [vmem:[%s1 + $0x2c0] sm:$0xff]
  %v112 = vld [vmem:[%s1 + $0x2c8] sm:$0xff]
  %v113 = vld [vmem:[%s1 + $0x2d0] sm:$0xff]
  %v114 = vld [vmem:[%s1 + $0x2d8] sm:$0xff]
  %v115 = vld [vmem:[%s1 + $0x2e0] sm:$0xff]
  %v116 = vld [vmem:[%s1 + $0x2e8] sm:$0xff]
  %v117 = vld [vmem:[%s1 + $0x2f0] sm:$0xff]
  %v118 = vld [vmem:[%s1 + $0x2f8] sm:$0xff]
  %v119 = vld [vmem:[%s1 + $0x300] sm:$0xff]
  %v120 = vld [vmem:[%s1 + $0x308] sm:$0xff]
  %v121 = vld [vmem:[%s1 + $0x310] sm:$0xff]
  %v122 = vld [vmem:[%s1 + $0x318] sm:$0xff]
  %v123 = vld [vmem:[%s1 + $0x320] sm:$0xff]
  %v124 = vld [vmem:[%s1 + $0x328] sm:$0xff]
  %v125 = vld [vmem:[%s1 + $0x330] sm:$0xff]
  %v126 = vld [vmem:[%s1 + $0x338] sm:$0xff]
  %v127 = vld [vmem:[%s1 + $0x340] sm:$0xff]
  %v128 = vld [vmem:[%s1 + $0x348] sm:$0xff]
  %v129 = vld [vmem:[%s1 + $0x350] sm:$0xff]
  %v130 = vld [vmem:[%s1 + $0x358] sm:$0xff]
  %v131 = vld [vmem:[%s1 + $0x360] sm:$0xff]
  %v132 = vld [vmem:[%s1 + $0x368] sm:$0xff]
  %v133 = vld [vmem:[%s1 + $0x370] sm:$0xff]
  %v134 = vld [vmem:[%s1 + $0x378] sm:$0xff]
  %v135 = vld [vmem:[%s1 + $0x380] sm:$0xff]
  %v136 = vld [vmem:[%s1 + $0x388] sm:$0xff]
  %v137 = vld [vmem:[%s1 + $0x390] sm:$0xff]
  %v138 = vld [vmem:[%s1 + $0x398] sm:$0xff]
  %v139 = vld [vmem:[%s1 + $0x3a0] sm:$0xff]
  %v140 = vld [vmem:[%s1 + $0x3a8] sm:$0xff]
  %v141 = vld [vmem:[%s1 + $0x3b0] sm:$0xff]
  %v142 = vld [vmem:[%s1 + $0x3b8] sm:$0xff]
  %v143 = vld [vmem:[%s1 + $0x3c0] sm:$0xff]
  %v144 = vld [vmem:[%s1 + $0x3c8] sm:$0xff]
  %v145 = vld [vmem:[%s1 + $0x3d0] sm:$0xff]
  %v146 = vld [vmem:[%s1 + $0x3d8] sm:$0xff]
  %v147 = vld [vmem:[%s1 + $0x3e0] sm:$0xff]
  %v148 = vld [vmem:[%s1 + $0x3e8] sm:$0xff]
  %v149 = vld [vmem:[%s1 + $0x3f0] sm:$0xff]
  %v150 = vld [vmem:[%s1 + $0x3f8] sm:$0xff]
  %v151 = vld [vmem:[%s1 + $0x400] sm:$0xff]
  %v152 = vld [vmem:[%s1 + $0x408] sm:$0xff]
  %v153 = vld [vmem:[%s1 + $0x410] sm:$0xff]
  %v154 = vld [vmem:[%s1 + $0x418] sm:$0xff]
  %v155 = vld [vmem:[%s1 + $0x420] sm:$0xff]
  %v156 = vld [vmem:[%s1 + $0x428] sm:$0xff]
  %v157 = vld [vmem:[%s1 + $0x430] sm:$0xff]
  %v158 = vld [vmem:[%s1 + $0x438] sm:$0xff]
  %v159 = vld [vmem:[%s1 + $0x440] sm:$0xff]
  %v160 = vld [vmem:[%s1 + $0x448] sm:$0xff]
  %v161 = vld [vmem:[%s1 + $0x450] sm:$0xff]
  %v162 = vld [vmem:[%s1 + $0x458] sm:$0xff]
  %v163 = vld [vmem:[%s1 + $0x460] sm:$0xff]
  %v164 = vld [vmem:[%s1 + $0x468] sm:$0xff]
  %v165 = vld [vmem:[%s1 + $0x470] sm:$0xff]
  %v166 = vld [vmem:[%s1 + $0x478] sm:$0xff]
  %v167 = vld [vmem:[%s1 + $0x480] sm:$0xff]
  %v168 = vld [vmem:[%s1 + $0x488] sm:$0xff]
  %v169 = vld [vmem:[%s1 + $0x490] sm:$0xff]
  %v170 = vld [vmem:[%s1 + $0x498] sm:$0xff]
  %v171 = vld [vmem:[%s1 + $0x4a0] sm:$0xff]
  %v172 = vld [vmem:[%s1 + $0x4a8] sm:$0xff]
  %v173 = vld [vmem:[%s1 + $0x4b0] sm:$0xff]
  %v174 = vld [vmem:[%s1 + $0x4b8] sm:$0xff]
  %v175 = vld [vmem:[%s1 + $0x4c0] sm:$0xff]
  %v176 = vld [vmem:[%s1 + $0x4c8] sm:$0xff]
  %v177 = vld [vmem:[%s1 + $0x4d0] sm:$0xff]
  %v178 = vld [vmem:[%s1 + $0x4d8] sm:$0xff]
  %v179 = vld [vmem:[%s1 + $0x4e0] sm:$0xff]
  %v180 = vld [vmem:[%s1 + $0x4e8] sm:$0xff]
  %v181 = vld [vmem:[%s1 + $0x4f0] sm:$0xff]
  %v182 = vld [vmem:[%s1 + $0x4f8] sm:$0xff]
  %v183 = vld [vmem:[%s1 + $0x500] sm:$0xff]
  %v184 = vld [vmem:[%s1 + $0x508] sm:$0xff]
  %v185 = vld [vmem:[%s1 + $0x510] sm:$0xff]
  %v186 = vld [vmem:[%s1 + $0x518] sm:$0xff]
  %v187 = vld [vmem:[%s1 + $0x520] sm:$0xff]
  %v188 = vld [vmem:[%s1 + $0x528] sm:$0xff]
  %v189 = vld [vmem:[%s1 + $0x530] sm:$0xff]
  %v190 = vld [vmem:[%s1 + $0x538] sm:$0xff]
  %v191 = vld [vmem:[%s1 + $0x540] sm:$0xff]
  %v192 = vld [vmem:[%s1 + $0x548] sm:$0xff]
  %v193 = vld [vmem:[%s1 + $0x550] sm:$0xff]
  %v194 = vld [vmem:[%s1 + $0x558] sm:$0xff]
  %v195 = vld [vmem:[%s1 + $0x560] sm:$0xff]
  %v196 = vld [vmem:[%s1 + $0x568] sm:$0xff]
  %v197 = vld [vmem:[%s1 + $0x570] sm:$0xff]
  %v198 = vld [vmem:[%s1 + $0x578] sm:$0xff]
  %v199 = vld [vmem:[%s1 + $0x580] sm:$0xff]
  %v200 = vld [vmem:[%s1 + $0x588] sm:$0xff]
  %v201 = vld [vmem:[%s1 + $0x590] sm:$0xff]
  %v202 = vld [vmem:[%s1 + $0x598] sm:$0xff]
  %v203 = vld [vmem:[%s1 + $0x5a0] sm:$0xff]
  %v204 = vld [vmem:[%s1 + $0x5a8] sm:$0xff]
  %v205 = vld [vmem:[%s1 + $0x5b0] sm:$0xff]
  %v206 = vld [vmem:[%s1 + $0x5b8] sm:$0xff]
  %v207 = vld [vmem:[%s1 + $0x5c0] sm:$0xff]
  %v208 = vld [vmem:[%s1 + $0x5c8] sm:$0xff]
  %v209 = vld [vmem:[%s1 + $0x5d0] sm:$0xff]
  %v210 = vld [vmem:[%s1 + $0x5d8] sm:$0xff]
  %v211 = vld [vmem:[%s1 + $0x5e0] sm:$0xff]
  %v212 = vld [vmem:[%s1 + $0x5e8] sm:$0xff]
  %v213 = vld [vmem:[%s1 + $0x5f0] sm:$0xff]
  %v214 = vld [vmem:[%s1 + $0x5f8] sm:$0xff]
  %v215 = vld [vmem:[%s1 + $0x600] sm:$0xff]
  %v216 = vld [vmem:[%s1 + $0x608] sm:$0xff]
  %v217 = vld [vmem:[%s1 + $0x610] sm:$0xff]
  %v218 = vld [vmem:[%s1 + $0x618] sm:$0xff]
  %v219 = vld [vmem:[%s1 + $0x620] sm:$0xff]
  %v220 = vld [vmem:[%s1 + $0x628] sm:$0xff]
  %v221 = vld [vmem:[%s1 + $0x630] sm:$0xff]
  %v222 = vld [vmem:[%s1 + $0x638] sm:$0xff]
  %v223 = vld [vmem:[%s1 + $0x640] sm:$0xff]
  %v224 = vld [vmem:[%s1 + $0x648] sm:$0xff]
  %v225 = vld [vmem:[%s1 + $0x650] sm:$0xff]
  %v226 = vld [vmem:[%s1 + $0x658] sm:$0xff]
  %v227 = vld [vmem:[%s1 + $0x660] sm:$0xff]
  %v228 = vld [vmem:[%s1 + $0x668] sm:$0xff]
  %v229 = vld [vmem:[%s1 + $0x670] sm:$0xff]
  %v230 = vld [vmem:[%s1 + $0x678] sm:$0xff]
  %v231 = vld [vmem:[%s1 + $0x680] sm:$0xff]
  %v232 = vld [vmem:[%s1 + $0x688] sm:$0xff]
  %v233 = vld [vmem:[%s1 + $0x690] sm:$0xff]
  %v234 = vld [vmem:[%s1 + $0x698] sm:$0xff]
  %v235 = vld [vmem:[%s1 + $0x6a0] sm:$0xff]
  %v236 = vld [vmem:[%s1 + $0x6a8] sm:$0xff]
  %v237 = vld [vmem:[%s1 + $0x6b0] sm:$0xff]
  %v238 = vld [vmem:[%s1 + $0x6b8] sm:$0xff]
  %v239 = vld [vmem:[%s1 + $0x6c0] sm:$0xff]
  %v240 = vld [vmem:[%s1 + $0x6c8] sm:$0xff]
  %v241 = vld [vmem:[%s1 + $0x6d0] sm:$0xff]
  %v242 = vld [vmem:[%s1 + $0x6d8] sm:$0xff]
  %v243 = vld [vmem:[%s1 + $0x6e0] sm:$0xff]
  %v244 = vld [vmem:[%s1 + $0x6e8] sm:$0xff]
  %v245 = vld [vmem:[%s1 + $0x6f0] sm:$0xff]
  %v246 = vld [vmem:[%s1 + $0x6f8] sm:$0xff]
  %v247 = vld [vmem:[%s1 + $0x700] sm:$0xff]
  %v248 = vld [vmem:[%s1 + $0x708] sm:$0xff]
  %v249 = vld [vmem:[%s1 + $0x710] sm:$0xff]
  %v250 = vld [vmem:[%s1 + $0x718] sm:$0xff]
  %v251 = vld [vmem:[%s1 + $0x720] sm:$0xff]
  %v252 = vld [vmem:[%s1 + $0x728] sm:$0xff]
  %v253 = vld [vmem:[%s1 + $0x730] sm:$0xff]
  %v254 = vld [vmem:[%s1 + $0x738] sm:$0xff]
  %v255 = vld [vmem:[%s1 + $0x740] sm:$0xff]
  %v256 = vld [vmem:[%s1 + $0x748] sm:$0xff]
  %v257 = vld [vmem:[%s1 + $0x750] sm:$0xff]
  %v258 = vld [vmem:[%s1 + $0x758] sm:$0xff]
  %v259 = vld [vmem:[%s1 + $0x760] sm:$0xff]
  %v260 = vld [vmem:[%s1 + $0x768] sm:$0xff]
  %v261 = vld [vmem:[%s1 + $0x770] sm:$0xff]
  %v262 = vld [vmem:[%s1 + $0x778] sm:$0xff]
  %v263 = vld [vmem:[%s1 + $0x780] sm:$0xff]
  %v264 = vld [vmem:[%s1 + $0x788] sm:$0xff]
  %v265 = vld [vmem:[%s1 + $0x790] sm:$0xff]
  %v266 = vld [vmem:[%s1 + $0x798] sm:$0xff]
  %v267 = vld [vmem:[%s1 + $0x7a0] sm:$0xff]
  %v268 = vld [vmem:[%s1 + $0x7a8] sm:$0xff]
  %v269 = vld [vmem:[%s1 + $0x7b0] sm:$0xff]
  %v270 = vld [vmem:[%s1 + $0x7b8] sm:$0xff]
  %v271 = vld [vmem:[%s1 + $0x7c0] sm:$0xff]
  %v272 = vld [vmem:[%s1 + $0x7c8] sm:$0xff]
  %v273 = vld [vmem:[%s1 + $0x7d0] sm:$0xff]
  %v274 = vld [vmem:[%s1 + $0x7d8] sm:$0xff]
  %v275 = vld [vmem:[%s1 + $0x7e0] sm:$0xff]
  %v276 = vld [vmem:[%s1 + $0x7e8] sm:$0xff]
  %v277 = vld [vmem:[%s1 + $0x7f0] sm:$0xff]
  %v278 = vld [vmem:[%s1 + $0x7f8] sm:$0xff]
  %v279 = vld [vmem:[%s1 + $0x800] sm:$0xff]
  %v280 = vld [vmem:[%s1 + $0x808] sm:$0xff]
  %v281 = vld [vmem:[%s1 + $0x810] sm:$0xff]
  %v282 = vld [vmem:[%s1 + $0x818] sm:$0xff]
  %v283 = vld [vmem:[%s1 + $0x820] sm:$0xff]
  %v284 = vld [vmem:[%s1 + $0x828] sm:$0xff]
  %v285 = vld [vmem:[%s1 + $0x830] sm:$0xff]
  %v286 = vld [vmem:[%s1 + $0x838] sm:$0xff]
  %v287 = vld [vmem:[%s1 + $0x840] sm:$0xff]
  %v288 = vld [vmem:[%s1 + $0x848] sm:$0xff]
  %v289 = vld [vmem:[%s1 + $0x850] sm:$0xff]
  %v290 = vld [vmem:[%s1 + $0x858] sm:$0xff]
  %v291 = vld [vmem:[%s1 + $0x860] sm:$0xff]
  %v292 = vld [vmem:[%s1 + $0x868] sm:$0xff]
  %v293 = vld [vmem:[%s1 + $0x870] sm:$0xff]
  %v294 = vld [vmem:[%s1 + $0x878] sm:$0xff]
  %v295 = vld [vmem:[%s1 + $0x880] sm:$0xff]
  %v296 = vld [vmem:[%s1 + $0x888] sm:$0xff]
  %v297 = vld [vmem:[%s1 + $0x890] sm:$0xff]
  %v298 = vld [vmem:[%s1 + $0x898] sm:$0xff]
  %v299 = vld [vmem:[%s1 + $0x8a0] sm:$0xff]
  %v300 = vld [vmem:[%s1 + $0x8a8] sm:$0xff]
  %v301 = vld [vmem:[%s1 + $0x8b0] sm:$0xff]
  %v302 = vld [vmem:[%s1 + $0x8b8] sm:$0xff]
  %v303 = vld [vmem:[%s1 + $0x8c0] sm:$0xff]
  %v304 = vld [vmem:[%s1 + $0x8c8] sm:$0xff]
  %v305 = vld [vmem:[%s1 + $0x8d0] sm:$0xff]
  %v306 = vld [vmem:[%s1 + $0x8d8] sm:$0xff]
  %v307 = vld [vmem:[%s1 + $0x8e0] sm:$0xff]
  %v308 = vld [vmem:[%s1 + $0x8e8] sm:$0xff]
  %v309 = vld [vmem:[%s1 + $0x8f0] sm:$0xff]
  %v310 = vld [vmem:[%s1 + $0x8f8] sm:$0xff]
  %v311 = vld [vmem:[%s1 + $0x900] sm:$0xff]
  %v312 = vld [vmem:[%s1 + $0x908] sm:$0xff]
  %v313 = vld [vmem:[%s1 + $0x910] sm:$0xff]
  %v314 = vld [vmem:[%s1 + $0x918] sm:$0xff]
  %v315 = vld [vmem:[%s1 + $0x920] sm:$0xff]
  %v316 = vld [vmem:[%s1 + $0x928] sm:$0xff]
  %v317 = vld [vmem:[%s1 + $0x930] sm:$0xff]
  %v318 = vld [vmem:[%s1 + $0x938] sm:$0xff]
  %v319 = vld [vmem:[%s1 + $0x940] sm:$0xff]
  %v320 = vld [vmem:[%s1 + $0x948] sm:$0xff]
  %v321 = vld [vmem:[%s1 + $0x950] sm:$0xff]
  %v322 = vld [vmem:[%s1 + $0x958] sm:$0xff]
  %v323 = vld [vmem:[%s1 + $0x960] sm:$0xff]
  %v324 = vld [vmem:[%s1 + $0x968] sm:$0xff]
  %v325 = vld [vmem:[%s1 + $0x970] sm:$0xff]
  %v326 = vld [vmem:[%s1 + $0x978] sm:$0xff]
  %v327 = vld [vmem:[%s1 + $0x980] sm:$0xff]
  %v328 = vld [vmem:[%s1 + $0x988] sm:$0xff]
  %v329 = vld [vmem:[%s1 + $0x990] sm:$0xff]
  %v330 = vld [vmem:[%s1 + $0x998] sm:$0xff]
  %v331 = vld [vmem:[%s1 + $0x9a0] sm:$0xff]
  %v332 = vld [vmem:[%s1 + $0x9a8] sm:$0xff]
  %v333 = vld [vmem:[%s1 + $0x9b0] sm:$0xff]
  %v334 = vld [vmem:[%s1 + $0x9b8] sm:$0xff]
  %v335 = vld [vmem:[%s1 + $0x9c0] sm:$0xff]
  %v336 = vld [vmem:[%s1 + $0x9c8] sm:$0xff]
  %v337 = vld [vmem:[%s1 + $0x9d0] sm:$0xff]
  %v338 = vld [vmem:[%s1 + $0x9d8] sm:$0xff]
  %v339 = vld [vmem:[%s1 + $0x9e0] sm:$0xff]
  %v340 = vld [vmem:[%s1 + $0x9e8] sm:$0xff]
  %v341 = vld [vmem:[%s1 + $0x9f0] sm:$0xff]
  %v342 = vld [vmem:[%s1 + $0x9f8] sm:$0xff]
  %v343 = vld [vmem:[%s1 + $0xa00] sm:$0xff]
  %v344 = vld [vmem:[%s1 + $0xa08] sm:$0xff]
  %v345 = vld [vmem:[%s1 + $0xa10] sm:$0xff]
  %v346 = vld [vmem:[%s1 + $0xa18] sm:$0xff]
  %v347 = vld [vmem:[%s1 + $0xa20] sm:$0xff]
  %v348 = vld [vmem:[%s1 + $0xa28] sm:$0xff]
  %v349 = vld [vmem:[%s1 + $0xa30] sm:$0xff]
  %v350 = vld [vmem:[%s1 + $0xa38] sm:$0xff]
  %v351 = vld [vmem:[%s1 + $0xa40] sm:$0xff]
  %v352 = vld [vmem:[%s1 + $0xa48] sm:$0xff]
  %v353 = vld [vmem:[%s1 + $0xa50] sm:$0xff]
  %v354 = vld [vmem:[%s1 + $0xa58] sm:$0xff]
  %v355 = vld [vmem:[%s1 + $0xa60] sm:$0xff]
  %v356 = vld [vmem:[%s1 + $0xa68] sm:$0xff]
  %v357 = vld [vmem:[%s1 + $0xa70] sm:$0xff]
  %v358 = vld [vmem:[%s1 + $0xa78] sm:$0xff]
  %v359 = vld [vmem:[%s1 + $0xa80] sm:$0xff]
  %v360 = vld [vmem:[%s1 + $0xa88] sm:$0xff]
  %v361 = vld [vmem:[%s1 + $0xa90] sm:$0xff]
  %v362 = vld [vmem:[%s1 + $0xa98] sm:$0xff]
  %v363 = vld [vmem:[%s1 + $0xaa0] sm:$0xff]
  %v364 = vld [vmem:[%s1 + $0xaa8] sm:$0xff]
  %v365 = vld [vmem:[%s1 + $0xab0] sm:$0xff]
  %v366 = vld [vmem:[%s1 + $0xab8] sm:$0xff]
  %v367 = vld [vmem:[%s1 + $0xac0] sm:$0xff]
  %v368 = vld [vmem:[%s1 + $0xac8] sm:$0xff]
  %v369 = vld [vmem:[%s1 + $0xad0] sm:$0xff]
  %v370 = vld [vmem:[%s1 + $0xad8] sm:$0xff]
  %v371 = vld [vmem:[%s1 + $0xae0] sm:$0xff]
  %v372 = vld [vmem:[%s1 + $0xae8] sm:$0xff]
  %v373 = vld [vmem:[%s1 + $0xaf0] sm:$0xff]
  %v374 = vld [vmem:[%s1 + $0xaf8] sm:$0xff]
  %v375 = vld [vmem:[%s1 + $0xb00] sm:$0xff]
  %v376 = vld [vmem:[%s1 + $0xb08] sm:$0xff]
  %v377 = vld [vmem:[%s1 + $0xb10] sm:$0xff]
  %v378 = vld [vmem:[%s1 + $0xb18] sm:$0xff]
  %v379 = vld [vmem:[%s1 + $0xb20] sm:$0xff]
  %v380 = vld [vmem:[%s1 + $0xb28] sm:$0xff]
  %v381 = vld [vmem:[%s1 + $0xb30] sm:$0xff]
  %v382 = vld [vmem:[%s1 + $0xb38] sm:$0xff]
  %v383 = vld [vmem:[%s1 + $0xb40] sm:$0xff]
  %v384 = vld [vmem:[%s1 + $0xb48] sm:$0xff]
  %v385 = vld [vmem:[%s1 + $0xb50] sm:$0xff]
  %v386 = vld [vmem:[%s1 + $0xb58] sm:$0xff]
  %v387 = vld [vmem:[%s1 + $0xb60] sm:$0xff]
  %v388 = vld [vmem:[%s1 + $0xb68] sm:$0xff]
  %v389 = vld [vmem:[%s1 + $0xb70] sm:$0xff]
  %v390 = vld [vmem:[%s1 + $0xb78] sm:$0xff]
  %v391 = vld [vmem:[%s1 + $0xb80] sm:$0xff]
  %v392 = vld [vmem:[%s1 + $0xb88] sm:$0xff]
  %v393 = vld [vmem:[%s1 + $0xb90] sm:$0xff]
  %v394 = vld [vmem:[%s1 + $0xb98] sm:$0xff]
  %v395 = vld [vmem:[%s1 + $0xba0] sm:$0xff]
  %v396 = vld [vmem:[%s1 + $0xba8] sm:$0xff]
  %v397 = vld [vmem:[%s1 + $0xbb0] sm:$0xff]
  %v398 = vld [vmem:[%s1 + $0xbb8] sm:$0xff]
  %v399 = vld [vmem:[%s1 + $0xbc0] sm:$0xff]
  %v400 = vld [vmem:[%s1 + $0xbc8] sm:$0xff]
  %v401 = vld [vmem:[%s1 + $0xbd0] sm:$0xff]
  %v402 = vld [vmem:[%s1 + $0xbd8] sm:$0xff]
  %v403 = vld [vmem:[%s1 + $0xbe0] sm:$0xff]
  %v404 = vld [vmem:[%s1 + $0xbe8] sm:$0xff]
  %v405 = vld [vmem:[%s1 + $0xbf0] sm:$0xff]
  %v406 = vld [vmem:[%s1 + $0xbf8] sm:$0xff]
  %v407 = vld [vmem:[%s1 + $0xc00] sm:$0xff]
  %v408 = vld [vmem:[%s1 + $0xc08] sm:$0xff]
  %v409 = vld [vmem:[%s1 + $0xc10] sm:$0xff]
  %v410 = vld [vmem:[%s1 + $0xc18] sm:$0xff]
  %v411 = vld [vmem:[%s1 + $0xc20] sm:$0xff]
  %v412 = vld [vmem:[%s1 + $0xc28] sm:$0xff]
  %v413 = vld [vmem:[%s1 + $0xc30] sm:$0xff]
  %v414 = vld [vmem:[%s1 + $0xc38] sm:$0xff]
  %v415 = vld [vmem:[%s1 + $0xc40] sm:$0xff]
  %v416 = vld [vmem:[%s1 + $0xc48] sm:$0xff]
  %v417 = vld [vmem:[%s1 + $0xc50] sm:$0xff]
  %v418 = vld [vmem:[%s1 + $0xc58] sm:$0xff]
  %v419 = vld [vmem:[%s1 + $0xc60] sm:$0xff]
  %v420 = vld [vmem:[%s1 + $0xc68] sm:$0xff]
  %v421 = vld [vmem:[%s1 + $0xc70] sm:$0xff]
  %v422 = vld [vmem:[%s1 + $0xc78] sm:$0xff]
  %v423 = vld [vmem:[%s2] sm:$0xf]
  %v425 = vlaneseq
  %v426 = vshrl.u32 %v425, 7
  %v427 = vsub.s32 0, %v426
  %v428 = vrot.slane %v423, %v427
  %v429 = vlaneseq
  %v430 = vshrl.u32 %v429, 7
  %v431 = vsub.s32 1, %v430
  %v432 = vrot.slane %v423, %v431
  %v433 = vlaneseq
  %v434 = vshrl.u32 %v433, 7
  %v435 = vsub.s32 2, %v434
  %v436 = vrot.slane %v423, %v435
  %v437 = vlaneseq
  %v438 = vshrl.u32 %v437, 7
  %v439 = vsub.s32 3, %v438
  %v440 = vrot.slane %v423, %v439
  %v447 = vcombine.high %v21, %v21
  %v449 = vunpack.c.l.s4 1966171168
  %v450 = vunpack.c.0.s8 %v449
  %v451 = vlaneseq
  %v452 = vshrl.u32 %v451, 7
  %v453 = vsub.s32 %v450, %v452
  %v454 = vrot.slane %v21, %v453
  %v456 = vunpack.c.l.s4 1966171168
  %v457 = vunpack.c.0.s8 %v456
  %v458 = vlaneseq
  %v459 = vshrl.u32 %v458, 7
  %v460 = vsub.s32 %v457, %v459
  %v461 = vrot.slane %v447, %v460
  %v462 = vcombine.high %v454, %v454
  %v463 = vcombine.high %v461, %v461
  %v465 = vunpack.c.l.s4 1966171168
  %v466 = vunpack.c.0.s8 %v465
  %v467 = vlaneseq
  %v468 = vshrl.u32 %v467, 7
  %v469 = vsub.s32 %v466, %v468
  %v470 = vrot.slane %v454, %v469
  %v472 = vunpack.c.l.s4 1966171168
  %v473 = vunpack.c.0.s8 %v472
  %v474 = vlaneseq
  %v475 = vshrl.u32 %v474, 7
  %v476 = vsub.s32 %v473, %v475
  %v477 = vrot.slane %v461, %v476
  %v479 = vunpack.c.l.s4 1966171168
  %v480 = vunpack.c.0.s8 %v479
  %v481 = vlaneseq
  %v482 = vshrl.u32 %v481, 7
  %v483 = vsub.s32 %v480, %v482
  %v484 = vrot.slane %v462, %v483
  %v486 = vunpack.c.l.s4 1966171168
  %v487 = vunpack.c.0.s8 %v486
  %v488 = vlaneseq
  %v489 = vshrl.u32 %v488, 7
  %v490 = vsub.s32 %v487, %v489
  %v491 = vrot.slane %v463, %v490
  %v492 = vcombine.high %v470, %v470
  %v493 = vcombine.high %v477, %v477
  %v494 = vcombine.high %v484, %v484
  %v495 = vcombine.high %v491, %v491
  %v496 = vcombine.high %v22, %v22
  %v498 = vunpack.c.l.s4 1966171168
  %v499 = vunpack.c.0.s8 %v498
  %v500 = vlaneseq
  %v501 = vshrl.u32 %v500, 7
  %v502 = vsub.s32 %v499, %v501
  %v503 = vrot.slane %v22, %v502
  %v505 = vunpack.c.l.s4 1966171168
  %v506 = vunpack.c.0.s8 %v505
  %v507 = vlaneseq
  %v508 = vshrl.u32 %v507, 7
  %v509 = vsub.s32 %v506, %v508
  %v510 = vrot.slane %v496, %v509
  %v511 = vcombine.high %v503, %v503
  %v513 = vunpack.c.l.s4 1966171168
  %v514 = vunpack.c.0.s8 %v513
  %v515 = vlaneseq
  %v516 = vshrl.u32 %v515, 7
  %v517 = vsub.s32 %v514, %v516
  %v518 = vrot.slane %v503, %v517
  %v520 = vunpack.c.l.s4 1966171168
  %v521 = vunpack.c.0.s8 %v520
  %v522 = vlaneseq
  %v523 = vshrl.u32 %v522, 7
  %v524 = vsub.s32 %v521, %v523
  %v525 = vrot.slane %v510, %v524
  %v527 = vunpack.c.l.s4 1966171168
  %v528 = vunpack.c.0.s8 %v527
  %v529 = vlaneseq
  %v530 = vshrl.u32 %v529, 7
  %v531 = vsub.s32 %v528, %v530
  %v532 = vrot.slane %v511, %v531
  %v533 = vcombine.high %v518, %v518
  %v534 = vcombine.high %v532, %v532
  %v947 = vunpack.c.l.b16 %v23
  %v948 = vunpack.c.h.b16 %v23
  %v949 = vunpack.c.l.b16 %v24
  %v950 = vunpack.c.h.b16 %v24
  %v951 = vunpack.c.l.b16 %v25
  %v952 = vunpack.c.h.b16 %v25
  %v953 = vunpack.c.l.b16 %v26
  %v954 = vunpack.c.h.b16 %v26
  %v955 = vunpack.c.l.b16 %v27
  %v956 = vunpack.c.h.b16 %v27
  %v957 = vunpack.c.l.b16 %v28
  %v958 = vunpack.c.h.b16 %v28
  %v959 = vunpack.c.l.b16 %v29
  %v960 = vunpack.c.h.b16 %v29
  %v961 = vunpack.c.l.b16 %v30
  %v962 = vunpack.c.h.b16 %v30
  %v963 = vunpack.c.l.b16 %v31
  %v964 = vunpack.c.h.b16 %v31
  %v965 = vunpack.c.l.b16 %v32
  %v966 = vunpack.c.h.b16 %v32
  %v967 = vunpack.c.l.b16 %v33
  %v968 = vunpack.c.h.b16 %v33
  %v969 = vunpack.c.l.b16 %v34
  %v970 = vunpack.c.h.b16 %v34
  %v971 = vunpack.c.l.b16 %v35
  %v972 = vunpack.c.h.b16 %v35
  %v973 = vunpack.c.l.b16 %v36
  %v974 = vunpack.c.h.b16 %v36
  %v975 = vunpack.c.l.b16 %v37
  %v976 = vunpack.c.h.b16 %v37
  %v977 = vunpack.c.l.b16 %v38
  %v978 = vunpack.c.h.b16 %v38
  %v979 = vunpack.c.l.b16 %v39
  %v980 = vunpack.c.h.b16 %v39
  %v981 = vunpack.c.l.b16 %v40
  %v982 = vunpack.c.h.b16 %v40
  %v983 = vunpack.c.l.b16 %v41
  %v984 = vunpack.c.h.b16 %v41
  %v985 = vunpack.c.l.b16 %v42
  %v986 = vunpack.c.h.b16 %v42
  %v987 = vunpack.c.l.b16 %v43
  %v988 = vunpack.c.h.b16 %v43
  %v989 = vunpack.c.l.b16 %v44
  %v990 = vunpack.c.h.b16 %v44
  %v991 = vunpack.c.l.b16 %v45
  %v992 = vunpack.c.h.b16 %v45
  %v993 = vunpack.c.l.b16 %v46
  %v994 = vunpack.c.h.b16 %v46
  %v995 = vunpack.c.l.b16 %v47
  %v996 = vunpack.c.h.b16 %v47
  %v997 = vunpack.c.l.b16 %v48
  %v998 = vunpack.c.h.b16 %v48
  %v999 = vunpack.c.l.b16 %v49
  %v1000 = vunpack.c.h.b16 %v49
  %v1001 = vunpack.c.l.b16 %v50
  %v1002 = vunpack.c.h.b16 %v50
  %v1003 = vunpack.c.l.b16 %v51
  %v1004 = vunpack.c.h.b16 %v51
  %v1005 = vunpack.c.l.b16 %v52
  %v1006 = vunpack.c.h.b16 %v52
  %v1007 = vunpack.c.l.b16 %v53
  %v1008 = vunpack.c.h.b16 %v53
  %v1009 = vunpack.c.l.b16 %v54
  %v1010 = vunpack.c.h.b16 %v54
  %v1011 = vunpack.c.l.b16 %v55
  %v1012 = vunpack.c.h.b16 %v55
  %v1013 = vunpack.c.l.b16 %v56
  %v1014 = vunpack.c.h.b16 %v56
  %v1015 = vunpack.c.l.b16 %v57
  %v1016 = vunpack.c.h.b16 %v57
  %v1017 = vunpack.c.l.b16 %v58
  %v1018 = vunpack.c.h.b16 %v58
  %v1019 = vunpack.c.l.b16 %v59
  %v1020 = vunpack.c.h.b16 %v59
  %v1021 = vunpack.c.l.b16 %v60
  %v1022 = vunpack.c.h.b16 %v60
  %v1023 = vunpack.c.l.b16 %v61
  %v1024 = vunpack.c.h.b16 %v61
  %v1025 = vunpack.c.l.b16 %v62
  %v1026 = vunpack.c.h.b16 %v62
  %v1027 = vunpack.c.l.b16 %v63
  %v1028 = vunpack.c.h.b16 %v63
  %v1029 = vunpack.c.l.b16 %v64
  %v1030 = vunpack.c.h.b16 %v64
  %v1031 = vunpack.c.l.b16 %v65
  %v1032 = vunpack.c.h.b16 %v65
  %v1033 = vunpack.c.l.b16 %v66
  %v1034 = vunpack.c.h.b16 %v66
  %v1035 = vunpack.c.l.b16 %v67
  %v1036 = vunpack.c.h.b16 %v67
  %v1037 = vunpack.c.l.b16 %v68
  %v1038 = vunpack.c.h.b16 %v68
  %v1039 = vunpack.c.l.b16 %v69
  %v1040 = vunpack.c.h.b16 %v69
  %v1041 = vunpack.c.l.b16 %v70
  %v1042 = vunpack.c.h.b16 %v70
  %v1043 = vunpack.c.l.b16 %v71
  %v1044 = vunpack.c.h.b16 %v71
  %v1045 = vunpack.c.l.b16 %v72
  %v1046 = vunpack.c.h.b16 %v72
  %v1047 = vunpack.c.l.b16 %v73
  %v1048 = vunpack.c.h.b16 %v73
  %v1049 = vunpack.c.l.b16 %v74
  %v1050 = vunpack.c.h.b16 %v74
  %v1051 = vunpack.c.l.b16 %v75
  %v1052 = vunpack.c.h.b16 %v75
  %v1053 = vunpack.c.l.b16 %v76
  %v1054 = vunpack.c.h.b16 %v76
  %v1055 = vunpack.c.l.b16 %v77
  %v1056 = vunpack.c.h.b16 %v77
  %v1057 = vunpack.c.l.b16 %v78
  %v1058 = vunpack.c.h.b16 %v78
  %v1059 = vunpack.c.l.b16 %v79
  %v1060 = vunpack.c.h.b16 %v79
  %v1061 = vunpack.c.l.b16 %v80
  %v1062 = vunpack.c.h.b16 %v80
  %v1063 = vunpack.c.l.b16 %v81
  %v1064 = vunpack.c.h.b16 %v81
  %v1065 = vunpack.c.l.b16 %v82
  %v1066 = vunpack.c.h.b16 %v82
  %v1067 = vunpack.c.l.b16 %v83
  %v1068 = vunpack.c.h.b16 %v83
  %v1069 = vunpack.c.l.b16 %v84
  %v1070 = vunpack.c.h.b16 %v84
  %v1071 = vunpack.c.l.b16 %v85
  %v1072 = vunpack.c.h.b16 %v85
  %v1073 = vunpack.c.l.b16 %v86
  %v1074 = vunpack.c.h.b16 %v86
  %v1075 = vunpack.c.l.b16 %v87
  %v1076 = vunpack.c.h.b16 %v87
  %v1077 = vunpack.c.l.b16 %v88
  %v1078 = vunpack.c.h.b16 %v88
  %v1079 = vunpack.c.l.b16 %v89
  %v1080 = vunpack.c.h.b16 %v89
  %v1081 = vunpack.c.l.b16 %v90
  %v1082 = vunpack.c.h.b16 %v90
  %v1083 = vunpack.c.l.b16 %v91
  %v1084 = vunpack.c.h.b16 %v91
  %v1085 = vunpack.c.l.b16 %v92
  %v1086 = vunpack.c.h.b16 %v92
  %v1087 = vunpack.c.l.b16 %v93
  %v1088 = vunpack.c.h.b16 %v93
  %v1089 = vunpack.c.l.b16 %v94
  %v1090 = vunpack.c.h.b16 %v94
  %v1091 = vunpack.c.l.b16 %v95
  %v1092 = vunpack.c.h.b16 %v95
  %v1093 = vunpack.c.l.b16 %v96
  %v1094 = vunpack.c.h.b16 %v96
  %v1095 = vunpack.c.l.b16 %v97
  %v1096 = vunpack.c.h.b16 %v97
  %v1097 = vunpack.c.l.b16 %v98
  %v1098 = vunpack.c.h.b16 %v98
  %v1099 = vunpack.c.l.b16 %v99
  %v1100 = vunpack.c.h.b16 %v99
  %v1101 = vunpack.c.l.b16 %v100
  %v1102 = vunpack.c.h.b16 %v100
  %v1103 = vunpack.c.l.b16 %v101
  %v1104 = vunpack.c.h.b16 %v101
  %v1105 = vunpack.c.l.b16 %v102
  %v1106 = vunpack.c.h.b16 %v102
  %v1107 = vunpack.c.l.b16 %v103
  %v1108 = vunpack.c.h.b16 %v103
  %v1109 = vunpack.c.l.b16 %v104
  %v1110 = vunpack.c.h.b16 %v104
  %v1111 = vunpack.c.l.b16 %v105
  %v1112 = vunpack.c.h.b16 %v105
  %v1113 = vunpack.c.l.b16 %v106
  %v1114 = vunpack.c.h.b16 %v106
  %v1115 = vunpack.c.l.b16 %v107
  %v1116 = vunpack.c.h.b16 %v107
  %v1117 = vunpack.c.l.b16 %v108
  %v1118 = vunpack.c.h.b16 %v108
  %v1119 = vunpack.c.l.b16 %v109
  %v1120 = vunpack.c.h.b16 %v109
  %v1121 = vunpack.c.l.b16 %v110
  %v1122 = vunpack.c.h.b16 %v110
  %v1123 = vunpack.c.l.b16 %v111
  %v1124 = vunpack.c.h.b16 %v111
  %v1125 = vunpack.c.l.b16 %v112
  %v1126 = vunpack.c.h.b16 %v112
  %v1127 = vunpack.c.l.b16 %v113
  %v1128 = vunpack.c.h.b16 %v113
  %v1129 = vunpack.c.l.b16 %v114
  %v1130 = vunpack.c.h.b16 %v114
  %v1131 = vunpack.c.l.b16 %v115
  %v1132 = vunpack.c.h.b16 %v115
  %v1133 = vunpack.c.l.b16 %v116
  %v1134 = vunpack.c.h.b16 %v116
  %v1135 = vunpack.c.l.b16 %v117
  %v1136 = vunpack.c.h.b16 %v117
  %v1137 = vunpack.c.l.b16 %v118
  %v1138 = vunpack.c.h.b16 %v118
  %v1139 = vunpack.c.l.b16 %v119
  %v1140 = vunpack.c.h.b16 %v119
  %v1141 = vunpack.c.l.b16 %v120
  %v1142 = vunpack.c.h.b16 %v120
  %v1143 = vunpack.c.l.b16 %v121
  %v1144 = vunpack.c.h.b16 %v121
  %v1145 = vunpack.c.l.b16 %v122
  %v1146 = vunpack.c.h.b16 %v122
  %v1147 = vunpack.c.l.b16 %v123
  %v1148 = vunpack.c.h.b16 %v123
  %v1149 = vunpack.c.l.b16 %v124
  %v1150 = vunpack.c.h.b16 %v124
  %v1151 = vunpack.c.l.b16 %v125
  %v1152 = vunpack.c.h.b16 %v125
  %v1153 = vunpack.c.l.b16 %v126
  %v1154 = vunpack.c.h.b16 %v126
  %v1155 = vunpack.c.l.b16 %v127
  %v1156 = vunpack.c.h.b16 %v127
  %v1157 = vunpack.c.l.b16 %v128
  %v1158 = vunpack.c.h.b16 %v128
  %v1159 = vunpack.c.l.b16 %v129
  %v1160 = vunpack.c.h.b16 %v129
  %v1161 = vunpack.c.l.b16 %v130
  %v1162 = vunpack.c.h.b16 %v130
  %v1163 = vunpack.c.l.b16 %v131
  %v1164 = vunpack.c.h.b16 %v131
  %v1165 = vunpack.c.l.b16 %v132
  %v1166 = vunpack.c.h.b16 %v132
  %v1167 = vunpack.c.l.b16 %v133
  %v1168 = vunpack.c.h.b16 %v133
  %v1169 = vunpack.c.l.b16 %v134
  %v1170 = vunpack.c.h.b16 %v134
  %v1171 = vunpack.c.l.b16 %v135
  %v1172 = vunpack.c.h.b16 %v135
  %v1173 = vunpack.c.l.b16 %v136
  %v1174 = vunpack.c.h.b16 %v136
  %v1175 = vunpack.c.l.b16 %v137
  %v1176 = vunpack.c.h.b16 %v137
  %v1177 = vunpack.c.l.b16 %v138
  %v1178 = vunpack.c.h.b16 %v138
  %v1179 = vunpack.c.l.b16 %v139
  %v1180 = vunpack.c.h.b16 %v139
  %v1181 = vunpack.c.l.b16 %v140
  %v1182 = vunpack.c.h.b16 %v140
  %v1183 = vunpack.c.l.b16 %v141
  %v1184 = vunpack.c.h.b16 %v141
  %v1185 = vunpack.c.l.b16 %v142
  %v1186 = vunpack.c.h.b16 %v142
  %v1187 = vunpack.c.l.b16 %v143
  %v1188 = vunpack.c.h.b16 %v143
  %v1189 = vunpack.c.l.b16 %v144
  %v1190 = vunpack.c.h.b16 %v144
  %v1191 = vunpack.c.l.b16 %v145
  %v1192 = vunpack.c.h.b16 %v145
  %v1193 = vunpack.c.l.b16 %v146
  %v1194 = vunpack.c.h.b16 %v146
  %v1195 = vunpack.c.l.b16 %v147
  %v1196 = vunpack.c.h.b16 %v147
  %v1197 = vunpack.c.l.b16 %v148
  %v1198 = vunpack.c.h.b16 %v148
  %v1199 = vunpack.c.l.b16 %v149
  %v1200 = vunpack.c.h.b16 %v149
  %v1201 = vunpack.c.l.b16 %v150
  %v1202 = vunpack.c.h.b16 %v150
  %v1203 = vunpack.c.l.b16 %v151
  %v1204 = vunpack.c.h.b16 %v151
  %v1205 = vunpack.c.l.b16 %v152
  %v1206 = vunpack.c.h.b16 %v152
  %v1207 = vunpack.c.l.b16 %v153
  %v1208 = vunpack.c.h.b16 %v153
  %v1209 = vunpack.c.l.b16 %v154
  %v1210 = vunpack.c.h.b16 %v154
  %v1211 = vunpack.c.l.b16 %v155
  %v1212 = vunpack.c.h.b16 %v155
  %v1213 = vunpack.c.l.b16 %v156
  %v1214 = vunpack.c.h.b16 %v156
  %v1215 = vunpack.c.l.b16 %v157
  %v1216 = vunpack.c.h.b16 %v157
  %v1217 = vunpack.c.l.b16 %v158
  %v1218 = vunpack.c.h.b16 %v158
  %v1219 = vunpack.c.l.b16 %v159
  %v1220 = vunpack.c.h.b16 %v159
  %v1221 = vunpack.c.l.b16 %v160
  %v1222 = vunpack.c.h.b16 %v160
  %v1223 = vunpack.c.l.b16 %v161
  %v1224 = vunpack.c.h.b16 %v161
  %v1225 = vunpack.c.l.b16 %v162
  %v1226 = vunpack.c.h.b16 %v162
  %v1227 = vunpack.c.l.b16 %v163
  %v1228 = vunpack.c.h.b16 %v163
  %v1229 = vunpack.c.l.b16 %v164
  %v1230 = vunpack.c.h.b16 %v164
  %v1231 = vunpack.c.l.b16 %v165
  %v1232 = vunpack.c.h.b16 %v165
  %v1233 = vunpack.c.l.b16 %v166
  %v1234 = vunpack.c.h.b16 %v166
  %v1235 = vunpack.c.l.b16 %v167
  %v1236 = vunpack.c.h.b16 %v167
  %v1237 = vunpack.c.l.b16 %v168
  %v1238 = vunpack.c.h.b16 %v168
  %v1239 = vunpack.c.l.b16 %v169
  %v1240 = vunpack.c.h.b16 %v169
  %v1241 = vunpack.c.l.b16 %v170
  %v1242 = vunpack.c.h.b16 %v170
  %v1243 = vunpack.c.l.b16 %v171
  %v1244 = vunpack.c.h.b16 %v171
  %v1245 = vunpack.c.l.b16 %v172
  %v1246 = vunpack.c.h.b16 %v172
  %v1247 = vunpack.c.l.b16 %v173
  %v1248 = vunpack.c.h.b16 %v173
  %v1249 = vunpack.c.l.b16 %v174
  %v1250 = vunpack.c.h.b16 %v174
  %v1251 = vunpack.c.l.b16 %v175
  %v1252 = vunpack.c.h.b16 %v175
  %v1253 = vunpack.c.l.b16 %v176
  %v1254 = vunpack.c.h.b16 %v176
  %v1255 = vunpack.c.l.b16 %v177
  %v1256 = vunpack.c.h.b16 %v177
  %v1257 = vunpack.c.l.b16 %v178
  %v1258 = vunpack.c.h.b16 %v178
  %v1259 = vunpack.c.l.b16 %v179
  %v1260 = vunpack.c.h.b16 %v179
  %v1261 = vunpack.c.l.b16 %v180
  %v1262 = vunpack.c.h.b16 %v180
  %v1263 = vunpack.c.l.b16 %v181
  %v1264 = vunpack.c.h.b16 %v181
  %v1265 = vunpack.c.l.b16 %v182
  %v1266 = vunpack.c.h.b16 %v182
  %v1267 = vunpack.c.l.b16 %v183
  %v1268 = vunpack.c.h.b16 %v183
  %v1269 = vunpack.c.l.b16 %v184
  %v1270 = vunpack.c.h.b16 %v184
  %v1271 = vunpack.c.l.b16 %v185
  %v1272 = vunpack.c.h.b16 %v185
  %v1273 = vunpack.c.l.b16 %v186
  %v1274 = vunpack.c.h.b16 %v186
  %v1275 = vunpack.c.l.b16 %v187
  %v1276 = vunpack.c.h.b16 %v187
  %v1277 = vunpack.c.l.b16 %v188
  %v1278 = vunpack.c.h.b16 %v188
  %v1279 = vunpack.c.l.b16 %v189
  %v1280 = vunpack.c.h.b16 %v189
  %v1281 = vunpack.c.l.b16 %v190
  %v1282 = vunpack.c.h.b16 %v190
  %v1283 = vunpack.c.l.b16 %v191
  %v1284 = vunpack.c.h.b16 %v191
  %v1285 = vunpack.c.l.b16 %v192
  %v1286 = vunpack.c.h.b16 %v192
  %v1287 = vunpack.c.l.b16 %v193
  %v1288 = vunpack.c.h.b16 %v193
  %v1289 = vunpack.c.l.b16 %v194
  %v1290 = vunpack.c.h.b16 %v194
  %v1291 = vunpack.c.l.b16 %v195
  %v1292 = vunpack.c.h.b16 %v195
  %v1293 = vunpack.c.l.b16 %v196
  %v1294 = vunpack.c.h.b16 %v196
  %v1295 = vunpack.c.l.b16 %v197
  %v1296 = vunpack.c.h.b16 %v197
  %v1297 = vunpack.c.l.b16 %v198
  %v1298 = vunpack.c.h.b16 %v198
  %v1299 = vunpack.c.l.b16 %v199
  %v1300 = vunpack.c.h.b16 %v199
  %v1301 = vunpack.c.l.b16 %v200
  %v1302 = vunpack.c.h.b16 %v200
  %v1303 = vunpack.c.l.b16 %v201
  %v1304 = vunpack.c.h.b16 %v201
  %v1305 = vunpack.c.l.b16 %v202
  %v1306 = vunpack.c.h.b16 %v202
  %v1307 = vunpack.c.l.b16 %v203
  %v1308 = vunpack.c.h.b16 %v203
  %v1309 = vunpack.c.l.b16 %v204
  %v1310 = vunpack.c.h.b16 %v204
  %v1311 = vunpack.c.l.b16 %v205
  %v1312 = vunpack.c.h.b16 %v205
  %v1313 = vunpack.c.l.b16 %v206
  %v1314 = vunpack.c.h.b16 %v206
  %v1315 = vunpack.c.l.b16 %v207
  %v1316 = vunpack.c.h.b16 %v207
  %v1317 = vunpack.c.l.b16 %v208
  %v1318 = vunpack.c.h.b16 %v208
  %v1319 = vunpack.c.l.b16 %v209
  %v1320 = vunpack.c.h.b16 %v209
  %v1321 = vunpack.c.l.b16 %v210
  %v1322 = vunpack.c.h.b16 %v210
  %v1323 = vunpack.c.l.b16 %v211
  %v1324 = vunpack.c.h.b16 %v211
  %v1325 = vunpack.c.l.b16 %v212
  %v1326 = vunpack.c.h.b16 %v212
  %v1327 = vunpack.c.l.b16 %v213
  %v1328 = vunpack.c.h.b16 %v213
  %v1329 = vunpack.c.l.b16 %v214
  %v1330 = vunpack.c.h.b16 %v214
  %v1331 = vunpack.c.l.b16 %v215
  %v1332 = vunpack.c.h.b16 %v215
  %v1333 = vunpack.c.l.b16 %v216
  %v1334 = vunpack.c.h.b16 %v216
  %v1335 = vunpack.c.l.b16 %v217
  %v1336 = vunpack.c.h.b16 %v217
  %v1337 = vunpack.c.l.b16 %v218
  %v1338 = vunpack.c.h.b16 %v218
  %v1339 = vunpack.c.l.b16 %v219
  %v1340 = vunpack.c.h.b16 %v219
  %v1341 = vunpack.c.l.b16 %v220
  %v1342 = vunpack.c.h.b16 %v220
  %v1343 = vunpack.c.l.b16 %v221
  %v1344 = vunpack.c.h.b16 %v221
  %v1345 = vunpack.c.l.b16 %v222
  %v1346 = vunpack.c.h.b16 %v222
  %v1347 = vunpack.c.l.b16 %v223
  %v1348 = vunpack.c.h.b16 %v223
  %v1349 = vunpack.c.l.b16 %v224
  %v1350 = vunpack.c.h.b16 %v224
  %v1351 = vunpack.c.l.b16 %v225
  %v1352 = vunpack.c.h.b16 %v225
  %v1353 = vunpack.c.l.b16 %v226
  %v1354 = vunpack.c.h.b16 %v226
  %v1355 = vunpack.c.l.b16 %v227
  %v1356 = vunpack.c.h.b16 %v227
  %v1357 = vunpack.c.l.b16 %v228
  %v1358 = vunpack.c.h.b16 %v228
  %v1359 = vunpack.c.l.b16 %v229
  %v1360 = vunpack.c.h.b16 %v229
  %v1361 = vunpack.c.l.b16 %v230
  %v1362 = vunpack.c.h.b16 %v230
  %v1363 = vunpack.c.l.b16 %v231
  %v1364 = vunpack.c.h.b16 %v231
  %v1365 = vunpack.c.l.b16 %v232
  %v1366 = vunpack.c.h.b16 %v232
  %v1367 = vunpack.c.l.b16 %v233
  %v1368 = vunpack.c.h.b16 %v233
  %v1369 = vunpack.c.l.b16 %v234
  %v1370 = vunpack.c.h.b16 %v234
  %v1371 = vunpack.c.l.b16 %v235
  %v1372 = vunpack.c.h.b16 %v235
  %v1373 = vunpack.c.l.b16 %v236
  %v1374 = vunpack.c.h.b16 %v236
  %v1375 = vunpack.c.l.b16 %v237
  %v1376 = vunpack.c.h.b16 %v237
  %v1377 = vunpack.c.l.b16 %v238
  %v1378 = vunpack.c.h.b16 %v238
  %v1379 = vunpack.c.l.b16 %v239
  %v1380 = vunpack.c.h.b16 %v239
  %v1381 = vunpack.c.l.b16 %v240
  %v1382 = vunpack.c.h.b16 %v240
  %v1383 = vunpack.c.l.b16 %v241
  %v1384 = vunpack.c.h.b16 %v241
  %v1385 = vunpack.c.l.b16 %v242
  %v1386 = vunpack.c.h.b16 %v242
  %v1387 = vunpack.c.l.b16 %v243
  %v1388 = vunpack.c.h.b16 %v243
  %v1389 = vunpack.c.l.b16 %v244
  %v1390 = vunpack.c.h.b16 %v244
  %v1391 = vunpack.c.l.b16 %v245
  %v1392 = vunpack.c.h.b16 %v245
  %v1393 = vunpack.c.l.b16 %v246
  %v1394 = vunpack.c.h.b16 %v246
  %v1395 = vunpack.c.l.b16 %v247
  %v1396 = vunpack.c.h.b16 %v247
  %v1397 = vunpack.c.l.b16 %v248
  %v1398 = vunpack.c.h.b16 %v248
  %v1399 = vunpack.c.l.b16 %v249
  %v1400 = vunpack.c.h.b16 %v249
  %v1401 = vunpack.c.l.b16 %v250
  %v1402 = vunpack.c.h.b16 %v250
  %v1403 = vunpack.c.l.b16 %v251
  %v1404 = vunpack.c.h.b16 %v251
  %v1405 = vunpack.c.l.b16 %v252
  %v1406 = vunpack.c.h.b16 %v252
  %v1407 = vunpack.c.l.b16 %v253
  %v1408 = vunpack.c.h.b16 %v253
  %v1409 = vunpack.c.l.b16 %v254
  %v1410 = vunpack.c.h.b16 %v254
  %v1411 = vunpack.c.l.b16 %v255
  %v1412 = vunpack.c.h.b16 %v255
  %v1413 = vunpack.c.l.b16 %v256
  %v1414 = vunpack.c.h.b16 %v256
  %v1415 = vunpack.c.l.b16 %v257
  %v1416 = vunpack.c.h.b16 %v257
  %v1417 = vunpack.c.l.b16 %v258
  %v1418 = vunpack.c.h.b16 %v258
  %v1419 = vunpack.c.l.b16 %v259
  %v1420 = vunpack.c.h.b16 %v259
  %v1421 = vunpack.c.l.b16 %v260
  %v1422 = vunpack.c.h.b16 %v260
  %v1423 = vunpack.c.l.b16 %v261
  %v1424 = vunpack.c.h.b16 %v261
  %v1425 = vunpack.c.l.b16 %v262
  %v1426 = vunpack.c.h.b16 %v262
  %v1427 = vunpack.c.l.b16 %v263
  %v1428 = vunpack.c.h.b16 %v263
  %v1429 = vunpack.c.l.b16 %v264
  %v1430 = vunpack.c.h.b16 %v264
  %v1431 = vunpack.c.l.b16 %v265
  %v1432 = vunpack.c.h.b16 %v265
  %v1433 = vunpack.c.l.b16 %v266
  %v1434 = vunpack.c.h.b16 %v266
  %v1435 = vunpack.c.l.b16 %v267
  %v1436 = vunpack.c.h.b16 %v267
  %v1437 = vunpack.c.l.b16 %v268
  %v1438 = vunpack.c.h.b16 %v268
  %v1439 = vunpack.c.l.b16 %v269
  %v1440 = vunpack.c.h.b16 %v269
  %v1441 = vunpack.c.l.b16 %v270
  %v1442 = vunpack.c.h.b16 %v270
  %v1443 = vunpack.c.l.b16 %v271
  %v1444 = vunpack.c.h.b16 %v271
  %v1445 = vunpack.c.l.b16 %v272
  %v1446 = vunpack.c.h.b16 %v272
  %v1447 = vunpack.c.l.b16 %v273
  %v1448 = vunpack.c.h.b16 %v273
  %v1449 = vunpack.c.l.b16 %v274
  %v1450 = vunpack.c.h.b16 %v274
  %v1451 = vunpack.c.l.b16 %v275
  %v1452 = vunpack.c.h.b16 %v275
  %v1453 = vunpack.c.l.b16 %v276
  %v1454 = vunpack.c.h.b16 %v276
  %v1455 = vunpack.c.l.b16 %v277
  %v1456 = vunpack.c.h.b16 %v277
  %v1457 = vunpack.c.l.b16 %v278
  %v1458 = vunpack.c.h.b16 %v278
  %v1459 = vunpack.c.l.b16 %v279
  %v1460 = vunpack.c.h.b16 %v279
  %v1461 = vunpack.c.l.b16 %v280
  %v1462 = vunpack.c.h.b16 %v280
  %v1463 = vunpack.c.l.b16 %v281
  %v1464 = vunpack.c.h.b16 %v281
  %v1465 = vunpack.c.l.b16 %v282
  %v1466 = vunpack.c.h.b16 %v282
  %v1467 = vunpack.c.l.b16 %v283
  %v1468 = vunpack.c.h.b16 %v283
  %v1469 = vunpack.c.l.b16 %v284
  %v1470 = vunpack.c.h.b16 %v284
  %v1471 = vunpack.c.l.b16 %v285
  %v1472 = vunpack.c.h.b16 %v285
  %v1473 = vunpack.c.l.b16 %v286
  %v1474 = vunpack.c.h.b16 %v286
  %v1475 = vunpack.c.l.b16 %v287
  %v1476 = vunpack.c.h.b16 %v287
  %v1477 = vunpack.c.l.b16 %v288
  %v1478 = vunpack.c.h.b16 %v288
  %v1479 = vunpack.c.l.b16 %v289
  %v1480 = vunpack.c.h.b16 %v289
  %v1481 = vunpack.c.l.b16 %v290
  %v1482 = vunpack.c.h.b16 %v290
  %v1483 = vunpack.c.l.b16 %v291
  %v1484 = vunpack.c.h.b16 %v291
  %v1485 = vunpack.c.l.b16 %v292
  %v1486 = vunpack.c.h.b16 %v292
  %v1487 = vunpack.c.l.b16 %v293
  %v1488 = vunpack.c.h.b16 %v293
  %v1489 = vunpack.c.l.b16 %v294
  %v1490 = vunpack.c.h.b16 %v294
  %v1491 = vunpack.c.l.b16 %v295
  %v1492 = vunpack.c.h.b16 %v295
  %v1493 = vunpack.c.l.b16 %v296
  %v1494 = vunpack.c.h.b16 %v296
  %v1495 = vunpack.c.l.b16 %v297
  %v1496 = vunpack.c.h.b16 %v297
  %v1497 = vunpack.c.l.b16 %v298
  %v1498 = vunpack.c.h.b16 %v298
  %v1499 = vunpack.c.l.b16 %v299
  %v1500 = vunpack.c.h.b16 %v299
  %v1501 = vunpack.c.l.b16 %v300
  %v1502 = vunpack.c.h.b16 %v300
  %v1503 = vunpack.c.l.b16 %v301
  %v1504 = vunpack.c.h.b16 %v301
  %v1505 = vunpack.c.l.b16 %v302
  %v1506 = vunpack.c.h.b16 %v302
  %v1507 = vunpack.c.l.b16 %v303
  %v1508 = vunpack.c.h.b16 %v303
  %v1509 = vunpack.c.l.b16 %v304
  %v1510 = vunpack.c.h.b16 %v304
  %v1511 = vunpack.c.l.b16 %v305
  %v1512 = vunpack.c.h.b16 %v305
  %v1513 = vunpack.c.l.b16 %v306
  %v1514 = vunpack.c.h.b16 %v306
  %v1515 = vunpack.c.l.b16 %v307
  %v1516 = vunpack.c.h.b16 %v307
  %v1517 = vunpack.c.l.b16 %v308
  %v1518 = vunpack.c.h.b16 %v308
  %v1519 = vunpack.c.l.b16 %v309
  %v1520 = vunpack.c.h.b16 %v309
  %v1521 = vunpack.c.l.b16 %v310
  %v1522 = vunpack.c.h.b16 %v310
  %v1523 = vunpack.c.l.b16 %v311
  %v1524 = vunpack.c.h.b16 %v311
  %v1525 = vunpack.c.l.b16 %v312
  %v1526 = vunpack.c.h.b16 %v312
  %v1527 = vunpack.c.l.b16 %v313
  %v1528 = vunpack.c.h.b16 %v313
  %v1529 = vunpack.c.l.b16 %v314
  %v1530 = vunpack.c.h.b16 %v314
  %v1531 = vunpack.c.l.b16 %v315
  %v1532 = vunpack.c.h.b16 %v315
  %v1533 = vunpack.c.l.b16 %v316
  %v1534 = vunpack.c.h.b16 %v316
  %v1535 = vunpack.c.l.b16 %v317
  %v1536 = vunpack.c.h.b16 %v317
  %v1537 = vunpack.c.l.b16 %v318
  %v1538 = vunpack.c.h.b16 %v318
  %v1539 = vunpack.c.l.b16 %v319
  %v1540 = vunpack.c.h.b16 %v319
  %v1541 = vunpack.c.l.b16 %v320
  %v1542 = vunpack.c.h.b16 %v320
  %v1543 = vunpack.c.l.b16 %v321
  %v1544 = vunpack.c.h.b16 %v321
  %v1545 = vunpack.c.l.b16 %v322
  %v1546 = vunpack.c.h.b16 %v322
  %v1547 = vunpack.c.l.b16 %v323
  %v1548 = vunpack.c.h.b16 %v323
  %v1549 = vunpack.c.l.b16 %v324
  %v1550 = vunpack.c.h.b16 %v324
  %v1551 = vunpack.c.l.b16 %v325
  %v1552 = vunpack.c.h.b16 %v325
  %v1553 = vunpack.c.l.b16 %v326
  %v1554 = vunpack.c.h.b16 %v326
  %v1555 = vunpack.c.l.b16 %v327
  %v1556 = vunpack.c.h.b16 %v327
  %v1557 = vunpack.c.l.b16 %v328
  %v1558 = vunpack.c.h.b16 %v328
  %v1559 = vunpack.c.l.b16 %v329
  %v1560 = vunpack.c.h.b16 %v329
  %v1561 = vunpack.c.l.b16 %v330
  %v1562 = vunpack.c.h.b16 %v330
  %v1563 = vunpack.c.l.b16 %v331
  %v1564 = vunpack.c.h.b16 %v331
  %v1565 = vunpack.c.l.b16 %v332
  %v1566 = vunpack.c.h.b16 %v332
  %v1567 = vunpack.c.l.b16 %v333
  %v1568 = vunpack.c.h.b16 %v333
  %v1569 = vunpack.c.l.b16 %v334
  %v1570 = vunpack.c.h.b16 %v334
  %v1571 = vunpack.c.l.b16 %v335
  %v1572 = vunpack.c.h.b16 %v335
  %v1573 = vunpack.c.l.b16 %v336
  %v1574 = vunpack.c.h.b16 %v336
  %v1575 = vunpack.c.l.b16 %v337
  %v1576 = vunpack.c.h.b16 %v337
  %v1577 = vunpack.c.l.b16 %v338
  %v1578 = vunpack.c.h.b16 %v338
  %v1579 = vunpack.c.l.b16 %v339
  %v1580 = vunpack.c.h.b16 %v339
  %v1581 = vunpack.c.l.b16 %v340
  %v1582 = vunpack.c.h.b16 %v340
  %v1583 = vunpack.c.l.b16 %v341
  %v1584 = vunpack.c.h.b16 %v341
  %v1585 = vunpack.c.l.b16 %v342
  %v1586 = vunpack.c.h.b16 %v342
  %v1587 = vunpack.c.l.b16 %v343
  %v1588 = vunpack.c.h.b16 %v343
  %v1589 = vunpack.c.l.b16 %v344
  %v1590 = vunpack.c.h.b16 %v344
  %v1591 = vunpack.c.l.b16 %v345
  %v1592 = vunpack.c.h.b16 %v345
  %v1593 = vunpack.c.l.b16 %v346
  %v1594 = vunpack.c.h.b16 %v346
  %v1595 = vunpack.c.l.b16 %v347
  %v1596 = vunpack.c.h.b16 %v347
  %v1597 = vunpack.c.l.b16 %v348
  %v1598 = vunpack.c.h.b16 %v348
  %v1599 = vunpack.c.l.b16 %v349
  %v1600 = vunpack.c.h.b16 %v349
  %v1601 = vunpack.c.l.b16 %v350
  %v1602 = vunpack.c.h.b16 %v350
  %v1603 = vunpack.c.l.b16 %v351
  %v1604 = vunpack.c.h.b16 %v351
  %v1605 = vunpack.c.l.b16 %v352
  %v1606 = vunpack.c.h.b16 %v352
  %v1607 = vunpack.c.l.b16 %v353
  %v1608 = vunpack.c.h.b16 %v353
  %v1609 = vunpack.c.l.b16 %v354
  %v1610 = vunpack.c.h.b16 %v354
  %v1611 = vunpack.c.l.b16 %v355
  %v1612 = vunpack.c.h.b16 %v355
  %v1613 = vunpack.c.l.b16 %v356
  %v1614 = vunpack.c.h.b16 %v356
  %v1615 = vunpack.c.l.b16 %v357
  %v1616 = vunpack.c.h.b16 %v357
  %v1617 = vunpack.c.l.b16 %v358
  %v1618 = vunpack.c.h.b16 %v358
  %v1619 = vunpack.c.l.b16 %v359
  %v1620 = vunpack.c.h.b16 %v359
  %v1621 = vunpack.c.l.b16 %v360
  %v1622 = vunpack.c.h.b16 %v360
  %v1623 = vunpack.c.l.b16 %v361
  %v1624 = vunpack.c.h.b16 %v361
  %v1625 = vunpack.c.l.b16 %v362
  %v1626 = vunpack.c.h.b16 %v362
  %v1627 = vunpack.c.l.b16 %v363
  %v1628 = vunpack.c.h.b16 %v363
  %v1629 = vunpack.c.l.b16 %v364
  %v1630 = vunpack.c.h.b16 %v364
  %v1631 = vunpack.c.l.b16 %v365
  %v1632 = vunpack.c.h.b16 %v365
  %v1633 = vunpack.c.l.b16 %v366
  %v1634 = vunpack.c.h.b16 %v366
  %v1635 = vunpack.c.l.b16 %v367
  %v1636 = vunpack.c.h.b16 %v367
  %v1637 = vunpack.c.l.b16 %v368
  %v1638 = vunpack.c.h.b16 %v368
  %v1639 = vunpack.c.l.b16 %v369
  %v1640 = vunpack.c.h.b16 %v369
  %v1641 = vunpack.c.l.b16 %v370
  %v1642 = vunpack.c.h.b16 %v370
  %v1643 = vunpack.c.l.b16 %v371
  %v1644 = vunpack.c.h.b16 %v371
  %v1645 = vunpack.c.l.b16 %v372
  %v1646 = vunpack.c.h.b16 %v372
  %v1647 = vunpack.c.l.b16 %v373
  %v1648 = vunpack.c.h.b16 %v373
  %v1649 = vunpack.c.l.b16 %v374
  %v1650 = vunpack.c.h.b16 %v374
  %v1651 = vunpack.c.l.b16 %v375
  %v1652 = vunpack.c.h.b16 %v375
  %v1653 = vunpack.c.l.b16 %v376
  %v1654 = vunpack.c.h.b16 %v376
  %v1655 = vunpack.c.l.b16 %v377
  %v1656 = vunpack.c.h.b16 %v377
  %v1657 = vunpack.c.l.b16 %v378
  %v1658 = vunpack.c.h.b16 %v378
  %v1659 = vunpack.c.l.b16 %v379
  %v1660 = vunpack.c.h.b16 %v379
  %v1661 = vunpack.c.l.b16 %v380
  %v1662 = vunpack.c.h.b16 %v380
  %v1663 = vunpack.c.l.b16 %v381
  %v1664 = vunpack.c.h.b16 %v381
  %v1665 = vunpack.c.l.b16 %v382
  %v1666 = vunpack.c.h.b16 %v382
  %v1667 = vunpack.c.l.b16 %v383
  %v1668 = vunpack.c.h.b16 %v383
  %v1669 = vunpack.c.l.b16 %v384
  %v1670 = vunpack.c.h.b16 %v384
  %v1671 = vunpack.c.l.b16 %v385
  %v1672 = vunpack.c.h.b16 %v385
  %v1673 = vunpack.c.l.b16 %v386
  %v1674 = vunpack.c.h.b16 %v386
  %v1675 = vunpack.c.l.b16 %v387
  %v1676 = vunpack.c.h.b16 %v387
  %v1677 = vunpack.c.l.b16 %v388
  %v1678 = vunpack.c.h.b16 %v388
  %v1679 = vunpack.c.l.b16 %v389
  %v1680 = vunpack.c.h.b16 %v389
  %v1681 = vunpack.c.l.b16 %v390
  %v1682 = vunpack.c.h.b16 %v390
  %v1683 = vunpack.c.l.b16 %v391
  %v1684 = vunpack.c.h.b16 %v391
  %v1685 = vunpack.c.l.b16 %v392
  %v1686 = vunpack.c.h.b16 %v392
  %v1687 = vunpack.c.l.b16 %v393
  %v1688 = vunpack.c.h.b16 %v393
  %v1689 = vunpack.c.l.b16 %v394
  %v1690 = vunpack.c.h.b16 %v394
  %v1691 = vunpack.c.l.b16 %v395
  %v1692 = vunpack.c.h.b16 %v395
  %v1693 = vunpack.c.l.b16 %v396
  %v1694 = vunpack.c.h.b16 %v396
  %v1695 = vunpack.c.l.b16 %v397
  %v1696 = vunpack.c.h.b16 %v397
  %v1697 = vunpack.c.l.b16 %v398
  %v1698 = vunpack.c.h.b16 %v398
  %v1699 = vunpack.c.l.b16 %v399
  %v1700 = vunpack.c.h.b16 %v399
  %v1701 = vunpack.c.l.b16 %v400
  %v1702 = vunpack.c.h.b16 %v400
  %v1703 = vunpack.c.l.b16 %v401
  %v1704 = vunpack.c.h.b16 %v401
  %v1705 = vunpack.c.l.b16 %v402
  %v1706 = vunpack.c.h.b16 %v402
  %v1707 = vunpack.c.l.b16 %v403
  %v1708 = vunpack.c.h.b16 %v403
  %v1709 = vunpack.c.l.b16 %v404
  %v1710 = vunpack.c.h.b16 %v404
  %v1711 = vunpack.c.l.b16 %v405
  %v1712 = vunpack.c.h.b16 %v405
  %v1713 = vunpack.c.l.b16 %v406
  %v1714 = vunpack.c.h.b16 %v406
  %v1715 = vunpack.c.l.b16 %v407
  %v1716 = vunpack.c.h.b16 %v407
  %v1717 = vunpack.c.l.b16 %v408
  %v1718 = vunpack.c.h.b16 %v408
  %v1719 = vunpack.c.l.b16 %v409
  %v1720 = vunpack.c.h.b16 %v409
  %v1721 = vunpack.c.l.b16 %v410
  %v1722 = vunpack.c.h.b16 %v410
  %v1723 = vunpack.c.l.b16 %v411
  %v1724 = vunpack.c.h.b16 %v411
  %v1725 = vunpack.c.l.b16 %v412
  %v1726 = vunpack.c.h.b16 %v412
  %v1727 = vunpack.c.l.b16 %v413
  %v1728 = vunpack.c.h.b16 %v413
  %v1729 = vunpack.c.l.b16 %v414
  %v1730 = vunpack.c.h.b16 %v414
  %v1731 = vunpack.c.l.b16 %v415
  %v1732 = vunpack.c.h.b16 %v415
  %v1733 = vunpack.c.l.b16 %v416
  %v1734 = vunpack.c.h.b16 %v416
  %v1735 = vunpack.c.l.b16 %v417
  %v1736 = vunpack.c.h.b16 %v417
  %v1737 = vunpack.c.l.b16 %v418
  %v1738 = vunpack.c.h.b16 %v418
  %v1739 = vunpack.c.l.b16 %v419
  %v1740 = vunpack.c.h.b16 %v419
  %v1741 = vunpack.c.l.b16 %v420
  %v1742 = vunpack.c.h.b16 %v420
  %v1743 = vunpack.c.l.b16 %v421
  %v1744 = vunpack.c.h.b16 %v421
  %v1745 = vunpack.c.l.b16 %v422
  %v1746 = vunpack.c.h.b16 %v422
  %v1747 = vpack.c.b16 %v951, %v947
  %v1748 = vpack.c.b16 %v952, %v948
  %v1749 = vpack.c.b16 %v953, %v949
  %v1750 = vpack.c.b16 %v954, %v950
  %v1751 = vpack.c.b16 %v959, %v955
  %v1752 = vpack.c.b16 %v960, %v956
  %v1753 = vpack.c.b16 %v961, %v957
  %v1754 = vpack.c.b16 %v962, %v958
  %v1755 = vpack.c.b16 %v967, %v963
  %v1756 = vpack.c.b16 %v968, %v964
  %v1757 = vpack.c.b16 %v969, %v965
  %v1758 = vpack.c.b16 %v970, %v966
  %v1759 = vpack.c.b16 %v975, %v971
  %v1760 = vpack.c.b16 %v976, %v972
  %v1761 = vpack.c.b16 %v977, %v973
  %v1762 = vpack.c.b16 %v978, %v974
  %v1763 = vpack.c.b16 %v983, %v979
  %v1764 = vpack.c.b16 %v984, %v980
  %v1765 = vpack.c.b16 %v985, %v981
  %v1766 = vpack.c.b16 %v986, %v982
  %v1767 = vpack.c.b16 %v991, %v987
  %v1768 = vpack.c.b16 %v992, %v988
  %v1769 = vpack.c.b16 %v993, %v989
  %v1770 = vpack.c.b16 %v994, %v990
  %v1771 = vpack.c.b16 %v999, %v995
  %v1772 = vpack.c.b16 %v1000, %v996
  %v1773 = vpack.c.b16 %v1001, %v997
  %v1774 = vpack.c.b16 %v1002, %v998
  %v1775 = vpack.c.b16 %v1007, %v1003
  %v1776 = vpack.c.b16 %v1008, %v1004
  %v1777 = vpack.c.b16 %v1009, %v1005
  %v1778 = vpack.c.b16 %v1010, %v1006
  %v1779 = vpack.c.b16 %v1015, %v1011
  %v1780 = vpack.c.b16 %v1016, %v1012
  %v1781 = vpack.c.b16 %v1017, %v1013
  %v1782 = vpack.c.b16 %v1018, %v1014
  %v1783 = vpack.c.b16 %v1023, %v1019
  %v1784 = vpack.c.b16 %v1024, %v1020
  %v1785 = vpack.c.b16 %v1025, %v1021
  %v1786 = vpack.c.b16 %v1026, %v1022
  %v1787 = vpack.c.b16 %v1031, %v1027
  %v1788 = vpack.c.b16 %v1032, %v1028
  %v1789 = vpack.c.b16 %v1033, %v1029
  %v1790 = vpack.c.b16 %v1034, %v1030
  %v1791 = vpack.c.b16 %v1039, %v1035
  %v1792 = vpack.c.b16 %v1040, %v1036
  %v1793 = vpack.c.b16 %v1041, %v1037
  %v1794 = vpack.c.b16 %v1042, %v1038
  %v1795 = vpack.c.b16 %v1047, %v1043
  %v1796 = vpack.c.b16 %v1048, %v1044
  %v1797 = vpack.c.b16 %v1049, %v1045
  %v1798 = vpack.c.b16 %v1050, %v1046
  %v1799 = vpack.c.b16 %v1055, %v1051
  %v1800 = vpack.c.b16 %v1056, %v1052
  %v1801 = vpack.c.b16 %v1057, %v1053
  %v1802 = vpack.c.b16 %v1058, %v1054
  %v1803 = vpack.c.b16 %v1063, %v1059
  %v1804 = vpack.c.b16 %v1064, %v1060
  %v1805 = vpack.c.b16 %v1065, %v1061
  %v1806 = vpack.c.b16 %v1066, %v1062
  %v1807 = vpack.c.b16 %v1071, %v1067
  %v1808 = vpack.c.b16 %v1072, %v1068
  %v1809 = vpack.c.b16 %v1073, %v1069
  %v1810 = vpack.c.b16 %v1074, %v1070
  %v1811 = vpack.c.b16 %v1079, %v1075
  %v1812 = vpack.c.b16 %v1080, %v1076
  %v1813 = vpack.c.b16 %v1081, %v1077
  %v1814 = vpack.c.b16 %v1082, %v1078
  %v1815 = vpack.c.b16 %v1087, %v1083
  %v1816 = vpack.c.b16 %v1088, %v1084
  %v1817 = vpack.c.b16 %v1089, %v1085
  %v1818 = vpack.c.b16 %v1090, %v1086
  %v1819 = vpack.c.b16 %v1095, %v1091
  %v1820 = vpack.c.b16 %v1096, %v1092
  %v1821 = vpack.c.b16 %v1097, %v1093
  %v1822 = vpack.c.b16 %v1098, %v1094
  %v1823 = vpack.c.b16 %v1103, %v1099
  %v1824 = vpack.c.b16 %v1104, %v1100
  %v1825 = vpack.c.b16 %v1105, %v1101
  %v1826 = vpack.c.b16 %v1106, %v1102
  %v1827 = vpack.c.b16 %v1111, %v1107
  %v1828 = vpack.c.b16 %v1112, %v1108
  %v1829 = vpack.c.b16 %v1113, %v1109
  %v1830 = vpack.c.b16 %v1114, %v1110
  %v1831 = vpack.c.b16 %v1119, %v1115
  %v1832 = vpack.c.b16 %v1120, %v1116
  %v1833 = vpack.c.b16 %v1121, %v1117
  %v1834 = vpack.c.b16 %v1122, %v1118
  %v1835 = vpack.c.b16 %v1127, %v1123
  %v1836 = vpack.c.b16 %v1128, %v1124
  %v1837 = vpack.c.b16 %v1129, %v1125
  %v1838 = vpack.c.b16 %v1130, %v1126
  %v1839 = vpack.c.b16 %v1135, %v1131
  %v1840 = vpack.c.b16 %v1136, %v1132
  %v1841 = vpack.c.b16 %v1137, %v1133
  %v1842 = vpack.c.b16 %v1138, %v1134
  %v1843 = vpack.c.b16 %v1143, %v1139
  %v1844 = vpack.c.b16 %v1144, %v1140
  %v1845 = vpack.c.b16 %v1145, %v1141
  %v1846 = vpack.c.b16 %v1146, %v1142
  %v1847 = vpack.c.b16 %v1151, %v1147
  %v1848 = vpack.c.b16 %v1152, %v1148
  %v1849 = vpack.c.b16 %v1153, %v1149
  %v1850 = vpack.c.b16 %v1154, %v1150
  %v1851 = vpack.c.b16 %v1159, %v1155
  %v1852 = vpack.c.b16 %v1160, %v1156
  %v1853 = vpack.c.b16 %v1161, %v1157
  %v1854 = vpack.c.b16 %v1162, %v1158
  %v1855 = vpack.c.b16 %v1167, %v1163
  %v1856 = vpack.c.b16 %v1168, %v1164
  %v1857 = vpack.c.b16 %v1169, %v1165
  %v1858 = vpack.c.b16 %v1170, %v1166
  %v1859 = vpack.c.b16 %v1175, %v1171
  %v1860 = vpack.c.b16 %v1176, %v1172
  %v1861 = vpack.c.b16 %v1177, %v1173
  %v1862 = vpack.c.b16 %v1178, %v1174
  %v1863 = vpack.c.b16 %v1183, %v1179
  %v1864 = vpack.c.b16 %v1184, %v1180
  %v1865 = vpack.c.b16 %v1185, %v1181
  %v1866 = vpack.c.b16 %v1186, %v1182
  %v1867 = vpack.c.b16 %v1191, %v1187
  %v1868 = vpack.c.b16 %v1192, %v1188
  %v1869 = vpack.c.b16 %v1193, %v1189
  %v1870 = vpack.c.b16 %v1194, %v1190
  %v1871 = vpack.c.b16 %v1199, %v1195
  %v1872 = vpack.c.b16 %v1200, %v1196
  %v1873 = vpack.c.b16 %v1201, %v1197
  %v1874 = vpack.c.b16 %v1202, %v1198
  %v1875 = vpack.c.b16 %v1207, %v1203
  %v1876 = vpack.c.b16 %v1208, %v1204
  %v1877 = vpack.c.b16 %v1209, %v1205
  %v1878 = vpack.c.b16 %v1210, %v1206
  %v1879 = vpack.c.b16 %v1215, %v1211
  %v1880 = vpack.c.b16 %v1216, %v1212
  %v1881 = vpack.c.b16 %v1217, %v1213
  %v1882 = vpack.c.b16 %v1218, %v1214
  %v1883 = vpack.c.b16 %v1223, %v1219
  %v1884 = vpack.c.b16 %v1224, %v1220
  %v1885 = vpack.c.b16 %v1225, %v1221
  %v1886 = vpack.c.b16 %v1226, %v1222
  %v1887 = vpack.c.b16 %v1231, %v1227
  %v1888 = vpack.c.b16 %v1232, %v1228
  %v1889 = vpack.c.b16 %v1233, %v1229
  %v1890 = vpack.c.b16 %v1234, %v1230
  %v1891 = vpack.c.b16 %v1239, %v1235
  %v1892 = vpack.c.b16 %v1240, %v1236
  %v1893 = vpack.c.b16 %v1241, %v1237
  %v1894 = vpack.c.b16 %v1242, %v1238
  %v1895 = vpack.c.b16 %v1247, %v1243
  %v1896 = vpack.c.b16 %v1248, %v1244
  %v1897 = vpack.c.b16 %v1249, %v1245
  %v1898 = vpack.c.b16 %v1250, %v1246
  %v1899 = vpack.c.b16 %v1255, %v1251
  %v1900 = vpack.c.b16 %v1256, %v1252
  %v1901 = vpack.c.b16 %v1257, %v1253
  %v1902 = vpack.c.b16 %v1258, %v1254
  %v1903 = vpack.c.b16 %v1263, %v1259
  %v1904 = vpack.c.b16 %v1264, %v1260
  %v1905 = vpack.c.b16 %v1265, %v1261
  %v1906 = vpack.c.b16 %v1266, %v1262
  %v1907 = vpack.c.b16 %v1271, %v1267
  %v1908 = vpack.c.b16 %v1272, %v1268
  %v1909 = vpack.c.b16 %v1273, %v1269
  %v1910 = vpack.c.b16 %v1274, %v1270
  %v1911 = vpack.c.b16 %v1279, %v1275
  %v1912 = vpack.c.b16 %v1280, %v1276
  %v1913 = vpack.c.b16 %v1281, %v1277
  %v1914 = vpack.c.b16 %v1282, %v1278
  %v1915 = vpack.c.b16 %v1287, %v1283
  %v1916 = vpack.c.b16 %v1288, %v1284
  %v1917 = vpack.c.b16 %v1289, %v1285
  %v1918 = vpack.c.b16 %v1290, %v1286
  %v1919 = vpack.c.b16 %v1295, %v1291
  %v1920 = vpack.c.b16 %v1296, %v1292
  %v1921 = vpack.c.b16 %v1297, %v1293
  %v1922 = vpack.c.b16 %v1298, %v1294
  %v1923 = vpack.c.b16 %v1303, %v1299
  %v1924 = vpack.c.b16 %v1304, %v1300
  %v1925 = vpack.c.b16 %v1305, %v1301
  %v1926 = vpack.c.b16 %v1306, %v1302
  %v1927 = vpack.c.b16 %v1311, %v1307
  %v1928 = vpack.c.b16 %v1312, %v1308
  %v1929 = vpack.c.b16 %v1313, %v1309
  %v1930 = vpack.c.b16 %v1314, %v1310
  %v1931 = vpack.c.b16 %v1319, %v1315
  %v1932 = vpack.c.b16 %v1320, %v1316
  %v1933 = vpack.c.b16 %v1321, %v1317
  %v1934 = vpack.c.b16 %v1322, %v1318
  %v1935 = vpack.c.b16 %v1327, %v1323
  %v1936 = vpack.c.b16 %v1328, %v1324
  %v1937 = vpack.c.b16 %v1329, %v1325
  %v1938 = vpack.c.b16 %v1330, %v1326
  %v1939 = vpack.c.b16 %v1335, %v1331
  %v1940 = vpack.c.b16 %v1336, %v1332
  %v1941 = vpack.c.b16 %v1337, %v1333
  %v1942 = vpack.c.b16 %v1338, %v1334
  %v1943 = vpack.c.b16 %v1343, %v1339
  %v1944 = vpack.c.b16 %v1344, %v1340
  %v1945 = vpack.c.b16 %v1345, %v1341
  %v1946 = vpack.c.b16 %v1346, %v1342
  %v1947 = vpack.c.b16 %v1351, %v1347
  %v1948 = vpack.c.b16 %v1352, %v1348
  %v1949 = vpack.c.b16 %v1353, %v1349
  %v1950 = vpack.c.b16 %v1354, %v1350
  %v1951 = vpack.c.b16 %v1359, %v1355
  %v1952 = vpack.c.b16 %v1360, %v1356
  %v1953 = vpack.c.b16 %v1361, %v1357
  %v1954 = vpack.c.b16 %v1362, %v1358
  %v1955 = vpack.c.b16 %v1367, %v1363
  %v1956 = vpack.c.b16 %v1368, %v1364
  %v1957 = vpack.c.b16 %v1369, %v1365
  %v1958 = vpack.c.b16 %v1370, %v1366
  %v1959 = vpack.c.b16 %v1375, %v1371
  %v1960 = vpack.c.b16 %v1376, %v1372
  %v1961 = vpack.c.b16 %v1377, %v1373
  %v1962 = vpack.c.b16 %v1378, %v1374
  %v1963 = vpack.c.b16 %v1383, %v1379
  %v1964 = vpack.c.b16 %v1384, %v1380
  %v1965 = vpack.c.b16 %v1385, %v1381
  %v1966 = vpack.c.b16 %v1386, %v1382
  %v1967 = vpack.c.b16 %v1391, %v1387
  %v1968 = vpack.c.b16 %v1392, %v1388
  %v1969 = vpack.c.b16 %v1393, %v1389
  %v1970 = vpack.c.b16 %v1394, %v1390
  %v1971 = vpack.c.b16 %v1399, %v1395
  %v1972 = vpack.c.b16 %v1400, %v1396
  %v1973 = vpack.c.b16 %v1401, %v1397
  %v1974 = vpack.c.b16 %v1402, %v1398
  %v1975 = vpack.c.b16 %v1407, %v1403
  %v1976 = vpack.c.b16 %v1408, %v1404
  %v1977 = vpack.c.b16 %v1409, %v1405
  %v1978 = vpack.c.b16 %v1410, %v1406
  %v1979 = vpack.c.b16 %v1415, %v1411
  %v1980 = vpack.c.b16 %v1416, %v1412
  %v1981 = vpack.c.b16 %v1417, %v1413
  %v1982 = vpack.c.b16 %v1418, %v1414
  %v1983 = vpack.c.b16 %v1423, %v1419
  %v1984 = vpack.c.b16 %v1424, %v1420
  %v1985 = vpack.c.b16 %v1425, %v1421
  %v1986 = vpack.c.b16 %v1426, %v1422
  %v1987 = vpack.c.b16 %v1431, %v1427
  %v1988 = vpack.c.b16 %v1432, %v1428
  %v1989 = vpack.c.b16 %v1433, %v1429
  %v1990 = vpack.c.b16 %v1434, %v1430
  %v1991 = vpack.c.b16 %v1439, %v1435
  %v1992 = vpack.c.b16 %v1440, %v1436
  %v1993 = vpack.c.b16 %v1441, %v1437
  %v1994 = vpack.c.b16 %v1442, %v1438
  %v1995 = vpack.c.b16 %v1447, %v1443
  %v1996 = vpack.c.b16 %v1448, %v1444
  %v1997 = vpack.c.b16 %v1449, %v1445
  %v1998 = vpack.c.b16 %v1450, %v1446
  %v1999 = vpack.c.b16 %v1455, %v1451
  %v2000 = vpack.c.b16 %v1456, %v1452
  %v2001 = vpack.c.b16 %v1457, %v1453
  %v2002 = vpack.c.b16 %v1458, %v1454
  %v2003 = vpack.c.b16 %v1463, %v1459
  %v2004 = vpack.c.b16 %v1464, %v1460
  %v2005 = vpack.c.b16 %v1465, %v1461
  %v2006 = vpack.c.b16 %v1466, %v1462
  %v2007 = vpack.c.b16 %v1471, %v1467
  %v2008 = vpack.c.b16 %v1472, %v1468
  %v2009 = vpack.c.b16 %v1473, %v1469
  %v2010 = vpack.c.b16 %v1474, %v1470
  %v2011 = vpack.c.b16 %v1479, %v1475
  %v2012 = vpack.c.b16 %v1480, %v1476
  %v2013 = vpack.c.b16 %v1481, %v1477
  %v2014 = vpack.c.b16 %v1482, %v1478
  %v2015 = vpack.c.b16 %v1487, %v1483
  %v2016 = vpack.c.b16 %v1488, %v1484
  %v2017 = vpack.c.b16 %v1489, %v1485
  %v2018 = vpack.c.b16 %v1490, %v1486
  %v2019 = vpack.c.b16 %v1495, %v1491
  %v2020 = vpack.c.b16 %v1496, %v1492
  %v2021 = vpack.c.b16 %v1497, %v1493
  %v2022 = vpack.c.b16 %v1498, %v1494
  %v2023 = vpack.c.b16 %v1503, %v1499
  %v2024 = vpack.c.b16 %v1504, %v1500
  %v2025 = vpack.c.b16 %v1505, %v1501
  %v2026 = vpack.c.b16 %v1506, %v1502
  %v2027 = vpack.c.b16 %v1511, %v1507
  %v2028 = vpack.c.b16 %v1512, %v1508
  %v2029 = vpack.c.b16 %v1513, %v1509
  %v2030 = vpack.c.b16 %v1514, %v1510
  %v2031 = vpack.c.b16 %v1519, %v1515
  %v2032 = vpack.c.b16 %v1520, %v1516
  %v2033 = vpack.c.b16 %v1521, %v1517
  %v2034 = vpack.c.b16 %v1522, %v1518
  %v2035 = vpack.c.b16 %v1527, %v1523
  %v2036 = vpack.c.b16 %v1528, %v1524
  %v2037 = vpack.c.b16 %v1529, %v1525
  %v2038 = vpack.c.b16 %v1530, %v1526
  %v2039 = vpack.c.b16 %v1535, %v1531
  %v2040 = vpack.c.b16 %v1536, %v1532
  %v2041 = vpack.c.b16 %v1537, %v1533
  %v2042 = vpack.c.b16 %v1538, %v1534
  %v2043 = vpack.c.b16 %v1543, %v1539
  %v2044 = vpack.c.b16 %v1544, %v1540
  %v2045 = vpack.c.b16 %v1545, %v1541
  %v2046 = vpack.c.b16 %v1546, %v1542
  %v2047 = vpack.c.b16 %v1551, %v1547
  %v2048 = vpack.c.b16 %v1552, %v1548
  %v2049 = vpack.c.b16 %v1553, %v1549
  %v2050 = vpack.c.b16 %v1554, %v1550
  %v2051 = vpack.c.b16 %v1559, %v1555
  %v2052 = vpack.c.b16 %v1560, %v1556
  %v2053 = vpack.c.b16 %v1561, %v1557
  %v2054 = vpack.c.b16 %v1562, %v1558
  %v2055 = vpack.c.b16 %v1567, %v1563
  %v2056 = vpack.c.b16 %v1568, %v1564
  %v2057 = vpack.c.b16 %v1569, %v1565
  %v2058 = vpack.c.b16 %v1570, %v1566
  %v2059 = vpack.c.b16 %v1575, %v1571
  %v2060 = vpack.c.b16 %v1576, %v1572
  %v2061 = vpack.c.b16 %v1577, %v1573
  %v2062 = vpack.c.b16 %v1578, %v1574
  %v2063 = vpack.c.b16 %v1583, %v1579
  %v2064 = vpack.c.b16 %v1584, %v1580
  %v2065 = vpack.c.b16 %v1585, %v1581
  %v2066 = vpack.c.b16 %v1586, %v1582
  %v2067 = vpack.c.b16 %v1591, %v1587
  %v2068 = vpack.c.b16 %v1592, %v1588
  %v2069 = vpack.c.b16 %v1593, %v1589
  %v2070 = vpack.c.b16 %v1594, %v1590
  %v2071 = vpack.c.b16 %v1599, %v1595
  %v2072 = vpack.c.b16 %v1600, %v1596
  %v2073 = vpack.c.b16 %v1601, %v1597
  %v2074 = vpack.c.b16 %v1602, %v1598
  %v2075 = vpack.c.b16 %v1607, %v1603
  %v2076 = vpack.c.b16 %v1608, %v1604
  %v2077 = vpack.c.b16 %v1609, %v1605
  %v2078 = vpack.c.b16 %v1610, %v1606
  %v2079 = vpack.c.b16 %v1615, %v1611
  %v2080 = vpack.c.b16 %v1616, %v1612
  %v2081 = vpack.c.b16 %v1617, %v1613
  %v2082 = vpack.c.b16 %v1618, %v1614
  %v2083 = vpack.c.b16 %v1623, %v1619
  %v2084 = vpack.c.b16 %v1624, %v1620
  %v2085 = vpack.c.b16 %v1625, %v1621
  %v2086 = vpack.c.b16 %v1626, %v1622
  %v2087 = vpack.c.b16 %v1631, %v1627
  %v2088 = vpack.c.b16 %v1632, %v1628
  %v2089 = vpack.c.b16 %v1633, %v1629
  %v2090 = vpack.c.b16 %v1634, %v1630
  %v2091 = vpack.c.b16 %v1639, %v1635
  %v2092 = vpack.c.b16 %v1640, %v1636
  %v2093 = vpack.c.b16 %v1641, %v1637
  %v2094 = vpack.c.b16 %v1642, %v1638
  %v2095 = vpack.c.b16 %v1647, %v1643
  %v2096 = vpack.c.b16 %v1648, %v1644
  %v2097 = vpack.c.b16 %v1649, %v1645
  %v2098 = vpack.c.b16 %v1650, %v1646
  %v2099 = vpack.c.b16 %v1655, %v1651
  %v2100 = vpack.c.b16 %v1656, %v1652
  %v2101 = vpack.c.b16 %v1657, %v1653
  %v2102 = vpack.c.b16 %v1658, %v1654
  %v2103 = vpack.c.b16 %v1663, %v1659
  %v2104 = vpack.c.b16 %v1664, %v1660
  %v2105 = vpack.c.b16 %v1665, %v1661
  %v2106 = vpack.c.b16 %v1666, %v1662
  %v2107 = vpack.c.b16 %v1671, %v1667
  %v2108 = vpack.c.b16 %v1672, %v1668
  %v2109 = vpack.c.b16 %v1673, %v1669
  %v2110 = vpack.c.b16 %v1674, %v1670
  %v2111 = vpack.c.b16 %v1679, %v1675
  %v2112 = vpack.c.b16 %v1680, %v1676
  %v2113 = vpack.c.b16 %v1681, %v1677
  %v2114 = vpack.c.b16 %v1682, %v1678
  %v2115 = vpack.c.b16 %v1687, %v1683
  %v2116 = vpack.c.b16 %v1688, %v1684
  %v2117 = vpack.c.b16 %v1689, %v1685
  %v2118 = vpack.c.b16 %v1690, %v1686
  %v2119 = vpack.c.b16 %v1695, %v1691
  %v2120 = vpack.c.b16 %v1696, %v1692
  %v2121 = vpack.c.b16 %v1697, %v1693
  %v2122 = vpack.c.b16 %v1698, %v1694
  %v2123 = vpack.c.b16 %v1703, %v1699
  %v2124 = vpack.c.b16 %v1704, %v1700
  %v2125 = vpack.c.b16 %v1705, %v1701
  %v2126 = vpack.c.b16 %v1706, %v1702
  %v2127 = vpack.c.b16 %v1711, %v1707
  %v2128 = vpack.c.b16 %v1712, %v1708
  %v2129 = vpack.c.b16 %v1713, %v1709
  %v2130 = vpack.c.b16 %v1714, %v1710
  %v2131 = vpack.c.b16 %v1719, %v1715
  %v2132 = vpack.c.b16 %v1720, %v1716
  %v2133 = vpack.c.b16 %v1721, %v1717
  %v2134 = vpack.c.b16 %v1722, %v1718
  %v2135 = vpack.c.b16 %v1727, %v1723
  %v2136 = vpack.c.b16 %v1728, %v1724
  %v2137 = vpack.c.b16 %v1729, %v1725
  %v2138 = vpack.c.b16 %v1730, %v1726
  %v2139 = vpack.c.b16 %v1735, %v1731
  %v2140 = vpack.c.b16 %v1736, %v1732
  %v2141 = vpack.c.b16 %v1737, %v1733
  %v2142 = vpack.c.b16 %v1738, %v1734
  %v2143 = vpack.c.b16 %v1743, %v1739
  %v2144 = vpack.c.b16 %v1744, %v1740
  %v2145 = vpack.c.b16 %v1745, %v1741
  %v2146 = vpack.c.b16 %v1746, %v1742
  %vm2547 = vcmask 523264
  %v2549 = vsel %vm2547, %v525, 0
  %2551 = vmatprep.subr.bf16.mxu0 %v1776
  %2552 = vmatpush1.bf16.msra.mxu0 %v1775
  %2553 = vmatprep.subr.bf16.mxu0 %v1772
  %2554 = vmatpush1.bf16.msra.mxu0 %v1771
  %2555 = vmatprep.subr.bf16.mxu0 %v1768
  %2556 = vmatpush1.bf16.msra.mxu0 %v1767
  %2557 = vmatprep.subr.bf16.mxu0 %v1764
  %2558 = vmatpush1.bf16.msra.mxu0 %v1763
  %2559 = vmatprep.subr.bf16.mxu0 %v1760
  %2560 = vmatpush1.bf16.msra.mxu0 %v1759
  %2561 = vmatprep.subr.bf16.mxu0 %v1756
  %2562 = vmatpush1.bf16.msra.mxu0 %v1755
  %2563 = vmatprep.subr.bf16.mxu0 %v1752
  %2564 = vmatpush1.bf16.msra.mxu0 %v1751
  %2565 = vmatprep.subr.bf16.mxu0 %v1748
  %2566 = vmatpush1.bf16.msra.mxu0 %v1747
  %2567 = vmatprep.subr.bf16.mxu0 %v1808
  %2568 = vmatpush2.bf16.msra.mxu0 %v1807
  %2569 = vmatprep.subr.bf16.mxu0 %v1804
  %2570 = vmatpush2.bf16.msra.mxu0 %v1803
  %2571 = vmatprep.subr.bf16.mxu0 %v1800
  %2572 = vmatpush2.bf16.msra.mxu0 %v1799
  %2573 = vmatprep.subr.bf16.mxu0 %v1796
  %2574 = vmatpush2.bf16.msra.mxu0 %v1795
  %2575 = vmatprep.subr.bf16.mxu0 %v1792
  %2576 = vmatpush2.bf16.msra.mxu0 %v1791
  %2577 = vmatprep.subr.bf16.mxu0 %v1788
  %2578 = vmatpush2.bf16.msra.mxu0 %v1787
  %2579 = vmatprep.subr.bf16.mxu0 %v1784
  %2580 = vmatpush2.bf16.msra.mxu0 %v1783
  %2581 = vmatprep.subr.bf16.mxu0 %v1780
  %2582 = vmatpush2.bf16.msra.mxu0 %v1779
  %2583 = vmatprep.mubr.bf16.mxu0 %v484
  %2584 = vmatmul.mubr.bf16.gmra.mxu0 %v470
  %v2585 = vpop.f32.mrf.mxu0
  %v2586 = vadd.f32 %v428, %v2585
  %v2587 = vpop.f32.mrf.mxu0
  %v2588 = vadd.f32 %v432, %v2587
  %v2589 = vpop.f32.mrf.mxu0
  %v2590 = vpop.f32.mrf.mxu0
  %2591 = vdwg.mxu0
  %2592 = vmatprep.subr.bf16.mxu0 %v1840
  %2593 = vmatpush1.bf16.msra.mxu0 %v1839
  %2594 = vmatprep.subr.bf16.mxu0 %v1836
  %2595 = vmatpush1.bf16.msra.mxu0 %v1835
  %2596 = vmatprep.subr.bf16.mxu0 %v1832
  %2597 = vmatpush1.bf16.msra.mxu0 %v1831
  %2598 = vmatprep.subr.bf16.mxu0 %v1828
  %2599 = vmatpush1.bf16.msra.mxu0 %v1827
  %2600 = vmatprep.subr.bf16.mxu0 %v1824
  %2601 = vmatpush1.bf16.msra.mxu0 %v1823
  %2602 = vmatprep.subr.bf16.mxu0 %v1820
  %2603 = vmatpush1.bf16.msra.mxu0 %v1819
  %2604 = vmatprep.subr.bf16.mxu0 %v1816
  %2605 = vmatpush1.bf16.msra.mxu0 %v1815
  %2606 = vmatprep.subr.bf16.mxu0 %v1812
  %2607 = vmatpush1.bf16.msra.mxu0 %v1811
  %2608 = vmatprep.subr.bf16.mxu0 %v1872
  %2609 = vmatpush2.bf16.msra.mxu0 %v1871
  %2610 = vmatprep.subr.bf16.mxu0 %v1868
  %2611 = vmatpush2.bf16.msra.mxu0 %v1867
  %2612 = vmatprep.subr.bf16.mxu0 %v1864
  %2613 = vmatpush2.bf16.msra.mxu0 %v1863
  %2614 = vmatprep.subr.bf16.mxu0 %v1860
  %2615 = vmatpush2.bf16.msra.mxu0 %v1859
  %2616 = vmatprep.subr.bf16.mxu0 %v1856
  %2617 = vmatpush2.bf16.msra.mxu0 %v1855
  %2618 = vmatprep.subr.bf16.mxu0 %v1852
  %2619 = vmatpush2.bf16.msra.mxu0 %v1851
  %2620 = vmatprep.subr.bf16.mxu0 %v1848
  %2621 = vmatpush2.bf16.msra.mxu0 %v1847
  %2622 = vmatprep.subr.bf16.mxu0 %v1844
  %2623 = vmatpush2.bf16.msra.mxu0 %v1843
  %2624 = vmatprep.mubr.bf16.mxu0 %v494
  %2625 = vmatmul.mubr.bf16.gmra.mxu0 %v492
  %v2626 = vpop.f32.mrf.mxu0
  %v2627 = vadd.f32 %v2586, %v2626
  %v2628 = vpop.f32.mrf.mxu0
  %v2629 = vadd.f32 %v2588, %v2628
  %v2630 = vpop.f32.mrf.mxu0
  %v2631 = vpop.f32.mrf.mxu0
  %2632 = vdwg.mxu0
  %2633 = vmatprep.subr.bf16.mxu0 %v1904
  %2634 = vmatpush1.bf16.msra.mxu0 %v1903
  %2635 = vmatprep.subr.bf16.mxu0 %v1900
  %2636 = vmatpush1.bf16.msra.mxu0 %v1899
  %2637 = vmatprep.subr.bf16.mxu0 %v1896
  %2638 = vmatpush1.bf16.msra.mxu0 %v1895
  %2639 = vmatprep.subr.bf16.mxu0 %v1892
  %2640 = vmatpush1.bf16.msra.mxu0 %v1891
  %2641 = vmatprep.subr.bf16.mxu0 %v1888
  %2642 = vmatpush1.bf16.msra.mxu0 %v1887
  %2643 = vmatprep.subr.bf16.mxu0 %v1884
  %2644 = vmatpush1.bf16.msra.mxu0 %v1883
  %2645 = vmatprep.subr.bf16.mxu0 %v1880
  %2646 = vmatpush1.bf16.msra.mxu0 %v1879
  %2647 = vmatprep.subr.bf16.mxu0 %v1876
  %2648 = vmatpush1.bf16.msra.mxu0 %v1875
  %2649 = vmatprep.subr.bf16.mxu0 %v1936
  %2650 = vmatpush2.bf16.msra.mxu0 %v1935
  %2651 = vmatprep.subr.bf16.mxu0 %v1932
  %2652 = vmatpush2.bf16.msra.mxu0 %v1931
  %2653 = vmatprep.subr.bf16.mxu0 %v1928
  %2654 = vmatpush2.bf16.msra.mxu0 %v1927
  %2655 = vmatprep.subr.bf16.mxu0 %v1924
  %2656 = vmatpush2.bf16.msra.mxu0 %v1923
  %2657 = vmatprep.subr.bf16.mxu0 %v1920
  %2658 = vmatpush2.bf16.msra.mxu0 %v1919
  %2659 = vmatprep.subr.bf16.mxu0 %v1916
  %2660 = vmatpush2.bf16.msra.mxu0 %v1915
  %2661 = vmatprep.subr.bf16.mxu0 %v1912
  %2662 = vmatpush2.bf16.msra.mxu0 %v1911
  %2663 = vmatprep.subr.bf16.mxu0 %v1908
  %2664 = vmatpush2.bf16.msra.mxu0 %v1907
  %2665 = vmatprep.mubr.bf16.mxu0 %v491
  %2666 = vmatmul.mubr.bf16.gmra.mxu0 %v477
  %v2667 = vpop.f32.mrf.mxu0
  %v2668 = vadd.f32 %v2627, %v2667
  %v2669 = vpop.f32.mrf.mxu0
  %v2670 = vadd.f32 %v2629, %v2669
  %v2671 = vpop.f32.mrf.mxu0
  %v2672 = vpop.f32.mrf.mxu0
  %2673 = vdwg.mxu0
  %2674 = vmatprep.subr.bf16.mxu0 %v1968
  %2675 = vmatpush1.bf16.msra.mxu0 %v1967
  %2676 = vmatprep.subr.bf16.mxu0 %v1964
  %2677 = vmatpush1.bf16.msra.mxu0 %v1963
  %2678 = vmatprep.subr.bf16.mxu0 %v1960
  %2679 = vmatpush1.bf16.msra.mxu0 %v1959
  %2680 = vmatprep.subr.bf16.mxu0 %v1956
  %2681 = vmatpush1.bf16.msra.mxu0 %v1955
  %2682 = vmatprep.subr.bf16.mxu0 %v1952
  %2683 = vmatpush1.bf16.msra.mxu0 %v1951
  %2684 = vmatprep.subr.bf16.mxu0 %v1948
  %2685 = vmatpush1.bf16.msra.mxu0 %v1947
  %2686 = vmatprep.subr.bf16.mxu0 %v1944
  %2687 = vmatpush1.bf16.msra.mxu0 %v1943
  %2688 = vmatprep.subr.bf16.mxu0 %v1940
  %2689 = vmatpush1.bf16.msra.mxu0 %v1939
  %2690 = vmatprep.subr.bf16.mxu0 %v2000
  %2691 = vmatpush2.bf16.msra.mxu0 %v1999
  %2692 = vmatprep.subr.bf16.mxu0 %v1996
  %2693 = vmatpush2.bf16.msra.mxu0 %v1995
  %2694 = vmatprep.subr.bf16.mxu0 %v1992
  %2695 = vmatpush2.bf16.msra.mxu0 %v1991
  %2696 = vmatprep.subr.bf16.mxu0 %v1988
  %2697 = vmatpush2.bf16.msra.mxu0 %v1987
  %2698 = vmatprep.subr.bf16.mxu0 %v1984
  %2699 = vmatpush2.bf16.msra.mxu0 %v1983
  %2700 = vmatprep.subr.bf16.mxu0 %v1980
  %2701 = vmatpush2.bf16.msra.mxu0 %v1979
  %2702 = vmatprep.subr.bf16.mxu0 %v1976
  %2703 = vmatpush2.bf16.msra.mxu0 %v1975
  %2704 = vmatprep.subr.bf16.mxu0 %v1972
  %2705 = vmatpush2.bf16.msra.mxu0 %v1971
  %2706 = vmatprep.mubr.bf16.mxu0 %v495
  %2707 = vmatmul.mubr.bf16.gmra.mxu0 %v493
  %v2708 = vpop.f32.mrf.mxu0
  %v2709 = vadd.f32 %v2668, %v2708
  %v2710 = vpop.f32.mrf.mxu0
  %v2711 = vadd.f32 %v2670, %v2710
  %v2712 = vpop.f32.mrf.mxu0
  %v2713 = vpop.f32.mrf.mxu0
  %2714 = vdwg.mxu0
  %2715 = vmatprep.subr.bf16.mxu0 %v2032
  %2716 = vmatpush1.bf16.msra.mxu0 %v2031
  %2717 = vmatprep.subr.bf16.mxu0 %v2028
  %2718 = vmatpush1.bf16.msra.mxu0 %v2027
  %2719 = vmatprep.subr.bf16.mxu0 %v2024
  %2720 = vmatpush1.bf16.msra.mxu0 %v2023
  %2721 = vmatprep.subr.bf16.mxu0 %v2020
  %2722 = vmatpush1.bf16.msra.mxu0 %v2019
  %2723 = vmatprep.subr.bf16.mxu0 %v2016
  %2724 = vmatpush1.bf16.msra.mxu0 %v2015
  %2725 = vmatprep.subr.bf16.mxu0 %v2012
  %2726 = vmatpush1.bf16.msra.mxu0 %v2011
  %2727 = vmatprep.subr.bf16.mxu0 %v2008
  %2728 = vmatpush1.bf16.msra.mxu0 %v2007
  %2729 = vmatprep.subr.bf16.mxu0 %v2004
  %2730 = vmatpush1.bf16.msra.mxu0 %v2003
  %2731 = vmatprep.subr.bf16.mxu0 %v2064
  %2732 = vmatpush2.bf16.msra.mxu0 %v2063
  %2733 = vmatprep.subr.bf16.mxu0 %v2060
  %2734 = vmatpush2.bf16.msra.mxu0 %v2059
  %2735 = vmatprep.subr.bf16.mxu0 %v2056
  %2736 = vmatpush2.bf16.msra.mxu0 %v2055
  %2737 = vmatprep.subr.bf16.mxu0 %v2052
  %2738 = vmatpush2.bf16.msra.mxu0 %v2051
  %2739 = vmatprep.subr.bf16.mxu0 %v2048
  %2740 = vmatpush2.bf16.msra.mxu0 %v2047
  %2741 = vmatprep.subr.bf16.mxu0 %v2044
  %2742 = vmatpush2.bf16.msra.mxu0 %v2043
  %2743 = vmatprep.subr.bf16.mxu0 %v2040
  %2744 = vmatpush2.bf16.msra.mxu0 %v2039
  %2745 = vmatprep.subr.bf16.mxu0 %v2036
  %2746 = vmatpush2.bf16.msra.mxu0 %v2035
  %2747 = vmatprep.mubr.bf16.mxu0 %v532
  %2748 = vmatmul.mubr.bf16.gmra.mxu0 %v518
  %v2749 = vpop.f32.mrf.mxu0
  %v2750 = vadd.f32 %v2709, %v2749
  %v2751 = vpop.f32.mrf.mxu0
  %v2752 = vadd.f32 %v2711, %v2751
  %v2753 = vpop.f32.mrf.mxu0
  %v2754 = vpop.f32.mrf.mxu0
  %2755 = vdwg.mxu0
  %2756 = vmatprep.subr.bf16.mxu0 %v2096
  %2757 = vmatpush1.bf16.msra.mxu0 %v2095
  %2758 = vmatprep.subr.bf16.mxu0 %v2092
  %2759 = vmatpush1.bf16.msra.mxu0 %v2091
  %2760 = vmatprep.subr.bf16.mxu0 %v2088
  %2761 = vmatpush1.bf16.msra.mxu0 %v2087
  %2762 = vmatprep.subr.bf16.mxu0 %v2084
  %2763 = vmatpush1.bf16.msra.mxu0 %v2083
  %2764 = vmatprep.subr.bf16.mxu0 %v2080
  %2765 = vmatpush1.bf16.msra.mxu0 %v2079
  %2766 = vmatprep.subr.bf16.mxu0 %v2076
  %2767 = vmatpush1.bf16.msra.mxu0 %v2075
  %2768 = vmatprep.subr.bf16.mxu0 %v2072
  %2769 = vmatpush1.bf16.msra.mxu0 %v2071
  %2770 = vmatprep.subr.bf16.mxu0 %v2068
  %2771 = vmatpush1.bf16.msra.mxu0 %v2067
  %2772 = vmatprep.subr.bf16.mxu0 %v2128
  %2773 = vmatpush2.bf16.msra.mxu0 %v2127
  %2774 = vmatprep.subr.bf16.mxu0 %v2124
  %2775 = vmatpush2.bf16.msra.mxu0 %v2123
  %2776 = vmatprep.subr.bf16.mxu0 %v2120
  %2777 = vmatpush2.bf16.msra.mxu0 %v2119
  %2778 = vmatprep.subr.bf16.mxu0 %v2116
  %2779 = vmatpush2.bf16.msra.mxu0 %v2115
  %2780 = vmatprep.subr.bf16.mxu0 %v2112
  %2781 = vmatpush2.bf16.msra.mxu0 %v2111
  %2782 = vmatprep.subr.bf16.mxu0 %v2108
  %2783 = vmatpush2.bf16.msra.mxu0 %v2107
  %2784 = vmatprep.subr.bf16.mxu0 %v2104
  %2785 = vmatpush2.bf16.msra.mxu0 %v2103
  %2786 = vmatprep.subr.bf16.mxu0 %v2100
  %2787 = vmatpush2.bf16.msra.mxu0 %v2099
  %2788 = vmatprep.mubr.bf16.mxu0 %v534
  %2789 = vmatmul.mubr.bf16.gmra.mxu0 %v533
  %v2790 = vpop.f32.mrf.mxu0
  %v2791 = vadd.f32 %v2750, %v2790
  %v2792 = vpop.f32.mrf.mxu0
  %v2793 = vadd.f32 %v2752, %v2792
  %v2794 = vpop.f32.mrf.mxu0
  %v2795 = vpop.f32.mrf.mxu0
  %2796 = vdwg.mxu0
  %2797 = vmatprep.subr.bf16.mxu0 0
  %2798 = vmatpush1.bf16.msra.mxu0 0
  %2799 = vmatprep.subr.bf16.mxu0 0
  %2800 = vmatpush1.bf16.msra.mxu0 0
  %2801 = vmatprep.subr.bf16.mxu0 0
  %2802 = vmatpush1.bf16.msra.mxu0 0
  %2803 = vmatprep.subr.bf16.mxu0 0
  %2804 = vmatpush1.bf16.msra.mxu0 0
  %2805 = vmatprep.subr.bf16.mxu0 %v2144
  %2806 = vmatpush1.bf16.msra.mxu0 %v2143
  %2807 = vmatprep.subr.bf16.mxu0 %v2140
  %2808 = vmatpush1.bf16.msra.mxu0 %v2139
  %2809 = vmatprep.subr.bf16.mxu0 %v2136
  %2810 = vmatpush1.bf16.msra.mxu0 %v2135
  %2811 = vmatprep.subr.bf16.mxu0 %v2132
  %2812 = vmatpush1.bf16.msra.mxu0 %v2131
  %2813 = vmatprep.subr.bf16.mxu0 0
  %2814 = vmatpush2.bf16.msra.mxu0 0
  %2815 = vmatprep.subr.bf16.mxu0 0
  %2816 = vmatpush2.bf16.msra.mxu0 0
  %2817 = vmatprep.subr.bf16.mxu0 0
  %2818 = vmatpush2.bf16.msra.mxu0 0
  %2819 = vmatprep.subr.bf16.mxu0 0
  %2820 = vmatpush2.bf16.msra.mxu0 0
  %2821 = vmatprep.subr.bf16.mxu0 0
  %2822 = vmatpush2.bf16.msra.mxu0 0
  %2823 = vmatprep.subr.bf16.mxu0 0
  %2824 = vmatpush2.bf16.msra.mxu0 0
  %2825 = vmatprep.subr.bf16.mxu0 0
  %2826 = vmatpush2.bf16.msra.mxu0 0
  %2827 = vmatprep.subr.bf16.mxu0 0
  %2828 = vmatpush2.bf16.msra.mxu0 0
  %2829 = vmatprep.mubr.bf16.mxu0 0
  %2830 = vmatmul.mubr.bf16.gmra.mxu0 %v2549
  %v2831 = vpop.f32.mrf.mxu0
  %v2832 = vadd.f32 %v2791, %v2831
  %v2833 = vpop.f32.mrf.mxu0
  %v2834 = vadd.f32 %v2793, %v2833
  %v2835 = vpop.f32.mrf.mxu0
  %v2836 = vpop.f32.mrf.mxu0
  %2837 = vdwg.mxu0
  %2838 = vmatprep.subr.bf16.mxu0 %v1778
  %2839 = vmatpush1.bf16.msra.mxu0 %v1777
  %2840 = vmatprep.subr.bf16.mxu0 %v1774
  %2841 = vmatpush1.bf16.msra.mxu0 %v1773
  %2842 = vmatprep.subr.bf16.mxu0 %v1770
  %2843 = vmatpush1.bf16.msra.mxu0 %v1769
  %2844 = vmatprep.subr.bf16.mxu0 %v1766
  %2845 = vmatpush1.bf16.msra.mxu0 %v1765
  %2846 = vmatprep.subr.bf16.mxu0 %v1762
  %2847 = vmatpush1.bf16.msra.mxu0 %v1761
  %2848 = vmatprep.subr.bf16.mxu0 %v1758
  %2849 = vmatpush1.bf16.msra.mxu0 %v1757
  %2850 = vmatprep.subr.bf16.mxu0 %v1754
  %2851 = vmatpush1.bf16.msra.mxu0 %v1753
  %2852 = vmatprep.subr.bf16.mxu0 %v1750
  %2853 = vmatpush1.bf16.msra.mxu0 %v1749
  %2854 = vmatprep.subr.bf16.mxu0 %v1810
  %2855 = vmatpush2.bf16.msra.mxu0 %v1809
  %2856 = vmatprep.subr.bf16.mxu0 %v1806
  %2857 = vmatpush2.bf16.msra.mxu0 %v1805
  %2858 = vmatprep.subr.bf16.mxu0 %v1802
  %2859 = vmatpush2.bf16.msra.mxu0 %v1801
  %2860 = vmatprep.subr.bf16.mxu0 %v1798
  %2861 = vmatpush2.bf16.msra.mxu0 %v1797
  %2862 = vmatprep.subr.bf16.mxu0 %v1794
  %2863 = vmatpush2.bf16.msra.mxu0 %v1793
  %2864 = vmatprep.subr.bf16.mxu0 %v1790
  %2865 = vmatpush2.bf16.msra.mxu0 %v1789
  %2866 = vmatprep.subr.bf16.mxu0 %v1786
  %2867 = vmatpush2.bf16.msra.mxu0 %v1785
  %2868 = vmatprep.subr.bf16.mxu0 %v1782
  %2869 = vmatpush2.bf16.msra.mxu0 %v1781
  %2870 = vmatprep.mubr.bf16.mxu0 %v484
  %2871 = vmatmul.mubr.bf16.gmra.mxu0 %v470
  %v2872 = vpop.f32.mrf.mxu0
  %v2873 = vadd.f32 %v436, %v2872
  %v2874 = vpop.f32.mrf.mxu0
  %v2875 = vadd.f32 %v440, %v2874
  %v2876 = vpop.f32.mrf.mxu0
  %v2877 = vpop.f32.mrf.mxu0
  %2878 = vdwg.mxu0
  %2879 = vmatprep.subr.bf16.mxu0 %v1842
  %2880 = vmatpush1.bf16.msra.mxu0 %v1841
  %2881 = vmatprep.subr.bf16.mxu0 %v1838
  %2882 = vmatpush1.bf16.msra.mxu0 %v1837
  %2883 = vmatprep.subr.bf16.mxu0 %v1834
  %2884 = vmatpush1.bf16.msra.mxu0 %v1833
  %2885 = vmatprep.subr.bf16.mxu0 %v1830
  %2886 = vmatpush1.bf16.msra.mxu0 %v1829
  %2887 = vmatprep.subr.bf16.mxu0 %v1826
  %2888 = vmatpush1.bf16.msra.mxu0 %v1825
  %2889 = vmatprep.subr.bf16.mxu0 %v1822
  %2890 = vmatpush1.bf16.msra.mxu0 %v1821
  %2891 = vmatprep.subr.bf16.mxu0 %v1818
  %2892 = vmatpush1.bf16.msra.mxu0 %v1817
  %2893 = vmatprep.subr.bf16.mxu0 %v1814
  %2894 = vmatpush1.bf16.msra.mxu0 %v1813
  %2895 = vmatprep.subr.bf16.mxu0 %v1874
  %2896 = vmatpush2.bf16.msra.mxu0 %v1873
  %2897 = vmatprep.subr.bf16.mxu0 %v1870
  %2898 = vmatpush2.bf16.msra.mxu0 %v1869
  %2899 = vmatprep.subr.bf16.mxu0 %v1866
  %2900 = vmatpush2.bf16.msra.mxu0 %v1865
  %2901 = vmatprep.subr.bf16.mxu0 %v1862
  %2902 = vmatpush2.bf16.msra.mxu0 %v1861
  %2903 = vmatprep.subr.bf16.mxu0 %v1858
  %2904 = vmatpush2.bf16.msra.mxu0 %v1857
  %2905 = vmatprep.subr.bf16.mxu0 %v1854
  %2906 = vmatpush2.bf16.msra.mxu0 %v1853
  %2907 = vmatprep.subr.bf16.mxu0 %v1850
  %2908 = vmatpush2.bf16.msra.mxu0 %v1849
  %2909 = vmatprep.subr.bf16.mxu0 %v1846
  %2910 = vmatpush2.bf16.msra.mxu0 %v1845
  %2911 = vmatprep.mubr.bf16.mxu0 %v494
  %2912 = vmatmul.mubr.bf16.gmra.mxu0 %v492
  %v2913 = vpop.f32.mrf.mxu0
  %v2914 = vadd.f32 %v2873, %v2913
  %v2915 = vpop.f32.mrf.mxu0
  %v2916 = vadd.f32 %v2875, %v2915
  %v2917 = vpop.f32.mrf.mxu0
  %v2918 = vpop.f32.mrf.mxu0
  %2919 = vdwg.mxu0
  %2920 = vmatprep.subr.bf16.mxu0 %v1906
  %2921 = vmatpush1.bf16.msra.mxu0 %v1905
  %2922 = vmatprep.subr.bf16.mxu0 %v1902
  %2923 = vmatpush1.bf16.msra.mxu0 %v1901
  %2924 = vmatprep.subr.bf16.mxu0 %v1898
  %2925 = vmatpush1.bf16.msra.mxu0 %v1897
  %2926 = vmatprep.subr.bf16.mxu0 %v1894
  %2927 = vmatpush1.bf16.msra.mxu0 %v1893
  %2928 = vmatprep.subr.bf16.mxu0 %v1890
  %2929 = vmatpush1.bf16.msra.mxu0 %v1889
  %2930 = vmatprep.subr.bf16.mxu0 %v1886
  %2931 = vmatpush1.bf16.msra.mxu0 %v1885
  %2932 = vmatprep.subr.bf16.mxu0 %v1882
  %2933 = vmatpush1.bf16.msra.mxu0 %v1881
  %2934 = vmatprep.subr.bf16.mxu0 %v1878
  %2935 = vmatpush1.bf16.msra.mxu0 %v1877
  %2936 = vmatprep.subr.bf16.mxu0 %v1938
  %2937 = vmatpush2.bf16.msra.mxu0 %v1937
  %2938 = vmatprep.subr.bf16.mxu0 %v1934
  %2939 = vmatpush2.bf16.msra.mxu0 %v1933
  %2940 = vmatprep.subr.bf16.mxu0 %v1930
  %2941 = vmatpush2.bf16.msra.mxu0 %v1929
  %2942 = vmatprep.subr.bf16.mxu0 %v1926
  %2943 = vmatpush2.bf16.msra.mxu0 %v1925
  %2944 = vmatprep.subr.bf16.mxu0 %v1922
  %2945 = vmatpush2.bf16.msra.mxu0 %v1921
  %2946 = vmatprep.subr.bf16.mxu0 %v1918
  %2947 = vmatpush2.bf16.msra.mxu0 %v1917
  %2948 = vmatprep.subr.bf16.mxu0 %v1914
  %2949 = vmatpush2.bf16.msra.mxu0 %v1913
  %2950 = vmatprep.subr.bf16.mxu0 %v1910
  %2951 = vmatpush2.bf16.msra.mxu0 %v1909
  %2952 = vmatprep.mubr.bf16.mxu0 %v491
  %2953 = vmatmul.mubr.bf16.gmra.mxu0 %v477
  %v2954 = vpop.f32.mrf.mxu0
  %v2955 = vadd.f32 %v2914, %v2954
  %v2956 = vpop.f32.mrf.mxu0
  %v2957 = vadd.f32 %v2916, %v2956
  %v2958 = vpop.f32.mrf.mxu0
  %v2959 = vpop.f32.mrf.mxu0
  %2960 = vdwg.mxu0
  %2961 = vmatprep.subr.bf16.mxu0 %v1970
  %2962 = vmatpush1.bf16.msra.mxu0 %v1969
  %2963 = vmatprep.subr.bf16.mxu0 %v1966
  %2964 = vmatpush1.bf16.msra.mxu0 %v1965
  %2965 = vmatprep.subr.bf16.mxu0 %v1962
  %2966 = vmatpush1.bf16.msra.mxu0 %v1961
  %2967 = vmatprep.subr.bf16.mxu0 %v1958
  %2968 = vmatpush1.bf16.msra.mxu0 %v1957
  %2969 = vmatprep.subr.bf16.mxu0 %v1954
  %2970 = vmatpush1.bf16.msra.mxu0 %v1953
  %2971 = vmatprep.subr.bf16.mxu0 %v1950
  %2972 = vmatpush1.bf16.msra.mxu0 %v1949
  %2973 = vmatprep.subr.bf16.mxu0 %v1946
  %2974 = vmatpush1.bf16.msra.mxu0 %v1945
  %2975 = vmatprep.subr.bf16.mxu0 %v1942
  %2976 = vmatpush1.bf16.msra.mxu0 %v1941
  %2977 = vmatprep.subr.bf16.mxu0 %v2002
  %2978 = vmatpush2.bf16.msra.mxu0 %v2001
  %2979 = vmatprep.subr.bf16.mxu0 %v1998
  %2980 = vmatpush2.bf16.msra.mxu0 %v1997
  %2981 = vmatprep.subr.bf16.mxu0 %v1994
  %2982 = vmatpush2.bf16.msra.mxu0 %v1993
  %2983 = vmatprep.subr.bf16.mxu0 %v1990
  %2984 = vmatpush2.bf16.msra.mxu0 %v1989
  %2985 = vmatprep.subr.bf16.mxu0 %v1986
  %2986 = vmatpush2.bf16.msra.mxu0 %v1985
  %2987 = vmatprep.subr.bf16.mxu0 %v1982
  %2988 = vmatpush2.bf16.msra.mxu0 %v1981
  %2989 = vmatprep.subr.bf16.mxu0 %v1978
  %2990 = vmatpush2.bf16.msra.mxu0 %v1977
  %2991 = vmatprep.subr.bf16.mxu0 %v1974
  %2992 = vmatpush2.bf16.msra.mxu0 %v1973
  %2993 = vmatprep.mubr.bf16.mxu0 %v495
  %2994 = vmatmul.mubr.bf16.gmra.mxu0 %v493
  %v2995 = vpop.f32.mrf.mxu0
  %v2996 = vadd.f32 %v2955, %v2995
  %v2997 = vpop.f32.mrf.mxu0
  %v2998 = vadd.f32 %v2957, %v2997
  %v2999 = vpop.f32.mrf.mxu0
  %v3000 = vpop.f32.mrf.mxu0
  %3001 = vdwg.mxu0
  %3002 = vmatprep.subr.bf16.mxu0 %v2034
  %3003 = vmatpush1.bf16.msra.mxu0 %v2033
  %3004 = vmatprep.subr.bf16.mxu0 %v2030
  %3005 = vmatpush1.bf16.msra.mxu0 %v2029
  %3006 = vmatprep.subr.bf16.mxu0 %v2026
  %3007 = vmatpush1.bf16.msra.mxu0 %v2025
  %3008 = vmatprep.subr.bf16.mxu0 %v2022
  %3009 = vmatpush1.bf16.msra.mxu0 %v2021
  %3010 = vmatprep.subr.bf16.mxu0 %v2018
  %3011 = vmatpush1.bf16.msra.mxu0 %v2017
  %3012 = vmatprep.subr.bf16.mxu0 %v2014
  %3013 = vmatpush1.bf16.msra.mxu0 %v2013
  %3014 = vmatprep.subr.bf16.mxu0 %v2010
  %3015 = vmatpush1.bf16.msra.mxu0 %v2009
  %3016 = vmatprep.subr.bf16.mxu0 %v2006
  %3017 = vmatpush1.bf16.msra.mxu0 %v2005
  %3018 = vmatprep.subr.bf16.mxu0 %v2066
  %3019 = vmatpush2.bf16.msra.mxu0 %v2065
  %3020 = vmatprep.subr.bf16.mxu0 %v2062
  %3021 = vmatpush2.bf16.msra.mxu0 %v2061
  %3022 = vmatprep.subr.bf16.mxu0 %v2058
  %3023 = vmatpush2.bf16.msra.mxu0 %v2057
  %3024 = vmatprep.subr.bf16.mxu0 %v2054
  %3025 = vmatpush2.bf16.msra.mxu0 %v2053
  %3026 = vmatprep.subr.bf16.mxu0 %v2050
  %3027 = vmatpush2.bf16.msra.mxu0 %v2049
  %3028 = vmatprep.subr.bf16.mxu0 %v2046
  %3029 = vmatpush2.bf16.msra.mxu0 %v2045
  %3030 = vmatprep.subr.bf16.mxu0 %v2042
  %3031 = vmatpush2.bf16.msra.mxu0 %v2041
  %3032 = vmatprep.subr.bf16.mxu0 %v2038
  %3033 = vmatpush2.bf16.msra.mxu0 %v2037
  %3034 = vmatprep.mubr.bf16.mxu0 %v532
  %3035 = vmatmul.mubr.bf16.gmra.mxu0 %v518
  %v3036 = vpop.f32.mrf.mxu0
  %v3037 = vadd.f32 %v2996, %v3036
  %v3038 = vpop.f32.mrf.mxu0
  %v3039 = vadd.f32 %v2998, %v3038
  %v3040 = vpop.f32.mrf.mxu0
  %v3041 = vpop.f32.mrf.mxu0
  %3042 = vdwg.mxu0
  %3043 = vmatprep.subr.bf16.mxu0 %v2098
  %3044 = vmatpush1.bf16.msra.mxu0 %v2097
  %3045 = vmatprep.subr.bf16.mxu0 %v2094
  %3046 = vmatpush1.bf16.msra.mxu0 %v2093
  %3047 = vmatprep.subr.bf16.mxu0 %v2090
  %3048 = vmatpush1.bf16.msra.mxu0 %v2089
  %3049 = vmatprep.subr.bf16.mxu0 %v2086
  %3050 = vmatpush1.bf16.msra.mxu0 %v2085
  %3051 = vmatprep.subr.bf16.mxu0 %v2082
  %3052 = vmatpush1.bf16.msra.mxu0 %v2081
  %3053 = vmatprep.subr.bf16.mxu0 %v2078
  %3054 = vmatpush1.bf16.msra.mxu0 %v2077
  %3055 = vmatprep.subr.bf16.mxu0 %v2074
  %3056 = vmatpush1.bf16.msra.mxu0 %v2073
  %3057 = vmatprep.subr.bf16.mxu0 %v2070
  %3058 = vmatpush1.bf16.msra.mxu0 %v2069
  %3059 = vmatprep.subr.bf16.mxu0 %v2130
  %3060 = vmatpush2.bf16.msra.mxu0 %v2129
  %3061 = vmatprep.subr.bf16.mxu0 %v2126
  %3062 = vmatpush2.bf16.msra.mxu0 %v2125
  %3063 = vmatprep.subr.bf16.mxu0 %v2122
  %3064 = vmatpush2.bf16.msra.mxu0 %v2121
  %3065 = vmatprep.subr.bf16.mxu0 %v2118
  %3066 = vmatpush2.bf16.msra.mxu0 %v2117
  %3067 = vmatprep.subr.bf16.mxu0 %v2114
  %3068 = vmatpush2.bf16.msra.mxu0 %v2113
  %3069 = vmatprep.subr.bf16.mxu0 %v2110
  %3070 = vmatpush2.bf16.msra.mxu0 %v2109
  %3071 = vmatprep.subr.bf16.mxu0 %v2106
  %3072 = vmatpush2.bf16.msra.mxu0 %v2105
  %3073 = vmatprep.subr.bf16.mxu0 %v2102
  %3074 = vmatpush2.bf16.msra.mxu0 %v2101
  %3075 = vmatprep.mubr.bf16.mxu0 %v534
  %3076 = vmatmul.mubr.bf16.gmra.mxu0 %v533
  %v3077 = vpop.f32.mrf.mxu0
  %v3078 = vadd.f32 %v3037, %v3077
  %v3079 = vpop.f32.mrf.mxu0
  %v3080 = vadd.f32 %v3039, %v3079
  %v3081 = vpop.f32.mrf.mxu0
  %v3082 = vpop.f32.mrf.mxu0
  %3083 = vdwg.mxu0
  %3084 = vmatprep.subr.bf16.mxu0 0
  %3085 = vmatpush1.bf16.msra.mxu0 0
  %3086 = vmatprep.subr.bf16.mxu0 0
  %3087 = vmatpush1.bf16.msra.mxu0 0
  %3088 = vmatprep.subr.bf16.mxu0 0
  %3089 = vmatpush1.bf16.msra.mxu0 0
  %3090 = vmatprep.subr.bf16.mxu0 0
  %3091 = vmatpush1.bf16.msra.mxu0 0
  %3092 = vmatprep.subr.bf16.mxu0 %v2146
  %3093 = vmatpush1.bf16.msra.mxu0 %v2145
  %3094 = vmatprep.subr.bf16.mxu0 %v2142
  %3095 = vmatpush1.bf16.msra.mxu0 %v2141
  %3096 = vmatprep.subr.bf16.mxu0 %v2138
  %3097 = vmatpush1.bf16.msra.mxu0 %v2137
  %3098 = vmatprep.subr.bf16.mxu0 %v2134
  %3099 = vmatpush1.bf16.msra.mxu0 %v2133
  %3100 = vmatprep.subr.bf16.mxu0 0
  %3101 = vmatpush2.bf16.msra.mxu0 0
  %3102 = vmatprep.subr.bf16.mxu0 0
  %3103 = vmatpush2.bf16.msra.mxu0 0
  %3104 = vmatprep.subr.bf16.mxu0 0
  %3105 = vmatpush2.bf16.msra.mxu0 0
  %3106 = vmatprep.subr.bf16.mxu0 0
  %3107 = vmatpush2.bf16.msra.mxu0 0
  %3108 = vmatprep.subr.bf16.mxu0 0
  %3109 = vmatpush2.bf16.msra.mxu0 0
  %3110 = vmatprep.subr.bf16.mxu0 0
  %3111 = vmatpush2.bf16.msra.mxu0 0
  %3112 = vmatprep.subr.bf16.mxu0 0
  %3113 = vmatpush2.bf16.msra.mxu0 0
  %3114 = vmatprep.subr.bf16.mxu0 0
  %3115 = vmatpush2.bf16.msra.mxu0 0
  %3116 = vmatprep.mubr.bf16.mxu0 0
  %3117 = vmatmul.mubr.bf16.gmra.mxu0 %v2549
  %v3118 = vpop.f32.mrf.mxu0
  %v3119 = vadd.f32 %v3078, %v3118
  %v3120 = vpop.f32.mrf.mxu0
  %v3121 = vadd.f32 %v3080, %v3120
  %v3122 = vpop.f32.mrf.mxu0
  %v3123 = vpop.f32.mrf.mxu0
  %3124 = vdwg.mxu0
  %v3125 = vmax.f32 %v2832, 0.0
  %v3126 = vmax.f32 %v2834, 0.0
  %v3127 = vmax.f32 %v3119, 0.0
  %v3128 = vmax.f32 %v3121, 0.0
  %v3129 = vpack.c.bf16 %v3125, %v3125
  %v3130 = vpack.c.bf16 %v3126, %v3126
  %v3131 = vpack.c.bf16 %v3127, %v3127
  %v3132 = vpack.c.bf16 %v3128, %v3128
  %v3133 = vld [vmem:[%s3] sm:$0xf]
  %v3134 = vld [vmem:[%s3 + $0x4] sm:$0xf]
  %v3135 = vld [vmem:[%s3 + $0x8] sm:$0xf]
  %v3136 = vld [vmem:[%s3 + $0xc] sm:$0xf]
  %v3137 = vld [vmem:[%s3 + $0x10] sm:$0xf]
  %v3138 = vld [vmem:[%s3 + $0x14] sm:$0xf]
  %v3139 = vld [vmem:[%s3 + $0x18] sm:$0xf]
  %v3140 = vld [vmem:[%s3 + $0x1c] sm:$0xf]
  %v3141 = vld [vmem:[%s3 + $0x20] sm:$0xf]
  %v3142 = vld [vmem:[%s3 + $0x24] sm:$0xf]
  %v3143 = vld [vmem:[%s3 + $0x28] sm:$0xf]
  %v3144 = vld [vmem:[%s3 + $0x2c] sm:$0xf]
  %v3145 = vld [vmem:[%s3 + $0x30] sm:$0xf]
  %v3146 = vld [vmem:[%s3 + $0x34] sm:$0xf]
  %v3147 = vld [vmem:[%s3 + $0x38] sm:$0xf]
  %v3148 = vld [vmem:[%s3 + $0x3c] sm:$0xf]
  %v3149 = vld [vmem:[%s3 + $0x40] sm:$0xf]
  %v3150 = vld [vmem:[%s3 + $0x44] sm:$0xf]
  %v3151 = vld [vmem:[%s3 + $0x48] sm:$0xf]
  %v3152 = vld [vmem:[%s3 + $0x4c] sm:$0xf]
  %v3153 = vld [vmem:[%s3 + $0x50] sm:$0xf]
  %v3154 = vld [vmem:[%s3 + $0x54] sm:$0xf]
  %v3155 = vld [vmem:[%s3 + $0x58] sm:$0xf]
  %v3156 = vld [vmem:[%s3 + $0x5c] sm:$0xf]
  %v3157 = vld [vmem:[%s3 + $0x60] sm:$0xf]
  %v3158 = vld [vmem:[%s3 + $0x64] sm:$0xf]
  %v3159 = vld [vmem:[%s3 + $0x68] sm:$0xf]
  %v3160 = vld [vmem:[%s3 + $0x6c] sm:$0xf]
  %v3161 = vld [vmem:[%s3 + $0x70] sm:$0xf]
  %v3162 = vld [vmem:[%s3 + $0x74] sm:$0xf]
  %v3163 = vld [vmem:[%s3 + $0x78] sm:$0xf]
  %v3164 = vld [vmem:[%s3 + $0x7c] sm:$0xf]
  %v3165 = vld [vmem:[%s3 + $0x80] sm:$0xf]
  %v3166 = vld [vmem:[%s3 + $0x84] sm:$0xf]
  %v3167 = vld [vmem:[%s3 + $0x88] sm:$0xf]
  %v3168 = vld [vmem:[%s3 + $0x8c] sm:$0xf]
  %v3169 = vld [vmem:[%s3 + $0x90] sm:$0xf]
  %v3170 = vld [vmem:[%s3 + $0x94] sm:$0xf]
  %v3171 = vld [vmem:[%s3 + $0x98] sm:$0xf]
  %v3172 = vld [vmem:[%s3 + $0x9c] sm:$0xf]
  %v3173 = vld [vmem:[%s3 + $0xa0] sm:$0xf]
  %v3174 = vld [vmem:[%s3 + $0xa4] sm:$0xf]
  %v3175 = vld [vmem:[%s3 + $0xa8] sm:$0xf]
  %v3176 = vld [vmem:[%s3 + $0xac] sm:$0xf]
  %v3177 = vld [vmem:[%s3 + $0xb0] sm:$0xf]
  %v3178 = vld [vmem:[%s3 + $0xb4] sm:$0xf]
  %v3179 = vld [vmem:[%s3 + $0xb8] sm:$0xf]
  %v3180 = vld [vmem:[%s3 + $0xbc] sm:$0xf]
  %v3181 = vld [vmem:[%s3 + $0xc0] sm:$0xf]
  %v3182 = vld [vmem:[%s3 + $0xc4] sm:$0xf]
  %v3183 = vld [vmem:[%s3 + $0xc8] sm:$0xf]
  %v3184 = vld [vmem:[%s3 + $0xcc] sm:$0xf]
  %v3185 = vld [vmem:[%s3 + $0xd0] sm:$0xf]
  %v3186 = vld [vmem:[%s3 + $0xd4] sm:$0xf]
  %v3187 = vld [vmem:[%s3 + $0xd8] sm:$0xf]
  %v3188 = vld [vmem:[%s3 + $0xdc] sm:$0xf]
  %v3189 = vld [vmem:[%s3 + $0xe0] sm:$0xf]
  %v3190 = vld [vmem:[%s3 + $0xe4] sm:$0xf]
  %v3191 = vld [vmem:[%s3 + $0xe8] sm:$0xf]
  %v3192 = vld [vmem:[%s3 + $0xec] sm:$0xf]
  %v3193 = vld [vmem:[%s3 + $0xf0] sm:$0xf]
  %v3194 = vld [vmem:[%s3 + $0xf4] sm:$0xf]
  %v3195 = vld [vmem:[%s3 + $0xf8] sm:$0xf]
  %v3196 = vld [vmem:[%s3 + $0xfc] sm:$0xf]
  %v3197 = vld [vmem:[%s4] sm:$0x1]
  %v3199 = vlaneseq
  %v3200 = vshrl.u32 %v3199, 7
  %v3201 = vsub.s32 0, %v3200
  %v3202 = vrot.slane %v3197, %v3201
  %v3268 = vunpack.c.l.b16 %v3133
  %v3269 = vunpack.c.l.b16 %v3134
  %v3270 = vunpack.c.l.b16 %v3135
  %v3271 = vunpack.c.l.b16 %v3136
  %v3272 = vunpack.c.l.b16 %v3137
  %v3273 = vunpack.c.l.b16 %v3138
  %v3274 = vunpack.c.l.b16 %v3139
  %v3275 = vunpack.c.l.b16 %v3140
  %v3276 = vunpack.c.l.b16 %v3141
  %v3277 = vunpack.c.l.b16 %v3142
  %v3278 = vunpack.c.l.b16 %v3143
  %v3279 = vunpack.c.l.b16 %v3144
  %v3280 = vunpack.c.l.b16 %v3145
  %v3281 = vunpack.c.l.b16 %v3146
  %v3282 = vunpack.c.l.b16 %v3147
  %v3283 = vunpack.c.l.b16 %v3148
  %v3284 = vunpack.c.l.b16 %v3149
  %v3285 = vunpack.c.l.b16 %v3150
  %v3286 = vunpack.c.l.b16 %v3151
  %v3287 = vunpack.c.l.b16 %v3152
  %v3288 = vunpack.c.l.b16 %v3153
  %v3289 = vunpack.c.l.b16 %v3154
  %v3290 = vunpack.c.l.b16 %v3155
  %v3291 = vunpack.c.l.b16 %v3156
  %v3292 = vunpack.c.l.b16 %v3157
  %v3293 = vunpack.c.l.b16 %v3158
  %v3294 = vunpack.c.l.b16 %v3159
  %v3295 = vunpack.c.l.b16 %v3160
  %v3296 = vunpack.c.l.b16 %v3161
  %v3297 = vunpack.c.l.b16 %v3162
  %v3298 = vunpack.c.l.b16 %v3163
  %v3299 = vunpack.c.l.b16 %v3164
  %v3300 = vunpack.c.l.b16 %v3165
  %v3301 = vunpack.c.l.b16 %v3166
  %v3302 = vunpack.c.l.b16 %v3167
  %v3303 = vunpack.c.l.b16 %v3168
  %v3304 = vunpack.c.l.b16 %v3169
  %v3305 = vunpack.c.l.b16 %v3170
  %v3306 = vunpack.c.l.b16 %v3171
  %v3307 = vunpack.c.l.b16 %v3172
  %v3308 = vunpack.c.l.b16 %v3173
  %v3309 = vunpack.c.l.b16 %v3174
  %v3310 = vunpack.c.l.b16 %v3175
  %v3311 = vunpack.c.l.b16 %v3176
  %v3312 = vunpack.c.l.b16 %v3177
  %v3313 = vunpack.c.l.b16 %v3178
  %v3314 = vunpack.c.l.b16 %v3179
  %v3315 = vunpack.c.l.b16 %v3180
  %v3316 = vunpack.c.l.b16 %v3181
  %v3317 = vunpack.c.l.b16 %v3182
  %v3318 = vunpack.c.l.b16 %v3183
  %v3319 = vunpack.c.l.b16 %v3184
  %v3320 = vunpack.c.l.b16 %v3185
  %v3321 = vunpack.c.l.b16 %v3186
  %v3322 = vunpack.c.l.b16 %v3187
  %v3323 = vunpack.c.l.b16 %v3188
  %v3324 = vunpack.c.l.b16 %v3189
  %v3325 = vunpack.c.l.b16 %v3190
  %v3326 = vunpack.c.l.b16 %v3191
  %v3327 = vunpack.c.l.b16 %v3192
  %v3328 = vunpack.c.l.b16 %v3193
  %v3329 = vunpack.c.l.b16 %v3194
  %v3330 = vunpack.c.l.b16 %v3195
  %v3331 = vunpack.c.l.b16 %v3196
  %v3332 = vpack.c.b16 %v3269, %v3268
  %v3333 = vpack.c.b16 %v3271, %v3270
  %v3334 = vpack.c.b16 %v3273, %v3272
  %v3335 = vpack.c.b16 %v3275, %v3274
  %v3336 = vpack.c.b16 %v3277, %v3276
  %v3337 = vpack.c.b16 %v3279, %v3278
  %v3338 = vpack.c.b16 %v3281, %v3280
  %v3339 = vpack.c.b16 %v3283, %v3282
  %v3340 = vpack.c.b16 %v3285, %v3284
  %v3341 = vpack.c.b16 %v3287, %v3286
  %v3342 = vpack.c.b16 %v3289, %v3288
  %v3343 = vpack.c.b16 %v3291, %v3290
  %v3344 = vpack.c.b16 %v3293, %v3292
  %v3345 = vpack.c.b16 %v3295, %v3294
  %v3346 = vpack.c.b16 %v3297, %v3296
  %v3347 = vpack.c.b16 %v3299, %v3298
  %v3348 = vpack.c.b16 %v3301, %v3300
  %v3349 = vpack.c.b16 %v3303, %v3302
  %v3350 = vpack.c.b16 %v3305, %v3304
  %v3351 = vpack.c.b16 %v3307, %v3306
  %v3352 = vpack.c.b16 %v3309, %v3308
  %v3353 = vpack.c.b16 %v3311, %v3310
  %v3354 = vpack.c.b16 %v3313, %v3312
  %v3355 = vpack.c.b16 %v3315, %v3314
  %v3356 = vpack.c.b16 %v3317, %v3316
  %v3357 = vpack.c.b16 %v3319, %v3318
  %v3358 = vpack.c.b16 %v3321, %v3320
  %v3359 = vpack.c.b16 %v3323, %v3322
  %v3360 = vpack.c.b16 %v3325, %v3324
  %v3361 = vpack.c.b16 %v3327, %v3326
  %v3362 = vpack.c.b16 %v3329, %v3328
  %v3363 = vpack.c.b16 %v3331, %v3330
  %3396 = vmatprep.subr.bf16.mxu0 0
  %3397 = vmatpush1.bf16.msra.mxu0 %v3339
  %3398 = vmatprep.subr.bf16.mxu0 0
  %3399 = vmatpush1.bf16.msra.mxu0 %v3338
  %3400 = vmatprep.subr.bf16.mxu0 0
  %3401 = vmatpush1.bf16.msra.mxu0 %v3337
  %3402 = vmatprep.subr.bf16.mxu0 0
  %3403 = vmatpush1.bf16.msra.mxu0 %v3336
  %3404 = vmatprep.subr.bf16.mxu0 0
  %3405 = vmatpush1.bf16.msra.mxu0 %v3335
  %3406 = vmatprep.subr.bf16.mxu0 0
  %3407 = vmatpush1.bf16.msra.mxu0 %v3334
  %3408 = vmatprep.subr.bf16.mxu0 0
  %3409 = vmatpush1.bf16.msra.mxu0 %v3333
  %3410 = vmatprep.subr.bf16.mxu0 0
  %3411 = vmatpush1.bf16.msra.mxu0 %v3332
  %3412 = vmatprep.subr.bf16.mxu0 0
  %3413 = vmatpush2.bf16.msra.mxu0 %v3347
  %3414 = vmatprep.subr.bf16.mxu0 0
  %3415 = vmatpush2.bf16.msra.mxu0 %v3346
  %3416 = vmatprep.subr.bf16.mxu0 0
  %3417 = vmatpush2.bf16.msra.mxu0 %v3345
  %3418 = vmatprep.subr.bf16.mxu0 0
  %3419 = vmatpush2.bf16.msra.mxu0 %v3344
  %3420 = vmatprep.subr.bf16.mxu0 0
  %3421 = vmatpush2.bf16.msra.mxu0 %v3343
  %3422 = vmatprep.subr.bf16.mxu0 0
  %3423 = vmatpush2.bf16.msra.mxu0 %v3342
  %3424 = vmatprep.subr.bf16.mxu0 0
  %3425 = vmatpush2.bf16.msra.mxu0 %v3341
  %3426 = vmatprep.subr.bf16.mxu0 0
  %3427 = vmatpush2.bf16.msra.mxu0 %v3340
  %3428 = vmatprep.mubr.bf16.mxu0 %v3130
  %3429 = vmatmul.mubr.bf16.gmra.mxu0 %v3129
  %v3430 = vpop.f32.mrf.mxu0
  %v3431 = vadd.f32 %v3202, %v3430
  %v3432 = vpop.f32.mrf.mxu0
  %v3433 = vpop.f32.mrf.mxu0
  %v3434 = vpop.f32.mrf.mxu0
  %3435 = vdwg.mxu0
  %3436 = vmatprep.subr.bf16.mxu0 0
  %3437 = vmatpush1.bf16.msra.mxu0 %v3355
  %3438 = vmatprep.subr.bf16.mxu0 0
  %3439 = vmatpush1.bf16.msra.mxu0 %v3354
  %3440 = vmatprep.subr.bf16.mxu0 0
  %3441 = vmatpush1.bf16.msra.mxu0 %v3353
  %3442 = vmatprep.subr.bf16.mxu0 0
  %3443 = vmatpush1.bf16.msra.mxu0 %v3352
  %3444 = vmatprep.subr.bf16.mxu0 0
  %3445 = vmatpush1.bf16.msra.mxu0 %v3351
  %3446 = vmatprep.subr.bf16.mxu0 0
  %3447 = vmatpush1.bf16.msra.mxu0 %v3350
  %3448 = vmatprep.subr.bf16.mxu0 0
  %3449 = vmatpush1.bf16.msra.mxu0 %v3349
  %3450 = vmatprep.subr.bf16.mxu0 0
  %3451 = vmatpush1.bf16.msra.mxu0 %v3348
  %3452 = vmatprep.subr.bf16.mxu0 0
  %3453 = vmatpush2.bf16.msra.mxu0 %v3363
  %3454 = vmatprep.subr.bf16.mxu0 0
  %3455 = vmatpush2.bf16.msra.mxu0 %v3362
  %3456 = vmatprep.subr.bf16.mxu0 0
  %3457 = vmatpush2.bf16.msra.mxu0 %v3361
  %3458 = vmatprep.subr.bf16.mxu0 0
  %3459 = vmatpush2.bf16.msra.mxu0 %v3360
  %3460 = vmatprep.subr.bf16.mxu0 0
  %3461 = vmatpush2.bf16.msra.mxu0 %v3359
  %3462 = vmatprep.subr.bf16.mxu0 0
  %3463 = vmatpush2.bf16.msra.mxu0 %v3358
  %3464 = vmatprep.subr.bf16.mxu0 0
  %3465 = vmatpush2.bf16.msra.mxu0 %v3357
  %3466 = vmatprep.subr.bf16.mxu0 0
  %3467 = vmatpush2.bf16.msra.mxu0 %v3356
  %3468 = vmatprep.mubr.bf16.mxu0 %v3132
  %3469 = vmatmul.mubr.bf16.gmra.mxu0 %v3131
  %v3470 = vpop.f32.mrf.mxu0
  %v3471 = vadd.f32 %v3431, %v3470
  %v3472 = vpop.f32.mrf.mxu0
  %v3473 = vpop.f32.mrf.mxu0
  %v3474 = vpop.f32.mrf.mxu0
  %3475 = vdwg.mxu0
  %vm3476 = vcmask 41984
  %3477 = vst.msk [vmem:[%s5] sm:$0x3] %vm3476, %v3471
  // Predicated region
  $region22: #{ensemble_forward.25} parent=0 // pred_check
    _
  $region23: #{ensemble_forward.25} parent=0 // pred_check_branch
    %3479 = sbr.rel (0) target = $region25
  $region24: #{ensemble_forward.25} parent=0 // pred_region
    _
  $region25: #{ensemble_forward.25} parent=0 // pred_fallthru
    _
  // Predicated region
  $region26: #{ensemble_forward.25} parent=0 // pred_check
    _
  $region27: #{ensemble_forward.25} parent=0 // pred_check_branch
    %3481 = sbr.rel (0) target = $region29
  $region28: #{ensemble_forward.25} parent=0 // pred_region
    _
  $region29: #{ensemble_forward.25} parent=0 // pred_fallthru
    _

// kernel: ensemble_forward.13
$region0: #{ensemble_forward.13}
  #allocation0 [shape = 'u32[]', space=smem, size = 0x4, offset = 0x4, fixed_abs, tag = 'smem constant byte address 0x4 - core index']
  #allocation1 [shape = 'u32[144,128]{1,0:T(1,128)}', space=vmem, size = 0x12000, scoped, tag = 'internal scratch']
  %s0 = inlined_call_operand.vmem [shape: bf16[288,256], index: 0, kind: input, shape index: {}]
  %s1 = inlined_call_operand.vmem [shape: bf16[2,256,32], index: 1, kind: input, shape index: {}]
  %s2 = inlined_call_operand.vmem [shape: f32[2,1,32], index: 2, kind: input, shape index: {}]
  %s3 = inlined_call_operand.vmem [shape: bf16[2,288,32], index: 3, kind: output, shape index: {}]
  %s4 = sld [smem:[#allocation0]]
  $region45: #{ensemble_forward.13} parent=0
    _
  %s6 = ssub.s32 1, %s4
  %s7 = scalar_select 0, %s6, %s4
  loop: start=0, step=1, limit=4
  $region2: #{ensemble_forward.13} parent=0 // loop_pre_header
    _
  $region3: #{ensemble_forward.13} parent=0 // loop_header
    %s9 = sphi 0, %s13
    %p10 = scmp.ge.s32.totalorder %s9, 4
    %s16 = sphi 0, %s28
    %s17 = sphi 0, %s24
    %s18 = sphi 0, %s16
    %s19 = sphi 0, %s17
    %s20 = sphi 0, %s18
    %s21 = sphi 0, %s19
    %s31 = sphi 0, %s33
    %s34 = sphi 0, %s31
    %s35 = sphi 0, %s34
    %s51 = sphi 0, %s35
    %s57 = sphi 0, %s59
    %s60 = sphi 0, %s57
    %s61 = sphi 0, %s60
    %s77 = sphi 0, %s61
    %s83 = sphi 0, %s85
    %s86 = sphi 0, %s83
    %s87 = sphi 0, %s86
    %s103 = sphi 0, %s87
    %s111 = sphi 0, %s113
    %s114 = sphi 0, %s111
    %s115 = sphi 0, %s114
    %s131 = sphi 0, %s115
  $region4: #{ensemble_forward.13} parent=0 // loop_header_branch
    %12 = sbr.rel (%p10) target = $region8
  $region5: #{ensemble_forward.13} parent=0 // loop_body
    %s14 = ssub.s32 %s9, 1
    %s15 = ssub.s32 %s9, 2
    %s22 = sadd.s32 1, %s17
    %p23 = scmp.ge.s32.totalorder %s22, 1
    %s24 = scalar_select %p23, 0, %s22
    %s25 = sadd.s32 1, %s16
    %s26 = scalar_select %p23, %s25, %s16
    %p27 = scmp.ge.s32.totalorder %s26, 2
    %s28 = scalar_select %p27, 0, %s26
    %s29 = ssub.s32 %s17, %s24
    %p30 = scmp.eq.s32.totalorder %s29, 0
    %s32 = sadd.s32 %s31, 1
    %s33 = scalar_select %p30, %s31, %s32
    %p36 = pneg %p30
    %p37 = scmp.eq.s32.totalorder %s9, 1
    %p38 = por %p36, %p37
    %p39 = scmp.ne.s32.totalorder %s31, %s34
    %p40 = scmp.eq.s32.totalorder %s9, 0
    %p41 = por %p39, %p40
    %p42 = scmp.ne.s32.totalorder %s31, %s34
    %p43 = scmp.eq.s32.totalorder %s14, 1
    %p44 = por %p42, %p43
    %p45 = scmp.ne.s32.totalorder %s34, %s35
    %p46 = scmp.eq.s32.totalorder %s14, 0
    %p47 = por %p45, %p46
    %p48 = scmp.ne.s32.totalorder %s34, %s35
    %p49 = scmp.eq.s32.totalorder %s15, 1
    %p50 = por %p48, %p49
    %p52 = scmp.ne.s32.totalorder %s35, %s51
    %p53 = scmp.eq.s32.totalorder %s15, 0
    %p54 = por %p52, %p53
    %s55 = ssub.s32 %s16, %s28
    %p56 = scmp.eq.s32.totalorder %s55, 0
    %s58 = sadd.s32 %s57, 1
    %s59 = scalar_select %p56, %s57, %s58
    %p62 = pneg %p56
    %p63 = scmp.eq.s32.totalorder %s9, 1
    %p64 = por %p62, %p63
    %p65 = scmp.ne.s32.totalorder %s57, %s60
    %p66 = scmp.eq.s32.totalorder %s9, 0
    %p67 = por %p65, %p66
    %p68 = scmp.ne.s32.totalorder %s57, %s60
    %p69 = scmp.eq.s32.totalorder %s14, 1
    %p70 = por %p68, %p69
    %p71 = scmp.ne.s32.totalorder %s60, %s61
    %p72 = scmp.eq.s32.totalorder %s14, 0
    %p73 = por %p71, %p72
    %p74 = scmp.ne.s32.totalorder %s60, %s61
    %p75 = scmp.eq.s32.totalorder %s15, 1
    %p76 = por %p74, %p75
    %p78 = scmp.ne.s32.totalorder %s61, %s77
    %p79 = scmp.eq.s32.totalorder %s15, 0
    %p80 = por %p78, %p79
    %s81 = ssub.s32 %s16, %s28
    %p82 = scmp.eq.s32.totalorder %s81, 0
    %s84 = sadd.s32 %s83, 1
    %s85 = scalar_select %p82, %s83, %s84
    %p88 = pneg %p82
    %p89 = scmp.eq.s32.totalorder %s9, 1
    %p90 = por %p88, %p89
    %p91 = scmp.ne.s32.totalorder %s83, %s86
    %p92 = scmp.eq.s32.totalorder %s9, 0
    %p93 = por %p91, %p92
    %p94 = scmp.ne.s32.totalorder %s83, %s86
    %p95 = scmp.eq.s32.totalorder %s14, 1
    %p96 = por %p94, %p95
    %p97 = scmp.ne.s32.totalorder %s86, %s87
    %p98 = scmp.eq.s32.totalorder %s14, 0
    %p99 = por %p97, %p98
    %p100 = scmp.ne.s32.totalorder %s86, %s87
    %p101 = scmp.eq.s32.totalorder %s15, 1
    %p102 = por %p100, %p101
    %p104 = scmp.ne.s32.totalorder %s87, %s103
    %p105 = scmp.eq.s32.totalorder %s15, 0
    %p106 = por %p104, %p105
    %s107 = ssub.s32 %s16, %s28
    %s108 = ssub.s32 %s17, %s24
    %s109 = sor.u32 %s107, %s108
    %p110 = scmp.eq.s32.totalorder %s109, 0
    %s112 = sadd.s32 %s111, 1
    %s113 = scalar_select %p110, %s111, %s112
    %p116 = pneg %p110
    %p117 = scmp.eq.s32.totalorder %s9, 1
    %p118 = por %p116, %p117
    %p119 = scmp.ne.s32.totalorder %s111, %s114
    %p120 = scmp.eq.s32.totalorder %s9, 0
    %p121 = por %p119, %p120
    %p122 = scmp.ne.s32.totalorder %s111, %s114
    %p123 = scmp.eq.s32.totalorder %s14, 1
    %p124 = por %p122, %p123
    %p125 = scmp.ne.s32.totalorder %s114, %s115
    %p126 = scmp.eq.s32.totalorder %s14, 0
    %p127 = por %p125, %p126
    %p128 = scmp.ne.s32.totalorder %s114, %s115
    %p129 = scmp.eq.s32.totalorder %s15, 1
    %p130 = por %p128, %p129
    %p132 = scmp.ne.s32.totalorder %s115, %s131
    %p133 = scmp.eq.s32.totalorder %s15, 0
    %p134 = por %p132, %p133
    %p135 = scmp.le.s32.totalorder 1, %s9
    %p136 = scmp.lt.s32.totalorder %s9, 3
    %p137 = pnand %p135, %p136
    %p138 = pneg %p137
    // Predicated region
    $region9: #{ensemble_forward.13} parent=5 // pred_check
      _
    $region10: #{ensemble_forward.13} parent=5 // pred_check_branch
      %140 = sbr.rel (%p137) target = $region12
    $region11: #{ensemble_forward.13} parent=5 // pred_region
      %s141 = ssub.s32 %s9, 1
      // Predicated region
      $region13: #{ensemble_forward.13} parent=11 // pred_check
        %p142 = pneg %p47
      $region14: #{ensemble_forward.13} parent=11 // pred_check_branch
        %144 = sbr.rel (%p142) target = $region16
      $region15: #{ensemble_forward.13} parent=11 // pred_region
        %s145 = smul.u32 36, %s19
        %p146 = scmp.lt.s32.totalorder %s145, 35
        %s147 = scalar_select %p146, %s145, 35
        %s148 = smul.addr %s147, 2
        %s149 = smul.addr %s148, 4
        %s150 = scalar_lea.vmem %s0, %s149
        %s151 = smul.u32 36, %s19
      $region16: #{ensemble_forward.13} parent=11 // pred_fallthru
        _
    $region12: #{ensemble_forward.13} parent=5 // pred_fallthru
      _
    %p152 = scmp.lt.s32.totalorder %s9, 2
    // Predicated region
    $region17: #{ensemble_forward.13} parent=5 // pred_check
      %p153 = pneg %p152
    $region18: #{ensemble_forward.13} parent=5 // pred_check_branch
      %155 = sbr.rel (%p153) target = $region20
    $region19: #{ensemble_forward.13} parent=5 // pred_region
      // Predicated region
      $region21: #{ensemble_forward.13} parent=19 // pred_check
        %p156 = pneg %p67
      $region22: #{ensemble_forward.13} parent=19 // pred_check_branch
        %158 = sbr.rel (%p156) target = $region24
      $region23: #{ensemble_forward.13} parent=19 // pred_region
        %p159 = scmp.lt.s32.totalorder %s16, 1
        %s160 = scalar_select %p159, %s16, 1
        %s161 = smul.addr %s160, 32
        %s162 = smul.addr %s161, 4
        %s163 = scalar_lea.vmem %s1, %s162
      $region24: #{ensemble_forward.13} parent=19 // pred_fallthru
        _
      // Predicated region
      $region25: #{ensemble_forward.13} parent=19 // pred_check
        %p164 = pneg %p93
      $region26: #{ensemble_forward.13} parent=19 // pred_check_branch
        %166 = sbr.rel (%p164) target = $region28
      $region27: #{ensemble_forward.13} parent=19 // pred_region
        %p167 = scmp.lt.s32.totalorder %s16, 1
        %s168 = scalar_select %p167, %s16, 1
        %s169 = scalar_lea.vmem %s2, %s168
      $region28: #{ensemble_forward.13} parent=19 // pred_fallthru
        _
    $region20: #{ensemble_forward.13} parent=5 // pred_fallthru
      _
    %p170 = scmp.le.s32.totalorder 1, %s9
    %p171 = scmp.lt.s32.totalorder %s9, 3
    %p172 = pnand %p170, %p171
    %p173 = pneg %p172
    // Predicated region
    $region29: #{ensemble_forward.13} parent=5 // pred_check
      _
    $region30: #{ensemble_forward.13} parent=5 // pred_check_branch
      %175 = sbr.rel (%p172) target = $region32
    $region31: #{ensemble_forward.13} parent=5 // pred_region
      %s176 = ssub.s32 %s9, 1
      %s177 = smul.u32 36, %s19
      %p178 = scmp.lt.s32.totalorder %s177, 35
      %s179 = scalar_select %p178, %s177, 35
      %s180 = smul.addr %s179, 2
      %s181 = smul.addr %s180, 4
      %s182 = scalar_lea.vmem %s0, %s181
      %p183 = pneg %p47
      %p184 = pneg %p44
      %p185 = scmp.lt.s32.totalorder %s18, 1
      %s186 = scalar_select %p185, %s18, 1
      %s187 = smul.addr %s186, 32
      %s188 = smul.addr %s187, 4
      %s189 = scalar_lea.vmem %s1, %s188
      %p190 = pneg %p73
      %p191 = pneg %p70
      %p192 = scmp.lt.s32.totalorder %s18, 1
      %s193 = scalar_select %p192, %s18, 1
      %s194 = scalar_lea.vmem %s2, %s193
      %p195 = pneg %p99
      %p196 = pneg %p96
      %p197 = pneg %p127
      %p198 = pneg %p124
      %s199 = smul.u32 36, %s19
      %p200 = scmp.lt.s32.totalorder %s18, 1
      %s201 = scalar_select %p200, %s18, 1
      %p202 = scmp.lt.s32.totalorder %s199, 35
      %s203 = scalar_select %p202, %s199, 35
      %s204 = smul.addr %s201, 36
      %s205 = sadd.s32 %s203, %s204
      %s206 = smul.addr %s205, 4
      %s207 = scalar_lea.vmem %s3, %s206
      %s208 = smul.u32 36, %s19
      %p209 = scmp.lt.s32.totalorder %s208, 35
      %s210 = scalar_select %p209, %s208, 35
      %s211 = smul.addr %s210, 2
      %s212 = smul.addr %s211, 4
      %s213 = scalar_lea.vmem %s0, %s212
      %s214 = smul.u32 36, %s19
      %p215 = scmp.lt.s32.totalorder %s18, 1
      %s216 = scalar_select %p215, %s18, 1
      %s217 = smul.addr %s216, 32
      %s218 = smul.addr %s217, 4
      %s219 = scalar_lea.vmem %s1, %s218
      %p220 = scmp.lt.s32.totalorder %s18, 1
      %s221 = scalar_select %p220, %s18, 1
      %s222 = scalar_lea.vmem %s2, %s221
      %s223 = smul.u32 36, %s19
      %p224 = scmp.lt.s32.totalorder %s18, 1
      %s225 = scalar_select %p224, %s18, 1
      %p226 = scmp.lt.s32.totalorder %s223, 35
      %s227 = scalar_select %p226, %s223, 35
      %s228 = smul.addr %s225, 36
      %s229 = sadd.s32 %s227, %s228
      %s230 = smul.addr %s229, 4
      %s231 = scalar_lea.vmem %s3, %s230
      %s232 = smul.u32 36, %s19
      %v234 = vld [vmem:[%s213] sm:$0xff]
      %v235 = vld [vmem:[%s213 + $0x8] sm:$0xff]
      %v236 = vld [vmem:[%s213 + $0x10] sm:$0xff]
      %v237 = vld [vmem:[%s213 + $0x18] sm:$0xff]
      %v238 = vld [vmem:[%s213 + $0x20] sm:$0xff]
      %v239 = vld [vmem:[%s213 + $0x28] sm:$0xff]
      %v240 = vld [vmem:[%s213 + $0x30] sm:$0xff]
      %v241 = vld [vmem:[%s213 + $0x38] sm:$0xff]
      %v242 = vld [vmem:[%s213 + $0x40] sm:$0xff]
      %v243 = vld [vmem:[%s213 + $0x48] sm:$0xff]
      %v244 = vld [vmem:[%s213 + $0x50] sm:$0xff]
      %v245 = vld [vmem:[%s213 + $0x58] sm:$0xff]
      %v246 = vld [vmem:[%s213 + $0x60] sm:$0xff]
      %v247 = vld [vmem:[%s213 + $0x68] sm:$0xff]
      %v248 = vld [vmem:[%s213 + $0x70] sm:$0xff]
      %v249 = vld [vmem:[%s213 + $0x78] sm:$0xff]
      %v250 = vld [vmem:[%s213 + $0x80] sm:$0xff]
      %v251 = vld [vmem:[%s213 + $0x88] sm:$0xff]
      %v252 = vld [vmem:[%s213 + $0x90] sm:$0xff]
      %v253 = vld [vmem:[%s213 + $0x98] sm:$0xff]
      %v254 = vld [vmem:[%s213 + $0xa0] sm:$0xff]
      %v255 = vld [vmem:[%s213 + $0xa8] sm:$0xff]
      %v256 = vld [vmem:[%s213 + $0xb0] sm:$0xff]
      %v257 = vld [vmem:[%s213 + $0xb8] sm:$0xff]
      %v258 = vld [vmem:[%s213 + $0xc0] sm:$0xff]
      %v259 = vld [vmem:[%s213 + $0xc8] sm:$0xff]
      %v260 = vld [vmem:[%s213 + $0xd0] sm:$0xff]
      %v261 = vld [vmem:[%s213 + $0xd8] sm:$0xff]
      %v262 = vld [vmem:[%s213 + $0xe0] sm:$0xff]
      %v263 = vld [vmem:[%s213 + $0xe8] sm:$0xff]
      %v264 = vld [vmem:[%s213 + $0xf0] sm:$0xff]
      %v265 = vld [vmem:[%s213 + $0xf8] sm:$0xff]
      %v266 = vld [vmem:[%s213 + $0x100] sm:$0xff]
      %v267 = vld [vmem:[%s213 + $0x108] sm:$0xff]
      %v268 = vld [vmem:[%s213 + $0x110] sm:$0xff]
      %v269 = vld [vmem:[%s213 + $0x118] sm:$0xff]
      %v270 = vld [vmem:[%s219] sm:$0xf]
      %v271 = vld [vmem:[%s219 + $0x4] sm:$0xf]
      %v272 = vld [vmem:[%s219 + $0x8] sm:$0xf]
      %v273 = vld [vmem:[%s219 + $0xc] sm:$0xf]
      %v274 = vld [vmem:[%s219 + $0x10] sm:$0xf]
      %v275 = vld [vmem:[%s219 + $0x14] sm:$0xf]
      %v276 = vld [vmem:[%s219 + $0x18] sm:$0xf]
      %v277 = vld [vmem:[%s219 + $0x1c] sm:$0xf]
      %v278 = vld [vmem:[%s219 + $0x20] sm:$0xf]
      %v279 = vld [vmem:[%s219 + $0x24] sm:$0xf]
      %v280 = vld [vmem:[%s219 + $0x28] sm:$0xf]
      %v281 = vld [vmem:[%s219 + $0x2c] sm:$0xf]
      %v282 = vld [vmem:[%s219 + $0x30] sm:$0xf]
      %v283 = vld [vmem:[%s219 + $0x34] sm:$0xf]
      %v284 = vld [vmem:[%s219 + $0x38] sm:$0xf]
      %v285 = vld [vmem:[%s219 + $0x3c] sm:$0xf]
      %v286 = vld [vmem:[%s219 + $0x40] sm:$0xf]
      %v287 = vld [vmem:[%s219 + $0x44] sm:$0xf]
      %v288 = vld [vmem:[%s219 + $0x48] sm:$0xf]
      %v289 = vld [vmem:[%s219 + $0x4c] sm:$0xf]
      %v290 = vld [vmem:[%s219 + $0x50] sm:$0xf]
      %v291 = vld [vmem:[%s219 + $0x54] sm:$0xf]
      %v292 = vld [vmem:[%s219 + $0x58] sm:$0xf]
      %v293 = vld [vmem:[%s219 + $0x5c] sm:$0xf]
      %v294 = vld [vmem:[%s219 + $0x60] sm:$0xf]
      %v295 = vld [vmem:[%s219 + $0x64] sm:$0xf]
      %v296 = vld [vmem:[%s219 + $0x68] sm:$0xf]
      %v297 = vld [vmem:[%s219 + $0x6c] sm:$0xf]
      %v298 = vld [vmem:[%s219 + $0x70] sm:$0xf]
      %v299 = vld [vmem:[%s219 + $0x74] sm:$0xf]
      %v300 = vld [vmem:[%s219 + $0x78] sm:$0xf]
      %v301 = vld [vmem:[%s219 + $0x7c] sm:$0xf]
      %v302 = vld [vmem:[%s222] sm:$0x1]
      %v304 = vlaneseq
      %v305 = vshrl.u32 %v304, 7
      %v306 = vsub.s32 0, %v305
      %v307 = vrot.slane %v302, %v306
      %v345 = vunpack.c.l.b16 %v234
      %v346 = vunpack.c.h.b16 %v234
      %v347 = vunpack.c.l.b16 %v235
      %v348 = vunpack.c.h.b16 %v235
      %v349 = vunpack.c.l.b16 %v236
      %v350 = vunpack.c.h.b16 %v236
      %v351 = vunpack.c.l.b16 %v237
      %v352 = vunpack.c.h.b16 %v237
      %v353 = vunpack.c.l.b16 %v238
      %v354 = vunpack.c.h.b16 %v238
      %v355 = vunpack.c.l.b16 %v239
      %v356 = vunpack.c.h.b16 %v239
      %v357 = vunpack.c.l.b16 %v240
      %v358 = vunpack.c.h.b16 %v240
      %v359 = vunpack.c.l.b16 %v241
      %v360 = vunpack.c.h.b16 %v241
      %v361 = vunpack.c.l.b16 %v242
      %v362 = vunpack.c.h.b16 %v242
      %v363 = vunpack.c.l.b16 %v243
      %v364 = vunpack.c.h.b16 %v243
      %v365 = vunpack.c.l.b16 %v244
      %v366 = vunpack.c.h.b16 %v244
      %v367 = vunpack.c.l.b16 %v245
      %v368 = vunpack.c.h.b16 %v245
      %v369 = vunpack.c.l.b16 %v246
      %v370 = vunpack.c.h.b16 %v246
      %v371 = vunpack.c.l.b16 %v247
      %v372 = vunpack.c.h.b16 %v247
      %v373 = vunpack.c.l.b16 %v248
      %v374 = vunpack.c.h.b16 %v248
      %v375 = vunpack.c.l.b16 %v249
      %v376 = vunpack.c.h.b16 %v249
      %v377 = vunpack.c.l.b16 %v250
      %v378 = vunpack.c.h.b16 %v250
      %v379 = vunpack.c.l.b16 %v251
      %v380 = vunpack.c.h.b16 %v251
      %v381 = vunpack.c.l.b16 %v252
      %v382 = vunpack.c.h.b16 %v252
      %v383 = vunpack.c.l.b16 %v253
      %v384 = vunpack.c.h.b16 %v253
      %v385 = vunpack.c.l.b16 %v254
      %v386 = vunpack.c.h.b16 %v254
      %v387 = vunpack.c.l.b16 %v255
      %v388 = vunpack.c.h.b16 %v255
      %v389 = vunpack.c.l.b16 %v256
      %v390 = vunpack.c.h.b16 %v256
      %v391 = vunpack.c.l.b16 %v257
      %v392 = vunpack.c.h.b16 %v257
      %v393 = vunpack.c.l.b16 %v258
      %v394 = vunpack.c.h.b16 %v258
      %v395 = vunpack.c.l.b16 %v259
      %v396 = vunpack.c.h.b16 %v259
      %v397 = vunpack.c.l.b16 %v260
      %v398 = vunpack.c.h.b16 %v260
      %v399 = vunpack.c.l.b16 %v261
      %v400 = vunpack.c.h.b16 %v261
      %v401 = vunpack.c.l.b16 %v262
      %v402 = vunpack.c.h.b16 %v262
      %v403 = vunpack.c.l.b16 %v263
      %v404 = vunpack.c.h.b16 %v263
      %v405 = vunpack.c.l.b16 %v264
      %v406 = vunpack.c.h.b16 %v264
      %v407 = vunpack.c.l.b16 %v265
      %v408 = vunpack.c.h.b16 %v265
      %v409 = vunpack.c.l.b16 %v266
      %v410 = vunpack.c.h.b16 %v266
      %v411 = vunpack.c.l.b16 %v267
      %v412 = vunpack.c.h.b16 %v267
      %v413 = vunpack.c.l.b16 %v268
      %v414 = vunpack.c.h.b16 %v268
      %v415 = vunpack.c.l.b16 %v269
      %v416 = vunpack.c.h.b16 %v269
      %v417 = vpack.c.b16 %v347, %v345
      %v418 = vpack.c.b16 %v348, %v346
      %v419 = vpack.c.b16 %v351, %v349
      %v420 = vpack.c.b16 %v352, %v350
      %v421 = vpack.c.b16 %v355, %v353
      %v422 = vpack.c.b16 %v356, %v354
      %v423 = vpack.c.b16 %v359, %v357
      %v424 = vpack.c.b16 %v360, %v358
      %v425 = vpack.c.b16 %v363, %v361
      %v426 = vpack.c.b16 %v364, %v362
      %v427 = vpack.c.b16 %v367, %v365
      %v428 = vpack.c.b16 %v368, %v366
      %v429 = vpack.c.b16 %v371, %v369
      %v430 = vpack.c.b16 %v372, %v370
      %v431 = vpack.c.b16 %v375, %v373
      %v432 = vpack.c.b16 %v376, %v374
      %v433 = vpack.c.b16 %v379, %v377
      %v434 = vpack.c.b16 %v380, %v378
      %v435 = vpack.c.b16 %v383, %v381
      %v436 = vpack.c.b16 %v384, %v382
      %v437 = vpack.c.b16 %v387, %v385
      %v438 = vpack.c.b16 %v388, %v386
      %v439 = vpack.c.b16 %v391, %v389
      %v440 = vpack.c.b16 %v392, %v390
      %v441 = vpack.c.b16 %v395, %v393
      %v442 = vpack.c.b16 %v396, %v394
      %v443 = vpack.c.b16 %v399, %v397
      %v444 = vpack.c.b16 %v400, %v398
      %v445 = vpack.c.b16 %v403, %v401
      %v446 = vpack.c.b16 %v404, %v402
      %v447 = vpack.c.b16 %v407, %v405
      %v448 = vpack.c.b16 %v408, %v406
      %v449 = vpack.c.b16 %v411, %v409
      %v450 = vpack.c.b16 %v412, %v410
      %v451 = vpack.c.b16 %v415, %v413
      %v452 = vpack.c.b16 %v416, %v414
      %v521 = vunpack.c.l.b16 %v270
      %v522 = vunpack.c.l.b16 %v271
      %v523 = vunpack.c.l.b16 %v272
      %v524 = vunpack.c.l.b16 %v273
      %v525 = vunpack.c.l.b16 %v274
      %v526 = vunpack.c.l.b16 %v275
      %v527 = vunpack.c.l.b16 %v276
      %v528 = vunpack.c.l.b16 %v277
      %v529 = vunpack.c.l.b16 %v278
      %v530 = vunpack.c.l.b16 %v279
      %v531 = vunpack.c.l.b16 %v280
      %v532 = vunpack.c.l.b16 %v281
      %v533 = vunpack.c.l.b16 %v282
      %v534 = vunpack.c.l.b16 %v283
      %v535 = vunpack.c.l.b16 %v284
      %v536 = vunpack.c.l.b16 %v285
      %v537 = vunpack.c.l.b16 %v286
      %v538 = vunpack.c.l.b16 %v287
      %v539 = vunpack.c.l.b16 %v288
      %v540 = vunpack.c.l.b16 %v289
      %v541 = vunpack.c.l.b16 %v290
      %v542 = vunpack.c.l.b16 %v291
      %v543 = vunpack.c.l.b16 %v292
      %v544 = vunpack.c.l.b16 %v293
      %v545 = vunpack.c.l.b16 %v294
      %v546 = vunpack.c.l.b16 %v295
      %v547 = vunpack.c.l.b16 %v296
      %v548 = vunpack.c.l.b16 %v297
      %v549 = vunpack.c.l.b16 %v298
      %v550 = vunpack.c.l.b16 %v299
      %v551 = vunpack.c.l.b16 %v300
      %v552 = vunpack.c.l.b16 %v301
      %v553 = vpack.c.b16 %v522, %v521
      %v554 = vpack.c.b16 %v524, %v523
      %v555 = vpack.c.b16 %v526, %v525
      %v556 = vpack.c.b16 %v528, %v527
      %v557 = vpack.c.b16 %v530, %v529
      %v558 = vpack.c.b16 %v532, %v531
      %v559 = vpack.c.b16 %v534, %v533
      %v560 = vpack.c.b16 %v536, %v535
      %v561 = vpack.c.b16 %v538, %v537
      %v562 = vpack.c.b16 %v540, %v539
      %v563 = vpack.c.b16 %v542, %v541
      %v564 = vpack.c.b16 %v544, %v543
      %v565 = vpack.c.b16 %v546, %v545
      %v566 = vpack.c.b16 %v548, %v547
      %v567 = vpack.c.b16 %v550, %v549
      %v568 = vpack.c.b16 %v552, %v551
      %585 = vmatprep.subr.bf16.mxu0 0
      %586 = vmatpush1.bf16.msra.mxu0 %v560
      %587 = vmatprep.subr.bf16.mxu0 0
      %588 = vmatpush1.bf16.msra.mxu0 %v559
      %589 = vmatprep.subr.bf16.mxu0 0
      %590 = vmatpush1.bf16.msra.mxu0 %v558
      %591 = vmatprep.subr.bf16.mxu0 0
      %592 = vmatpush1.bf16.msra.mxu0 %v557
      %593 = vmatprep.subr.bf16.mxu0 0
      %594 = vmatpush1.bf16.msra.mxu0 %v556
      %595 = vmatprep.subr.bf16.mxu0 0
      %596 = vmatpush1.bf16.msra.mxu0 %v555
      %597 = vmatprep.subr.bf16.mxu0 0
      %598 = vmatpush1.bf16.msra.mxu0 %v554
      %599 = vmatprep.subr.bf16.mxu0 0
      %600 = vmatpush1.bf16.msra.mxu0 %v553
      %601 = vmatprep.subr.bf16.mxu0 0
      %602 = vmatpush2.bf16.msra.mxu0 %v568
      %603 = vmatprep.subr.bf16.mxu0 0
      %604 = vmatpush2.bf16.msra.mxu0 %v567
      %605 = vmatprep.subr.bf16.mxu0 0
      %606 = vmatpush2.bf16.msra.mxu0 %v566
      %607 = vmatprep.subr.bf16.mxu0 0
      %608 = vmatpush2.bf16.msra.mxu0 %v565
      %609 = vmatprep.subr.bf16.mxu0 0
      %610 = vmatpush2.bf16.msra.mxu0 %v564
      %611 = vmatprep.subr.bf16.mxu0 0
      %612 = vmatpush2.bf16.msra.mxu0 %v563
      %613 = vmatprep.subr.bf16.mxu0 0
      %614 = vmatpush2.bf16.msra.mxu0 %v562
      %615 = vmatprep.subr.bf16.mxu0 0
      %616 = vmatpush2.bf16.msra.mxu0 %v561
      %617 = vmatprep.mubr.bf16.mxu0 %v418
      %618 = vmatmul.mubr.bf16.gmra.mxu0 %v417
      %v619 = vpop.f32.mrf.mxu0
      %v620 = vadd.f32 %v307, %v619
      %v621 = vpop.f32.mrf.mxu0
      %v622 = vpop.f32.mrf.mxu0
      %v623 = vadd.f32 %v307, %v622
      %v624 = vpop.f32.mrf.mxu0
      %625 = vmatprep.mubr.bf16.mxu0 %v420
      %626 = vmatmul.mubr.bf16.gmra.mxu0 %v419
      %v627 = vpop.f32.mrf.mxu0
      %v628 = vadd.f32 %v307, %v627
      %v629 = vpop.f32.mrf.mxu0
      %v630 = vpop.f32.mrf.mxu0
      %v631 = vadd.f32 %v307, %v630
      %v632 = vpop.f32.mrf.mxu0
      %633 = vmatprep.mubr.bf16.mxu0 %v422
      %634 = vmatmul.mubr.bf16.gmra.mxu0 %v421
      %v635 = vpop.f32.mrf.mxu0
      %v636 = vadd.f32 %v307, %v635
      %v637 = vpop.f32.mrf.mxu0
      %v638 = vpop.f32.mrf.mxu0
      %v639 = vadd.f32 %v307, %v638
      %v640 = vpop.f32.mrf.mxu0
      %641 = vmatprep.mubr.bf16.mxu0 %v424
      %642 = vmatmul.mubr.bf16.gmra.mxu0 %v423
      %v643 = vpop.f32.mrf.mxu0
      %v644 = vadd.f32 %v307, %v643
      %v645 = vpop.f32.mrf.mxu0
      %v646 = vpop.f32.mrf.mxu0
      %v647 = vadd.f32 %v307, %v646
      %v648 = vpop.f32.mrf.mxu0
      %649 = vmatprep.mubr.bf16.mxu0 %v426
      %650 = vmatmul.mubr.bf16.gmra.mxu0 %v425
      %v651 = vpop.f32.mrf.mxu0
      %v652 = vadd.f32 %v307, %v651
      %v653 = vpop.f32.mrf.mxu0
      %v654 = vpop.f32.mrf.mxu0
      %v655 = vadd.f32 %v307, %v654
      %v656 = vpop.f32.mrf.mxu0
      %657 = vmatprep.mubr.bf16.mxu0 %v428
      %658 = vmatmul.mubr.bf16.gmra.mxu0 %v427
      %v659 = vpop.f32.mrf.mxu0
      %v660 = vadd.f32 %v307, %v659
      %v661 = vpop.f32.mrf.mxu0
      %v662 = vpop.f32.mrf.mxu0
      %v663 = vadd.f32 %v307, %v662
      %v664 = vpop.f32.mrf.mxu0
      %665 = vmatprep.mubr.bf16.mxu0 %v430
      %666 = vmatmul.mubr.bf16.gmra.mxu0 %v429
      %v667 = vpop.f32.mrf.mxu0
      %v668 = vadd.f32 %v307, %v667
      %v669 = vpop.f32.mrf.mxu0
      %v670 = vpop.f32.mrf.mxu0
      %v671 = vadd.f32 %v307, %v670
      %v672 = vpop.f32.mrf.mxu0
      %673 = vmatprep.mubr.bf16.mxu0 %v432
      %674 = vmatmul.mubr.bf16.gmra.mxu0 %v431
      %v675 = vpop.f32.mrf.mxu0
      %v676 = vadd.f32 %v307, %v675
      %v677 = vpop.f32.mrf.mxu0
      %v678 = vpop.f32.mrf.mxu0
      %v679 = vadd.f32 %v307, %v678
      %v680 = vpop.f32.mrf.mxu0
      %681 = vmatprep.mubr.bf16.mxu0 %v434
      %682 = vmatmul.mubr.bf16.gmra.mxu0 %v433
      %v683 = vpop.f32.mrf.mxu0
      %v684 = vadd.f32 %v307, %v683
      %v685 = vpop.f32.mrf.mxu0
      %v686 = vpop.f32.mrf.mxu0
      %v687 = vadd.f32 %v307, %v686
      %v688 = vpop.f32.mrf.mxu0
      %689 = vmatprep.mubr.bf16.mxu0 %v436
      %690 = vmatmul.mubr.bf16.gmra.mxu0 %v435
      %v691 = vpop.f32.mrf.mxu0
      %v692 = vadd.f32 %v307, %v691
      %v693 = vpop.f32.mrf.mxu0
      %v694 = vpop.f32.mrf.mxu0
      %v695 = vadd.f32 %v307, %v694
      %v696 = vpop.f32.mrf.mxu0
      %697 = vmatprep.mubr.bf16.mxu0 %v438
      %698 = vmatmul.mubr.bf16.gmra.mxu0 %v437
      %v699 = vpop.f32.mrf.mxu0
      %v700 = vadd.f32 %v307, %v699
      %v701 = vpop.f32.mrf.mxu0
      %v702 = vpop.f32.mrf.mxu0
      %v703 = vadd.f32 %v307, %v702
      %v704 = vpop.f32.mrf.mxu0
      %705 = vmatprep.mubr.bf16.mxu0 %v440
      %706 = vmatmul.mubr.bf16.gmra.mxu0 %v439
      %v707 = vpop.f32.mrf.mxu0
      %v708 = vadd.f32 %v307, %v707
      %v709 = vpop.f32.mrf.mxu0
      %v710 = vpop.f32.mrf.mxu0
      %v711 = vadd.f32 %v307, %v710
      %v712 = vpop.f32.mrf.mxu0
      %713 = vmatprep.mubr.bf16.mxu0 %v442
      %714 = vmatmul.mubr.bf16.gmra.mxu0 %v441
      %v715 = vpop.f32.mrf.mxu0
      %v716 = vadd.f32 %v307, %v715
      %v717 = vpop.f32.mrf.mxu0
      %v718 = vpop.f32.mrf.mxu0
      %v719 = vadd.f32 %v307, %v718
      %v720 = vpop.f32.mrf.mxu0
      %721 = vmatprep.mubr.bf16.mxu0 %v444
      %722 = vmatmul.mubr.bf16.gmra.mxu0 %v443
      %v723 = vpop.f32.mrf.mxu0
      %v724 = vadd.f32 %v307, %v723
      %v725 = vpop.f32.mrf.mxu0
      %v726 = vpop.f32.mrf.mxu0
      %v727 = vadd.f32 %v307, %v726
      %v728 = vpop.f32.mrf.mxu0
      %729 = vmatprep.mubr.bf16.mxu0 %v446
      %730 = vmatmul.mubr.bf16.gmra.mxu0 %v445
      %v731 = vpop.f32.mrf.mxu0
      %v732 = vadd.f32 %v307, %v731
      %v733 = vpop.f32.mrf.mxu0
      %v734 = vpop.f32.mrf.mxu0
      %v735 = vadd.f32 %v307, %v734
      %v736 = vpop.f32.mrf.mxu0
      %737 = vmatprep.mubr.bf16.mxu0 %v448
      %738 = vmatmul.mubr.bf16.gmra.mxu0 %v447
      %v739 = vpop.f32.mrf.mxu0
      %v740 = vadd.f32 %v307, %v739
      %v741 = vpop.f32.mrf.mxu0
      %v742 = vpop.f32.mrf.mxu0
      %v743 = vadd.f32 %v307, %v742
      %v744 = vpop.f32.mrf.mxu0
      %745 = vmatprep.mubr.bf16.mxu0 %v450
      %746 = vmatmul.mubr.bf16.gmra.mxu0 %v449
      %v747 = vpop.f32.mrf.mxu0
      %v748 = vadd.f32 %v307, %v747
      %v749 = vpop.f32.mrf.mxu0
      %v750 = vpop.f32.mrf.mxu0
      %v751 = vadd.f32 %v307, %v750
      %v752 = vpop.f32.mrf.mxu0
      %753 = vmatprep.mubr.bf16.mxu0 %v452
      %754 = vmatmul.mubr.bf16.gmra.mxu0 %v451
      %v755 = vpop.f32.mrf.mxu0
      %v756 = vadd.f32 %v307, %v755
      %v757 = vpop.f32.mrf.mxu0
      %v758 = vpop.f32.mrf.mxu0
      %v759 = vadd.f32 %v307, %v758
      %v760 = vpop.f32.mrf.mxu0
      %761 = vdwg.mxu0
      %v762 = vmax.f32 %v620, 0.0
      %v763 = vmax.f32 %v623, 0.0
      %v764 = vmax.f32 %v628, 0.0
      %v765 = vmax.f32 %v631, 0.0
      %v766 = vmax.f32 %v636, 0.0
      %v767 = vmax.f32 %v639, 0.0
      %v768 = vmax.f32 %v644, 0.0
      %v769 = vmax.f32 %v647, 0.0
      %v770 = vmax.f32 %v652, 0.0
      %v771 = vmax.f32 %v655, 0.0
      %v772 = vmax.f32 %v660, 0.0
      %v773 = vmax.f32 %v663, 0.0
      %v774 = vmax.f32 %v668, 0.0
      %v775 = vmax.f32 %v671, 0.0
      %v776 = vmax.f32 %v676, 0.0
      %v777 = vmax.f32 %v679, 0.0
      %v778 = vmax.f32 %v684, 0.0
      %v779 = vmax.f32 %v687, 0.0
      %v780 = vmax.f32 %v692, 0.0
      %v781 = vmax.f32 %v695, 0.0
      %v782 = vmax.f32 %v700, 0.0
      %v783 = vmax.f32 %v703, 0.0
      %v784 = vmax.f32 %v708, 0.0
      %v785 = vmax.f32 %v711, 0.0
      %v786 = vmax.f32 %v716, 0.0
      %v787 = vmax.f32 %v719, 0.0
      %v788 = vmax.f32 %v724, 0.0
      %v789 = vmax.f32 %v727, 0.0
      %v790 = vmax.f32 %v732, 0.0
      %v791 = vmax.f32 %v735, 0.0
      %v792 = vmax.f32 %v740, 0.0
      %v793 = vmax.f32 %v743, 0.0
      %v794 = vmax.f32 %v748, 0.0
      %v795 = vmax.f32 %v751, 0.0
      %v796 = vmax.f32 %v756, 0.0
      %v797 = vmax.f32 %v759, 0.0
      %v798 = vpack.c.bf16 %v763, %v762
      %v799 = vpack.c.bf16 %v765, %v764
      %v800 = vpack.c.bf16 %v767, %v766
      %v801 = vpack.c.bf16 %v769, %v768
      %v802 = vpack.c.bf16 %v771, %v770
      %v803 = vpack.c.bf16 %v773, %v772
      %v804 = vpack.c.bf16 %v775, %v774
      %v805 = vpack.c.bf16 %v777, %v776
      %v806 = vpack.c.bf16 %v779, %v778
      %v807 = vpack.c.bf16 %v781, %v780
      %v808 = vpack.c.bf16 %v783, %v782
      %v809 = vpack.c.bf16 %v785, %v784
      %v810 = vpack.c.bf16 %v787, %v786
      %v811 = vpack.c.bf16 %v789, %v788
      %v812 = vpack.c.bf16 %v791, %v790
      %v813 = vpack.c.bf16 %v793, %v792
      %v814 = vpack.c.bf16 %v795, %v794
      %v815 = vpack.c.bf16 %v797, %v796
      %v834 = vunpack.c.l.b16 %v798
      %v835 = vunpack.c.h.b16 %v798
      %v836 = vunpack.c.l.b16 %v799
      %v837 = vunpack.c.h.b16 %v799
      %v838 = vunpack.c.l.b16 %v800
      %v839 = vunpack.c.h.b16 %v800
      %v840 = vunpack.c.l.b16 %v801
      %v841 = vunpack.c.h.b16 %v801
      %v842 = vunpack.c.l.b16 %v802
      %v843 = vunpack.c.h.b16 %v802
      %v844 = vunpack.c.l.b16 %v803
      %v845 = vunpack.c.h.b16 %v803
      %v846 = vunpack.c.l.b16 %v804
      %v847 = vunpack.c.h.b16 %v804
      %v848 = vunpack.c.l.b16 %v805
      %v849 = vunpack.c.h.b16 %v805
      %v850 = vunpack.c.l.b16 %v806
      %v851 = vunpack.c.h.b16 %v806
      %v852 = vunpack.c.l.b16 %v807
      %v853 = vunpack.c.h.b16 %v807
      %v854 = vunpack.c.l.b16 %v808
      %v855 = vunpack.c.h.b16 %v808
      %v856 = vunpack.c.l.b16 %v809
      %v857 = vunpack.c.h.b16 %v809
      %v858 = vunpack.c.l.b16 %v810
      %v859 = vunpack.c.h.b16 %v810
      %v860 = vunpack.c.l.b16 %v811
      %v861 = vunpack.c.h.b16 %v811
      %v862 = vunpack.c.l.b16 %v812
      %v863 = vunpack.c.h.b16 %v812
      %v864 = vunpack.c.l.b16 %v813
      %v865 = vunpack.c.h.b16 %v813
      %v866 = vunpack.c.l.b16 %v814
      %v867 = vunpack.c.h.b16 %v814
      %v868 = vunpack.c.l.b16 %v815
      %v869 = vunpack.c.h.b16 %v815
      %v870 = vpack.c.b16 %v834, %v834
      %v871 = vpack.c.b16 %v835, %v835
      %v872 = vpack.c.b16 %v836, %v836
      %v873 = vpack.c.b16 %v837, %v837
      %v874 = vpack.c.b16 %v838, %v838
      %v875 = vpack.c.b16 %v839, %v839
      %v876 = vpack.c.b16 %v840, %v840
      %v877 = vpack.c.b16 %v841, %v841
      %v878 = vpack.c.b16 %v842, %v842
      %v879 = vpack.c.b16 %v843, %v843
      %v880 = vpack.c.b16 %v844, %v844
      %v881 = vpack.c.b16 %v845, %v845
      %v882 = vpack.c.b16 %v846, %v846
      %v883 = vpack.c.b16 %v847, %v847
      %v884 = vpack.c.b16 %v848, %v848
      %v885 = vpack.c.b16 %v849, %v849
      %v886 = vpack.c.b16 %v850, %v850
      %v887 = vpack.c.b16 %v851, %v851
      %v888 = vpack.c.b16 %v852, %v852
      %v889 = vpack.c.b16 %v853, %v853
      %v890 = vpack.c.b16 %v854, %v854
      %v891 = vpack.c.b16 %v855, %v855
      %v892 = vpack.c.b16 %v856, %v856
      %v893 = vpack.c.b16 %v857, %v857
      %v894 = vpack.c.b16 %v858, %v858
      %v895 = vpack.c.b16 %v859, %v859
      %v896 = vpack.c.b16 %v860, %v860
      %v897 = vpack.c.b16 %v861, %v861
      %v898 = vpack.c.b16 %v862, %v862
      %v899 = vpack.c.b16 %v863, %v863
      %v900 = vpack.c.b16 %v864, %v864
      %v901 = vpack.c.b16 %v865, %v865
      %v902 = vpack.c.b16 %v866, %v866
      %v903 = vpack.c.b16 %v867, %v867
      %v904 = vpack.c.b16 %v868, %v868
      %v905 = vpack.c.b16 %v869, %v869
      %vm942 = vcmask 257024
      %943 = vst.msk [vmem:[%s231] sm:$0xf] %vm942, %v870
      %944 = vst.msk [vmem:[%s231 + $0x4] sm:$0xf] %vm942, %v871
      %945 = vst.msk [vmem:[%s231 + $0x8] sm:$0xf] %vm942, %v872
      %946 = vst.msk [vmem:[%s231 + $0xc] sm:$0xf] %vm942, %v873
      %947 = vst.msk [vmem:[%s231 + $0x10] sm:$0xf] %vm942, %v874
      %948 = vst.msk [vmem:[%s231 + $0x14] sm:$0xf] %vm942, %v875
      %949 = vst.msk [vmem:[%s231 + $0x18] sm:$0xf] %vm942, %v876
      %950 = vst.msk [vmem:[%s231 + $0x1c] sm:$0xf] %vm942, %v877
      %951 = vst.msk [vmem:[%s231 + $0x20] sm:$0xf] %vm942, %v878
      %952 = vst.msk [vmem:[%s231 + $0x24] sm:$0xf] %vm942, %v879
      %953 = vst.msk [vmem:[%s231 + $0x28] sm:$0xf] %vm942, %v880
      %954 = vst.msk [vmem:[%s231 + $0x2c] sm:$0xf] %vm942, %v881
      %955 = vst.msk [vmem:[%s231 + $0x30] sm:$0xf] %vm942, %v882
      %956 = vst.msk [vmem:[%s231 + $0x34] sm:$0xf] %vm942, %v883
      %957 = vst.msk [vmem:[%s231 + $0x38] sm:$0xf] %vm942, %v884
      %958 = vst.msk [vmem:[%s231 + $0x3c] sm:$0xf] %vm942, %v885
      %959 = vst.msk [vmem:[%s231 + $0x40] sm:$0xf] %vm942, %v886
      %960 = vst.msk [vmem:[%s231 + $0x44] sm:$0xf] %vm942, %v887
      %961 = vst.msk [vmem:[%s231 + $0x48] sm:$0xf] %vm942, %v888
      %962 = vst.msk [vmem:[%s231 + $0x4c] sm:$0xf] %vm942, %v889
      %963 = vst.msk [vmem:[%s231 + $0x50] sm:$0xf] %vm942, %v890
      %964 = vst.msk [vmem:[%s231 + $0x54] sm:$0xf] %vm942, %v891
      %965 = vst.msk [vmem:[%s231 + $0x58] sm:$0xf] %vm942, %v892
      %966 = vst.msk [vmem:[%s231 + $0x5c] sm:$0xf] %vm942, %v893
      %967 = vst.msk [vmem:[%s231 + $0x60] sm:$0xf] %vm942, %v894
      %968 = vst.msk [vmem:[%s231 + $0x64] sm:$0xf] %vm942, %v895
      %969 = vst.msk [vmem:[%s231 + $0x68] sm:$0xf] %vm942, %v896
      %970 = vst.msk [vmem:[%s231 + $0x6c] sm:$0xf] %vm942, %v897
      %971 = vst.msk [vmem:[%s231 + $0x70] sm:$0xf] %vm942, %v898
      %972 = vst.msk [vmem:[%s231 + $0x74] sm:$0xf] %vm942, %v899
      %973 = vst.msk [vmem:[%s231 + $0x78] sm:$0xf] %vm942, %v900
      %974 = vst.msk [vmem:[%s231 + $0x7c] sm:$0xf] %vm942, %v901
      %975 = vst.msk [vmem:[%s231 + $0x80] sm:$0xf] %vm942, %v902
      %976 = vst.msk [vmem:[%s231 + $0x84] sm:$0xf] %vm942, %v903
      %977 = vst.msk [vmem:[%s231 + $0x88] sm:$0xf] %vm942, %v904
      %978 = vst.msk [vmem:[%s231 + $0x8c] sm:$0xf] %vm942, %v905
      %s979 = smul.u32 36, %s19
      %p980 = scmp.lt.s32.totalorder %s18, 1
      %s981 = scalar_select %p980, %s18, 1
      %p982 = scmp.lt.s32.totalorder %s979, 35
      %s983 = scalar_select %p982, %s979, 35
      %s984 = smul.addr %s981, 36
      %s985 = sadd.s32 %s983, %s984
      %s986 = smul.addr %s985, 4
      %s987 = scalar_lea.vmem %s3, %s986
      // Predicated region
      $region33: #{ensemble_forward.13} parent=31 // pred_check
        %p988 = pneg %p124
      $region34: #{ensemble_forward.13} parent=31 // pred_check_branch
        %990 = sbr.rel (%p988) target = $region36
      $region35: #{ensemble_forward.13} parent=31 // pred_region
        %s991 = smul.u32 36, %s19
      $region36: #{ensemble_forward.13} parent=31 // pred_fallthru
        _
    $region32: #{ensemble_forward.13} parent=5 // pred_fallthru
      _
    %p992 = scmp.le.s32.totalorder 2, %s9
    // Predicated region
    $region37: #{ensemble_forward.13} parent=5 // pred_check
      %p993 = pneg %p992
    $region38: #{ensemble_forward.13} parent=5 // pred_check_branch
      %995 = sbr.rel (%p993) target = $region40
    $region39: #{ensemble_forward.13} parent=5 // pred_region
      %s996 = ssub.s32 %s9, 2
      // Predicated region
      $region41: #{ensemble_forward.13} parent=39 // pred_check
        %p997 = pneg %p130
      $region42: #{ensemble_forward.13} parent=39 // pred_check_branch
        %999 = sbr.rel (%p997) target = $region44
      $region43: #{ensemble_forward.13} parent=39 // pred_region
        %s1000 = smul.u32 36, %s21
        %p1001 = scmp.lt.s32.totalorder %s20, 1
        %s1002 = scalar_select %p1001, %s20, 1
        %p1003 = scmp.lt.s32.totalorder %s1000, 35
        %s1004 = scalar_select %p1003, %s1000, 35
        %s1005 = smul.addr %s1002, 36
        %s1006 = sadd.s32 %s1004, %s1005
        %s1007 = smul.addr %s1006, 4
        %s1008 = scalar_lea.vmem %s3, %s1007
      $region44: #{ensemble_forward.13} parent=39 // pred_fallthru
        _
    $region40: #{ensemble_forward.13} parent=5 // pred_fallthru
      _
  $region6: #{ensemble_forward.13} parent=0 // loop_footer
    %s13 = sadd.s32 1, %s9
  $region7: #{ensemble_forward.13} parent=0 // loop_footer_branch
    %8 = sbr.rel target = $region3
  $region8: #{ensemble_forward.13} parent=0 // loop_exit
    _

// kernel: ensemble_forward.14
$region0: #{ensemble_forward.14}
  #allocation0 [shape = 'u32[]', space=smem, size = 0x4, offset = 0x4, fixed_abs, tag = 'smem constant byte address 0x4 - core index']
  #allocation1 [shape = 'u32[144,128]{1,0:T(1,128)}', space=vmem, size = 0x12000, scoped, tag = 'internal scratch']
  %s0 = inlined_call_operand.vmem [shape: bf16[2,50,512], index: 0, kind: input, shape index: {}]
  %s1 = inlined_call_operand.vmem [shape: bf16[2,512,64], index: 1, kind: input, shape index: {}]
  %s2 = inlined_call_operand.vmem [shape: f32[2,1,64], index: 2, kind: input, shape index: {}]
  %s3 = inlined_call_operand.vmem [shape: bf16[2,50,64], index: 3, kind: output, shape index: {}]
  %s4 = sld [smem:[#allocation0]]
  $region45: #{ensemble_forward.14} parent=0
    _
  %s6 = ssub.s32 1, %s4
  %s7 = scalar_select 0, %s6, %s4
  loop: start=0, step=1, limit=4
  $region2: #{ensemble_forward.14} parent=0 // loop_pre_header
    _
  $region3: #{ensemble_forward.14} parent=0 // loop_header
    %s9 = sphi 0, %s13
    %p10 = scmp.ge.s32.totalorder %s9, 4
    %s16 = sphi 0, %s28
    %s17 = sphi 0, %s24
    %s18 = sphi 0, %s16
    %s19 = sphi 0, %s17
    %s20 = sphi 0, %s18
    %s21 = sphi 0, %s19
    %s33 = sphi 0, %s35
    %s36 = sphi 0, %s33
    %s37 = sphi 0, %s36
    %s53 = sphi 0, %s37
    %s59 = sphi 0, %s61
    %s62 = sphi 0, %s59
    %s63 = sphi 0, %s62
    %s79 = sphi 0, %s63
    %s85 = sphi 0, %s87
    %s88 = sphi 0, %s85
    %s89 = sphi 0, %s88
    %s105 = sphi 0, %s89
    %s113 = sphi 0, %s115
    %s116 = sphi 0, %s113
    %s117 = sphi 0, %s116
    %s133 = sphi 0, %s117
  $region4: #{ensemble_forward.14} parent=0 // loop_header_branch
    %12 = sbr.rel (%p10) target = $region8
  $region5: #{ensemble_forward.14} parent=0 // loop_body
    %s14 = ssub.s32 %s9, 1
    %s15 = ssub.s32 %s9, 2
    %s22 = sadd.s32 1, %s17
    %p23 = scmp.ge.s32.totalorder %s22, 1
    %s24 = scalar_select %p23, 0, %s22
    %s25 = sadd.s32 1, %s16
    %s26 = scalar_select %p23, %s25, %s16
    %p27 = scmp.ge.s32.totalorder %s26, 2
    %s28 = scalar_select %p27, 0, %s26
    %s29 = ssub.s32 %s16, %s28
    %s30 = ssub.s32 %s17, %s24
    %s31 = sor.u32 %s29, %s30
    %p32 = scmp.eq.s32.totalorder %s31, 0
    %s34 = sadd.s32 %s33, 1
    %s35 = scalar_select %p32, %s33, %s34
    %p38 = pneg %p32
    %p39 = scmp.eq.s32.totalorder %s9, 1
    %p40 = por %p38, %p39
    %p41 = scmp.ne.s32.totalorder %s33, %s36
    %p42 = scmp.eq.s32.totalorder %s9, 0
    %p43 = por %p41, %p42
    %p44 = scmp.ne.s32.totalorder %s33, %s36
    %p45 = scmp.eq.s32.totalorder %s14, 1
    %p46 = por %p44, %p45
    %p47 = scmp.ne.s32.totalorder %s36, %s37
    %p48 = scmp.eq.s32.totalorder %s14, 0
    %p49 = por %p47, %p48
    %p50 = scmp.ne.s32.totalorder %s36, %s37
    %p51 = scmp.eq.s32.totalorder %s15, 1
    %p52 = por %p50, %p51
    %p54 = scmp.ne.s32.totalorder %s37, %s53
    %p55 = scmp.eq.s32.totalorder %s15, 0
    %p56 = por %p54, %p55
    %s57 = ssub.s32 %s16, %s28
    %p58 = scmp.eq.s32.totalorder %s57, 0
    %s60 = sadd.s32 %s59, 1
    %s61 = scalar_select %p58, %s59, %s60
    %p64 = pneg %p58
    %p65 = scmp.eq.s32.totalorder %s9, 1
    %p66 = por %p64, %p65
    %p67 = scmp.ne.s32.totalorder %s59, %s62
    %p68 = scmp.eq.s32.totalorder %s9, 0
    %p69 = por %p67, %p68
    %p70 = scmp.ne.s32.totalorder %s59, %s62
    %p71 = scmp.eq.s32.totalorder %s14, 1
    %p72 = por %p70, %p71
    %p73 = scmp.ne.s32.totalorder %s62, %s63
    %p74 = scmp.eq.s32.totalorder %s14, 0
    %p75 = por %p73, %p74
    %p76 = scmp.ne.s32.totalorder %s62, %s63
    %p77 = scmp.eq.s32.totalorder %s15, 1
    %p78 = por %p76, %p77
    %p80 = scmp.ne.s32.totalorder %s63, %s79
    %p81 = scmp.eq.s32.totalorder %s15, 0
    %p82 = por %p80, %p81
    %s83 = ssub.s32 %s16, %s28
    %p84 = scmp.eq.s32.totalorder %s83, 0
    %s86 = sadd.s32 %s85, 1
    %s87 = scalar_select %p84, %s85, %s86
    %p90 = pneg %p84
    %p91 = scmp.eq.s32.totalorder %s9, 1
    %p92 = por %p90, %p91
    %p93 = scmp.ne.s32.totalorder %s85, %s88
    %p94 = scmp.eq.s32.totalorder %s9, 0
    %p95 = por %p93, %p94
    %p96 = scmp.ne.s32.totalorder %s85, %s88
    %p97 = scmp.eq.s32.totalorder %s14, 1
    %p98 = por %p96, %p97
    %p99 = scmp.ne.s32.totalorder %s88, %s89
    %p100 = scmp.eq.s32.totalorder %s14, 0
    %p101 = por %p99, %p100
    %p102 = scmp.ne.s32.totalorder %s88, %s89
    %p103 = scmp.eq.s32.totalorder %s15, 1
    %p104 = por %p102, %p103
    %p106 = scmp.ne.s32.totalorder %s89, %s105
    %p107 = scmp.eq.s32.totalorder %s15, 0
    %p108 = por %p106, %p107
    %s109 = ssub.s32 %s16, %s28
    %s110 = ssub.s32 %s17, %s24
    %s111 = sor.u32 %s109, %s110
    %p112 = scmp.eq.s32.totalorder %s111, 0
    %s114 = sadd.s32 %s113, 1
    %s115 = scalar_select %p112, %s113, %s114
    %p118 = pneg %p112
    %p119 = scmp.eq.s32.totalorder %s9, 1
    %p120 = por %p118, %p119
    %p121 = scmp.ne.s32.totalorder %s113, %s116
    %p122 = scmp.eq.s32.totalorder %s9, 0
    %p123 = por %p121, %p122
    %p124 = scmp.ne.s32.totalorder %s113, %s116
    %p125 = scmp.eq.s32.totalorder %s14, 1
    %p126 = por %p124, %p125
    %p127 = scmp.ne.s32.totalorder %s116, %s117
    %p128 = scmp.eq.s32.totalorder %s14, 0
    %p129 = por %p127, %p128
    %p130 = scmp.ne.s32.totalorder %s116, %s117
    %p131 = scmp.eq.s32.totalorder %s15, 1
    %p132 = por %p130, %p131
    %p134 = scmp.ne.s32.totalorder %s117, %s133
    %p135 = scmp.eq.s32.totalorder %s15, 0
    %p136 = por %p134, %p135
    %p137 = scmp.le.s32.totalorder 1, %s9
    %p138 = scmp.lt.s32.totalorder %s9, 3
    %p139 = pnand %p137, %p138
    %p140 = pneg %p139
    // Predicated region
    $region9: #{ensemble_forward.14} parent=5 // pred_check
      _
    $region10: #{ensemble_forward.14} parent=5 // pred_check_branch
      %142 = sbr.rel (%p139) target = $region12
    $region11: #{ensemble_forward.14} parent=5 // pred_region
      %s143 = ssub.s32 %s9, 1
    $region12: #{ensemble_forward.14} parent=5 // pred_fallthru
      _
    %p144 = scmp.lt.s32.totalorder %s9, 2
    // Predicated region
    $region13: #{ensemble_forward.14} parent=5 // pred_check
      %p145 = pneg %p144
    $region14: #{ensemble_forward.14} parent=5 // pred_check_branch
      %147 = sbr.rel (%p145) target = $region16
    $region15: #{ensemble_forward.14} parent=5 // pred_region
      // Predicated region
      $region17: #{ensemble_forward.14} parent=15 // pred_check
        %p148 = pneg %p43
      $region18: #{ensemble_forward.14} parent=15 // pred_check_branch
        %150 = sbr.rel (%p148) target = $region20
      $region19: #{ensemble_forward.14} parent=15 // pred_region
        %s151 = smul.u32 7, %s17
        %p152 = scmp.lt.s32.totalorder %s16, 1
        %s153 = scalar_select %p152, %s16, 1
        %p154 = scmp.lt.s32.totalorder %s151, 6
        %s155 = scalar_select %p154, %s151, 6
        %s156 = smul.addr %s155, 4
        %s157 = smul.addr %s153, 28
        %s158 = sadd.s32 %s156, %s157
        %s159 = smul.addr %s158, 4
        %s160 = scalar_lea.vmem %s0, %s159
        %s161 = smul.u32 7, %s17
      $region20: #{ensemble_forward.14} parent=15 // pred_fallthru
        _
      // Predicated region
      $region21: #{ensemble_forward.14} parent=15 // pred_check
        %p162 = pneg %p69
      $region22: #{ensemble_forward.14} parent=15 // pred_check_branch
        %164 = sbr.rel (%p162) target = $region24
      $region23: #{ensemble_forward.14} parent=15 // pred_region
        %p165 = scmp.lt.s32.totalorder %s16, 1
        %s166 = scalar_select %p165, %s16, 1
        %s167 = smul.addr %s166, 64
        %s168 = smul.addr %s167, 4
        %s169 = scalar_lea.vmem %s1, %s168
      $region24: #{ensemble_forward.14} parent=15 // pred_fallthru
        _
      // Predicated region
      $region25: #{ensemble_forward.14} parent=15 // pred_check
        %p170 = pneg %p95
      $region26: #{ensemble_forward.14} parent=15 // pred_check_branch
        %172 = sbr.rel (%p170) target = $region28
      $region27: #{ensemble_forward.14} parent=15 // pred_region
        %p173 = scmp.lt.s32.totalorder %s16, 1
        %s174 = scalar_select %p173, %s16, 1
        %s175 = scalar_lea.vmem %s2, %s174
      $region28: #{ensemble_forward.14} parent=15 // pred_fallthru
        _
    $region16: #{ensemble_forward.14} parent=5 // pred_fallthru
      _
    %p176 = scmp.le.s32.totalorder 1, %s9
    %p177 = scmp.lt.s32.totalorder %s9, 3
    %p178 = pnand %p176, %p177
    %p179 = pneg %p178
    // Predicated region
    $region29: #{ensemble_forward.14} parent=5 // pred_check
      _
    $region30: #{ensemble_forward.14} parent=5 // pred_check_branch
      %181 = sbr.rel (%p178) target = $region32
    $region31: #{ensemble_forward.14} parent=5 // pred_region
      %s182 = ssub.s32 %s9, 1
      %s183 = smul.u32 7, %s19
      %p184 = scmp.lt.s32.totalorder %s18, 1
      %s185 = scalar_select %p184, %s18, 1
      %p186 = scmp.lt.s32.totalorder %s183, 6
      %s187 = scalar_select %p186, %s183, 6
      %s188 = smul.addr %s187, 4
      %s189 = smul.addr %s185, 28
      %s190 = sadd.s32 %s188, %s189
      %s191 = smul.addr %s190, 4
      %s192 = scalar_lea.vmem %s0, %s191
      %p193 = pneg %p49
      %p194 = pneg %p46
      %p195 = scmp.lt.s32.totalorder %s18, 1
      %s196 = scalar_select %p195, %s18, 1
      %s197 = smul.addr %s196, 64
      %s198 = smul.addr %s197, 4
      %s199 = scalar_lea.vmem %s1, %s198
      %p200 = pneg %p75
      %p201 = pneg %p72
      %p202 = scmp.lt.s32.totalorder %s18, 1
      %s203 = scalar_select %p202, %s18, 1
      %s204 = scalar_lea.vmem %s2, %s203
      %p205 = pneg %p101
      %p206 = pneg %p98
      %p207 = pneg %p129
      %p208 = pneg %p126
      %s209 = smul.u32 7, %s19
      %p210 = scmp.lt.s32.totalorder %s18, 1
      %s211 = scalar_select %p210, %s18, 1
      %p212 = scmp.lt.s32.totalorder %s209, 6
      %s213 = scalar_select %p212, %s209, 6
      %s214 = smul.addr %s211, 7
      %s215 = sadd.s32 %s213, %s214
      %s216 = smul.addr %s215, 4
      %s217 = scalar_lea.vmem %s3, %s216
      %s218 = smul.u32 7, %s19
      %p219 = scmp.lt.s32.totalorder %s18, 1
      %s220 = scalar_select %p219, %s18, 1
      %p221 = scmp.lt.s32.totalorder %s218, 6
      %s222 = scalar_select %p221, %s218, 6
      %s223 = smul.addr %s222, 4
      %s224 = smul.addr %s220, 28
      %s225 = sadd.s32 %s223, %s224
      %s226 = smul.addr %s225, 4
      %s227 = scalar_lea.vmem %s0, %s226
      %s228 = smul.u32 7, %s19
      %p229 = scmp.lt.s32.totalorder %s18, 1
      %s230 = scalar_select %p229, %s18, 1
      %s231 = smul.addr %s230, 64
      %s232 = smul.addr %s231, 4
      %s233 = scalar_lea.vmem %s1, %s232
      %p234 = scmp.lt.s32.totalorder %s18, 1
      %s235 = scalar_select %p234, %s18, 1
      %s236 = scalar_lea.vmem %s2, %s235
      %s237 = smul.u32 7, %s19
      %p238 = scmp.lt.s32.totalorder %s18, 1
      %s239 = scalar_select %p238, %s18, 1
      %p240 = scmp.lt.s32.totalorder %s237, 6
      %s241 = scalar_select %p240, %s237, 6
      %s242 = smul.addr %s239, 7
      %s243 = sadd.s32 %s241, %s242
      %s244 = smul.addr %s243, 4
      %s245 = scalar_lea.vmem %s3, %s244
      %s246 = smul.u32 7, %s19
      %v248 = vld [vmem:[%s227] sm:$0xff]
      %v249 = vld [vmem:[%s227 + $0x8] sm:$0xff]
      %v250 = vld [vmem:[%s227 + $0x10] sm:$0xff]
      %v251 = vld [vmem:[%s227 + $0x18] sm:$0xff]
      %v252 = vld [vmem:[%s227 + $0x20] sm:$0xff]
      %v253 = vld [vmem:[%s227 + $0x28] sm:$0xff]
      %v254 = vld [vmem:[%s227 + $0x30] sm:$0xff]
      %v255 = vld [vmem:[%s227 + $0x38] sm:$0xff]
      %v256 = vld [vmem:[%s227 + $0x40] sm:$0xff]
      %v257 = vld [vmem:[%s227 + $0x48] sm:$0xff]
      %v258 = vld [vmem:[%s227 + $0x50] sm:$0xff]
      %v259 = vld [vmem:[%s227 + $0x58] sm:$0xff]
      %v260 = vld [vmem:[%s227 + $0x60] sm:$0x11]
      %v261 = vld [vmem:[%s227 + $0x68] sm:$0x11]
      %v262 = vld [vmem:[%s233] sm:$0xf]
      %v263 = vld [vmem:[%s233 + $0x4] sm:$0xf]
      %v264 = vld [vmem:[%s233 + $0x8] sm:$0xf]
      %v265 = vld [vmem:[%s233 + $0xc] sm:$0xf]
      %v266 = vld [vmem:[%s233 + $0x10] sm:$0xf]
      %v267 = vld [vmem:[%s233 + $0x14] sm:$0xf]
      %v268 = vld [vmem:[%s233 + $0x18] sm:$0xf]
      %v269 = vld [vmem:[%s233 + $0x1c] sm:$0xf]
      %v270 = vld [vmem:[%s233 + $0x20] sm:$0xf]
      %v271 = vld [vmem:[%s233 + $0x24] sm:$0xf]
      %v272 = vld [vmem:[%s233 + $0x28] sm:$0xf]
      %v273 = vld [vmem:[%s233 + $0x2c] sm:$0xf]
      %v274 = vld [vmem:[%s233 + $0x30] sm:$0xf]
      %v275 = vld [vmem:[%s233 + $0x34] sm:$0xf]
      %v276 = vld [vmem:[%s233 + $0x38] sm:$0xf]
      %v277 = vld [vmem:[%s233 + $0x3c] sm:$0xf]
      %v278 = vld [vmem:[%s233 + $0x40] sm:$0xf]
      %v279 = vld [vmem:[%s233 + $0x44] sm:$0xf]
      %v280 = vld [vmem:[%s233 + $0x48] sm:$0xf]
      %v281 = vld [vmem:[%s233 + $0x4c] sm:$0xf]
      %v282 = vld [vmem:[%s233 + $0x50] sm:$0xf]
      %v283 = vld [vmem:[%s233 + $0x54] sm:$0xf]
      %v284 = vld [vmem:[%s233 + $0x58] sm:$0xf]
      %v285 = vld [vmem:[%s233 + $0x5c] sm:$0xf]
      %v286 = vld [vmem:[%s233 + $0x60] sm:$0xf]
      %v287 = vld [vmem:[%s233 + $0x64] sm:$0xf]
      %v288 = vld [vmem:[%s233 + $0x68] sm:$0xf]
      %v289 = vld [vmem:[%s233 + $0x6c] sm:$0xf]
      %v290 = vld [vmem:[%s233 + $0x70] sm:$0xf]
      %v291 = vld [vmem:[%s233 + $0x74] sm:$0xf]
      %v292 = vld [vmem:[%s233 + $0x78] sm:$0xf]
      %v293 = vld [vmem:[%s233 + $0x7c] sm:$0xf]
      %v294 = vld [vmem:[%s233 + $0x80] sm:$0xf]
      %v295 = vld [vmem:[%s233 + $0x84] sm:$0xf]
      %v296 = vld [vmem:[%s233 + $0x88] sm:$0xf]
      %v297 = vld [vmem:[%s233 + $0x8c] sm:$0xf]
      %v298 = vld [vmem:[%s233 + $0x90] sm:$0xf]
      %v299 = vld [vmem:[%s233 + $0x94] sm:$0xf]
      %v300 = vld [vmem:[%s233 + $0x98] sm:$0xf]
      %v301 = vld [vmem:[%s233 + $0x9c] sm:$0xf]
      %v302 = vld [vmem:[%s233 + $0xa0] sm:$0xf]
      %v303 = vld [vmem:[%s233 + $0xa4] sm:$0xf]
      %v304 = vld [vmem:[%s233 + $0xa8] sm:$0xf]
      %v305 = vld [vmem:[%s233 + $0xac] sm:$0xf]
      %v306 = vld [vmem:[%s233 + $0xb0] sm:$0xf]
      %v307 = vld [vmem:[%s233 + $0xb4] sm:$0xf]
      %v308 = vld [vmem:[%s233 + $0xb8] sm:$0xf]
      %v309 = vld [vmem:[%s233 + $0xbc] sm:$0xf]
      %v310 = vld [vmem:[%s233 + $0xc0] sm:$0xf]
      %v311 = vld [vmem:[%s233 + $0xc4] sm:$0xf]
      %v312 = vld [vmem:[%s233 + $0xc8] sm:$0xf]
      %v313 = vld [vmem:[%s233 + $0xcc] sm:$0xf]
      %v314 = vld [vmem:[%s233 + $0xd0] sm:$0xf]
      %v315 = vld [vmem:[%s233 + $0xd4] sm:$0xf]
      %v316 = vld [vmem:[%s233 + $0xd8] sm:$0xf]
      %v317 = vld [vmem:[%s233 + $0xdc] sm:$0xf]
      %v318 = vld [vmem:[%s233 + $0xe0] sm:$0xf]
      %v319 = vld [vmem:[%s233 + $0xe4] sm:$0xf]
      %v320 = vld [vmem:[%s233 + $0xe8] sm:$0xf]
      %v321 = vld [vmem:[%s233 + $0xec] sm:$0xf]
      %v322 = vld [vmem:[%s233 + $0xf0] sm:$0xf]
      %v323 = vld [vmem:[%s233 + $0xf4] sm:$0xf]
      %v324 = vld [vmem:[%s233 + $0xf8] sm:$0xf]
      %v325 = vld [vmem:[%s233 + $0xfc] sm:$0xf]
      %v326 = vld [vmem:[%s236] sm:$0x1]
      %v328 = vlaneseq
      %v329 = vshrl.u32 %v328, 7
      %v330 = vsub.s32 0, %v329
      %v331 = vrot.slane %v326, %v330
      %v347 = vunpack.c.l.b16 %v248
      %v348 = vunpack.c.h.b16 %v248
      %v349 = vunpack.c.l.b16 %v249
      %v350 = vunpack.c.h.b16 %v249
      %v351 = vunpack.c.l.b16 %v250
      %v352 = vunpack.c.h.b16 %v250
      %v353 = vunpack.c.l.b16 %v251
      %v354 = vunpack.c.h.b16 %v251
      %v355 = vunpack.c.l.b16 %v252
      %v356 = vunpack.c.h.b16 %v252
      %v357 = vunpack.c.l.b16 %v253
      %v358 = vunpack.c.h.b16 %v253
      %v359 = vunpack.c.l.b16 %v254
      %v360 = vunpack.c.h.b16 %v254
      %v361 = vunpack.c.l.b16 %v255
      %v362 = vunpack.c.h.b16 %v255
      %v363 = vunpack.c.l.b16 %v256
      %v364 = vunpack.c.h.b16 %v256
      %v365 = vunpack.c.l.b16 %v257
      %v366 = vunpack.c.h.b16 %v257
      %v367 = vunpack.c.l.b16 %v258
      %v368 = vunpack.c.h.b16 %v258
      %v369 = vunpack.c.l.b16 %v259
      %v370 = vunpack.c.h.b16 %v259
      %v371 = vunpack.c.l.b16 %v260
      %v372 = vunpack.c.h.b16 %v260
      %v373 = vunpack.c.l.b16 %v261
      %v374 = vunpack.c.h.b16 %v261
      %v375 = vpack.c.b16 %v351, %v347
      %v376 = vpack.c.b16 %v352, %v348
      %v377 = vpack.c.b16 %v353, %v349
      %v378 = vpack.c.b16 %v354, %v350
      %v379 = vpack.c.b16 %v359, %v355
      %v380 = vpack.c.b16 %v360, %v356
      %v381 = vpack.c.b16 %v361, %v357
      %v382 = vpack.c.b16 %v362, %v358
      %v383 = vpack.c.b16 %v367, %v363
      %v384 = vpack.c.b16 %v368, %v364
      %v385 = vpack.c.b16 %v369, %v365
      %v386 = vpack.c.b16 %v370, %v366
      %v387 = vpack.c.b16 %v371, %v371
      %v388 = vpack.c.b16 %v372, %v372
      %v389 = vpack.c.b16 %v373, %v373
      %v390 = vpack.c.b16 %v374, %v374
      %v471 = vunpack.c.l.b16 %v262
      %v472 = vunpack.c.l.b16 %v263
      %v473 = vunpack.c.l.b16 %v264
      %v474 = vunpack.c.l.b16 %v265
      %v475 = vunpack.c.l.b16 %v266
      %v476 = vunpack.c.l.b16 %v267
      %v477 = vunpack.c.l.b16 %v268
      %v478 = vunpack.c.l.b16 %v269
      %v479 = vunpack.c.l.b16 %v270
      %v480 = vunpack.c.l.b16 %v271
      %v481 = vunpack.c.l.b16 %v272
      %v482 = vunpack.c.l.b16 %v273
      %v483 = vunpack.c.l.b16 %v274
      %v484 = vunpack.c.l.b16 %v275
      %v485 = vunpack.c.l.b16 %v276
      %v486 = vunpack.c.l.b16 %v277
      %v487 = vunpack.c.l.b16 %v278
      %v488 = vunpack.c.l.b16 %v279
      %v489 = vunpack.c.l.b16 %v280
      %v490 = vunpack.c.l.b16 %v281
      %v491 = vunpack.c.l.b16 %v282
      %v492 = vunpack.c.l.b16 %v283
      %v493 = vunpack.c.l.b16 %v284
      %v494 = vunpack.c.l.b16 %v285
      %v495 = vunpack.c.l.b16 %v286
      %v496 = vunpack.c.l.b16 %v287
      %v497 = vunpack.c.l.b16 %v288
      %v498 = vunpack.c.l.b16 %v289
      %v499 = vunpack.c.l.b16 %v290
      %v500 = vunpack.c.l.b16 %v291
      %v501 = vunpack.c.l.b16 %v292
      %v502 = vunpack.c.l.b16 %v293
      %v503 = vunpack.c.l.b16 %v294
      %v504 = vunpack.c.l.b16 %v295
      %v505 = vunpack.c.l.b16 %v296
      %v506 = vunpack.c.l.b16 %v297
      %v507 = vunpack.c.l.b16 %v298
      %v508 = vunpack.c.l.b16 %v299
      %v509 = vunpack.c.l.b16 %v300
      %v510 = vunpack.c.l.b16 %v301
      %v511 = vunpack.c.l.b16 %v302
      %v512 = vunpack.c.l.b16 %v303
      %v513 = vunpack.c.l.b16 %v304
      %v514 = vunpack.c.l.b16 %v305
      %v515 = vunpack.c.l.b16 %v306
      %v516 = vunpack.c.l.b16 %v307
      %v517 = vunpack.c.l.b16 %v308
      %v518 = vunpack.c.l.b16 %v309
      %v519 = vunpack.c.l.b16 %v310
      %v520 = vunpack.c.l.b16 %v311
      %v521 = vunpack.c.l.b16 %v312
      %v522 = vunpack.c.l.b16 %v313
      %v523 = vunpack.c.l.b16 %v314
      %v524 = vunpack.c.l.b16 %v315
      %v525 = vunpack.c.l.b16 %v316
      %v526 = vunpack.c.l.b16 %v317
      %v527 = vunpack.c.l.b16 %v318
      %v528 = vunpack.c.l.b16 %v319
      %v529 = vunpack.c.l.b16 %v320
      %v530 = vunpack.c.l.b16 %v321
      %v531 = vunpack.c.l.b16 %v322
      %v532 = vunpack.c.l.b16 %v323
      %v533 = vunpack.c.l.b16 %v324
      %v534 = vunpack.c.l.b16 %v325
      %v535 = vpack.c.b16 %v472, %v471
      %v536 = vpack.c.b16 %v474, %v473
      %v537 = vpack.c.b16 %v476, %v475
      %v538 = vpack.c.b16 %v478, %v477
      %v539 = vpack.c.b16 %v480, %v479
      %v540 = vpack.c.b16 %v482, %v481
      %v541 = vpack.c.b16 %v484, %v483
      %v542 = vpack.c.b16 %v486, %v485
      %v543 = vpack.c.b16 %v488, %v487
      %v544 = vpack.c.b16 %v490, %v489
      %v545 = vpack.c.b16 %v492, %v491
      %v546 = vpack.c.b16 %v494, %v493
      %v547 = vpack.c.b16 %v496, %v495
      %v548 = vpack.c.b16 %v498, %v497
      %v549 = vpack.c.b16 %v500, %v499
      %v550 = vpack.c.b16 %v502, %v501
      %v551 = vpack.c.b16 %v504, %v503
      %v552 = vpack.c.b16 %v506, %v505
      %v553 = vpack.c.b16 %v508, %v507
      %v554 = vpack.c.b16 %v510, %v509
      %v555 = vpack.c.b16 %v512, %v511
      %v556 = vpack.c.b16 %v514, %v513
      %v557 = vpack.c.b16 %v516, %v515
      %v558 = vpack.c.b16 %v518, %v517
      %v559 = vpack.c.b16 %v520, %v519
      %v560 = vpack.c.b16 %v522, %v521
      %v561 = vpack.c.b16 %v524, %v523
      %v562 = vpack.c.b16 %v526, %v525
      %v563 = vpack.c.b16 %v528, %v527
      %v564 = vpack.c.b16 %v530, %v529
      %v565 = vpack.c.b16 %v532, %v531
      %v566 = vpack.c.b16 %v534, %v533
      %599 = vmatprep.subr.bf16.mxu0 0
      %600 = vmatpush1.bf16.msra.mxu0 %v542
      %601 = vmatprep.subr.bf16.mxu0 0
      %602 = vmatpush1.bf16.msra.mxu0 %v541
      %603 = vmatprep.subr.bf16.mxu0 0
      %604 = vmatpush1.bf16.msra.mxu0 %v540
      %605 = vmatprep.subr.bf16.mxu0 0
      %606 = vmatpush1.bf16.msra.mxu0 %v539
      %607 = vmatprep.subr.bf16.mxu0 0
      %608 = vmatpush1.bf16.msra.mxu0 %v538
      %609 = vmatprep.subr.bf16.mxu0 0
      %610 = vmatpush1.bf16.msra.mxu0 %v537
      %611 = vmatprep.subr.bf16.mxu0 0
      %612 = vmatpush1.bf16.msra.mxu0 %v536
      %613 = vmatprep.subr.bf16.mxu0 0
      %614 = vmatpush1.bf16.msra.mxu0 %v535
      %615 = vmatprep.subr.bf16.mxu0 0
      %616 = vmatpush2.bf16.msra.mxu0 %v550
      %617 = vmatprep.subr.bf16.mxu0 0
      %618 = vmatpush2.bf16.msra.mxu0 %v549
      %619 = vmatprep.subr.bf16.mxu0 0
      %620 = vmatpush2.bf16.msra.mxu0 %v548
      %621 = vmatprep.subr.bf16.mxu0 0
      %622 = vmatpush2.bf16.msra.mxu0 %v547
      %623 = vmatprep.subr.bf16.mxu0 0
      %624 = vmatpush2.bf16.msra.mxu0 %v546
      %625 = vmatprep.subr.bf16.mxu0 0
      %626 = vmatpush2.bf16.msra.mxu0 %v545
      %627 = vmatprep.subr.bf16.mxu0 0
      %628 = vmatpush2.bf16.msra.mxu0 %v544
      %629 = vmatprep.subr.bf16.mxu0 0
      %630 = vmatpush2.bf16.msra.mxu0 %v543
      %631 = vmatprep.mubr.bf16.mxu0 %v376
      %632 = vmatmul.mubr.bf16.gmra.mxu0 %v375
      %v633 = vpop.f32.mrf.mxu0
      %v634 = vadd.f32 %v331, %v633
      %v635 = vpop.f32.mrf.mxu0
      %v636 = vpop.f32.mrf.mxu0
      %v637 = vadd.f32 %v331, %v636
      %v638 = vpop.f32.mrf.mxu0
      %639 = vmatprep.mubr.bf16.mxu0 %v380
      %640 = vmatmul.mubr.bf16.gmra.mxu0 %v379
      %v641 = vpop.f32.mrf.mxu0
      %v642 = vadd.f32 %v331, %v641
      %v643 = vpop.f32.mrf.mxu0
      %v644 = vpop.f32.mrf.mxu0
      %v645 = vadd.f32 %v331, %v644
      %v646 = vpop.f32.mrf.mxu0
      %647 = vmatprep.mubr.bf16.mxu0 %v384
      %648 = vmatmul.mubr.bf16.gmra.mxu0 %v383
      %v649 = vpop.f32.mrf.mxu0
      %v650 = vadd.f32 %v331, %v649
      %v651 = vpop.f32.mrf.mxu0
      %v652 = vpop.f32.mrf.mxu0
      %v653 = vadd.f32 %v331, %v652
      %v654 = vpop.f32.mrf.mxu0
      %655 = vmatprep.mubr.bf16.mxu0 %v388
      %656 = vmatmul.mubr.bf16.gmra.mxu0 %v387
      %v657 = vpop.f32.mrf.mxu0
      %v658 = vadd.f32 %v331, %v657
      %v659 = vpop.f32.mrf.mxu0
      %v660 = vpop.f32.mrf.mxu0
      %v661 = vpop.f32.mrf.mxu0
      %662 = vdwg.mxu0
      %663 = vmatprep.subr.bf16.mxu0 0
      %664 = vmatpush1.bf16.msra.mxu0 %v558
      %665 = vmatprep.subr.bf16.mxu0 0
      %666 = vmatpush1.bf16.msra.mxu0 %v557
      %667 = vmatprep.subr.bf16.mxu0 0
      %668 = vmatpush1.bf16.msra.mxu0 %v556
      %669 = vmatprep.subr.bf16.mxu0 0
      %670 = vmatpush1.bf16.msra.mxu0 %v555
      %671 = vmatprep.subr.bf16.mxu0 0
      %672 = vmatpush1.bf16.msra.mxu0 %v554
      %673 = vmatprep.subr.bf16.mxu0 0
      %674 = vmatpush1.bf16.msra.mxu0 %v553
      %675 = vmatprep.subr.bf16.mxu0 0
      %676 = vmatpush1.bf16.msra.mxu0 %v552
      %677 = vmatprep.subr.bf16.mxu0 0
      %678 = vmatpush1.bf16.msra.mxu0 %v551
      %679 = vmatprep.subr.bf16.mxu0 0
      %680 = vmatpush2.bf16.msra.mxu0 %v566
      %681 = vmatprep.subr.bf16.mxu0 0
      %682 = vmatpush2.bf16.msra.mxu0 %v565
      %683 = vmatprep.subr.bf16.mxu0 0
      %684 = vmatpush2.bf16.msra.mxu0 %v564
      %685 = vmatprep.subr.bf16.mxu0 0
      %686 = vmatpush2.bf16.msra.mxu0 %v563
      %687 = vmatprep.subr.bf16.mxu0 0
      %688 = vmatpush2.bf16.msra.mxu0 %v562
      %689 = vmatprep.subr.bf16.mxu0 0
      %690 = vmatpush2.bf16.msra.mxu0 %v561
      %691 = vmatprep.subr.bf16.mxu0 0
      %692 = vmatpush2.bf16.msra.mxu0 %v560
      %693 = vmatprep.subr.bf16.mxu0 0
      %694 = vmatpush2.bf16.msra.mxu0 %v559
      %695 = vmatprep.mubr.bf16.mxu0 %v378
      %696 = vmatmul.mubr.bf16.gmra.mxu0 %v377
      %v697 = vpop.f32.mrf.mxu0
      %v698 = vadd.f32 %v634, %v697
      %v699 = vpop.f32.mrf.mxu0
      %v700 = vpop.f32.mrf.mxu0
      %v701 = vadd.f32 %v637, %v700
      %v702 = vpop.f32.mrf.mxu0
      %703 = vmatprep.mubr.bf16.mxu0 %v382
      %704 = vmatmul.mubr.bf16.gmra.mxu0 %v381
      %v705 = vpop.f32.mrf.mxu0
      %v706 = vadd.f32 %v642, %v705
      %v707 = vpop.f32.mrf.mxu0
      %v708 = vpop.f32.mrf.mxu0
      %v709 = vadd.f32 %v645, %v708
      %v710 = vpop.f32.mrf.mxu0
      %711 = vmatprep.mubr.bf16.mxu0 %v386
      %712 = vmatmul.mubr.bf16.gmra.mxu0 %v385
      %v713 = vpop.f32.mrf.mxu0
      %v714 = vadd.f32 %v650, %v713
      %v715 = vpop.f32.mrf.mxu0
      %v716 = vpop.f32.mrf.mxu0
      %v717 = vadd.f32 %v653, %v716
      %v718 = vpop.f32.mrf.mxu0
      %719 = vmatprep.mubr.bf16.mxu0 %v390
      %720 = vmatmul.mubr.bf16.gmra.mxu0 %v389
      %v721 = vpop.f32.mrf.mxu0
      %v722 = vadd.f32 %v658, %v721
      %v723 = vpop.f32.mrf.mxu0
      %v724 = vpop.f32.mrf.mxu0
      %v725 = vpop.f32.mrf.mxu0
      %726 = vdwg.mxu0
      %v727 = vmax.f32 %v698, 0.0
      %v728 = vmax.f32 %v701, 0.0
      %v729 = vmax.f32 %v706, 0.0
      %v730 = vmax.f32 %v709, 0.0
      %v731 = vmax.f32 %v714, 0.0
      %v732 = vmax.f32 %v717, 0.0
      %v733 = vmax.f32 %v722, 0.0
      %v734 = vpack.c.bf16 %v728, %v727
      %v735 = vpack.c.bf16 %v730, %v729
      %v736 = vpack.c.bf16 %v732, %v731
      %v737 = vpack.c.bf16 %v733, %v733
      %v742 = vunpack.c.l.b16 %v734
      %v743 = vunpack.c.h.b16 %v734
      %v744 = vunpack.c.l.b16 %v735
      %v745 = vunpack.c.h.b16 %v735
      %v746 = vunpack.c.l.b16 %v736
      %v747 = vunpack.c.h.b16 %v736
      %v748 = vunpack.c.l.b16 %v737
      %v749 = vpack.c.b16 %v742, %v742
      %v750 = vpack.c.b16 %v743, %v743
      %v751 = vpack.c.b16 %v744, %v744
      %v752 = vpack.c.b16 %v745, %v745
      %v753 = vpack.c.b16 %v746, %v746
      %v754 = vpack.c.b16 %v747, %v747
      %v755 = vpack.c.b16 %v748, %v748
      %vm763 = vcmask 519168
      %764 = vst.msk [vmem:[%s245] sm:$0xf] %vm763, %v749
      %765 = vst.msk [vmem:[%s245 + $0x4] sm:$0xf] %vm763, %v750
      %766 = vst.msk [vmem:[%s245 + $0x8] sm:$0xf] %vm763, %v751
      %767 = vst.msk [vmem:[%s245 + $0xc] sm:$0xf] %vm763, %v752
      %768 = vst.msk [vmem:[%s245 + $0x10] sm:$0xf] %vm763, %v753
      %769 = vst.msk [vmem:[%s245 + $0x14] sm:$0xf] %vm763, %v754
      %vm770 = vcmask 516096
      %771 = vst.msk [vmem:[%s245 + $0x18] sm:$0x1] %vm770, %v755
      %s772 = smul.u32 7, %s19
      %p773 = scmp.lt.s32.totalorder %s18, 1
      %s774 = scalar_select %p773, %s18, 1
      %p775 = scmp.lt.s32.totalorder %s772, 6
      %s776 = scalar_select %p775, %s772, 6
      %s777 = smul.addr %s774, 7
      %s778 = sadd.s32 %s776, %s777
      %s779 = smul.addr %s778, 4
      %s780 = scalar_lea.vmem %s3, %s779
      // Predicated region
      $region33: #{ensemble_forward.14} parent=31 // pred_check
        %p781 = pneg %p126
      $region34: #{ensemble_forward.14} parent=31 // pred_check_branch
        %783 = sbr.rel (%p781) target = $region36
      $region35: #{ensemble_forward.14} parent=31 // pred_region
        %s784 = smul.u32 7, %s19
      $region36: #{ensemble_forward.14} parent=31 // pred_fallthru
        _
    $region32: #{ensemble_forward.14} parent=5 // pred_fallthru
      _
    %p785 = scmp.le.s32.totalorder 2, %s9
    // Predicated region
    $region37: #{ensemble_forward.14} parent=5 // pred_check
      %p786 = pneg %p785
    $region38: #{ensemble_forward.14} parent=5 // pred_check_branch
      %788 = sbr.rel (%p786) target = $region40
    $region39: #{ensemble_forward.14} parent=5 // pred_region
      %s789 = ssub.s32 %s9, 2
      // Predicated region
      $region41: #{ensemble_forward.14} parent=39 // pred_check
        %p790 = pneg %p132
      $region42: #{ensemble_forward.14} parent=39 // pred_check_branch
        %792 = sbr.rel (%p790) target = $region44
      $region43: #{ensemble_forward.14} parent=39 // pred_region
        %s793 = smul.u32 7, %s21
        %p794 = scmp.lt.s32.totalorder %s20, 1
        %s795 = scalar_select %p794, %s20, 1
        %p796 = scmp.lt.s32.totalorder %s793, 6
        %s797 = scalar_select %p796, %s793, 6
        %s798 = smul.addr %s795, 7
        %s799 = sadd.s32 %s797, %s798
        %s800 = smul.addr %s799, 4
        %s801 = scalar_lea.vmem %s3, %s800
      $region44: #{ensemble_forward.14} parent=39 // pred_fallthru
        _
    $region40: #{ensemble_forward.14} parent=5 // pred_fallthru
      _
  $region6: #{ensemble_forward.14} parent=0 // loop_footer
    %s13 = sadd.s32 1, %s9
  $region7: #{ensemble_forward.14} parent=0 // loop_footer_branch
    %8 = sbr.rel target = $region3
  $region8: #{ensemble_forward.14} parent=0 // loop_exit
    _

// kernel: ensemble_forward.15
$region0: #{ensemble_forward.15}
  #allocation0 [shape = 'u32[]', space=smem, size = 0x4, offset = 0x4, fixed_abs, tag = 'smem constant byte address 0x4 - core index']
  #allocation1 [shape = 'u32[144,128]{1,0:T(1,128)}', space=vmem, size = 0x12000, scoped, tag = 'internal scratch']
  %s0 = inlined_call_operand.vmem [shape: bf16[2,18,576], index: 0, kind: input, shape index: {}]
  %s1 = inlined_call_operand.vmem [shape: bf16[2,576,64], index: 1, kind: input, shape index: {}]
  %s2 = inlined_call_operand.vmem [shape: f32[2,1,64], index: 2, kind: input, shape index: {}]
  %s3 = inlined_call_operand.vmem [shape: bf16[2,18,64], index: 3, kind: output, shape index: {}]
  %s4 = sld [smem:[#allocation0]]
  $region45: #{ensemble_forward.15} parent=0
    _
  %s6 = ssub.s32 1, %s4
  %s7 = scalar_select 0, %s6, %s4
  loop: start=0, step=1, limit=4
  $region2: #{ensemble_forward.15} parent=0 // loop_pre_header
    _
  $region3: #{ensemble_forward.15} parent=0 // loop_header
    %s9 = sphi 0, %s13
    %p10 = scmp.ge.s32.totalorder %s9, 4
    %s16 = sphi 0, %s28
    %s17 = sphi 0, %s24
    %s18 = sphi 0, %s16
    %s19 = sphi 0, %s17
    %s20 = sphi 0, %s18
    %s21 = sphi 0, %s19
    %s33 = sphi 0, %s35
    %s36 = sphi 0, %s33
    %s37 = sphi 0, %s36
    %s53 = sphi 0, %s37
    %s59 = sphi 0, %s61
    %s62 = sphi 0, %s59
    %s63 = sphi 0, %s62
    %s79 = sphi 0, %s63
    %s85 = sphi 0, %s87
    %s88 = sphi 0, %s85
    %s89 = sphi 0, %s88
    %s105 = sphi 0, %s89
    %s113 = sphi 0, %s115
    %s116 = sphi 0, %s113
    %s117 = sphi 0, %s116
    %s133 = sphi 0, %s117
  $region4: #{ensemble_forward.15} parent=0 // loop_header_branch
    %12 = sbr.rel (%p10) target = $region8
  $region5: #{ensemble_forward.15} parent=0 // loop_body
    %s14 = ssub.s32 %s9, 1
    %s15 = ssub.s32 %s9, 2
    %s22 = sadd.s32 1, %s17
    %p23 = scmp.ge.s32.totalorder %s22, 1
    %s24 = scalar_select %p23, 0, %s22
    %s25 = sadd.s32 1, %s16
    %s26 = scalar_select %p23, %s25, %s16
    %p27 = scmp.ge.s32.totalorder %s26, 2
    %s28 = scalar_select %p27, 0, %s26
    %s29 = ssub.s32 %s16, %s28
    %s30 = ssub.s32 %s17, %s24
    %s31 = sor.u32 %s29, %s30
    %p32 = scmp.eq.s32.totalorder %s31, 0
    %s34 = sadd.s32 %s33, 1
    %s35 = scalar_select %p32, %s33, %s34
    %p38 = pneg %p32
    %p39 = scmp.eq.s32.totalorder %s9, 1
    %p40 = por %p38, %p39
    %p41 = scmp.ne.s32.totalorder %s33, %s36
    %p42 = scmp.eq.s32.totalorder %s9, 0
    %p43 = por %p41, %p42
    %p44 = scmp.ne.s32.totalorder %s33, %s36
    %p45 = scmp.eq.s32.totalorder %s14, 1
    %p46 = por %p44, %p45
    %p47 = scmp.ne.s32.totalorder %s36, %s37
    %p48 = scmp.eq.s32.totalorder %s14, 0
    %p49 = por %p47, %p48
    %p50 = scmp.ne.s32.totalorder %s36, %s37
    %p51 = scmp.eq.s32.totalorder %s15, 1
    %p52 = por %p50, %p51
    %p54 = scmp.ne.s32.totalorder %s37, %s53
    %p55 = scmp.eq.s32.totalorder %s15, 0
    %p56 = por %p54, %p55
    %s57 = ssub.s32 %s16, %s28
    %p58 = scmp.eq.s32.totalorder %s57, 0
    %s60 = sadd.s32 %s59, 1
    %s61 = scalar_select %p58, %s59, %s60
    %p64 = pneg %p58
    %p65 = scmp.eq.s32.totalorder %s9, 1
    %p66 = por %p64, %p65
    %p67 = scmp.ne.s32.totalorder %s59, %s62
    %p68 = scmp.eq.s32.totalorder %s9, 0
    %p69 = por %p67, %p68
    %p70 = scmp.ne.s32.totalorder %s59, %s62
    %p71 = scmp.eq.s32.totalorder %s14, 1
    %p72 = por %p70, %p71
    %p73 = scmp.ne.s32.totalorder %s62, %s63
    %p74 = scmp.eq.s32.totalorder %s14, 0
    %p75 = por %p73, %p74
    %p76 = scmp.ne.s32.totalorder %s62, %s63
    %p77 = scmp.eq.s32.totalorder %s15, 1
    %p78 = por %p76, %p77
    %p80 = scmp.ne.s32.totalorder %s63, %s79
    %p81 = scmp.eq.s32.totalorder %s15, 0
    %p82 = por %p80, %p81
    %s83 = ssub.s32 %s16, %s28
    %p84 = scmp.eq.s32.totalorder %s83, 0
    %s86 = sadd.s32 %s85, 1
    %s87 = scalar_select %p84, %s85, %s86
    %p90 = pneg %p84
    %p91 = scmp.eq.s32.totalorder %s9, 1
    %p92 = por %p90, %p91
    %p93 = scmp.ne.s32.totalorder %s85, %s88
    %p94 = scmp.eq.s32.totalorder %s9, 0
    %p95 = por %p93, %p94
    %p96 = scmp.ne.s32.totalorder %s85, %s88
    %p97 = scmp.eq.s32.totalorder %s14, 1
    %p98 = por %p96, %p97
    %p99 = scmp.ne.s32.totalorder %s88, %s89
    %p100 = scmp.eq.s32.totalorder %s14, 0
    %p101 = por %p99, %p100
    %p102 = scmp.ne.s32.totalorder %s88, %s89
    %p103 = scmp.eq.s32.totalorder %s15, 1
    %p104 = por %p102, %p103
    %p106 = scmp.ne.s32.totalorder %s89, %s105
    %p107 = scmp.eq.s32.totalorder %s15, 0
    %p108 = por %p106, %p107
    %s109 = ssub.s32 %s16, %s28
    %s110 = ssub.s32 %s17, %s24
    %s111 = sor.u32 %s109, %s110
    %p112 = scmp.eq.s32.totalorder %s111, 0
    %s114 = sadd.s32 %s113, 1
    %s115 = scalar_select %p112, %s113, %s114
    %p118 = pneg %p112
    %p119 = scmp.eq.s32.totalorder %s9, 1
    %p120 = por %p118, %p119
    %p121 = scmp.ne.s32.totalorder %s113, %s116
    %p122 = scmp.eq.s32.totalorder %s9, 0
    %p123 = por %p121, %p122
    %p124 = scmp.ne.s32.totalorder %s113, %s116
    %p125 = scmp.eq.s32.totalorder %s14, 1
    %p126 = por %p124, %p125
    %p127 = scmp.ne.s32.totalorder %s116, %s117
    %p128 = scmp.eq.s32.totalorder %s14, 0
    %p129 = por %p127, %p128
    %p130 = scmp.ne.s32.totalorder %s116, %s117
    %p131 = scmp.eq.s32.totalorder %s15, 1
    %p132 = por %p130, %p131
    %p134 = scmp.ne.s32.totalorder %s117, %s133
    %p135 = scmp.eq.s32.totalorder %s15, 0
    %p136 = por %p134, %p135
    %p137 = scmp.le.s32.totalorder 1, %s9
    %p138 = scmp.lt.s32.totalorder %s9, 3
    %p139 = pnand %p137, %p138
    %p140 = pneg %p139
    // Predicated region
    $region9: #{ensemble_forward.15} parent=5 // pred_check
      _
    $region10: #{ensemble_forward.15} parent=5 // pred_check_branch
      %142 = sbr.rel (%p139) target = $region12
    $region11: #{ensemble_forward.15} parent=5 // pred_region
      %s143 = ssub.s32 %s9, 1
    $region12: #{ensemble_forward.15} parent=5 // pred_fallthru
      _
    %p144 = scmp.lt.s32.totalorder %s9, 2
    // Predicated region
    $region13: #{ensemble_forward.15} parent=5 // pred_check
      %p145 = pneg %p144
    $region14: #{ensemble_forward.15} parent=5 // pred_check_branch
      %147 = sbr.rel (%p145) target = $region16
    $region15: #{ensemble_forward.15} parent=5 // pred_region
      // Predicated region
      $region17: #{ensemble_forward.15} parent=15 // pred_check
        %p148 = pneg %p43
      $region18: #{ensemble_forward.15} parent=15 // pred_check_branch
        %150 = sbr.rel (%p148) target = $region20
      $region19: #{ensemble_forward.15} parent=15 // pred_region
        %s151 = smul.u32 3, %s17
        %p152 = scmp.lt.s32.totalorder %s16, 1
        %s153 = scalar_select %p152, %s16, 1
        %p154 = scmp.lt.s32.totalorder %s151, 2
        %s155 = scalar_select %p154, %s151, 2
        %s156 = smul.addr %s155, 5
        %s157 = smul.addr %s153, 15
        %s158 = sadd.s32 %s156, %s157
        %s159 = smul.addr %s158, 4
        %s160 = scalar_lea.vmem %s0, %s159
        %s161 = smul.u32 3, %s17
      $region20: #{ensemble_forward.15} parent=15 // pred_fallthru
        _
      // Predicated region
      $region21: #{ensemble_forward.15} parent=15 // pred_check
        %p162 = pneg %p69
      $region22: #{ensemble_forward.15} parent=15 // pred_check_branch
        %164 = sbr.rel (%p162) target = $region24
      $region23: #{ensemble_forward.15} parent=15 // pred_region
        %p165 = scmp.lt.s32.totalorder %s16, 1
        %s166 = scalar_select %p165, %s16, 1
        %s167 = smul.addr %s166, 72
        %s168 = smul.addr %s167, 4
        %s169 = scalar_lea.vmem %s1, %s168
      $region24: #{ensemble_forward.15} parent=15 // pred_fallthru
        _
      // Predicated region
      $region25: #{ensemble_forward.15} parent=15 // pred_check
        %p170 = pneg %p95
      $region26: #{ensemble_forward.15} parent=15 // pred_check_branch
        %172 = sbr.rel (%p170) target = $region28
      $region27: #{ensemble_forward.15} parent=15 // pred_region
        %p173 = scmp.lt.s32.totalorder %s16, 1
        %s174 = scalar_select %p173, %s16, 1
        %s175 = scalar_lea.vmem %s2, %s174
      $region28: #{ensemble_forward.15} parent=15 // pred_fallthru
        _
    $region16: #{ensemble_forward.15} parent=5 // pred_fallthru
      _
    %p176 = scmp.le.s32.totalorder 1, %s9
    %p177 = scmp.lt.s32.totalorder %s9, 3
    %p178 = pnand %p176, %p177
    %p179 = pneg %p178
    // Predicated region
    $region29: #{ensemble_forward.15} parent=5 // pred_check
      _
    $region30: #{ensemble_forward.15} parent=5 // pred_check_branch
      %181 = sbr.rel (%p178) target = $region32
    $region31: #{ensemble_forward.15} parent=5 // pred_region
      %s182 = ssub.s32 %s9, 1
      %s183 = smul.u32 3, %s19
      %p184 = scmp.lt.s32.totalorder %s18, 1
      %s185 = scalar_select %p184, %s18, 1
      %p186 = scmp.lt.s32.totalorder %s183, 2
      %s187 = scalar_select %p186, %s183, 2
      %s188 = smul.addr %s187, 5
      %s189 = smul.addr %s185, 15
      %s190 = sadd.s32 %s188, %s189
      %s191 = smul.addr %s190, 4
      %s192 = scalar_lea.vmem %s0, %s191
      %p193 = pneg %p49
      %p194 = pneg %p46
      %p195 = scmp.lt.s32.totalorder %s18, 1
      %s196 = scalar_select %p195, %s18, 1
      %s197 = smul.addr %s196, 72
      %s198 = smul.addr %s197, 4
      %s199 = scalar_lea.vmem %s1, %s198
      %p200 = pneg %p75
      %p201 = pneg %p72
      %p202 = scmp.lt.s32.totalorder %s18, 1
      %s203 = scalar_select %p202, %s18, 1
      %s204 = scalar_lea.vmem %s2, %s203
      %p205 = pneg %p101
      %p206 = pneg %p98
      %p207 = pneg %p129
      %p208 = pneg %p126
      %s209 = smul.u32 3, %s19
      %p210 = scmp.lt.s32.totalorder %s18, 1
      %s211 = scalar_select %p210, %s18, 1
      %p212 = scmp.lt.s32.totalorder %s209, 2
      %s213 = scalar_select %p212, %s209, 2
      %s214 = smul.addr %s211, 3
      %s215 = sadd.s32 %s213, %s214
      %s216 = smul.addr %s215, 4
      %s217 = scalar_lea.vmem %s3, %s216
      %s218 = smul.u32 3, %s19
      %p219 = scmp.lt.s32.totalorder %s18, 1
      %s220 = scalar_select %p219, %s18, 1
      %p221 = scmp.lt.s32.totalorder %s218, 2
      %s222 = scalar_select %p221, %s218, 2
      %s223 = smul.addr %s222, 5
      %s224 = smul.addr %s220, 15
      %s225 = sadd.s32 %s223, %s224
      %s226 = smul.addr %s225, 4
      %s227 = scalar_lea.vmem %s0, %s226
      %s228 = smul.u32 3, %s19
      %p229 = scmp.lt.s32.totalorder %s18, 1
      %s230 = scalar_select %p229, %s18, 1
      %s231 = smul.addr %s230, 72
      %s232 = smul.addr %s231, 4
      %s233 = scalar_lea.vmem %s1, %s232
      %p234 = scmp.lt.s32.totalorder %s18, 1
      %s235 = scalar_select %p234, %s18, 1
      %s236 = scalar_lea.vmem %s2, %s235
      %s237 = smul.u32 3, %s19
      %p238 = scmp.lt.s32.totalorder %s18, 1
      %s239 = scalar_select %p238, %s18, 1
      %p240 = scmp.lt.s32.totalorder %s237, 2
      %s241 = scalar_select %p240, %s237, 2
      %s242 = smul.addr %s239, 3
      %s243 = sadd.s32 %s241, %s242
      %s244 = smul.addr %s243, 4
      %s245 = scalar_lea.vmem %s3, %s244
      %s246 = smul.u32 3, %s19
      %v248 = vld [vmem:[%s227] sm:$0xff]
      %v249 = vld [vmem:[%s227 + $0x8] sm:$0xff]
      %v250 = vld [vmem:[%s227 + $0x10] sm:$0xf]
      %v251 = vld [vmem:[%s227 + $0x14] sm:$0xff]
      %v252 = vld [vmem:[%s227 + $0x1c] sm:$0xff]
      %v253 = vld [vmem:[%s227 + $0x24] sm:$0xf]
      %v254 = vld [vmem:[%s227 + $0x28] sm:$0x11]
      %v255 = vld [vmem:[%s227 + $0x30] sm:$0x11]
      %v256 = vld [vmem:[%s227 + $0x38] sm:$0x1]
      %v257 = vld [vmem:[%s233] sm:$0xf]
      %v258 = vld [vmem:[%s233 + $0x4] sm:$0xf]
      %v259 = vld [vmem:[%s233 + $0x8] sm:$0xf]
      %v260 = vld [vmem:[%s233 + $0xc] sm:$0xf]
      %v261 = vld [vmem:[%s233 + $0x10] sm:$0xf]
      %v262 = vld [vmem:[%s233 + $0x14] sm:$0xf]
      %v263 = vld [vmem:[%s233 + $0x18] sm:$0xf]
      %v264 = vld [vmem:[%s233 + $0x1c] sm:$0xf]
      %v265 = vld [vmem:[%s233 + $0x20] sm:$0xf]
      %v266 = vld [vmem:[%s233 + $0x24] sm:$0xf]
      %v267 = vld [vmem:[%s233 + $0x28] sm:$0xf]
      %v268 = vld [vmem:[%s233 + $0x2c] sm:$0xf]
      %v269 = vld [vmem:[%s233 + $0x30] sm:$0xf]
      %v270 = vld [vmem:[%s233 + $0x34] sm:$0xf]
      %v271 = vld [vmem:[%s233 + $0x38] sm:$0xf]
      %v272 = vld [vmem:[%s233 + $0x3c] sm:$0xf]
      %v273 = vld [vmem:[%s233 + $0x40] sm:$0xf]
      %v274 = vld [vmem:[%s233 + $0x44] sm:$0xf]
      %v275 = vld [vmem:[%s233 + $0x48] sm:$0xf]
      %v276 = vld [vmem:[%s233 + $0x4c] sm:$0xf]
      %v277 = vld [vmem:[%s233 + $0x50] sm:$0xf]
      %v278 = vld [vmem:[%s233 + $0x54] sm:$0xf]
      %v279 = vld [vmem:[%s233 + $0x58] sm:$0xf]
      %v280 = vld [vmem:[%s233 + $0x5c] sm:$0xf]
      %v281 = vld [vmem:[%s233 + $0x60] sm:$0xf]
      %v282 = vld [vmem:[%s233 + $0x64] sm:$0xf]
      %v283 = vld [vmem:[%s233 + $0x68] sm:$0xf]
      %v284 = vld [vmem:[%s233 + $0x6c] sm:$0xf]
      %v285 = vld [vmem:[%s233 + $0x70] sm:$0xf]
      %v286 = vld [vmem:[%s233 + $0x74] sm:$0xf]
      %v287 = vld [vmem:[%s233 + $0x78] sm:$0xf]
      %v288 = vld [vmem:[%s233 + $0x7c] sm:$0xf]
      %v289 = vld [vmem:[%s233 + $0x80] sm:$0xf]
      %v290 = vld [vmem:[%s233 + $0x84] sm:$0xf]
      %v291 = vld [vmem:[%s233 + $0x88] sm:$0xf]
      %v292 = vld [vmem:[%s233 + $0x8c] sm:$0xf]
      %v293 = vld [vmem:[%s233 + $0x90] sm:$0xf]
      %v294 = vld [vmem:[%s233 + $0x94] sm:$0xf]
      %v295 = vld [vmem:[%s233 + $0x98] sm:$0xf]
      %v296 = vld [vmem:[%s233 + $0x9c] sm:$0xf]
      %v297 = vld [vmem:[%s233 + $0xa0] sm:$0xf]
      %v298 = vld [vmem:[%s233 + $0xa4] sm:$0xf]
      %v299 = vld [vmem:[%s233 + $0xa8] sm:$0xf]
      %v300 = vld [vmem:[%s233 + $0xac] sm:$0xf]
      %v301 = vld [vmem:[%s233 + $0xb0] sm:$0xf]
      %v302 = vld [vmem:[%s233 + $0xb4] sm:$0xf]
      %v303 = vld [vmem:[%s233 + $0xb8] sm:$0xf]
      %v304 = vld [vmem:[%s233 + $0xbc] sm:$0xf]
      %v305 = vld [vmem:[%s233 + $0xc0] sm:$0xf]
      %v306 = vld [vmem:[%s233 + $0xc4] sm:$0xf]
      %v307 = vld [vmem:[%s233 + $0xc8] sm:$0xf]
      %v308 = vld [vmem:[%s233 + $0xcc] sm:$0xf]
      %v309 = vld [vmem:[%s233 + $0xd0] sm:$0xf]
      %v310 = vld [vmem:[%s233 + $0xd4] sm:$0xf]
      %v311 = vld [vmem:[%s233 + $0xd8] sm:$0xf]
      %v312 = vld [vmem:[%s233 + $0xdc] sm:$0xf]
      %v313 = vld [vmem:[%s233 + $0xe0] sm:$0xf]
      %v314 = vld [vmem:[%s233 + $0xe4] sm:$0xf]
      %v315 = vld [vmem:[%s233 + $0xe8] sm:$0xf]
      %v316 = vld [vmem:[%s233 + $0xec] sm:$0xf]
      %v317 = vld [vmem:[%s233 + $0xf0] sm:$0xf]
      %v318 = vld [vmem:[%s233 + $0xf4] sm:$0xf]
      %v319 = vld [vmem:[%s233 + $0xf8] sm:$0xf]
      %v320 = vld [vmem:[%s233 + $0xfc] sm:$0xf]
      %v321 = vld [vmem:[%s233 + $0x100] sm:$0xf]
      %v322 = vld [vmem:[%s233 + $0x104] sm:$0xf]
      %v323 = vld [vmem:[%s233 + $0x108] sm:$0xf]
      %v324 = vld [vmem:[%s233 + $0x10c] sm:$0xf]
      %v325 = vld [vmem:[%s233 + $0x110] sm:$0xf]
      %v326 = vld [vmem:[%s233 + $0x114] sm:$0xf]
      %v327 = vld [vmem:[%s233 + $0x118] sm:$0xf]
      %v328 = vld [vmem:[%s233 + $0x11c] sm:$0xf]
      %v329 = vld [vmem:[%s236] sm:$0x1]
      %v331 = vlaneseq
      %v332 = vshrl.u32 %v331, 7
      %v333 = vsub.s32 0, %v332
      %v334 = vrot.slane %v329, %v333
      %v345 = vunpack.c.l.b16 %v248
      %v346 = vunpack.c.h.b16 %v248
      %v347 = vunpack.c.l.b16 %v249
      %v348 = vunpack.c.h.b16 %v249
      %v349 = vunpack.c.l.b16 %v250
      %v350 = vunpack.c.l.b16 %v251
      %v351 = vunpack.c.h.b16 %v251
      %v352 = vunpack.c.l.b16 %v252
      %v353 = vunpack.c.h.b16 %v252
      %v354 = vunpack.c.l.b16 %v253
      %v355 = vunpack.c.l.b16 %v254
      %v356 = vunpack.c.h.b16 %v254
      %v357 = vunpack.c.l.b16 %v255
      %v358 = vunpack.c.h.b16 %v255
      %v359 = vunpack.c.l.b16 %v256
      %v360 = vpack.c.b16 %v350, %v345
      %v361 = vpack.c.b16 %v351, %v346
      %v362 = vpack.c.b16 %v352, %v347
      %v363 = vpack.c.b16 %v353, %v348
      %v364 = vpack.c.b16 %v354, %v349
      %v365 = vpack.c.b16 %v355, %v355
      %v366 = vpack.c.b16 %v356, %v356
      %v367 = vpack.c.b16 %v357, %v357
      %v368 = vpack.c.b16 %v358, %v358
      %v369 = vpack.c.b16 %v359, %v359
      %v450 = vunpack.c.l.b16 %v257
      %v451 = vunpack.c.l.b16 %v258
      %v452 = vunpack.c.l.b16 %v259
      %v453 = vunpack.c.l.b16 %v260
      %v454 = vunpack.c.l.b16 %v261
      %v455 = vunpack.c.l.b16 %v262
      %v456 = vunpack.c.l.b16 %v263
      %v457 = vunpack.c.l.b16 %v264
      %v458 = vunpack.c.l.b16 %v265
      %v459 = vunpack.c.l.b16 %v266
      %v460 = vunpack.c.l.b16 %v267
      %v461 = vunpack.c.l.b16 %v268
      %v462 = vunpack.c.l.b16 %v269
      %v463 = vunpack.c.l.b16 %v270
      %v464 = vunpack.c.l.b16 %v271
      %v465 = vunpack.c.l.b16 %v272
      %v466 = vunpack.c.l.b16 %v273
      %v467 = vunpack.c.l.b16 %v274
      %v468 = vunpack.c.l.b16 %v275
      %v469 = vunpack.c.l.b16 %v276
      %v470 = vunpack.c.l.b16 %v277
      %v471 = vunpack.c.l.b16 %v278
      %v472 = vunpack.c.l.b16 %v279
      %v473 = vunpack.c.l.b16 %v280
      %v474 = vunpack.c.l.b16 %v281
      %v475 = vunpack.c.l.b16 %v282
      %v476 = vunpack.c.l.b16 %v283
      %v477 = vunpack.c.l.b16 %v284
      %v478 = vunpack.c.l.b16 %v285
      %v479 = vunpack.c.l.b16 %v286
      %v480 = vunpack.c.l.b16 %v287
      %v481 = vunpack.c.l.b16 %v288
      %v482 = vunpack.c.l.b16 %v289
      %v483 = vunpack.c.l.b16 %v290
      %v484 = vunpack.c.l.b16 %v291
      %v485 = vunpack.c.l.b16 %v292
      %v486 = vunpack.c.l.b16 %v293
      %v487 = vunpack.c.l.b16 %v294
      %v488 = vunpack.c.l.b16 %v295
      %v489 = vunpack.c.l.b16 %v296
      %v490 = vunpack.c.l.b16 %v297
      %v491 = vunpack.c.l.b16 %v298
      %v492 = vunpack.c.l.b16 %v299
      %v493 = vunpack.c.l.b16 %v300
      %v494 = vunpack.c.l.b16 %v301
      %v495 = vunpack.c.l.b16 %v302
      %v496 = vunpack.c.l.b16 %v303
      %v497 = vunpack.c.l.b16 %v304
      %v498 = vunpack.c.l.b16 %v305
      %v499 = vunpack.c.l.b16 %v306
      %v500 = vunpack.c.l.b16 %v307
      %v501 = vunpack.c.l.b16 %v308
      %v502 = vunpack.c.l.b16 %v309
      %v503 = vunpack.c.l.b16 %v310
      %v504 = vunpack.c.l.b16 %v311
      %v505 = vunpack.c.l.b16 %v312
      %v506 = vunpack.c.l.b16 %v313
      %v507 = vunpack.c.l.b16 %v314
      %v508 = vunpack.c.l.b16 %v315
      %v509 = vunpack.c.l.b16 %v316
      %v510 = vunpack.c.l.b16 %v317
      %v511 = vunpack.c.l.b16 %v318
      %v512 = vunpack.c.l.b16 %v319
      %v513 = vunpack.c.l.b16 %v320
      %v514 = vunpack.c.l.b16 %v321
      %v515 = vunpack.c.l.b16 %v322
      %v516 = vunpack.c.l.b16 %v323
      %v517 = vunpack.c.l.b16 %v324
      %v518 = vunpack.c.l.b16 %v325
      %v519 = vunpack.c.l.b16 %v326
      %v520 = vunpack.c.l.b16 %v327
      %v521 = vunpack.c.l.b16 %v328
      %v522 = vpack.c.b16 %v451, %v450
      %v523 = vpack.c.b16 %v453, %v452
      %v524 = vpack.c.b16 %v455, %v454
      %v525 = vpack.c.b16 %v457, %v456
      %v526 = vpack.c.b16 %v459, %v458
      %v527 = vpack.c.b16 %v461, %v460
      %v528 = vpack.c.b16 %v463, %v462
      %v529 = vpack.c.b16 %v465, %v464
      %v530 = vpack.c.b16 %v467, %v466
      %v531 = vpack.c.b16 %v469, %v468
      %v532 = vpack.c.b16 %v471, %v470
      %v533 = vpack.c.b16 %v473, %v472
      %v534 = vpack.c.b16 %v475, %v474
      %v535 = vpack.c.b16 %v477, %v476
      %v536 = vpack.c.b16 %v479, %v478
      %v537 = vpack.c.b16 %v481, %v480
      %v538 = vpack.c.b16 %v483, %v482
      %v539 = vpack.c.b16 %v485, %v484
      %v540 = vpack.c.b16 %v487, %v486
      %v541 = vpack.c.b16 %v489, %v488
      %v542 = vpack.c.b16 %v491, %v490
      %v543 = vpack.c.b16 %v493, %v492
      %v544 = vpack.c.b16 %v495, %v494
      %v545 = vpack.c.b16 %v497, %v496
      %v546 = vpack.c.b16 %v499, %v498
      %v547 = vpack.c.b16 %v501, %v500
      %v548 = vpack.c.b16 %v503, %v502
      %v549 = vpack.c.b16 %v505, %v504
      %v550 = vpack.c.b16 %v507, %v506
      %v551 = vpack.c.b16 %v509, %v508
      %v552 = vpack.c.b16 %v511, %v510
      %v553 = vpack.c.b16 %v513, %v512
      %v554 = vpack.c.b16 %v515, %v514
      %v555 = vpack.c.b16 %v517, %v516
      %v556 = vpack.c.b16 %v519, %v518
      %v557 = vpack.c.b16 %v521, %v520
      %vm594 = vcmask 523264
      %v596 = vsel %vm594, %v364, 0
      %v599 = vsel %vm594, %v369, 0
      %601 = vmatprep.subr.bf16.mxu0 0
      %602 = vmatpush1.bf16.msra.mxu0 %v529
      %603 = vmatprep.subr.bf16.mxu0 0
      %604 = vmatpush1.bf16.msra.mxu0 %v528
      %605 = vmatprep.subr.bf16.mxu0 0
      %606 = vmatpush1.bf16.msra.mxu0 %v527
      %607 = vmatprep.subr.bf16.mxu0 0
      %608 = vmatpush1.bf16.msra.mxu0 %v526
      %609 = vmatprep.subr.bf16.mxu0 0
      %610 = vmatpush1.bf16.msra.mxu0 %v525
      %611 = vmatprep.subr.bf16.mxu0 0
      %612 = vmatpush1.bf16.msra.mxu0 %v524
      %613 = vmatprep.subr.bf16.mxu0 0
      %614 = vmatpush1.bf16.msra.mxu0 %v523
      %615 = vmatprep.subr.bf16.mxu0 0
      %616 = vmatpush1.bf16.msra.mxu0 %v522
      %617 = vmatprep.subr.bf16.mxu0 0
      %618 = vmatpush2.bf16.msra.mxu0 %v537
      %619 = vmatprep.subr.bf16.mxu0 0
      %620 = vmatpush2.bf16.msra.mxu0 %v536
      %621 = vmatprep.subr.bf16.mxu0 0
      %622 = vmatpush2.bf16.msra.mxu0 %v535
      %623 = vmatprep.subr.bf16.mxu0 0
      %624 = vmatpush2.bf16.msra.mxu0 %v534
      %625 = vmatprep.subr.bf16.mxu0 0
      %626 = vmatpush2.bf16.msra.mxu0 %v533
      %627 = vmatprep.subr.bf16.mxu0 0
      %628 = vmatpush2.bf16.msra.mxu0 %v532
      %629 = vmatprep.subr.bf16.mxu0 0
      %630 = vmatpush2.bf16.msra.mxu0 %v531
      %631 = vmatprep.subr.bf16.mxu0 0
      %632 = vmatpush2.bf16.msra.mxu0 %v530
      %633 = vmatprep.mubr.bf16.mxu0 %v361
      %634 = vmatmul.mubr.bf16.gmra.mxu0 %v360
      %v635 = vpop.f32.mrf.mxu0
      %v636 = vadd.f32 %v334, %v635
      %v637 = vpop.f32.mrf.mxu0
      %v638 = vpop.f32.mrf.mxu0
      %v639 = vadd.f32 %v334, %v638
      %v640 = vpop.f32.mrf.mxu0
      %641 = vmatprep.mubr.bf16.mxu0 %v366
      %642 = vmatmul.mubr.bf16.gmra.mxu0 %v365
      %v643 = vpop.f32.mrf.mxu0
      %v644 = vadd.f32 %v334, %v643
      %v645 = vpop.f32.mrf.mxu0
      %v646 = vpop.f32.mrf.mxu0
      %v647 = vpop.f32.mrf.mxu0
      %648 = vdwg.mxu0
      %649 = vmatprep.subr.bf16.mxu0 0
      %650 = vmatpush1.bf16.msra.mxu0 %v545
      %651 = vmatprep.subr.bf16.mxu0 0
      %652 = vmatpush1.bf16.msra.mxu0 %v544
      %653 = vmatprep.subr.bf16.mxu0 0
      %654 = vmatpush1.bf16.msra.mxu0 %v543
      %655 = vmatprep.subr.bf16.mxu0 0
      %656 = vmatpush1.bf16.msra.mxu0 %v542
      %657 = vmatprep.subr.bf16.mxu0 0
      %658 = vmatpush1.bf16.msra.mxu0 %v541
      %659 = vmatprep.subr.bf16.mxu0 0
      %660 = vmatpush1.bf16.msra.mxu0 %v540
      %661 = vmatprep.subr.bf16.mxu0 0
      %662 = vmatpush1.bf16.msra.mxu0 %v539
      %663 = vmatprep.subr.bf16.mxu0 0
      %664 = vmatpush1.bf16.msra.mxu0 %v538
      %665 = vmatprep.subr.bf16.mxu0 0
      %666 = vmatpush2.bf16.msra.mxu0 %v553
      %667 = vmatprep.subr.bf16.mxu0 0
      %668 = vmatpush2.bf16.msra.mxu0 %v552
      %669 = vmatprep.subr.bf16.mxu0 0
      %670 = vmatpush2.bf16.msra.mxu0 %v551
      %671 = vmatprep.subr.bf16.mxu0 0
      %672 = vmatpush2.bf16.msra.mxu0 %v550
      %673 = vmatprep.subr.bf16.mxu0 0
      %674 = vmatpush2.bf16.msra.mxu0 %v549
      %675 = vmatprep.subr.bf16.mxu0 0
      %676 = vmatpush2.bf16.msra.mxu0 %v548
      %677 = vmatprep.subr.bf16.mxu0 0
      %678 = vmatpush2.bf16.msra.mxu0 %v547
      %679 = vmatprep.subr.bf16.mxu0 0
      %680 = vmatpush2.bf16.msra.mxu0 %v546
      %681 = vmatprep.mubr.bf16.mxu0 %v363
      %682 = vmatmul.mubr.bf16.gmra.mxu0 %v362
      %v683 = vpop.f32.mrf.mxu0
      %v684 = vadd.f32 %v636, %v683
      %v685 = vpop.f32.mrf.mxu0
      %v686 = vpop.f32.mrf.mxu0
      %v687 = vadd.f32 %v639, %v686
      %v688 = vpop.f32.mrf.mxu0
      %689 = vmatprep.mubr.bf16.mxu0 %v368
      %690 = vmatmul.mubr.bf16.gmra.mxu0 %v367
      %v691 = vpop.f32.mrf.mxu0
      %v692 = vadd.f32 %v644, %v691
      %v693 = vpop.f32.mrf.mxu0
      %v694 = vpop.f32.mrf.mxu0
      %v695 = vpop.f32.mrf.mxu0
      %696 = vdwg.mxu0
      %697 = vmatprep.subr.bf16.mxu0 0
      %698 = vmatpush1.bf16.msra.mxu0 0
      %699 = vmatprep.subr.bf16.mxu0 0
      %700 = vmatpush1.bf16.msra.mxu0 0
      %701 = vmatprep.subr.bf16.mxu0 0
      %702 = vmatpush1.bf16.msra.mxu0 0
      %703 = vmatprep.subr.bf16.mxu0 0
      %704 = vmatpush1.bf16.msra.mxu0 0
      %705 = vmatprep.subr.bf16.mxu0 0
      %706 = vmatpush1.bf16.msra.mxu0 %v557
      %707 = vmatprep.subr.bf16.mxu0 0
      %708 = vmatpush1.bf16.msra.mxu0 %v556
      %709 = vmatprep.subr.bf16.mxu0 0
      %710 = vmatpush1.bf16.msra.mxu0 %v555
      %711 = vmatprep.subr.bf16.mxu0 0
      %712 = vmatpush1.bf16.msra.mxu0 %v554
      %713 = vmatprep.subr.bf16.mxu0 0
      %714 = vmatpush2.bf16.msra.mxu0 0
      %715 = vmatprep.subr.bf16.mxu0 0
      %716 = vmatpush2.bf16.msra.mxu0 0
      %717 = vmatprep.subr.bf16.mxu0 0
      %718 = vmatpush2.bf16.msra.mxu0 0
      %719 = vmatprep.subr.bf16.mxu0 0
      %720 = vmatpush2.bf16.msra.mxu0 0
      %721 = vmatprep.subr.bf16.mxu0 0
      %722 = vmatpush2.bf16.msra.mxu0 0
      %723 = vmatprep.subr.bf16.mxu0 0
      %724 = vmatpush2.bf16.msra.mxu0 0
      %725 = vmatprep.subr.bf16.mxu0 0
      %726 = vmatpush2.bf16.msra.mxu0 0
      %727 = vmatprep.subr.bf16.mxu0 0
      %728 = vmatpush2.bf16.msra.mxu0 0
      %729 = vmatprep.mubr.bf16.mxu0 0
      %730 = vmatmul.mubr.bf16.gmra.mxu0 %v596
      %v731 = vpop.f32.mrf.mxu0
      %v732 = vadd.f32 %v684, %v731
      %v733 = vpop.f32.mrf.mxu0
      %v734 = vpop.f32.mrf.mxu0
      %v735 = vadd.f32 %v687, %v734
      %v736 = vpop.f32.mrf.mxu0
      %737 = vmatprep.mubr.bf16.mxu0 0
      %738 = vmatmul.mubr.bf16.gmra.mxu0 %v599
      %v739 = vpop.f32.mrf.mxu0
      %v740 = vadd.f32 %v692, %v739
      %v741 = vpop.f32.mrf.mxu0
      %v742 = vpop.f32.mrf.mxu0
      %v743 = vpop.f32.mrf.mxu0
      %744 = vdwg.mxu0
      %v745 = vmax.f32 %v732, 0.0
      %v746 = vmax.f32 %v735, 0.0
      %v747 = vmax.f32 %v740, 0.0
      %v748 = vpack.c.bf16 %v746, %v745
      %v749 = vpack.c.bf16 %v747, %v747
      %v752 = vunpack.c.l.b16 %v748
      %v753 = vunpack.c.h.b16 %v748
      %v754 = vunpack.c.l.b16 %v749
      %v755 = vpack.c.b16 %v752, %v752
      %v756 = vpack.c.b16 %v753, %v753
      %v757 = vpack.c.b16 %v754, %v754
      %vm761 = vcmask 519168
      %762 = vst.msk [vmem:[%s245] sm:$0xf] %vm761, %v755
      %763 = vst.msk [vmem:[%s245 + $0x4] sm:$0xf] %vm761, %v756
      %vm764 = vcmask 516096
      %765 = vst.msk [vmem:[%s245 + $0x8] sm:$0x1] %vm764, %v757
      %s766 = smul.u32 3, %s19
      %p767 = scmp.lt.s32.totalorder %s18, 1
      %s768 = scalar_select %p767, %s18, 1
      %p769 = scmp.lt.s32.totalorder %s766, 2
      %s770 = scalar_select %p769, %s766, 2
      %s771 = smul.addr %s768, 3
      %s772 = sadd.s32 %s770, %s771
      %s773 = smul.addr %s772, 4
      %s774 = scalar_lea.vmem %s3, %s773
      // Predicated region
      $region33: #{ensemble_forward.15} parent=31 // pred_check
        %p775 = pneg %p126
      $region34: #{ensemble_forward.15} parent=31 // pred_check_branch
        %777 = sbr.rel (%p775) target = $region36
      $region35: #{ensemble_forward.15} parent=31 // pred_region
        %s778 = smul.u32 3, %s19
      $region36: #{ensemble_forward.15} parent=31 // pred_fallthru
        _
    $region32: #{ensemble_forward.15} parent=5 // pred_fallthru
      _
    %p779 = scmp.le.s32.totalorder 2, %s9
    // Predicated region
    $region37: #{ensemble_forward.15} parent=5 // pred_check
      %p780 = pneg %p779
    $region38: #{ensemble_forward.15} parent=5 // pred_check_branch
      %782 = sbr.rel (%p780) target = $region40
    $region39: #{ensemble_forward.15} parent=5 // pred_region
      %s783 = ssub.s32 %s9, 2
      // Predicated region
      $region41: #{ensemble_forward.15} parent=39 // pred_check
        %p784 = pneg %p132
      $region42: #{ensemble_forward.15} parent=39 // pred_check_branch
        %786 = sbr.rel (%p784) target = $region44
      $region43: #{ensemble_forward.15} parent=39 // pred_region
        %s787 = smul.u32 3, %s21
        %p788 = scmp.lt.s32.totalorder %s20, 1
        %s789 = scalar_select %p788, %s20, 1
        %p790 = scmp.lt.s32.totalorder %s787, 2
        %s791 = scalar_select %p790, %s787, 2
        %s792 = smul.addr %s789, 3
        %s793 = sadd.s32 %s791, %s792
        %s794 = smul.addr %s793, 4
        %s795 = scalar_lea.vmem %s3, %s794
      $region44: #{ensemble_forward.15} parent=39 // pred_fallthru
        _
    $region40: #{ensemble_forward.15} parent=5 // pred_fallthru
      _
  $region6: #{ensemble_forward.15} parent=0 // loop_footer
    %s13 = sadd.s32 1, %s9
  $region7: #{ensemble_forward.15} parent=0 // loop_footer_branch
    %8 = sbr.rel target = $region3
  $region8: #{ensemble_forward.15} parent=0 // loop_exit
    _

// kernel: ensemble_forward.16
$region0: #{ensemble_forward.16}
  #allocation0 [shape = 'u32[]', space=smem, size = 0x4, offset = 0x4, fixed_abs, tag = 'smem constant byte address 0x4 - core index']
  #allocation1 [shape = 'u32[144,128]{1,0:T(1,128)}', space=vmem, size = 0x12000, scoped, tag = 'internal scratch']
  %s0 = inlined_call_operand.vmem [shape: bf16[2,2,576], index: 0, kind: input, shape index: {}]
  %s1 = inlined_call_operand.vmem [shape: bf16[2,576,512], index: 1, kind: input, shape index: {}]
  %s2 = inlined_call_operand.vmem [shape: f32[2,1,512], index: 2, kind: input, shape index: {}]
  %s3 = inlined_call_operand.vmem [shape: bf16[2,512,6], index: 3, kind: input, shape index: {}]
  %s4 = inlined_call_operand.vmem [shape: f32[2,1,6], index: 4, kind: input, shape index: {}]
  %s5 = inlined_call_operand.vmem [shape: f32[2,2,6], index: 5, kind: output, shape index: {}]
  %s6 = sld [smem:[#allocation0]]
  $region53: #{ensemble_forward.16} parent=0
    _
  %s8 = ssub.s32 1, %s6
  %s9 = scalar_select 0, %s8, %s6
  loop: start=0, step=1, limit=4
  $region2: #{ensemble_forward.16} parent=0 // loop_pre_header
    _
  $region3: #{ensemble_forward.16} parent=0 // loop_header
    %s11 = sphi 0, %s15
    %p12 = scmp.ge.s32.totalorder %s11, 4
    %s21 = sphi 0, %s23
    %s24 = sphi 0, %s21
    %s25 = sphi 0, %s24
    %s41 = sphi 0, %s25
    %s47 = sphi 0, %s49
    %s50 = sphi 0, %s47
    %s51 = sphi 0, %s50
    %s67 = sphi 0, %s51
    %s73 = sphi 0, %s75
    %s76 = sphi 0, %s73
    %s77 = sphi 0, %s76
    %s93 = sphi 0, %s77
    %s99 = sphi 0, %s101
    %s102 = sphi 0, %s99
    %s103 = sphi 0, %s102
    %s119 = sphi 0, %s103
    %s125 = sphi 0, %s127
    %s128 = sphi 0, %s125
    %s129 = sphi 0, %s128
    %s145 = sphi 0, %s129
    %s151 = sphi 0, %s153
    %s154 = sphi 0, %s151
    %s155 = sphi 0, %s154
    %s171 = sphi 0, %s155
  $region4: #{ensemble_forward.16} parent=0 // loop_header_branch
    %14 = sbr.rel (%p12) target = $region8
  $region5: #{ensemble_forward.16} parent=0 // loop_body
    %s16 = ssub.s32 %s11, 1
    %s17 = ssub.s32 %s11, 2
    %s18 = sadd.s32 %s11, 1
    %s19 = ssub.s32 %s11, %s18
    %p20 = scmp.eq.s32.totalorder %s19, 0
    %s22 = sadd.s32 %s21, 1
    %s23 = scalar_select %p20, %s21, %s22
    %p26 = pneg %p20
    %p27 = scmp.eq.s32.totalorder %s11, 1
    %p28 = por %p26, %p27
    %p29 = scmp.ne.s32.totalorder %s21, %s24
    %p30 = scmp.eq.s32.totalorder %s11, 0
    %p31 = por %p29, %p30
    %p32 = scmp.ne.s32.totalorder %s21, %s24
    %p33 = scmp.eq.s32.totalorder %s16, 1
    %p34 = por %p32, %p33
    %p35 = scmp.ne.s32.totalorder %s24, %s25
    %p36 = scmp.eq.s32.totalorder %s16, 0
    %p37 = por %p35, %p36
    %p38 = scmp.ne.s32.totalorder %s24, %s25
    %p39 = scmp.eq.s32.totalorder %s17, 1
    %p40 = por %p38, %p39
    %p42 = scmp.ne.s32.totalorder %s25, %s41
    %p43 = scmp.eq.s32.totalorder %s17, 0
    %p44 = por %p42, %p43
    %s45 = ssub.s32 %s11, %s18
    %p46 = scmp.eq.s32.totalorder %s45, 0
    %s48 = sadd.s32 %s47, 1
    %s49 = scalar_select %p46, %s47, %s48
    %p52 = pneg %p46
    %p53 = scmp.eq.s32.totalorder %s11, 1
    %p54 = por %p52, %p53
    %p55 = scmp.ne.s32.totalorder %s47, %s50
    %p56 = scmp.eq.s32.totalorder %s11, 0
    %p57 = por %p55, %p56
    %p58 = scmp.ne.s32.totalorder %s47, %s50
    %p59 = scmp.eq.s32.totalorder %s16, 1
    %p60 = por %p58, %p59
    %p61 = scmp.ne.s32.totalorder %s50, %s51
    %p62 = scmp.eq.s32.totalorder %s16, 0
    %p63 = por %p61, %p62
    %p64 = scmp.ne.s32.totalorder %s50, %s51
    %p65 = scmp.eq.s32.totalorder %s17, 1
    %p66 = por %p64, %p65
    %p68 = scmp.ne.s32.totalorder %s51, %s67
    %p69 = scmp.eq.s32.totalorder %s17, 0
    %p70 = por %p68, %p69
    %s71 = ssub.s32 %s11, %s18
    %p72 = scmp.eq.s32.totalorder %s71, 0
    %s74 = sadd.s32 %s73, 1
    %s75 = scalar_select %p72, %s73, %s74
    %p78 = pneg %p72
    %p79 = scmp.eq.s32.totalorder %s11, 1
    %p80 = por %p78, %p79
    %p81 = scmp.ne.s32.totalorder %s73, %s76
    %p82 = scmp.eq.s32.totalorder %s11, 0
    %p83 = por %p81, %p82
    %p84 = scmp.ne.s32.totalorder %s73, %s76
    %p85 = scmp.eq.s32.totalorder %s16, 1
    %p86 = por %p84, %p85
    %p87 = scmp.ne.s32.totalorder %s76, %s77
    %p88 = scmp.eq.s32.totalorder %s16, 0
    %p89 = por %p87, %p88
    %p90 = scmp.ne.s32.totalorder %s76, %s77
    %p91 = scmp.eq.s32.totalorder %s17, 1
    %p92 = por %p90, %p91
    %p94 = scmp.ne.s32.totalorder %s77, %s93
    %p95 = scmp.eq.s32.totalorder %s17, 0
    %p96 = por %p94, %p95
    %s97 = ssub.s32 %s11, %s18
    %p98 = scmp.eq.s32.totalorder %s97, 0
    %s100 = sadd.s32 %s99, 1
    %s101 = scalar_select %p98, %s99, %s100
    %p104 = pneg %p98
    %p105 = scmp.eq.s32.totalorder %s11, 1
    %p106 = por %p104, %p105
    %p107 = scmp.ne.s32.totalorder %s99, %s102
    %p108 = scmp.eq.s32.totalorder %s11, 0
    %p109 = por %p107, %p108
    %p110 = scmp.ne.s32.totalorder %s99, %s102
    %p111 = scmp.eq.s32.totalorder %s16, 1
    %p112 = por %p110, %p111
    %p113 = scmp.ne.s32.totalorder %s102, %s103
    %p114 = scmp.eq.s32.totalorder %s16, 0
    %p115 = por %p113, %p114
    %p116 = scmp.ne.s32.totalorder %s102, %s103
    %p117 = scmp.eq.s32.totalorder %s17, 1
    %p118 = por %p116, %p117
    %p120 = scmp.ne.s32.totalorder %s103, %s119
    %p121 = scmp.eq.s32.totalorder %s17, 0
    %p122 = por %p120, %p121
    %s123 = ssub.s32 %s11, %s18
    %p124 = scmp.eq.s32.totalorder %s123, 0
    %s126 = sadd.s32 %s125, 1
    %s127 = scalar_select %p124, %s125, %s126
    %p130 = pneg %p124
    %p131 = scmp.eq.s32.totalorder %s11, 1
    %p132 = por %p130, %p131
    %p133 = scmp.ne.s32.totalorder %s125, %s128
    %p134 = scmp.eq.s32.totalorder %s11, 0
    %p135 = por %p133, %p134
    %p136 = scmp.ne.s32.totalorder %s125, %s128
    %p137 = scmp.eq.s32.totalorder %s16, 1
    %p138 = por %p136, %p137
    %p139 = scmp.ne.s32.totalorder %s128, %s129
    %p140 = scmp.eq.s32.totalorder %s16, 0
    %p141 = por %p139, %p140
    %p142 = scmp.ne.s32.totalorder %s128, %s129
    %p143 = scmp.eq.s32.totalorder %s17, 1
    %p144 = por %p142, %p143
    %p146 = scmp.ne.s32.totalorder %s129, %s145
    %p147 = scmp.eq.s32.totalorder %s17, 0
    %p148 = por %p146, %p147
    %s149 = ssub.s32 %s11, %s18
    %p150 = scmp.eq.s32.totalorder %s149, 0
    %s152 = sadd.s32 %s151, 1
    %s153 = scalar_select %p150, %s151, %s152
    %p156 = pneg %p150
    %p157 = scmp.eq.s32.totalorder %s11, 1
    %p158 = por %p156, %p157
    %p159 = scmp.ne.s32.totalorder %s151, %s154
    %p160 = scmp.eq.s32.totalorder %s11, 0
    %p161 = por %p159, %p160
    %p162 = scmp.ne.s32.totalorder %s151, %s154
    %p163 = scmp.eq.s32.totalorder %s16, 1
    %p164 = por %p162, %p163
    %p165 = scmp.ne.s32.totalorder %s154, %s155
    %p166 = scmp.eq.s32.totalorder %s16, 0
    %p167 = por %p165, %p166
    %p168 = scmp.ne.s32.totalorder %s154, %s155
    %p169 = scmp.eq.s32.totalorder %s17, 1
    %p170 = por %p168, %p169
    %p172 = scmp.ne.s32.totalorder %s155, %s171
    %p173 = scmp.eq.s32.totalorder %s17, 0
    %p174 = por %p172, %p173
    %p175 = scmp.le.s32.totalorder 1, %s11
    %p176 = scmp.lt.s32.totalorder %s11, 3
    %p177 = pnand %p175, %p176
    %p178 = pneg %p177
    // Predicated region
    $region9: #{ensemble_forward.16} parent=5 // pred_check
      _
    $region10: #{ensemble_forward.16} parent=5 // pred_check_branch
      %180 = sbr.rel (%p177) target = $region12
    $region11: #{ensemble_forward.16} parent=5 // pred_region
      %s181 = ssub.s32 %s11, 1
    $region12: #{ensemble_forward.16} parent=5 // pred_fallthru
      _
    %p182 = scmp.lt.s32.totalorder %s11, 2
    // Predicated region
    $region13: #{ensemble_forward.16} parent=5 // pred_check
      %p183 = pneg %p182
    $region14: #{ensemble_forward.16} parent=5 // pred_check_branch
      %185 = sbr.rel (%p183) target = $region16
    $region15: #{ensemble_forward.16} parent=5 // pred_region
      // Predicated region
      $region17: #{ensemble_forward.16} parent=15 // pred_check
        %p186 = pneg %p31
      $region18: #{ensemble_forward.16} parent=15 // pred_check_branch
        %188 = sbr.rel (%p186) target = $region20
      $region19: #{ensemble_forward.16} parent=15 // pred_region
        %p189 = scmp.lt.s32.totalorder %s11, 1
        %s190 = scalar_select %p189, %s11, 1
        %s191 = smul.addr %s190, 5
        %s192 = scalar_lea.vmem %s0, %s191
      $region20: #{ensemble_forward.16} parent=15 // pred_fallthru
        _
      // Predicated region
      $region21: #{ensemble_forward.16} parent=15 // pred_check
        %p193 = pneg %p57
      $region22: #{ensemble_forward.16} parent=15 // pred_check_branch
        %195 = sbr.rel (%p193) target = $region24
      $region23: #{ensemble_forward.16} parent=15 // pred_region
        %p196 = scmp.lt.s32.totalorder %s11, 1
        %s197 = scalar_select %p196, %s11, 1
        %s198 = smul.addr %s197, 288
        %s199 = smul.addr %s198, 4
        %s200 = scalar_lea.vmem %s1, %s199
      $region24: #{ensemble_forward.16} parent=15 // pred_fallthru
        _
      // Predicated region
      $region25: #{ensemble_forward.16} parent=15 // pred_check
        %p201 = pneg %p83
      $region26: #{ensemble_forward.16} parent=15 // pred_check_branch
        %203 = sbr.rel (%p201) target = $region28
      $region27: #{ensemble_forward.16} parent=15 // pred_region
        %p204 = scmp.lt.s32.totalorder %s11, 1
        %s205 = scalar_select %p204, %s11, 1
        %s206 = smul.addr %s205, 4
        %s207 = scalar_lea.vmem %s2, %s206
      $region28: #{ensemble_forward.16} parent=15 // pred_fallthru
        _
      // Predicated region
      $region29: #{ensemble_forward.16} parent=15 // pred_check
        %p208 = pneg %p109
      $region30: #{ensemble_forward.16} parent=15 // pred_check_branch
        %210 = sbr.rel (%p208) target = $region32
      $region31: #{ensemble_forward.16} parent=15 // pred_region
        %p211 = scmp.lt.s32.totalorder %s11, 1
        %s212 = scalar_select %p211, %s11, 1
        %s213 = smul.addr %s212, 64
        %s214 = smul.addr %s213, 4
        %s215 = scalar_lea.vmem %s3, %s214
      $region32: #{ensemble_forward.16} parent=15 // pred_fallthru
        _
      // Predicated region
      $region33: #{ensemble_forward.16} parent=15 // pred_check
        %p216 = pneg %p135
      $region34: #{ensemble_forward.16} parent=15 // pred_check_branch
        %218 = sbr.rel (%p216) target = $region36
      $region35: #{ensemble_forward.16} parent=15 // pred_region
        %p219 = scmp.lt.s32.totalorder %s11, 1
        %s220 = scalar_select %p219, %s11, 1
        %s221 = scalar_lea.vmem %s4, %s220
      $region36: #{ensemble_forward.16} parent=15 // pred_fallthru
        _
    $region16: #{ensemble_forward.16} parent=5 // pred_fallthru
      _
    %p222 = scmp.le.s32.totalorder 1, %s11
    %p223 = scmp.lt.s32.totalorder %s11, 3
    %p224 = pnand %p222, %p223
    %p225 = pneg %p224
    // Predicated region
    $region37: #{ensemble_forward.16} parent=5 // pred_check
      _
    $region38: #{ensemble_forward.16} parent=5 // pred_check_branch
      %227 = sbr.rel (%p224) target = $region40
    $region39: #{ensemble_forward.16} parent=5 // pred_region
      %s228 = ssub.s32 %s11, 1
      %p229 = scmp.lt.s32.totalorder %s16, 1
      %s230 = scalar_select %p229, %s16, 1
      %s231 = smul.addr %s230, 5
      %s232 = scalar_lea.vmem %s0, %s231
      %p233 = pneg %p37
      %p234 = pneg %p34
      %p235 = scmp.lt.s32.totalorder %s16, 1
      %s236 = scalar_select %p235, %s16, 1
      %s237 = smul.addr %s236, 288
      %s238 = smul.addr %s237, 4
      %s239 = scalar_lea.vmem %s1, %s238
      %p240 = pneg %p63
      %p241 = pneg %p60
      %p242 = scmp.lt.s32.totalorder %s16, 1
      %s243 = scalar_select %p242, %s16, 1
      %s244 = smul.addr %s243, 4
      %s245 = scalar_lea.vmem %s2, %s244
      %p246 = pneg %p89
      %p247 = pneg %p86
      %p248 = scmp.lt.s32.totalorder %s16, 1
      %s249 = scalar_select %p248, %s16, 1
      %s250 = smul.addr %s249, 64
      %s251 = smul.addr %s250, 4
      %s252 = scalar_lea.vmem %s3, %s251
      %p253 = pneg %p115
      %p254 = pneg %p112
      %p255 = scmp.lt.s32.totalorder %s16, 1
      %s256 = scalar_select %p255, %s16, 1
      %s257 = scalar_lea.vmem %s4, %s256
      %p258 = pneg %p141
      %p259 = pneg %p138
      %p260 = pneg %p167
      %p261 = pneg %p164
      %p262 = scmp.lt.s32.totalorder %s16, 1
      %s263 = scalar_select %p262, %s16, 1
      %s264 = smul.addr %s263, 2
      %s265 = scalar_lea.vmem %s5, %s264
      %p266 = scmp.lt.s32.totalorder %s16, 1
      %s267 = scalar_select %p266, %s16, 1
      %s268 = smul.addr %s267, 5
      %s269 = scalar_lea.vmem %s0, %s268
      %p270 = scmp.lt.s32.totalorder %s16, 1
      %s271 = scalar_select %p270, %s16, 1
      %s272 = smul.addr %s271, 288
      %s273 = smul.addr %s272, 4
      %s274 = scalar_lea.vmem %s1, %s273
      %p275 = scmp.lt.s32.totalorder %s16, 1
      %s276 = scalar_select %p275, %s16, 1
      %s277 = smul.addr %s276, 4
      %s278 = scalar_lea.vmem %s2, %s277
      %p279 = scmp.lt.s32.totalorder %s16, 1
      %s280 = scalar_select %p279, %s16, 1
      %s281 = smul.addr %s280, 64
      %s282 = smul.addr %s281, 4
      %s283 = scalar_lea.vmem %s3, %s282
      %p284 = scmp.lt.s32.totalorder %s16, 1
      %s285 = scalar_select %p284, %s16, 1
      %s286 = scalar_lea.vmem %s4, %s285
      %p287 = scmp.lt.s32.totalorder %s16, 1
      %s288 = scalar_select %p287, %s16, 1
      %s289 = smul.addr %s288, 2
      %s290 = scalar_lea.vmem %s5, %s289
      %v292 = vld [vmem:[%s269] sm:$0x1f]
      %v293 = vld [vmem:[%s274] sm:$0xff]
      %v294 = vld [vmem:[%s274 + $0x8] sm:$0xff]
      %v295 = vld [vmem:[%s274 + $0x10] sm:$0xff]
      %v296 = vld [vmem:[%s274 + $0x18] sm:$0xff]
      %v297 = vld [vmem:[%s274 + $0x20] sm:$0xff]
      %v298 = vld [vmem:[%s274 + $0x28] sm:$0xff]
      %v299 = vld [vmem:[%s274 + $0x30] sm:$0xff]
      %v300 = vld [vmem:[%s274 + $0x38] sm:$0xff]
      %v301 = vld [vmem:[%s274 + $0x40] sm:$0xff]
      %v302 = vld [vmem:[%s274 + $0x48] sm:$0xff]
      %v303 = vld [vmem:[%s274 + $0x50] sm:$0xff]
      %v304 = vld [vmem:[%s274 + $0x58] sm:$0xff]
      %v305 = vld [vmem:[%s274 + $0x60] sm:$0xff]
      %v306 = vld [vmem:[%s274 + $0x68] sm:$0xff]
      %v307 = vld [vmem:[%s274 + $0x70] sm:$0xff]
      %v308 = vld [vmem:[%s274 + $0x78] sm:$0xff]
      %v309 = vld [vmem:[%s274 + $0x80] sm:$0xff]
      %v310 = vld [vmem:[%s274 + $0x88] sm:$0xff]
      %v311 = vld [vmem:[%s274 + $0x90] sm:$0xff]
      %v312 = vld [vmem:[%s274 + $0x98] sm:$0xff]
      %v313 = vld [vmem:[%s274 + $0xa0] sm:$0xff]
      %v314 = vld [vmem:[%s274 + $0xa8] sm:$0xff]
      %v315 = vld [vmem:[%s274 + $0xb0] sm:$0xff]
      %v316 = vld [vmem:[%s274 + $0xb8] sm:$0xff]
      %v317 = vld [vmem:[%s274 + $0xc0] sm:$0xff]
      %v318 = vld [vmem:[%s274 + $0xc8] sm:$0xff]
      %v319 = vld [vmem:[%s274 + $0xd0] sm:$0xff]
      %v320 = vld [vmem:[%s274 + $0xd8] sm:$0xff]
      %v321 = vld [vmem:[%s274 + $0xe0] sm:$0xff]
      %v322 = vld [vmem:[%s274 + $0xe8] sm:$0xff]
      %v323 = vld [vmem:[%s274 + $0xf0] sm:$0xff]
      %v324 = vld [vmem:[%s274 + $0xf8] sm:$0xff]
      %v325 = vld [vmem:[%s274 + $0x100] sm:$0xff]
      %v326 = vld [vmem:[%s274 + $0x108] sm:$0xff]
      %v327 = vld [vmem:[%s274 + $0x110] sm:$0xff]
      %v328 = vld [vmem:[%s274 + $0x118] sm:$0xff]
      %v329 = vld [vmem:[%s274 + $0x120] sm:$0xff]
      %v330 = vld [vmem:[%s274 + $0x128] sm:$0xff]
      %v331 = vld [vmem:[%s274 + $0x130] sm:$0xff]
      %v332 = vld [vmem:[%s274 + $0x138] sm:$0xff]
      %v333 = vld [vmem:[%s274 + $0x140] sm:$0xff]
      %v334 = vld [vmem:[%s274 + $0x148] sm:$0xff]
      %v335 = vld [vmem:[%s274 + $0x150] sm:$0xff]
      %v336 = vld [vmem:[%s274 + $0x158] sm:$0xff]
      %v337 = vld [vmem:[%s274 + $0x160] sm:$0xff]
      %v338 = vld [vmem:[%s274 + $0x168] sm:$0xff]
      %v339 = vld [vmem:[%s274 + $0x170] sm:$0xff]
      %v340 = vld [vmem:[%s274 + $0x178] sm:$0xff]
      %v341 = vld [vmem:[%s274 + $0x180] sm:$0xff]
      %v342 = vld [vmem:[%s274 + $0x188] sm:$0xff]
      %v343 = vld [vmem:[%s274 + $0x190] sm:$0xff]
      %v344 = vld [vmem:[%s274 + $0x198] sm:$0xff]
      %v345 = vld [vmem:[%s274 + $0x1a0] sm:$0xff]
      %v346 = vld [vmem:[%s274 + $0x1a8] sm:$0xff]
      %v347 = vld [vmem:[%s274 + $0x1b0] sm:$0xff]
      %v348 = vld [vmem:[%s274 + $0x1b8] sm:$0xff]
      %v349 = vld [vmem:[%s274 + $0x1c0] sm:$0xff]
      %v350 = vld [vmem:[%s274 + $0x1c8] sm:$0xff]
      %v351 = vld [vmem:[%s274 + $0x1d0] sm:$0xff]
      %v352 = vld [vmem:[%s274 + $0x1d8] sm:$0xff]
      %v353 = vld [vmem:[%s274 + $0x1e0] sm:$0xff]
      %v354 = vld [vmem:[%s274 + $0x1e8] sm:$0xff]
      %v355 = vld [vmem:[%s274 + $0x1f0] sm:$0xff]
      %v356 = vld [vmem:[%s274 + $0x1f8] sm:$0xff]
      %v357 = vld [vmem:[%s274 + $0x200] sm:$0xff]
      %v358 = vld [vmem:[%s274 + $0x208] sm:$0xff]
      %v359 = vld [vmem:[%s274 + $0x210] sm:$0xff]
      %v360 = vld [vmem:[%s274 + $0x218] sm:$0xff]
      %v361 = vld [vmem:[%s274 + $0x220] sm:$0xff]
      %v362 = vld [vmem:[%s274 + $0x228] sm:$0xff]
      %v363 = vld [vmem:[%s274 + $0x230] sm:$0xff]
      %v364 = vld [vmem:[%s274 + $0x238] sm:$0xff]
      %v365 = vld [vmem:[%s274 + $0x240] sm:$0xff]
      %v366 = vld [vmem:[%s274 + $0x248] sm:$0xff]
      %v367 = vld [vmem:[%s274 + $0x250] sm:$0xff]
      %v368 = vld [vmem:[%s274 + $0x258] sm:$0xff]
      %v369 = vld [vmem:[%s274 + $0x260] sm:$0xff]
      %v370 = vld [vmem:[%s274 + $0x268] sm:$0xff]
      %v371 = vld [vmem:[%s274 + $0x270] sm:$0xff]
      %v372 = vld [vmem:[%s274 + $0x278] sm:$0xff]
      %v373 = vld [vmem:[%s274 + $0x280] sm:$0xff]
      %v374 = vld [vmem:[%s274 + $0x288] sm:$0xff]
      %v375 = vld [vmem:[%s274 + $0x290] sm:$0xff]
      %v376 = vld [vmem:[%s274 + $0x298] sm:$0xff]
      %v377 = vld [vmem:[%s274 + $0x2a0] sm:$0xff]
      %v378 = vld [vmem:[%s274 + $0x2a8] sm:$0xff]
      %v379 = vld [vmem:[%s274 + $0x2b0] sm:$0xff]
      %v380 = vld [vmem:[%s274 + $0x2b8] sm:$0xff]
      %v381 = vld [vmem:[%s274 + $0x2c0] sm:$0xff]
      %v382 = vld [vmem:[%s274 + $0x2c8] sm:$0xff]
      %v383 = vld [vmem:[%s274 + $0x2d0] sm:$0xff]
      %v384 = vld [vmem:[%s274 + $0x2d8] sm:$0xff]
      %v385 = vld [vmem:[%s274 + $0x2e0] sm:$0xff]
      %v386 = vld [vmem:[%s274 + $0x2e8] sm:$0xff]
      %v387 = vld [vmem:[%s274 + $0x2f0] sm:$0xff]
      %v388 = vld [vmem:[%s274 + $0x2f8] sm:$0xff]
      %v389 = vld [vmem:[%s274 + $0x300] sm:$0xff]
      %v390 = vld [vmem:[%s274 + $0x308] sm:$0xff]
      %v391 = vld [vmem:[%s274 + $0x310] sm:$0xff]
      %v392 = vld [vmem:[%s274 + $0x318] sm:$0xff]
      %v393 = vld [vmem:[%s274 + $0x320] sm:$0xff]
      %v394 = vld [vmem:[%s274 + $0x328] sm:$0xff]
      %v395 = vld [vmem:[%s274 + $0x330] sm:$0xff]
      %v396 = vld [vmem:[%s274 + $0x338] sm:$0xff]
      %v397 = vld [vmem:[%s274 + $0x340] sm:$0xff]
      %v398 = vld [vmem:[%s274 + $0x348] sm:$0xff]
      %v399 = vld [vmem:[%s274 + $0x350] sm:$0xff]
      %v400 = vld [vmem:[%s274 + $0x358] sm:$0xff]
      %v401 = vld [vmem:[%s274 + $0x360] sm:$0xff]
      %v402 = vld [vmem:[%s274 + $0x368] sm:$0xff]
      %v403 = vld [vmem:[%s274 + $0x370] sm:$0xff]
      %v404 = vld [vmem:[%s274 + $0x378] sm:$0xff]
      %v405 = vld [vmem:[%s274 + $0x380] sm:$0xff]
      %v406 = vld [vmem:[%s274 + $0x388] sm:$0xff]
      %v407 = vld [vmem:[%s274 + $0x390] sm:$0xff]
      %v408 = vld [vmem:[%s274 + $0x398] sm:$0xff]
      %v409 = vld [vmem:[%s274 + $0x3a0] sm:$0xff]
      %v410 = vld [vmem:[%s274 + $0x3a8] sm:$0xff]
      %v411 = vld [vmem:[%s274 + $0x3b0] sm:$0xff]
      %v412 = vld [vmem:[%s274 + $0x3b8] sm:$0xff]
      %v413 = vld [vmem:[%s274 + $0x3c0] sm:$0xff]
      %v414 = vld [vmem:[%s274 + $0x3c8] sm:$0xff]
      %v415 = vld [vmem:[%s274 + $0x3d0] sm:$0xff]
      %v416 = vld [vmem:[%s274 + $0x3d8] sm:$0xff]
      %v417 = vld [vmem:[%s274 + $0x3e0] sm:$0xff]
      %v418 = vld [vmem:[%s274 + $0x3e8] sm:$0xff]
      %v419 = vld [vmem:[%s274 + $0x3f0] sm:$0xff]
      %v420 = vld [vmem:[%s274 + $0x3f8] sm:$0xff]
      %v421 = vld [vmem:[%s274 + $0x400] sm:$0xff]
      %v422 = vld [vmem:[%s274 + $0x408] sm:$0xff]
      %v423 = vld [vmem:[%s274 + $0x410] sm:$0xff]
      %v424 = vld [vmem:[%s274 + $0x418] sm:$0xff]
      %v425 = vld [vmem:[%s274 + $0x420] sm:$0xff]
      %v426 = vld [vmem:[%s274 + $0x428] sm:$0xff]
      %v427 = vld [vmem:[%s274 + $0x430] sm:$0xff]
      %v428 = vld [vmem:[%s274 + $0x438] sm:$0xff]
      %v429 = vld [vmem:[%s274 + $0x440] sm:$0xff]
      %v430 = vld [vmem:[%s274 + $0x448] sm:$0xff]
      %v431 = vld [vmem:[%s274 + $0x450] sm:$0xff]
      %v432 = vld [vmem:[%s274 + $0x458] sm:$0xff]
      %v433 = vld [vmem:[%s274 + $0x460] sm:$0xff]
      %v434 = vld [vmem:[%s274 + $0x468] sm:$0xff]
      %v435 = vld [vmem:[%s274 + $0x470] sm:$0xff]
      %v436 = vld [vmem:[%s274 + $0x478] sm:$0xff]
      %v437 = vld [vmem:[%s278] sm:$0xf]
      %v439 = vlaneseq
      %v440 = vshrl.u32 %v439, 7
      %v441 = vsub.s32 0, %v440
      %v442 = vrot.slane %v437, %v441
      %v443 = vlaneseq
      %v444 = vshrl.u32 %v443, 7
      %v445 = vsub.s32 1, %v444
      %v446 = vrot.slane %v437, %v445
      %v447 = vlaneseq
      %v448 = vshrl.u32 %v447, 7
      %v449 = vsub.s32 2, %v448
      %v450 = vrot.slane %v437, %v449
      %v451 = vlaneseq
      %v452 = vshrl.u32 %v451, 7
      %v453 = vsub.s32 3, %v452
      %v454 = vrot.slane %v437, %v453
      %v460 = vcombine.high %v292, %v292
      %v462 = vunpack.c.l.s4 1966171168
      %v463 = vunpack.c.0.s8 %v462
      %v464 = vlaneseq
      %v465 = vshrl.u32 %v464, 7
      %v466 = vsub.s32 %v463, %v465
      %v467 = vrot.slane %v292, %v466
      %v469 = vunpack.c.l.s4 1966171168
      %v470 = vunpack.c.0.s8 %v469
      %v471 = vlaneseq
      %v472 = vshrl.u32 %v471, 7
      %v473 = vsub.s32 %v470, %v472
      %v474 = vrot.slane %v460, %v473
      %v475 = vcombine.high %v467, %v467
      %v477 = vunpack.c.l.s4 1966171168
      %v478 = vunpack.c.0.s8 %v477
      %v479 = vlaneseq
      %v480 = vshrl.u32 %v479, 7
      %v481 = vsub.s32 %v478, %v480
      %v482 = vrot.slane %v467, %v481
      %v484 = vunpack.c.l.s4 1966171168
      %v485 = vunpack.c.0.s8 %v484
      %v486 = vlaneseq
      %v487 = vshrl.u32 %v486, 7
      %v488 = vsub.s32 %v485, %v487
      %v489 = vrot.slane %v474, %v488
      %v491 = vunpack.c.l.s4 1966171168
      %v492 = vunpack.c.0.s8 %v491
      %v493 = vlaneseq
      %v494 = vshrl.u32 %v493, 7
      %v495 = vsub.s32 %v492, %v494
      %v496 = vrot.slane %v475, %v495
      %v497 = vcombine.high %v482, %v482
      %v498 = vcombine.high %v496, %v496
      %v647 = vunpack.c.l.b16 %v293
      %v648 = vunpack.c.h.b16 %v293
      %v649 = vunpack.c.l.b16 %v294
      %v650 = vunpack.c.h.b16 %v294
      %v651 = vunpack.c.l.b16 %v295
      %v652 = vunpack.c.h.b16 %v295
      %v653 = vunpack.c.l.b16 %v296
      %v654 = vunpack.c.h.b16 %v296
      %v655 = vunpack.c.l.b16 %v297
      %v656 = vunpack.c.h.b16 %v297
      %v657 = vunpack.c.l.b16 %v298
      %v658 = vunpack.c.h.b16 %v298
      %v659 = vunpack.c.l.b16 %v299
      %v660 = vunpack.c.h.b16 %v299
      %v661 = vunpack.c.l.b16 %v300
      %v662 = vunpack.c.h.b16 %v300
      %v663 = vunpack.c.l.b16 %v301
      %v664 = vunpack.c.h.b16 %v301
      %v665 = vunpack.c.l.b16 %v302
      %v666 = vunpack.c.h.b16 %v302
      %v667 = vunpack.c.l.b16 %v303
      %v668 = vunpack.c.h.b16 %v303
      %v669 = vunpack.c.l.b16 %v304
      %v670 = vunpack.c.h.b16 %v304
      %v671 = vunpack.c.l.b16 %v305
      %v672 = vunpack.c.h.b16 %v305
      %v673 = vunpack.c.l.b16 %v306
      %v674 = vunpack.c.h.b16 %v306
      %v675 = vunpack.c.l.b16 %v307
      %v676 = vunpack.c.h.b16 %v307
      %v677 = vunpack.c.l.b16 %v308
      %v678 = vunpack.c.h.b16 %v308
      %v679 = vunpack.c.l.b16 %v309
      %v680 = vunpack.c.h.b16 %v309
      %v681 = vunpack.c.l.b16 %v310
      %v682 = vunpack.c.h.b16 %v310
      %v683 = vunpack.c.l.b16 %v311
      %v684 = vunpack.c.h.b16 %v311
      %v685 = vunpack.c.l.b16 %v312
      %v686 = vunpack.c.h.b16 %v312
      %v687 = vunpack.c.l.b16 %v313
      %v688 = vunpack.c.h.b16 %v313
      %v689 = vunpack.c.l.b16 %v314
      %v690 = vunpack.c.h.b16 %v314
      %v691 = vunpack.c.l.b16 %v315
      %v692 = vunpack.c.h.b16 %v315
      %v693 = vunpack.c.l.b16 %v316
      %v694 = vunpack.c.h.b16 %v316
      %v695 = vunpack.c.l.b16 %v317
      %v696 = vunpack.c.h.b16 %v317
      %v697 = vunpack.c.l.b16 %v318
      %v698 = vunpack.c.h.b16 %v318
      %v699 = vunpack.c.l.b16 %v319
      %v700 = vunpack.c.h.b16 %v319
      %v701 = vunpack.c.l.b16 %v320
      %v702 = vunpack.c.h.b16 %v320
      %v703 = vunpack.c.l.b16 %v321
      %v704 = vunpack.c.h.b16 %v321
      %v705 = vunpack.c.l.b16 %v322
      %v706 = vunpack.c.h.b16 %v322
      %v707 = vunpack.c.l.b16 %v323
      %v708 = vunpack.c.h.b16 %v323
      %v709 = vunpack.c.l.b16 %v324
      %v710 = vunpack.c.h.b16 %v324
      %v711 = vunpack.c.l.b16 %v325
      %v712 = vunpack.c.h.b16 %v325
      %v713 = vunpack.c.l.b16 %v326
      %v714 = vunpack.c.h.b16 %v326
      %v715 = vunpack.c.l.b16 %v327
      %v716 = vunpack.c.h.b16 %v327
      %v717 = vunpack.c.l.b16 %v328
      %v718 = vunpack.c.h.b16 %v328
      %v719 = vunpack.c.l.b16 %v329
      %v720 = vunpack.c.h.b16 %v329
      %v721 = vunpack.c.l.b16 %v330
      %v722 = vunpack.c.h.b16 %v330
      %v723 = vunpack.c.l.b16 %v331
      %v724 = vunpack.c.h.b16 %v331
      %v725 = vunpack.c.l.b16 %v332
      %v726 = vunpack.c.h.b16 %v332
      %v727 = vunpack.c.l.b16 %v333
      %v728 = vunpack.c.h.b16 %v333
      %v729 = vunpack.c.l.b16 %v334
      %v730 = vunpack.c.h.b16 %v334
      %v731 = vunpack.c.l.b16 %v335
      %v732 = vunpack.c.h.b16 %v335
      %v733 = vunpack.c.l.b16 %v336
      %v734 = vunpack.c.h.b16 %v336
      %v735 = vunpack.c.l.b16 %v337
      %v736 = vunpack.c.h.b16 %v337
      %v737 = vunpack.c.l.b16 %v338
      %v738 = vunpack.c.h.b16 %v338
      %v739 = vunpack.c.l.b16 %v339
      %v740 = vunpack.c.h.b16 %v339
      %v741 = vunpack.c.l.b16 %v340
      %v742 = vunpack.c.h.b16 %v340
      %v743 = vunpack.c.l.b16 %v341
      %v744 = vunpack.c.h.b16 %v341
      %v745 = vunpack.c.l.b16 %v342
      %v746 = vunpack.c.h.b16 %v342
      %v747 = vunpack.c.l.b16 %v343
      %v748 = vunpack.c.h.b16 %v343
      %v749 = vunpack.c.l.b16 %v344
      %v750 = vunpack.c.h.b16 %v344
      %v751 = vunpack.c.l.b16 %v345
      %v752 = vunpack.c.h.b16 %v345
      %v753 = vunpack.c.l.b16 %v346
      %v754 = vunpack.c.h.b16 %v346
      %v755 = vunpack.c.l.b16 %v347
      %v756 = vunpack.c.h.b16 %v347
      %v757 = vunpack.c.l.b16 %v348
      %v758 = vunpack.c.h.b16 %v348
      %v759 = vunpack.c.l.b16 %v349
      %v760 = vunpack.c.h.b16 %v349
      %v761 = vunpack.c.l.b16 %v350
      %v762 = vunpack.c.h.b16 %v350
      %v763 = vunpack.c.l.b16 %v351
      %v764 = vunpack.c.h.b16 %v351
      %v765 = vunpack.c.l.b16 %v352
      %v766 = vunpack.c.h.b16 %v352
      %v767 = vunpack.c.l.b16 %v353
      %v768 = vunpack.c.h.b16 %v353
      %v769 = vunpack.c.l.b16 %v354
      %v770 = vunpack.c.h.b16 %v354
      %v771 = vunpack.c.l.b16 %v355
      %v772 = vunpack.c.h.b16 %v355
      %v773 = vunpack.c.l.b16 %v356
      %v774 = vunpack.c.h.b16 %v356
      %v775 = vunpack.c.l.b16 %v357
      %v776 = vunpack.c.h.b16 %v357
      %v777 = vunpack.c.l.b16 %v358
      %v778 = vunpack.c.h.b16 %v358
      %v779 = vunpack.c.l.b16 %v359
      %v780 = vunpack.c.h.b16 %v359
      %v781 = vunpack.c.l.b16 %v360
      %v782 = vunpack.c.h.b16 %v360
      %v783 = vunpack.c.l.b16 %v361
      %v784 = vunpack.c.h.b16 %v361
      %v785 = vunpack.c.l.b16 %v362
      %v786 = vunpack.c.h.b16 %v362
      %v787 = vunpack.c.l.b16 %v363
      %v788 = vunpack.c.h.b16 %v363
      %v789 = vunpack.c.l.b16 %v364
      %v790 = vunpack.c.h.b16 %v364
      %v791 = vunpack.c.l.b16 %v365
      %v792 = vunpack.c.h.b16 %v365
      %v793 = vunpack.c.l.b16 %v366
      %v794 = vunpack.c.h.b16 %v366
      %v795 = vunpack.c.l.b16 %v367
      %v796 = vunpack.c.h.b16 %v367
      %v797 = vunpack.c.l.b16 %v368
      %v798 = vunpack.c.h.b16 %v368
      %v799 = vunpack.c.l.b16 %v369
      %v800 = vunpack.c.h.b16 %v369
      %v801 = vunpack.c.l.b16 %v370
      %v802 = vunpack.c.h.b16 %v370
      %v803 = vunpack.c.l.b16 %v371
      %v804 = vunpack.c.h.b16 %v371
      %v805 = vunpack.c.l.b16 %v372
      %v806 = vunpack.c.h.b16 %v372
      %v807 = vunpack.c.l.b16 %v373
      %v808 = vunpack.c.h.b16 %v373
      %v809 = vunpack.c.l.b16 %v374
      %v810 = vunpack.c.h.b16 %v374
      %v811 = vunpack.c.l.b16 %v375
      %v812 = vunpack.c.h.b16 %v375
      %v813 = vunpack.c.l.b16 %v376
      %v814 = vunpack.c.h.b16 %v376
      %v815 = vunpack.c.l.b16 %v377
      %v816 = vunpack.c.h.b16 %v377
      %v817 = vunpack.c.l.b16 %v378
      %v818 = vunpack.c.h.b16 %v378
      %v819 = vunpack.c.l.b16 %v379
      %v820 = vunpack.c.h.b16 %v379
      %v821 = vunpack.c.l.b16 %v380
      %v822 = vunpack.c.h.b16 %v380
      %v823 = vunpack.c.l.b16 %v381
      %v824 = vunpack.c.h.b16 %v381
      %v825 = vunpack.c.l.b16 %v382
      %v826 = vunpack.c.h.b16 %v382
      %v827 = vunpack.c.l.b16 %v383
      %v828 = vunpack.c.h.b16 %v383
      %v829 = vunpack.c.l.b16 %v384
      %v830 = vunpack.c.h.b16 %v384
      %v831 = vunpack.c.l.b16 %v385
      %v832 = vunpack.c.h.b16 %v385
      %v833 = vunpack.c.l.b16 %v386
      %v834 = vunpack.c.h.b16 %v386
      %v835 = vunpack.c.l.b16 %v387
      %v836 = vunpack.c.h.b16 %v387
      %v837 = vunpack.c.l.b16 %v388
      %v838 = vunpack.c.h.b16 %v388
      %v839 = vunpack.c.l.b16 %v389
      %v840 = vunpack.c.h.b16 %v389
      %v841 = vunpack.c.l.b16 %v390
      %v842 = vunpack.c.h.b16 %v390
      %v843 = vunpack.c.l.b16 %v391
      %v844 = vunpack.c.h.b16 %v391
      %v845 = vunpack.c.l.b16 %v392
      %v846 = vunpack.c.h.b16 %v392
      %v847 = vunpack.c.l.b16 %v393
      %v848 = vunpack.c.h.b16 %v393
      %v849 = vunpack.c.l.b16 %v394
      %v850 = vunpack.c.h.b16 %v394
      %v851 = vunpack.c.l.b16 %v395
      %v852 = vunpack.c.h.b16 %v395
      %v853 = vunpack.c.l.b16 %v396
      %v854 = vunpack.c.h.b16 %v396
      %v855 = vunpack.c.l.b16 %v397
      %v856 = vunpack.c.h.b16 %v397
      %v857 = vunpack.c.l.b16 %v398
      %v858 = vunpack.c.h.b16 %v398
      %v859 = vunpack.c.l.b16 %v399
      %v860 = vunpack.c.h.b16 %v399
      %v861 = vunpack.c.l.b16 %v400
      %v862 = vunpack.c.h.b16 %v400
      %v863 = vunpack.c.l.b16 %v401
      %v864 = vunpack.c.h.b16 %v401
      %v865 = vunpack.c.l.b16 %v402
      %v866 = vunpack.c.h.b16 %v402
      %v867 = vunpack.c.l.b16 %v403
      %v868 = vunpack.c.h.b16 %v403
      %v869 = vunpack.c.l.b16 %v404
      %v870 = vunpack.c.h.b16 %v404
      %v871 = vunpack.c.l.b16 %v405
      %v872 = vunpack.c.h.b16 %v405
      %v873 = vunpack.c.l.b16 %v406
      %v874 = vunpack.c.h.b16 %v406
      %v875 = vunpack.c.l.b16 %v407
      %v876 = vunpack.c.h.b16 %v407
      %v877 = vunpack.c.l.b16 %v408
      %v878 = vunpack.c.h.b16 %v408
      %v879 = vunpack.c.l.b16 %v409
      %v880 = vunpack.c.h.b16 %v409
      %v881 = vunpack.c.l.b16 %v410
      %v882 = vunpack.c.h.b16 %v410
      %v883 = vunpack.c.l.b16 %v411
      %v884 = vunpack.c.h.b16 %v411
      %v885 = vunpack.c.l.b16 %v412
      %v886 = vunpack.c.h.b16 %v412
      %v887 = vunpack.c.l.b16 %v413
      %v888 = vunpack.c.h.b16 %v413
      %v889 = vunpack.c.l.b16 %v414
      %v890 = vunpack.c.h.b16 %v414
      %v891 = vunpack.c.l.b16 %v415
      %v892 = vunpack.c.h.b16 %v415
      %v893 = vunpack.c.l.b16 %v416
      %v894 = vunpack.c.h.b16 %v416
      %v895 = vunpack.c.l.b16 %v417
      %v896 = vunpack.c.h.b16 %v417
      %v897 = vunpack.c.l.b16 %v418
      %v898 = vunpack.c.h.b16 %v418
      %v899 = vunpack.c.l.b16 %v419
      %v900 = vunpack.c.h.b16 %v419
      %v901 = vunpack.c.l.b16 %v420
      %v902 = vunpack.c.h.b16 %v420
      %v903 = vunpack.c.l.b16 %v421
      %v904 = vunpack.c.h.b16 %v421
      %v905 = vunpack.c.l.b16 %v422
      %v906 = vunpack.c.h.b16 %v422
      %v907 = vunpack.c.l.b16 %v423
      %v908 = vunpack.c.h.b16 %v423
      %v909 = vunpack.c.l.b16 %v424
      %v910 = vunpack.c.h.b16 %v424
      %v911 = vunpack.c.l.b16 %v425
      %v912 = vunpack.c.h.b16 %v425
      %v913 = vunpack.c.l.b16 %v426
      %v914 = vunpack.c.h.b16 %v426
      %v915 = vunpack.c.l.b16 %v427
      %v916 = vunpack.c.h.b16 %v427
      %v917 = vunpack.c.l.b16 %v428
      %v918 = vunpack.c.h.b16 %v428
      %v919 = vunpack.c.l.b16 %v429
      %v920 = vunpack.c.h.b16 %v429
      %v921 = vunpack.c.l.b16 %v430
      %v922 = vunpack.c.h.b16 %v430
      %v923 = vunpack.c.l.b16 %v431
      %v924 = vunpack.c.h.b16 %v431
      %v925 = vunpack.c.l.b16 %v432
      %v926 = vunpack.c.h.b16 %v432
      %v927 = vunpack.c.l.b16 %v433
      %v928 = vunpack.c.h.b16 %v433
      %v929 = vunpack.c.l.b16 %v434
      %v930 = vunpack.c.h.b16 %v434
      %v931 = vunpack.c.l.b16 %v435
      %v932 = vunpack.c.h.b16 %v435
      %v933 = vunpack.c.l.b16 %v436
      %v934 = vunpack.c.h.b16 %v436
      %v935 = vpack.c.b16 %v651, %v647
      %v936 = vpack.c.b16 %v652, %v648
      %v937 = vpack.c.b16 %v653, %v649
      %v938 = vpack.c.b16 %v654, %v650
      %v939 = vpack.c.b16 %v659, %v655
      %v940 = vpack.c.b16 %v660, %v656
      %v941 = vpack.c.b16 %v661, %v657
      %v942 = vpack.c.b16 %v662, %v658
      %v943 = vpack.c.b16 %v667, %v663
      %v944 = vpack.c.b16 %v668, %v664
      %v945 = vpack.c.b16 %v669, %v665
      %v946 = vpack.c.b16 %v670, %v666
      %v947 = vpack.c.b16 %v675, %v671
      %v948 = vpack.c.b16 %v676, %v672
      %v949 = vpack.c.b16 %v677, %v673
      %v950 = vpack.c.b16 %v678, %v674
      %v951 = vpack.c.b16 %v683, %v679
      %v952 = vpack.c.b16 %v684, %v680
      %v953 = vpack.c.b16 %v685, %v681
      %v954 = vpack.c.b16 %v686, %v682
      %v955 = vpack.c.b16 %v691, %v687
      %v956 = vpack.c.b16 %v692, %v688
      %v957 = vpack.c.b16 %v693, %v689
      %v958 = vpack.c.b16 %v694, %v690
      %v959 = vpack.c.b16 %v699, %v695
      %v960 = vpack.c.b16 %v700, %v696
      %v961 = vpack.c.b16 %v701, %v697
      %v962 = vpack.c.b16 %v702, %v698
      %v963 = vpack.c.b16 %v707, %v703
      %v964 = vpack.c.b16 %v708, %v704
      %v965 = vpack.c.b16 %v709, %v705
      %v966 = vpack.c.b16 %v710, %v706
      %v967 = vpack.c.b16 %v715, %v711
      %v968 = vpack.c.b16 %v716, %v712
      %v969 = vpack.c.b16 %v717, %v713
      %v970 = vpack.c.b16 %v718, %v714
      %v971 = vpack.c.b16 %v723, %v719
      %v972 = vpack.c.b16 %v724, %v720
      %v973 = vpack.c.b16 %v725, %v721
      %v974 = vpack.c.b16 %v726, %v722
      %v975 = vpack.c.b16 %v731, %v727
      %v976 = vpack.c.b16 %v732, %v728
      %v977 = vpack.c.b16 %v733, %v729
      %v978 = vpack.c.b16 %v734, %v730
      %v979 = vpack.c.b16 %v739, %v735
      %v980 = vpack.c.b16 %v740, %v736
      %v981 = vpack.c.b16 %v741, %v737
      %v982 = vpack.c.b16 %v742, %v738
      %v983 = vpack.c.b16 %v747, %v743
      %v984 = vpack.c.b16 %v748, %v744
      %v985 = vpack.c.b16 %v749, %v745
      %v986 = vpack.c.b16 %v750, %v746
      %v987 = vpack.c.b16 %v755, %v751
      %v988 = vpack.c.b16 %v756, %v752
      %v989 = vpack.c.b16 %v757, %v753
      %v990 = vpack.c.b16 %v758, %v754
      %v991 = vpack.c.b16 %v763, %v759
      %v992 = vpack.c.b16 %v764, %v760
      %v993 = vpack.c.b16 %v765, %v761
      %v994 = vpack.c.b16 %v766, %v762
      %v995 = vpack.c.b16 %v771, %v767
      %v996 = vpack.c.b16 %v772, %v768
      %v997 = vpack.c.b16 %v773, %v769
      %v998 = vpack.c.b16 %v774, %v770
      %v999 = vpack.c.b16 %v779, %v775
      %v1000 = vpack.c.b16 %v780, %v776
      %v1001 = vpack.c.b16 %v781, %v777
      %v1002 = vpack.c.b16 %v782, %v778
      %v1003 = vpack.c.b16 %v787, %v783
      %v1004 = vpack.c.b16 %v788, %v784
      %v1005 = vpack.c.b16 %v789, %v785
      %v1006 = vpack.c.b16 %v790, %v786
      %v1007 = vpack.c.b16 %v795, %v791
      %v1008 = vpack.c.b16 %v796, %v792
      %v1009 = vpack.c.b16 %v797, %v793
      %v1010 = vpack.c.b16 %v798, %v794
      %v1011 = vpack.c.b16 %v803, %v799
      %v1012 = vpack.c.b16 %v804, %v800
      %v1013 = vpack.c.b16 %v805, %v801
      %v1014 = vpack.c.b16 %v806, %v802
      %v1015 = vpack.c.b16 %v811, %v807
      %v1016 = vpack.c.b16 %v812, %v808
      %v1017 = vpack.c.b16 %v813, %v809
      %v1018 = vpack.c.b16 %v814, %v810
      %v1019 = vpack.c.b16 %v819, %v815
      %v1020 = vpack.c.b16 %v820, %v816
      %v1021 = vpack.c.b16 %v821, %v817
      %v1022 = vpack.c.b16 %v822, %v818
      %v1023 = vpack.c.b16 %v827, %v823
      %v1024 = vpack.c.b16 %v828, %v824
      %v1025 = vpack.c.b16 %v829, %v825
      %v1026 = vpack.c.b16 %v830, %v826
      %v1027 = vpack.c.b16 %v835, %v831
      %v1028 = vpack.c.b16 %v836, %v832
      %v1029 = vpack.c.b16 %v837, %v833
      %v1030 = vpack.c.b16 %v838, %v834
      %v1031 = vpack.c.b16 %v843, %v839
      %v1032 = vpack.c.b16 %v844, %v840
      %v1033 = vpack.c.b16 %v845, %v841
      %v1034 = vpack.c.b16 %v846, %v842
      %v1035 = vpack.c.b16 %v851, %v847
      %v1036 = vpack.c.b16 %v852, %v848
      %v1037 = vpack.c.b16 %v853, %v849
      %v1038 = vpack.c.b16 %v854, %v850
      %v1039 = vpack.c.b16 %v859, %v855
      %v1040 = vpack.c.b16 %v860, %v856
      %v1041 = vpack.c.b16 %v861, %v857
      %v1042 = vpack.c.b16 %v862, %v858
      %v1043 = vpack.c.b16 %v867, %v863
      %v1044 = vpack.c.b16 %v868, %v864
      %v1045 = vpack.c.b16 %v869, %v865
      %v1046 = vpack.c.b16 %v870, %v866
      %v1047 = vpack.c.b16 %v875, %v871
      %v1048 = vpack.c.b16 %v876, %v872
      %v1049 = vpack.c.b16 %v877, %v873
      %v1050 = vpack.c.b16 %v878, %v874
      %v1051 = vpack.c.b16 %v883, %v879
      %v1052 = vpack.c.b16 %v884, %v880
      %v1053 = vpack.c.b16 %v885, %v881
      %v1054 = vpack.c.b16 %v886, %v882
      %v1055 = vpack.c.b16 %v891, %v887
      %v1056 = vpack.c.b16 %v892, %v888
      %v1057 = vpack.c.b16 %v893, %v889
      %v1058 = vpack.c.b16 %v894, %v890
      %v1059 = vpack.c.b16 %v899, %v895
      %v1060 = vpack.c.b16 %v900, %v896
      %v1061 = vpack.c.b16 %v901, %v897
      %v1062 = vpack.c.b16 %v902, %v898
      %v1063 = vpack.c.b16 %v907, %v903
      %v1064 = vpack.c.b16 %v908, %v904
      %v1065 = vpack.c.b16 %v909, %v905
      %v1066 = vpack.c.b16 %v910, %v906
      %v1067 = vpack.c.b16 %v915, %v911
      %v1068 = vpack.c.b16 %v916, %v912
      %v1069 = vpack.c.b16 %v917, %v913
      %v1070 = vpack.c.b16 %v918, %v914
      %v1071 = vpack.c.b16 %v923, %v919
      %v1072 = vpack.c.b16 %v924, %v920
      %v1073 = vpack.c.b16 %v925, %v921
      %v1074 = vpack.c.b16 %v926, %v922
      %v1075 = vpack.c.b16 %v931, %v927
      %v1076 = vpack.c.b16 %v932, %v928
      %v1077 = vpack.c.b16 %v933, %v929
      %v1078 = vpack.c.b16 %v934, %v930
      %vm1223 = vcmask 523264
      %v1225 = vsel %vm1223, %v489, 0
      %1227 = vmatprep.subr.bf16.mxu0 %v964
      %1228 = vmatpush1.bf16.msra.mxu0 %v963
      %1229 = vmatprep.subr.bf16.mxu0 %v960
      %1230 = vmatpush1.bf16.msra.mxu0 %v959
      %1231 = vmatprep.subr.bf16.mxu0 %v956
      %1232 = vmatpush1.bf16.msra.mxu0 %v955
      %1233 = vmatprep.subr.bf16.mxu0 %v952
      %1234 = vmatpush1.bf16.msra.mxu0 %v951
      %1235 = vmatprep.subr.bf16.mxu0 %v948
      %1236 = vmatpush1.bf16.msra.mxu0 %v947
      %1237 = vmatprep.subr.bf16.mxu0 %v944
      %1238 = vmatpush1.bf16.msra.mxu0 %v943
      %1239 = vmatprep.subr.bf16.mxu0 %v940
      %1240 = vmatpush1.bf16.msra.mxu0 %v939
      %1241 = vmatprep.subr.bf16.mxu0 %v936
      %1242 = vmatpush1.bf16.msra.mxu0 %v935
      %1243 = vmatprep.subr.bf16.mxu0 %v996
      %1244 = vmatpush2.bf16.msra.mxu0 %v995
      %1245 = vmatprep.subr.bf16.mxu0 %v992
      %1246 = vmatpush2.bf16.msra.mxu0 %v991
      %1247 = vmatprep.subr.bf16.mxu0 %v988
      %1248 = vmatpush2.bf16.msra.mxu0 %v987
      %1249 = vmatprep.subr.bf16.mxu0 %v984
      %1250 = vmatpush2.bf16.msra.mxu0 %v983
      %1251 = vmatprep.subr.bf16.mxu0 %v980
      %1252 = vmatpush2.bf16.msra.mxu0 %v979
      %1253 = vmatprep.subr.bf16.mxu0 %v976
      %1254 = vmatpush2.bf16.msra.mxu0 %v975
      %1255 = vmatprep.subr.bf16.mxu0 %v972
      %1256 = vmatpush2.bf16.msra.mxu0 %v971
      %1257 = vmatprep.subr.bf16.mxu0 %v968
      %1258 = vmatpush2.bf16.msra.mxu0 %v967
      %1259 = vmatprep.mubr.bf16.mxu0 %v496
      %1260 = vmatmul.mubr.bf16.gmra.mxu0 %v482
      %v1261 = vpop.f32.mrf.mxu0
      %v1262 = vadd.f32 %v442, %v1261
      %v1263 = vpop.f32.mrf.mxu0
      %v1264 = vadd.f32 %v446, %v1263
      %v1265 = vpop.f32.mrf.mxu0
      %v1266 = vpop.f32.mrf.mxu0
      %1267 = vdwg.mxu0
      %1268 = vmatprep.subr.bf16.mxu0 %v1028
      %1269 = vmatpush1.bf16.msra.mxu0 %v1027
      %1270 = vmatprep.subr.bf16.mxu0 %v1024
      %1271 = vmatpush1.bf16.msra.mxu0 %v1023
      %1272 = vmatprep.subr.bf16.mxu0 %v1020
      %1273 = vmatpush1.bf16.msra.mxu0 %v1019
      %1274 = vmatprep.subr.bf16.mxu0 %v1016
      %1275 = vmatpush1.bf16.msra.mxu0 %v1015
      %1276 = vmatprep.subr.bf16.mxu0 %v1012
      %1277 = vmatpush1.bf16.msra.mxu0 %v1011
      %1278 = vmatprep.subr.bf16.mxu0 %v1008
      %1279 = vmatpush1.bf16.msra.mxu0 %v1007
      %1280 = vmatprep.subr.bf16.mxu0 %v1004
      %1281 = vmatpush1.bf16.msra.mxu0 %v1003
      %1282 = vmatprep.subr.bf16.mxu0 %v1000
      %1283 = vmatpush1.bf16.msra.mxu0 %v999
      %1284 = vmatprep.subr.bf16.mxu0 %v1060
      %1285 = vmatpush2.bf16.msra.mxu0 %v1059
      %1286 = vmatprep.subr.bf16.mxu0 %v1056
      %1287 = vmatpush2.bf16.msra.mxu0 %v1055
      %1288 = vmatprep.subr.bf16.mxu0 %v1052
      %1289 = vmatpush2.bf16.msra.mxu0 %v1051
      %1290 = vmatprep.subr.bf16.mxu0 %v1048
      %1291 = vmatpush2.bf16.msra.mxu0 %v1047
      %1292 = vmatprep.subr.bf16.mxu0 %v1044
      %1293 = vmatpush2.bf16.msra.mxu0 %v1043
      %1294 = vmatprep.subr.bf16.mxu0 %v1040
      %1295 = vmatpush2.bf16.msra.mxu0 %v1039
      %1296 = vmatprep.subr.bf16.mxu0 %v1036
      %1297 = vmatpush2.bf16.msra.mxu0 %v1035
      %1298 = vmatprep.subr.bf16.mxu0 %v1032
      %1299 = vmatpush2.bf16.msra.mxu0 %v1031
      %1300 = vmatprep.mubr.bf16.mxu0 %v498
      %1301 = vmatmul.mubr.bf16.gmra.mxu0 %v497
      %v1302 = vpop.f32.mrf.mxu0
      %v1303 = vadd.f32 %v1262, %v1302
      %v1304 = vpop.f32.mrf.mxu0
      %v1305 = vadd.f32 %v1264, %v1304
      %v1306 = vpop.f32.mrf.mxu0
      %v1307 = vpop.f32.mrf.mxu0
      %1308 = vdwg.mxu0
      %1309 = vmatprep.subr.bf16.mxu0 0
      %1310 = vmatpush1.bf16.msra.mxu0 0
      %1311 = vmatprep.subr.bf16.mxu0 0
      %1312 = vmatpush1.bf16.msra.mxu0 0
      %1313 = vmatprep.subr.bf16.mxu0 0
      %1314 = vmatpush1.bf16.msra.mxu0 0
      %1315 = vmatprep.subr.bf16.mxu0 0
      %1316 = vmatpush1.bf16.msra.mxu0 0
      %1317 = vmatprep.subr.bf16.mxu0 %v1076
      %1318 = vmatpush1.bf16.msra.mxu0 %v1075
      %1319 = vmatprep.subr.bf16.mxu0 %v1072
      %1320 = vmatpush1.bf16.msra.mxu0 %v1071
      %1321 = vmatprep.subr.bf16.mxu0 %v1068
      %1322 = vmatpush1.bf16.msra.mxu0 %v1067
      %1323 = vmatprep.subr.bf16.mxu0 %v1064
      %1324 = vmatpush1.bf16.msra.mxu0 %v1063
      %1325 = vmatprep.subr.bf16.mxu0 0
      %1326 = vmatpush2.bf16.msra.mxu0 0
      %1327 = vmatprep.subr.bf16.mxu0 0
      %1328 = vmatpush2.bf16.msra.mxu0 0
      %1329 = vmatprep.subr.bf16.mxu0 0
      %1330 = vmatpush2.bf16.msra.mxu0 0
      %1331 = vmatprep.subr.bf16.mxu0 0
      %1332 = vmatpush2.bf16.msra.mxu0 0
      %1333 = vmatprep.subr.bf16.mxu0 0
      %1334 = vmatpush2.bf16.msra.mxu0 0
      %1335 = vmatprep.subr.bf16.mxu0 0
      %1336 = vmatpush2.bf16.msra.mxu0 0
      %1337 = vmatprep.subr.bf16.mxu0 0
      %1338 = vmatpush2.bf16.msra.mxu0 0
      %1339 = vmatprep.subr.bf16.mxu0 0
      %1340 = vmatpush2.bf16.msra.mxu0 0
      %1341 = vmatprep.mubr.bf16.mxu0 0
      %1342 = vmatmul.mubr.bf16.gmra.mxu0 %v1225
      %v1343 = vpop.f32.mrf.mxu0
      %v1344 = vadd.f32 %v1303, %v1343
      %v1345 = vpop.f32.mrf.mxu0
      %v1346 = vadd.f32 %v1305, %v1345
      %v1347 = vpop.f32.mrf.mxu0
      %v1348 = vpop.f32.mrf.mxu0
      %1349 = vdwg.mxu0
      %1350 = vmatprep.subr.bf16.mxu0 %v966
      %1351 = vmatpush1.bf16.msra.mxu0 %v965
      %1352 = vmatprep.subr.bf16.mxu0 %v962
      %1353 = vmatpush1.bf16.msra.mxu0 %v961
      %1354 = vmatprep.subr.bf16.mxu0 %v958
      %1355 = vmatpush1.bf16.msra.mxu0 %v957
      %1356 = vmatprep.subr.bf16.mxu0 %v954
      %1357 = vmatpush1.bf16.msra.mxu0 %v953
      %1358 = vmatprep.subr.bf16.mxu0 %v950
      %1359 = vmatpush1.bf16.msra.mxu0 %v949
      %1360 = vmatprep.subr.bf16.mxu0 %v946
      %1361 = vmatpush1.bf16.msra.mxu0 %v945
      %1362 = vmatprep.subr.bf16.mxu0 %v942
      %1363 = vmatpush1.bf16.msra.mxu0 %v941
      %1364 = vmatprep.subr.bf16.mxu0 %v938
      %1365 = vmatpush1.bf16.msra.mxu0 %v937
      %1366 = vmatprep.subr.bf16.mxu0 %v998
      %1367 = vmatpush2.bf16.msra.mxu0 %v997
      %1368 = vmatprep.subr.bf16.mxu0 %v994
      %1369 = vmatpush2.bf16.msra.mxu0 %v993
      %1370 = vmatprep.subr.bf16.mxu0 %v990
      %1371 = vmatpush2.bf16.msra.mxu0 %v989
      %1372 = vmatprep.subr.bf16.mxu0 %v986
      %1373 = vmatpush2.bf16.msra.mxu0 %v985
      %1374 = vmatprep.subr.bf16.mxu0 %v982
      %1375 = vmatpush2.bf16.msra.mxu0 %v981
      %1376 = vmatprep.subr.bf16.mxu0 %v978
      %1377 = vmatpush2.bf16.msra.mxu0 %v977
      %1378 = vmatprep.subr.bf16.mxu0 %v974
      %1379 = vmatpush2.bf16.msra.mxu0 %v973
      %1380 = vmatprep.subr.bf16.mxu0 %v970
      %1381 = vmatpush2.bf16.msra.mxu0 %v969
      %1382 = vmatprep.mubr.bf16.mxu0 %v496
      %1383 = vmatmul.mubr.bf16.gmra.mxu0 %v482
      %v1384 = vpop.f32.mrf.mxu0
      %v1385 = vadd.f32 %v450, %v1384
      %v1386 = vpop.f32.mrf.mxu0
      %v1387 = vadd.f32 %v454, %v1386
      %v1388 = vpop.f32.mrf.mxu0
      %v1389 = vpop.f32.mrf.mxu0
      %1390 = vdwg.mxu0
      %1391 = vmatprep.subr.bf16.mxu0 %v1030
      %1392 = vmatpush1.bf16.msra.mxu0 %v1029
      %1393 = vmatprep.subr.bf16.mxu0 %v1026
      %1394 = vmatpush1.bf16.msra.mxu0 %v1025
      %1395 = vmatprep.subr.bf16.mxu0 %v1022
      %1396 = vmatpush1.bf16.msra.mxu0 %v1021
      %1397 = vmatprep.subr.bf16.mxu0 %v1018
      %1398 = vmatpush1.bf16.msra.mxu0 %v1017
      %1399 = vmatprep.subr.bf16.mxu0 %v1014
      %1400 = vmatpush1.bf16.msra.mxu0 %v1013
      %1401 = vmatprep.subr.bf16.mxu0 %v1010
      %1402 = vmatpush1.bf16.msra.mxu0 %v1009
      %1403 = vmatprep.subr.bf16.mxu0 %v1006
      %1404 = vmatpush1.bf16.msra.mxu0 %v1005
      %1405 = vmatprep.subr.bf16.mxu0 %v1002
      %1406 = vmatpush1.bf16.msra.mxu0 %v1001
      %1407 = vmatprep.subr.bf16.mxu0 %v1062
      %1408 = vmatpush2.bf16.msra.mxu0 %v1061
      %1409 = vmatprep.subr.bf16.mxu0 %v1058
      %1410 = vmatpush2.bf16.msra.mxu0 %v1057
      %1411 = vmatprep.subr.bf16.mxu0 %v1054
      %1412 = vmatpush2.bf16.msra.mxu0 %v1053
      %1413 = vmatprep.subr.bf16.mxu0 %v1050
      %1414 = vmatpush2.bf16.msra.mxu0 %v1049
      %1415 = vmatprep.subr.bf16.mxu0 %v1046
      %1416 = vmatpush2.bf16.msra.mxu0 %v1045
      %1417 = vmatprep.subr.bf16.mxu0 %v1042
      %1418 = vmatpush2.bf16.msra.mxu0 %v1041
      %1419 = vmatprep.subr.bf16.mxu0 %v1038
      %1420 = vmatpush2.bf16.msra.mxu0 %v1037
      %1421 = vmatprep.subr.bf16.mxu0 %v1034
      %1422 = vmatpush2.bf16.msra.mxu0 %v1033
      %1423 = vmatprep.mubr.bf16.mxu0 %v498
      %1424 = vmatmul.mubr.bf16.gmra.mxu0 %v497
      %v1425 = vpop.f32.mrf.mxu0
      %v1426 = vadd.f32 %v1385, %v1425
      %v1427 = vpop.f32.mrf.mxu0
      %v1428 = vadd.f32 %v1387, %v1427
      %v1429 = vpop.f32.mrf.mxu0
      %v1430 = vpop.f32.mrf.mxu0
      %1431 = vdwg.mxu0
      %1432 = vmatprep.subr.bf16.mxu0 0
      %1433 = vmatpush1.bf16.msra.mxu0 0
      %1434 = vmatprep.subr.bf16.mxu0 0
      %1435 = vmatpush1.bf16.msra.mxu0 0
      %1436 = vmatprep.subr.bf16.mxu0 0
      %1437 = vmatpush1.bf16.msra.mxu0 0
      %1438 = vmatprep.subr.bf16.mxu0 0
      %1439 = vmatpush1.bf16.msra.mxu0 0
      %1440 = vmatprep.subr.bf16.mxu0 %v1078
      %1441 = vmatpush1.bf16.msra.mxu0 %v1077
      %1442 = vmatprep.subr.bf16.mxu0 %v1074
      %1443 = vmatpush1.bf16.msra.mxu0 %v1073
      %1444 = vmatprep.subr.bf16.mxu0 %v1070
      %1445 = vmatpush1.bf16.msra.mxu0 %v1069
      %1446 = vmatprep.subr.bf16.mxu0 %v1066
      %1447 = vmatpush1.bf16.msra.mxu0 %v1065
      %1448 = vmatprep.subr.bf16.mxu0 0
      %1449 = vmatpush2.bf16.msra.mxu0 0
      %1450 = vmatprep.subr.bf16.mxu0 0
      %1451 = vmatpush2.bf16.msra.mxu0 0
      %1452 = vmatprep.subr.bf16.mxu0 0
      %1453 = vmatpush2.bf16.msra.mxu0 0
      %1454 = vmatprep.subr.bf16.mxu0 0
      %1455 = vmatpush2.bf16.msra.mxu0 0
      %1456 = vmatprep.subr.bf16.mxu0 0
      %1457 = vmatpush2.bf16.msra.mxu0 0
      %1458 = vmatprep.subr.bf16.mxu0 0
      %1459 = vmatpush2.bf16.msra.mxu0 0
      %1460 = vmatprep.subr.bf16.mxu0 0
      %1461 = vmatpush2.bf16.msra.mxu0 0
      %1462 = vmatprep.subr.bf16.mxu0 0
      %1463 = vmatpush2.bf16.msra.mxu0 0
      %1464 = vmatprep.mubr.bf16.mxu0 0
      %1465 = vmatmul.mubr.bf16.gmra.mxu0 %v1225
      %v1466 = vpop.f32.mrf.mxu0
      %v1467 = vadd.f32 %v1426, %v1466
      %v1468 = vpop.f32.mrf.mxu0
      %v1469 = vadd.f32 %v1428, %v1468
      %v1470 = vpop.f32.mrf.mxu0
      %v1471 = vpop.f32.mrf.mxu0
      %1472 = vdwg.mxu0
      %v1473 = vmax.f32 %v1344, 0.0
      %v1474 = vmax.f32 %v1346, 0.0
      %v1475 = vmax.f32 %v1467, 0.0
      %v1476 = vmax.f32 %v1469, 0.0
      %v1477 = vpack.c.bf16 %v1473, %v1473
      %v1478 = vpack.c.bf16 %v1474, %v1474
      %v1479 = vpack.c.bf16 %v1475, %v1475
      %v1480 = vpack.c.bf16 %v1476, %v1476
      %v1481 = vld [vmem:[%s283] sm:$0xf]
      %v1482 = vld [vmem:[%s283 + $0x4] sm:$0xf]
      %v1483 = vld [vmem:[%s283 + $0x8] sm:$0xf]
      %v1484 = vld [vmem:[%s283 + $0xc] sm:$0xf]
      %v1485 = vld [vmem:[%s283 + $0x10] sm:$0xf]
      %v1486 = vld [vmem:[%s283 + $0x14] sm:$0xf]
      %v1487 = vld [vmem:[%s283 + $0x18] sm:$0xf]
      %v1488 = vld [vmem:[%s283 + $0x1c] sm:$0xf]
      %v1489 = vld [vmem:[%s283 + $0x20] sm:$0xf]
      %v1490 = vld [vmem:[%s283 + $0x24] sm:$0xf]
      %v1491 = vld [vmem:[%s283 + $0x28] sm:$0xf]
      %v1492 = vld [vmem:[%s283 + $0x2c] sm:$0xf]
      %v1493 = vld [vmem:[%s283 + $0x30] sm:$0xf]
      %v1494 = vld [vmem:[%s283 + $0x34] sm:$0xf]
      %v1495 = vld [vmem:[%s283 + $0x38] sm:$0xf]
      %v1496 = vld [vmem:[%s283 + $0x3c] sm:$0xf]
      %v1497 = vld [vmem:[%s283 + $0x40] sm:$0xf]
      %v1498 = vld [vmem:[%s283 + $0x44] sm:$0xf]
      %v1499 = vld [vmem:[%s283 + $0x48] sm:$0xf]
      %v1500 = vld [vmem:[%s283 + $0x4c] sm:$0xf]
      %v1501 = vld [vmem:[%s283 + $0x50] sm:$0xf]
      %v1502 = vld [vmem:[%s283 + $0x54] sm:$0xf]
      %v1503 = vld [vmem:[%s283 + $0x58] sm:$0xf]
      %v1504 = vld [vmem:[%s283 + $0x5c] sm:$0xf]
      %v1505 = vld [vmem:[%s283 + $0x60] sm:$0xf]
      %v1506 = vld [vmem:[%s283 + $0x64] sm:$0xf]
      %v1507 = vld [vmem:[%s283 + $0x68] sm:$0xf]
      %v1508 = vld [vmem:[%s283 + $0x6c] sm:$0xf]
      %v1509 = vld [vmem:[%s283 + $0x70] sm:$0xf]
      %v1510 = vld [vmem:[%s283 + $0x74] sm:$0xf]
      %v1511 = vld [vmem:[%s283 + $0x78] sm:$0xf]
      %v1512 = vld [vmem:[%s283 + $0x7c] sm:$0xf]
      %v1513 = vld [vmem:[%s283 + $0x80] sm:$0xf]
      %v1514 = vld [vmem:[%s283 + $0x84] sm:$0xf]
      %v1515 = vld [vmem:[%s283 + $0x88] sm:$0xf]
      %v1516 = vld [vmem:[%s283 + $0x8c] sm:$0xf]
      %v1517 = vld [vmem:[%s283 + $0x90] sm:$0xf]
      %v1518 = vld [vmem:[%s283 + $0x94] sm:$0xf]
      %v1519 = vld [vmem:[%s283 + $0x98] sm:$0xf]
      %v1520 = vld [vmem:[%s283 + $0x9c] sm:$0xf]
      %v1521 = vld [vmem:[%s283 + $0xa0] sm:$0xf]
      %v1522 = vld [vmem:[%s283 + $0xa4] sm:$0xf]
      %v1523 = vld [vmem:[%s283 + $0xa8] sm:$0xf]
      %v1524 = vld [vmem:[%s283 + $0xac] sm:$0xf]
      %v1525 = vld [vmem:[%s283 + $0xb0] sm:$0xf]
      %v1526 = vld [vmem:[%s283 + $0xb4] sm:$0xf]
      %v1527 = vld [vmem:[%s283 + $0xb8] sm:$0xf]
      %v1528 = vld [vmem:[%s283 + $0xbc] sm:$0xf]
      %v1529 = vld [vmem:[%s283 + $0xc0] sm:$0xf]
      %v1530 = vld [vmem:[%s283 + $0xc4] sm:$0xf]
      %v1531 = vld [vmem:[%s283 + $0xc8] sm:$0xf]
      %v1532 = vld [vmem:[%s283 + $0xcc] sm:$0xf]
      %v1533 = vld [vmem:[%s283 + $0xd0] sm:$0xf]
      %v1534 = vld [vmem:[%s283 + $0xd4] sm:$0xf]
      %v1535 = vld [vmem:[%s283 + $0xd8] sm:$0xf]
      %v1536 = vld [vmem:[%s283 + $0xdc] sm:$0xf]
      %v1537 = vld [vmem:[%s283 + $0xe0] sm:$0xf]
      %v1538 = vld [vmem:[%s283 + $0xe4] sm:$0xf]
      %v1539 = vld [vmem:[%s283 + $0xe8] sm:$0xf]
      %v1540 = vld [vmem:[%s283 + $0xec] sm:$0xf]
      %v1541 = vld [vmem:[%s283 + $0xf0] sm:$0xf]
      %v1542 = vld [vmem:[%s283 + $0xf4] sm:$0xf]
      %v1543 = vld [vmem:[%s283 + $0xf8] sm:$0xf]
      %v1544 = vld [vmem:[%s283 + $0xfc] sm:$0xf]
      %v1545 = vld [vmem:[%s286] sm:$0x1]
      %v1547 = vlaneseq
      %v1548 = vshrl.u32 %v1547, 7
      %v1549 = vsub.s32 0, %v1548
      %v1550 = vrot.slane %v1545, %v1549
      %v1616 = vunpack.c.l.b16 %v1481
      %v1617 = vunpack.c.l.b16 %v1482
      %v1618 = vunpack.c.l.b16 %v1483
      %v1619 = vunpack.c.l.b16 %v1484
      %v1620 = vunpack.c.l.b16 %v1485
      %v1621 = vunpack.c.l.b16 %v1486
      %v1622 = vunpack.c.l.b16 %v1487
      %v1623 = vunpack.c.l.b16 %v1488
      %v1624 = vunpack.c.l.b16 %v1489
      %v1625 = vunpack.c.l.b16 %v1490
      %v1626 = vunpack.c.l.b16 %v1491
      %v1627 = vunpack.c.l.b16 %v1492
      %v1628 = vunpack.c.l.b16 %v1493
      %v1629 = vunpack.c.l.b16 %v1494
      %v1630 = vunpack.c.l.b16 %v1495
      %v1631 = vunpack.c.l.b16 %v1496
      %v1632 = vunpack.c.l.b16 %v1497
      %v1633 = vunpack.c.l.b16 %v1498
      %v1634 = vunpack.c.l.b16 %v1499
      %v1635 = vunpack.c.l.b16 %v1500
      %v1636 = vunpack.c.l.b16 %v1501
      %v1637 = vunpack.c.l.b16 %v1502
      %v1638 = vunpack.c.l.b16 %v1503
      %v1639 = vunpack.c.l.b16 %v1504
      %v1640 = vunpack.c.l.b16 %v1505
      %v1641 = vunpack.c.l.b16 %v1506
      %v1642 = vunpack.c.l.b16 %v1507
      %v1643 = vunpack.c.l.b16 %v1508
      %v1644 = vunpack.c.l.b16 %v1509
      %v1645 = vunpack.c.l.b16 %v1510
      %v1646 = vunpack.c.l.b16 %v1511
      %v1647 = vunpack.c.l.b16 %v1512
      %v1648 = vunpack.c.l.b16 %v1513
      %v1649 = vunpack.c.l.b16 %v1514
      %v1650 = vunpack.c.l.b16 %v1515
      %v1651 = vunpack.c.l.b16 %v1516
      %v1652 = vunpack.c.l.b16 %v1517
      %v1653 = vunpack.c.l.b16 %v1518
      %v1654 = vunpack.c.l.b16 %v1519
      %v1655 = vunpack.c.l.b16 %v1520
      %v1656 = vunpack.c.l.b16 %v1521
      %v1657 = vunpack.c.l.b16 %v1522
      %v1658 = vunpack.c.l.b16 %v1523
      %v1659 = vunpack.c.l.b16 %v1524
      %v1660 = vunpack.c.l.b16 %v1525
      %v1661 = vunpack.c.l.b16 %v1526
      %v1662 = vunpack.c.l.b16 %v1527
      %v1663 = vunpack.c.l.b16 %v1528
      %v1664 = vunpack.c.l.b16 %v1529
      %v1665 = vunpack.c.l.b16 %v1530
      %v1666 = vunpack.c.l.b16 %v1531
      %v1667 = vunpack.c.l.b16 %v1532
      %v1668 = vunpack.c.l.b16 %v1533
      %v1669 = vunpack.c.l.b16 %v1534
      %v1670 = vunpack.c.l.b16 %v1535
      %v1671 = vunpack.c.l.b16 %v1536
      %v1672 = vunpack.c.l.b16 %v1537
      %v1673 = vunpack.c.l.b16 %v1538
      %v1674 = vunpack.c.l.b16 %v1539
      %v1675 = vunpack.c.l.b16 %v1540
      %v1676 = vunpack.c.l.b16 %v1541
      %v1677 = vunpack.c.l.b16 %v1542
      %v1678 = vunpack.c.l.b16 %v1543
      %v1679 = vunpack.c.l.b16 %v1544
      %v1680 = vpack.c.b16 %v1617, %v1616
      %v1681 = vpack.c.b16 %v1619, %v1618
      %v1682 = vpack.c.b16 %v1621, %v1620
      %v1683 = vpack.c.b16 %v1623, %v1622
      %v1684 = vpack.c.b16 %v1625, %v1624
      %v1685 = vpack.c.b16 %v1627, %v1626
      %v1686 = vpack.c.b16 %v1629, %v1628
      %v1687 = vpack.c.b16 %v1631, %v1630
      %v1688 = vpack.c.b16 %v1633, %v1632
      %v1689 = vpack.c.b16 %v1635, %v1634
      %v1690 = vpack.c.b16 %v1637, %v1636
      %v1691 = vpack.c.b16 %v1639, %v1638
      %v1692 = vpack.c.b16 %v1641, %v1640
      %v1693 = vpack.c.b16 %v1643, %v1642
      %v1694 = vpack.c.b16 %v1645, %v1644
      %v1695 = vpack.c.b16 %v1647, %v1646
      %v1696 = vpack.c.b16 %v1649, %v1648
      %v1697 = vpack.c.b16 %v1651, %v1650
      %v1698 = vpack.c.b16 %v1653, %v1652
      %v1699 = vpack.c.b16 %v1655, %v1654
      %v1700 = vpack.c.b16 %v1657, %v1656
      %v1701 = vpack.c.b16 %v1659, %v1658
      %v1702 = vpack.c.b16 %v1661, %v1660
      %v1703 = vpack.c.b16 %v1663, %v1662
      %v1704 = vpack.c.b16 %v1665, %v1664
      %v1705 = vpack.c.b16 %v1667, %v1666
      %v1706 = vpack.c.b16 %v1669, %v1668
      %v1707 = vpack.c.b16 %v1671, %v1670
      %v1708 = vpack.c.b16 %v1673, %v1672
      %v1709 = vpack.c.b16 %v1675, %v1674
      %v1710 = vpack.c.b16 %v1677, %v1676
      %v1711 = vpack.c.b16 %v1679, %v1678
      %1744 = vmatprep.subr.bf16.mxu0 0
      %1745 = vmatpush1.bf16.msra.mxu0 %v1687
      %1746 = vmatprep.subr.bf16.mxu0 0
      %1747 = vmatpush1.bf16.msra.mxu0 %v1686
      %1748 = vmatprep.subr.bf16.mxu0 0
      %1749 = vmatpush1.bf16.msra.mxu0 %v1685
      %1750 = vmatprep.subr.bf16.mxu0 0
      %1751 = vmatpush1.bf16.msra.mxu0 %v1684
      %1752 = vmatprep.subr.bf16.mxu0 0
      %1753 = vmatpush1.bf16.msra.mxu0 %v1683
      %1754 = vmatprep.subr.bf16.mxu0 0
      %1755 = vmatpush1.bf16.msra.mxu0 %v1682
      %1756 = vmatprep.subr.bf16.mxu0 0
      %1757 = vmatpush1.bf16.msra.mxu0 %v1681
      %1758 = vmatprep.subr.bf16.mxu0 0
      %1759 = vmatpush1.bf16.msra.mxu0 %v1680
      %1760 = vmatprep.subr.bf16.mxu0 0
      %1761 = vmatpush2.bf16.msra.mxu0 %v1695
      %1762 = vmatprep.subr.bf16.mxu0 0
      %1763 = vmatpush2.bf16.msra.mxu0 %v1694
      %1764 = vmatprep.subr.bf16.mxu0 0
      %1765 = vmatpush2.bf16.msra.mxu0 %v1693
      %1766 = vmatprep.subr.bf16.mxu0 0
      %1767 = vmatpush2.bf16.msra.mxu0 %v1692
      %1768 = vmatprep.subr.bf16.mxu0 0
      %1769 = vmatpush2.bf16.msra.mxu0 %v1691
      %1770 = vmatprep.subr.bf16.mxu0 0
      %1771 = vmatpush2.bf16.msra.mxu0 %v1690
      %1772 = vmatprep.subr.bf16.mxu0 0
      %1773 = vmatpush2.bf16.msra.mxu0 %v1689
      %1774 = vmatprep.subr.bf16.mxu0 0
      %1775 = vmatpush2.bf16.msra.mxu0 %v1688
      %1776 = vmatprep.mubr.bf16.mxu0 %v1478
      %1777 = vmatmul.mubr.bf16.gmra.mxu0 %v1477
      %v1778 = vpop.f32.mrf.mxu0
      %v1779 = vadd.f32 %v1550, %v1778
      %v1780 = vpop.f32.mrf.mxu0
      %v1781 = vpop.f32.mrf.mxu0
      %v1782 = vpop.f32.mrf.mxu0
      %1783 = vdwg.mxu0
      %1784 = vmatprep.subr.bf16.mxu0 0
      %1785 = vmatpush1.bf16.msra.mxu0 %v1703
      %1786 = vmatprep.subr.bf16.mxu0 0
      %1787 = vmatpush1.bf16.msra.mxu0 %v1702
      %1788 = vmatprep.subr.bf16.mxu0 0
      %1789 = vmatpush1.bf16.msra.mxu0 %v1701
      %1790 = vmatprep.subr.bf16.mxu0 0
      %1791 = vmatpush1.bf16.msra.mxu0 %v1700
      %1792 = vmatprep.subr.bf16.mxu0 0
      %1793 = vmatpush1.bf16.msra.mxu0 %v1699
      %1794 = vmatprep.subr.bf16.mxu0 0
      %1795 = vmatpush1.bf16.msra.mxu0 %v1698
      %1796 = vmatprep.subr.bf16.mxu0 0
      %1797 = vmatpush1.bf16.msra.mxu0 %v1697
      %1798 = vmatprep.subr.bf16.mxu0 0
      %1799 = vmatpush1.bf16.msra.mxu0 %v1696
      %1800 = vmatprep.subr.bf16.mxu0 0
      %1801 = vmatpush2.bf16.msra.mxu0 %v1711
      %1802 = vmatprep.subr.bf16.mxu0 0
      %1803 = vmatpush2.bf16.msra.mxu0 %v1710
      %1804 = vmatprep.subr.bf16.mxu0 0
      %1805 = vmatpush2.bf16.msra.mxu0 %v1709
      %1806 = vmatprep.subr.bf16.mxu0 0
      %1807 = vmatpush2.bf16.msra.mxu0 %v1708
      %1808 = vmatprep.subr.bf16.mxu0 0
      %1809 = vmatpush2.bf16.msra.mxu0 %v1707
      %1810 = vmatprep.subr.bf16.mxu0 0
      %1811 = vmatpush2.bf16.msra.mxu0 %v1706
      %1812 = vmatprep.subr.bf16.mxu0 0
      %1813 = vmatpush2.bf16.msra.mxu0 %v1705
      %1814 = vmatprep.subr.bf16.mxu0 0
      %1815 = vmatpush2.bf16.msra.mxu0 %v1704
      %1816 = vmatprep.mubr.bf16.mxu0 %v1480
      %1817 = vmatmul.mubr.bf16.gmra.mxu0 %v1479
      %v1818 = vpop.f32.mrf.mxu0
      %v1819 = vadd.f32 %v1779, %v1818
      %v1820 = vpop.f32.mrf.mxu0
      %v1821 = vpop.f32.mrf.mxu0
      %v1822 = vpop.f32.mrf.mxu0
      %1823 = vdwg.mxu0
      %vm1824 = vcmask 41984
      %1825 = vst.msk [vmem:[%s290] sm:$0x3] %vm1824, %v1819
      %p1826 = scmp.lt.s32.totalorder %s16, 1
      %s1827 = scalar_select %p1826, %s16, 1
      %s1828 = smul.addr %s1827, 2
      %s1829 = scalar_lea.vmem %s5, %s1828
      // Predicated region
      $region41: #{ensemble_forward.16} parent=39 // pred_check
        %p1830 = pneg %p164
      $region42: #{ensemble_forward.16} parent=39 // pred_check_branch
        %1832 = sbr.rel (%p1830) target = $region44
      $region43: #{ensemble_forward.16} parent=39 // pred_region
        _
      $region44: #{ensemble_forward.16} parent=39 // pred_fallthru
        _
    $region40: #{ensemble_forward.16} parent=5 // pred_fallthru
      _
    %p1833 = scmp.le.s32.totalorder 2, %s11
    // Predicated region
    $region45: #{ensemble_forward.16} parent=5 // pred_check
      %p1834 = pneg %p1833
    $region46: #{ensemble_forward.16} parent=5 // pred_check_branch
      %1836 = sbr.rel (%p1834) target = $region48
    $region47: #{ensemble_forward.16} parent=5 // pred_region
      %s1837 = ssub.s32 %s11, 2
      // Predicated region
      $region49: #{ensemble_forward.16} parent=47 // pred_check
        %p1838 = pneg %p170
      $region50: #{ensemble_forward.16} parent=47 // pred_check_branch
        %1840 = sbr.rel (%p1838) target = $region52
      $region51: #{ensemble_forward.16} parent=47 // pred_region
        %p1841 = scmp.lt.s32.totalorder %s17, 1
        %s1842 = scalar_select %p1841, %s17, 1
        %s1843 = smul.addr %s1842, 2
        %s1844 = scalar_lea.vmem %s5, %s1843
      $region52: #{ensemble_forward.16} parent=47 // pred_fallthru
        _
    $region48: #{ensemble_forward.16} parent=5 // pred_fallthru
      _
  $region6: #{ensemble_forward.16} parent=0 // loop_footer
    %s15 = sadd.s32 1, %s11
  $region7: #{ensemble_forward.16} parent=0 // loop_footer_branch
    %10 = sbr.rel target = $region3
  $region8: #{ensemble_forward.16} parent=0 // loop_exit
    _

</llo_original>
